<compile_context>
chip_gen: v6e
topology: v6e:2x2x1
jax: 0.10.0
libtpu: 0.0.40
codegen_flags: <defaults>
</compile_context>

<pallas_src>
import functools
import math

import jax
import jax.numpy as jnp
from jax.experimental import pallas as pl
from jax.experimental.pallas import tpu as pltpu


# ----------------------------------------------------------------------------
# Pallas kernels
# ----------------------------------------------------------------------------

_TM = 256   # matmul row tile
_TN = 128   # matmul col tile (only applied when Cout > 128)
_TK = 512   # matmul reduction tile (K <= 512 for every layer of this network)


def _swish_f32(x):
    return x * jax.nn.sigmoid(x)


def _round_up(v, m):
    return ((v + m - 1) // m) * m


def _mm_kernel(x_ref, w_ref, o_ref, acc_ref, *, act_in, act_out):
    """Tiled matmul with fused input swish and output sigmoid epilogues.
    bf16 MXU inputs, f32 accumulation in VMEM scratch across the K grid axis."""
    @pl.when(pl.program_id(2) == 0)
    def _():
        acc_ref[...] = jnp.zeros_like(acc_ref)

    x = x_ref[...]
    if act_in == "swish":
        x = _swish_f32(x.astype(jnp.float32)).astype(jnp.bfloat16)
    acc_ref[...] += jnp.dot(x, w_ref[...], preferred_element_type=jnp.float32)

    @pl.when(pl.program_id(2) == pl.num_programs(2) - 1)
    def _():
        y = acc_ref[...]
        if act_out == "sigmoid":
            y = jax.nn.sigmoid(y)
        o_ref[...] = y.astype(o_ref.dtype)


def pallas_matmul(x2d, w, act_in="none", act_out="none", out_dtype=jnp.bfloat16):
    """act_in(x2d) @ w (+ act_out), (M, K) @ (K, N) -> (M, N).

    M padding only ever touches the tiny deep-level tensors of this network
    (all large M are multiples of 256); N stays un-padded when Cout <= 128 so
    the weight/output blocks never blow the VMEM budget on v7x."""
    M, K = x2d.shape
    n_out = w.shape[1]
    x2d = x2d.astype(jnp.bfloat16)
    w = w.astype(jnp.bfloat16)

    mp = _round_up(max(M, _TM), _TM)
    if mp != M:
        x2d = jnp.pad(x2d, ((0, mp - M), (0, 0)))

    if n_out <= _TN:
        tn, np_ = n_out, n_out
    else:
        tn = _TN
        np_ = _round_up(n_out, _TN)
        if np_ != n_out:
            w = jnp.pad(w, ((0, 0), (0, np_ - n_out)))

    if K <= _TK:
        tk, kp = K, K
    else:
        tk = _TK
        kp = _round_up(K, _TK)
        if kp != K:
            x2d = jnp.pad(x2d, ((0, 0), (0, kp - K)))
            w = jnp.pad(w, ((0, kp - K), (0, 0)))

    out = pl.pallas_call(
        functools.partial(_mm_kernel, act_in=act_in, act_out=act_out),
        out_shape=jax.ShapeDtypeStruct((mp, np_), out_dtype),
        grid=(mp // _TM, np_ // tn, kp // tk),
        in_specs=[pl.BlockSpec((_TM, tk), lambda i, j, k: (i, k)),
                  pl.BlockSpec((tk, tn), lambda i, j, k: (k, j))],
        out_specs=pl.BlockSpec((_TM, tn), lambda i, j, k: (i, j)),
        scratch_shapes=[pltpu.VMEM((_TM, tn), jnp.float32)],
        compiler_params=pltpu.CompilerParams(
            dimension_semantics=("parallel", "parallel", "arbitrary")),
    )(x2d, w)
    if mp != M or np_ != n_out:
        out = out[:M, :n_out]
    return out


def _dw_kernel(x0_ref, x1_ref, x2_ref, w_ref, o_ref, *, act_in):
    """Depthwise 3x3x3 conv for one output depth slice.  The 3 depth-shifted
    halo slices arrive as separate pipelined blocks; 27 taps accumulate in f32
    on the VPU.  Optional fused swish on the input (swish(0)==0, so applying it
    to the zero-padded slab is exact)."""
    _, _, H, W, C = o_ref.shape
    w = w_ref[...].astype(jnp.float32)                    # (3, 3, 3, C)
    acc = jnp.zeros((H, W, C), jnp.float32)
    for kd, x_ref in enumerate((x0_ref, x1_ref, x2_ref)):
        s = x_ref[0, 0].astype(jnp.float32)               # (H+2, W+2, C)
        if act_in == "swish":
            s = _swish_f32(s)
        for kh in range(3):
            for kw in range(3):
                acc = acc + s[kh:kh + H, kw:kw + W, :] * w[kd, kh, kw]
    o_ref[0, 0] = acc.astype(o_ref.dtype)


def depthwise_conv3(x, w, d_stride=1, act_in="none"):
    """Depthwise 3x3x3 conv, padding 1.  The depth stride is fused into the
    index_map so only the needed depth slices are read and computed."""
    N, D, H, W, C = x.shape
    d_out = (D - 1) // d_stride + 1
    xp = jnp.pad(x, ((0, 0), (1, 1), (1, 1), (1, 1), (0, 0)))
    in_specs = [
        pl.BlockSpec((1, 1, H + 2, W + 2, C),
                     lambda n, d, kd=kd, sd=d_stride: (n, sd * d + kd, 0, 0, 0))
        for kd in range(3)
    ] + [pl.BlockSpec((3, 3, 3, C), lambda n, d: (0, 0, 0, 0))]
    return pl.pallas_call(
        functools.partial(_dw_kernel, act_in=act_in),
        out_shape=jax.ShapeDtypeStruct((N, d_out, H, W, C), jnp.bfloat16),
        grid=(N, d_out),
        in_specs=in_specs,
        out_specs=pl.BlockSpec((1, 1, H, W, C), lambda n, d: (n, d, 0, 0, 0)),
        compiler_params=pltpu.CompilerParams(
            dimension_semantics=("parallel", "parallel")),
    )(xp, xp, xp, w)


def _conv3_kernel(x0_ref, x1_ref, x2_ref, w_ref, o_ref, *, act_in):
    """Dense 3x3x3 conv for one output depth slice as 27 shifted
    (H*W, Cin) @ (Cin, Cout) MXU matmuls accumulated in f32 (no HBM im2col)."""
    _, _, H, W, Cout = o_ref.shape
    Cin = w_ref.shape[3]
    acc = jnp.zeros((H * W, Cout), jnp.float32)
    for kd, x_ref in enumerate((x0_ref, x1_ref, x2_ref)):
        s = x_ref[0, 0].astype(jnp.float32)               # (H+2, W+2, Cin)
        if act_in == "swish":
            s = _swish_f32(s)
        s = s.astype(jnp.bfloat16)
        for kh in range(3):
            for kw in range(3):
                win = s[kh:kh + H, kw:kw + W, :].reshape(H * W, Cin)
                acc = acc + jnp.dot(win, w_ref[kd, kh, kw],
                                    preferred_element_type=jnp.float32)
    o_ref[0, 0] = acc.reshape(H, W, Cout).astype(o_ref.dtype)


@functools.partial(jax.jit, static_argnames=("act_in",))
def conv3x3_direct(x, w, act_in="none"):
    """Full 3x3x3 conv, stride 1, pad 1.  w: (3, 3, 3, Cin, Cout)."""
    N, D, H, W, C = x.shape
    c_out = w.shape[-1]
    xp = jnp.pad(x.astype(jnp.bfloat16),
                 ((0, 0), (1, 1), (1, 1), (1, 1), (0, 0)))
    wb = w.astype(jnp.bfloat16)
    in_specs = [
        pl.BlockSpec((1, 1, H + 2, W + 2, C),
                     lambda n, d, kd=kd: (n, d + kd, 0, 0, 0))
        for kd in range(3)
    ] + [pl.BlockSpec((3, 3, 3, C, c_out), lambda n, d: (0, 0, 0, 0, 0))]
    return pl.pallas_call(
        functools.partial(_conv3_kernel, act_in=act_in),
        out_shape=jax.ShapeDtypeStruct((N, D, H, W, c_out), jnp.bfloat16),
        grid=(N, D),
        in_specs=in_specs,
        out_specs=pl.BlockSpec((1, 1, H, W, c_out), lambda n, d: (n, d, 0, 0, 0)),
        compiler_params=pltpu.CompilerParams(
            dimension_semantics=("parallel", "parallel")),
    )(xp, xp, xp, wb)


def _inorm_kernel(*refs, act, has_residual):
    if has_residual:
        x_ref, r_ref, g_ref, b_ref, o_ref = refs
    else:
        x_ref, g_ref, b_ref, o_ref = refs
    x = x_ref[0].astype(jnp.float32)                      # (M, C)
    mean = jnp.mean(x, axis=0, keepdims=True)
    var = jnp.mean(jnp.square(x - mean), axis=0, keepdims=True)  # biased (torch)
    y = (x - mean) * jax.lax.rsqrt(var + 1e-5) * g_ref[...] + b_ref[...]
    if act == "swish":
        y = _swish_f32(y)
    if has_residual:
        y = y + r_ref[0].astype(jnp.float32)
    o_ref[0] = y.astype(o_ref.dtype)


@functools.partial(jax.jit, static_argnames=("act",))
def instance_norm(x, gamma, beta, act="none", residual=None):
    """InstanceNorm3d(affine=True, eps=1e-5) with f32 statistics, optional fused
    swish epilogue and optional fused residual add (residual + norm(x))."""
    N, D, H, W, C = x.shape
    M = D * H * W
    x3 = x.reshape(N, M, C)
    operands = [x3]
    in_specs = [pl.BlockSpec((1, M, C), lambda n: (n, 0, 0))]
    if residual is not None:
        operands.append(residual.reshape(N, M, C))
        in_specs.append(pl.BlockSpec((1, M, C), lambda n: (n, 0, 0)))
    operands += [gamma.reshape(1, C).astype(jnp.float32),
                 beta.reshape(1, C).astype(jnp.float32)]
    in_specs += [pl.BlockSpec((1, C), lambda n: (0, 0)),
                 pl.BlockSpec((1, C), lambda n: (0, 0))]
    out = pl.pallas_call(
        functools.partial(_inorm_kernel, act=act,
                          has_residual=residual is not None),
        out_shape=jax.ShapeDtypeStruct((N, M, C), jnp.bfloat16),
        grid=(N,),
        in_specs=in_specs,
        out_specs=pl.BlockSpec((1, M, C), lambda n: (n, 0, 0)),
        compiler_params=pltpu.CompilerParams(
            dimension_semantics=("parallel",)),
    )(*operands)
    return out.reshape(N, D, H, W, C)


# ----------------------------------------------------------------------------
# Conv wrappers (glue + Pallas kernels)
# ----------------------------------------------------------------------------

def _triple(v):
    if isinstance(v, (list, tuple)):
        return tuple(int(s) for s in v)
    return (int(v),) * 3


@functools.partial(jax.jit, static_argnames=("stride", "act_in"))
def separable_conv3d(x, dw, pw, stride=(1, 1, 1), act_in="none"):
    """SeparableConv3d: depthwise 3x3x3 (pad 1, stride) then pointwise 1x1x1.
    The depth stride is fused into the depthwise kernel; H/W stride is applied
    by subsampling before the pointwise matmul."""
    sd, sh, sw = stride
    y = depthwise_conv3(x.astype(jnp.bfloat16), dw, d_stride=sd, act_in=act_in)
    if (sh, sw) != (1, 1):
        # TODO(synk): fold the H/W stride into the depthwise kernel too
        # (strided in-kernel windows); only the two stem convs take this path.
        y = y[:, :, ::sh, ::sw, :]
    N, D, H, W, C = y.shape
    out = pallas_matmul(y.reshape(-1, C), pw)
    return out.reshape(N, D, H, W, pw.shape[1])


@functools.partial(jax.jit,
                   static_argnames=("stride", "act_in", "act_out", "out_dtype"))
def conv1x1(x, w, stride=(1, 1, 1), act_in="none", act_out="none",
            out_dtype=jnp.bfloat16):
    """1x1x1 conv (optionally strided), bias-free, with fused activations."""
    if stride != (1, 1, 1):
        x = x[:, ::stride[0], ::stride[1], ::stride[2], :]
    N, D, H, W, C = x.shape
    y = pallas_matmul(x.reshape(-1, C), w, act_in=act_in, act_out=act_out,
                      out_dtype=out_dtype)
    return y.reshape(N, D, H, W, w.shape[1])


# TODO(synk): trilinear resize (align_corners=True) is gather-based; it stays in
# plain JAX glue since data-dependent gathers have no clean BlockSpec mapping.
@functools.partial(jax.jit, static_argnames=("scale",))
def trilinear_interp(x, scale):
    scale = _triple(scale)
    out = x
    for axis, s in zip((1, 2, 3), scale):
        if s == 1:
            continue
        insz = out.shape[axis]
        outsz = insz * s
        pos = jnp.arange(outsz, dtype=jnp.float32) * (insz - 1) / (outsz - 1)
        lo = jnp.clip(jnp.floor(pos).astype(jnp.int32), 0, insz - 1)
        hi = jnp.minimum(lo + 1, insz - 1)
        frac = pos - lo.astype(jnp.float32)
        shape = [1] * out.ndim
        shape[axis] = outsz
        frac = frac.reshape(shape)
        out = (jnp.take(out, lo, axis=axis) * (1.0 - frac)
               + jnp.take(out, hi, axis=axis) * frac)
    return out.astype(x.dtype)


# ----------------------------------------------------------------------------
# Parameter initialization (deterministic, synthetic)
# ----------------------------------------------------------------------------

class KeyGen:
    def __init__(self, seed=0):
        self.key = jax.random.PRNGKey(seed)

    def __call__(self):
        self.key, sub = jax.random.split(self.key)
        return sub


def init_norm(kg, planes):
    return {"gamma": jnp.ones((planes,), jnp.float32),
            "beta": jnp.zeros((planes,), jnp.float32)}


def init_sep(kg, cin, cout):
    return {"dw": jax.random.normal(kg(), (3, 3, 3, cin), jnp.float32)
                  * (0.3 / math.sqrt(27.0)),
            "pw": jax.random.normal(kg(), (cin, cout), jnp.float32)
                  * (1.0 / math.sqrt(cin))}


def init_conv1x1(kg, cin, cout):
    return jax.random.normal(kg(), (cin, cout), jnp.float32) / math.sqrt(cin)


def init_conv3(kg, cin, cout):
    return (jax.random.normal(kg(), (3, 3, 3, cin, cout), jnp.float32)
            / math.sqrt(27.0 * cin))


def init_cell(kg, inplanes, up=True, same=True, down=True, factor=2):
    p = {"same": same, "factor": _triple(factor), "up": None, "down": None}
    if up:
        p["up"] = {"conv": init_conv1x1(kg, inplanes, inplanes // 2),
                   "norm": init_norm(kg, inplanes // 2)}
    if down:
        dfac = 2 if up else factor
        p["down"] = {"conv": init_conv1x1(kg, inplanes, inplanes * 2),
                     "norm": init_norm(kg, inplanes * 2),
                     "stride": _triple(dfac)}
    p["core"] = {"sep1": init_sep(kg, inplanes, inplanes),
                 "norm1": init_norm(kg, inplanes),
                 "sep2": init_sep(kg, inplanes, inplanes),
                 "norm2": init_norm(kg, inplanes)}
    return p


def init_layer(kg, depth, factor):
    levels = [0] if depth % 2 == 0 else [1]
    if depth < 7 and depth > 1:
        levels.append(levels[0] + 2)
    inputs = [[1, 2, 2, 2, 2], [1, 3, 3, 3, 0], [0, 1, 3, 3, 0], [0, 1, 2, 0, 0]]
    cells = []
    for lv in levels:
        up, keep, down = True, True, True
        channels = 64 * 2 ** lv
        idx = depth // 2
        if idx < 4 and lv == 0:
            up = False
        if idx == 4 or (idx < 4 and inputs[lv][idx + 1] == 0):
            keep = False
            down = False
        elif lv == 3:
            down = False
        if lv < 2 and idx < 4:
            c_factor = factor[2]
        elif lv == 0 and idx == 4:
            c_factor = factor[1]
        else:
            c_factor = 2
        cells.append(init_cell(kg, channels, up, keep, down, c_factor))
    return cells


def init_network(kg, modalities, num_classes, strides):
    p = {}
    p["stem1"] = {"sep1": init_sep(kg, modalities, 32), "norm1": init_norm(kg, 32),
                  "sep2": init_sep(kg, 32, 32), "norm2": init_norm(kg, 32)}
    p["stem2"] = {"sep1": init_sep(kg, 32, 32), "norm1": init_norm(kg, 32),
                  "sep2": init_sep(kg, 32, 64), "norm2": init_norm(kg, 64)}
    p["backbone"] = [init_layer(kg, d, strides) for d in range(9)]
    p["combination"] = {"conv": init_conv3(kg, 32, 32), "norm": init_norm(kg, 32)}
    p["combination_brain"] = {"conv": init_conv3(kg, 32, 32),
                              "norm": init_norm(kg, 32)}
    p["final"] = init_conv1x1(kg, 32, num_classes)
    p["final_brain"] = init_conv1x1(kg, 32, num_classes)
    return p


# ----------------------------------------------------------------------------
# Forward passes (mirror the PyTorch modules, with activations/residuals fused)
# ----------------------------------------------------------------------------

def sep_apply(x, p, stride=(1, 1, 1), act_in="none"):
    return separable_conv3d(x, p["dw"], p["pw"], stride=stride, act_in=act_in)


def norm_apply(x, p, act="none", residual=None):
    return instance_norm(x, p["gamma"], p["beta"], act=act, residual=residual)


def cell_forward(p, x):
    out = [None, None, None]
    # core: swish -> sep -> norm -> swish -> sep -> norm; the swishes are fused
    # into the depthwise input / norm epilogue, the residual add into norm2.
    c = sep_apply(x, p["core"]["sep1"], act_in="swish")
    c = norm_apply(c, p["core"]["norm1"], act="swish")
    c = sep_apply(c, p["core"]["sep2"])
    xc = norm_apply(c, p["core"]["norm2"], residual=x)        # x + core(x)
    if p["up"] is not None:
        u = conv1x1(xc, p["up"]["conv"], act_in="swish")
        u = norm_apply(u, p["up"]["norm"])
        out[0] = trilinear_interp(u, p["factor"])
    if p["same"]:
        out[1] = xc
    if p["down"] is not None:
        d = conv1x1(xc, p["down"]["conv"], stride=p["down"]["stride"],
                    act_in="swish")
        out[2] = norm_apply(d, p["down"]["norm"])
    return out


def layer_forward(cells, x, initial_idx):
    for idx_c, cp in enumerate(cells):
        index = initial_idx + idx_c * 2
        in_cell = sum(x[index])
        x[index] = []
        out_cell = cell_forward(cp, in_cell)
        for idx_i, indiv in enumerate(out_cell):
            if indiv is not None:
                x[idx_i - 1 + index].append(indiv)
    return x


def network_forward(p, x_ncdhw, strides):
    # NCDHW -> NDHWC, activations kept in bf16 between kernels.
    x = jnp.transpose(x_ncdhw, (0, 2, 3, 4, 1)).astype(jnp.bfloat16)
    s0 = _triple(strides[0])
    s1 = _triple(strides[1])

    # stem 1: Sep, Norm, swish, Sep(stride), Norm, swish
    h = sep_apply(x, p["stem1"]["sep1"])
    h = norm_apply(h, p["stem1"]["norm1"], act="swish")
    h = sep_apply(h, p["stem1"]["sep2"], stride=s0)
    x_small = norm_apply(h, p["stem1"]["norm2"], act="swish")

    # stem 2: Sep, Norm, swish, Sep(stride), Norm
    h = sep_apply(x_small, p["stem2"]["sep1"])
    h = norm_apply(h, p["stem2"]["norm1"], act="swish")
    h = sep_apply(h, p["stem2"]["sep2"], stride=s1)
    h = norm_apply(h, p["stem2"]["norm2"])

    xs = [[h], [], [], []]
    for depth, cells in enumerate(p["backbone"]):
        initial_idx = 0 if depth % 2 == 0 else 1
        xs = layer_forward(cells, xs, initial_idx)

    h = xs[-1][0] + x_small

    # vessel + brain combination convs batched into one lane-denser 64-channel
    # pass (InstanceNorm stats are per-channel, so the concat is exact).
    wcomb = jnp.concatenate([p["combination"]["conv"],
                             p["combination_brain"]["conv"]], axis=-1)
    gcomb = jnp.concatenate([p["combination"]["norm"]["gamma"],
                             p["combination_brain"]["norm"]["gamma"]])
    bcomb = jnp.concatenate([p["combination"]["norm"]["beta"],
                             p["combination_brain"]["norm"]["beta"]])
    y = conv3x3_direct(h, wcomb, act_in="swish")
    y = instance_norm(y, gcomb, bcomb)
    y = trilinear_interp(y, s0)                   # interp(concat) == concat(interp)
    vessel, brain = y[..., :32], y[..., 32:]

    # final conv: swish + 1x1 conv + sigmoid fused into one matmul kernel.
    x_vessel = conv1x1(vessel, p["final"], act_in="swish", act_out="sigmoid",
                       out_dtype=jnp.float32)
    _x_brain = conv1x1(brain, p["final_brain"], act_in="swish")  # unused, as in torch

    return jnp.transpose(x_vessel, (0, 4, 1, 2, 3))              # back to NCDHW


def rog_forward(params, x_ncdhw, strides):
    return network_forward(params, x_ncdhw, strides)


# ----------------------------------------------------------------------------
# Main
# ----------------------------------------------------------------------------

if __name__ == "__main__":
    cfg = {"modalities": 2, "classes": 1,
           "strides": [[2, 2, 1], [2, 2, 1], [2, 2, 2]]}

    kg = KeyGen(0)                                   # params from PRNGKey(0)
    params = init_network(kg, cfg["modalities"], cfg["classes"],
                          cfg["strides"][:3])

    # Input must be divisible by 32 in D,H and 8 in W (4 downsampling stages).
    key = jax.random.PRNGKey(0)
    x = jax.random.normal(jax.random.fold_in(key, 123),
                          (1, cfg["modalities"], 32, 32, 16), jnp.float32)

    y = rog_forward(params, x, cfg["strides"][:3])
    y = jax.block_until_ready(y)

    assert y.shape == (1, cfg["classes"], 32, 32, 16), y.shape
    assert bool(jnp.all(jnp.isfinite(y)))
    assert bool(jnp.all((y >= 0.0) & (y <= 1.0)))    # sigmoid output range
    print("KERNEL_OK")
</pallas_src>

<mosaic_0001>
module attributes {stable_mosaic.version = 11 : i64} {
  func.func @_mm_kernel(%arg0: i32, %arg1: i32, %arg2: i32, %arg3: memref<256x2xbf16, #tpu.memory_space<vmem>>, %arg4: memref<2x32xbf16, #tpu.memory_space<vmem>>, %arg5: memref<256x32xbf16, #tpu.memory_space<vmem>>, %arg6: memref<256x32xf32, #tpu.memory_space<vmem>>) attributes {dimension_semantics = [#tpu.dimension_semantics<parallel>, #tpu.dimension_semantics<parallel>, #tpu.dimension_semantics<arbitrary>], iteration_bounds = array<i64: 64, 1, 1>, scalar_prefetch = 0 : i64, scratch_operands = 1 : i64, tpu.core_type = #tpu.core_type<tc>, window_params = [{transform_indices = @transform_0, window_bounds = array<i64: 256, 2>}, {transform_indices = @transform_1, window_bounds = array<i64: 2, 32>}, {transform_indices = @transform_2, window_bounds = array<i64: 256, 32>}]} {
    %c0_i32 = arith.constant 0 : i32
    %0 = arith.cmpi eq, %arg2, %c0_i32 : i32
    %1 = arith.extui %0 : i1 to i32
    %c0_i32_0 = arith.constant 0 : i32
    %2 = arith.cmpi ne, %1, %c0_i32_0 : i32
    scf.if %2 {
      %cst_10 = arith.constant 0.000000e+00 : f32
      %12 = vector.broadcast %cst_10 : f32 to vector<256x32xf32>
      %c0_11 = arith.constant 0 : index
      %c0_12 = arith.constant 0 : index
      %13 = vector.load %arg6[%c0_11, %c0_12] : memref<256x32xf32, #tpu.memory_space<vmem>>, vector<256x32xf32>
      tpu.vector_store %arg6[%c0_11, %c0_12], %12 {strides = array<i32>} : memref<256x32xf32, #tpu.memory_space<vmem>>, vector<256x32xf32>,
    } else {
    }
    %c0 = arith.constant 0 : index
    %c0_1 = arith.constant 0 : index
    %3 = vector.load %arg3[%c0, %c0_1] : memref<256x2xbf16, #tpu.memory_space<vmem>>, vector<256x2xbf16>
    %c0_2 = arith.constant 0 : index
    %c0_3 = arith.constant 0 : index
    %4 = vector.load %arg6[%c0_2, %c0_3] : memref<256x32xf32, #tpu.memory_space<vmem>>, vector<256x32xf32>
    %c0_4 = arith.constant 0 : index
    %c0_5 = arith.constant 0 : index
    %5 = vector.load %arg4[%c0_4, %c0_5] : memref<2x32xbf16, #tpu.memory_space<vmem>>, vector<2x32xbf16>
    %cst = arith.constant dense<0.000000e+00> : vector<256x32xf32>
    %6 = tpu.matmul %3, %5, %cst {dimension_numbers = #tpu.dot_dimension_numbers<[1], [0], [0], [1], [0, 0, 1, 1], [], []>} : vector<256x2xbf16>, vector<2x32xbf16>, vector<256x32xf32> -> vector<256x32xf32>
    %7 = arith.addf %4, %6 : vector<256x32xf32>
    %c0_6 = arith.constant 0 : index
    %c0_7 = arith.constant 0 : index
    %8 = vector.load %arg6[%c0_6, %c0_7] : memref<256x32xf32, #tpu.memory_space<vmem>>, vector<256x32xf32>
    tpu.vector_store %arg6[%c0_6, %c0_7], %7 {strides = array<i32>} : memref<256x32xf32, #tpu.memory_space<vmem>>, vector<256x32xf32>,
    %c0_i32_8 = arith.constant 0 : i32
    %9 = arith.cmpi eq, %arg2, %c0_i32_8 : i32
    %10 = arith.extui %9 : i1 to i32
    %c0_i32_9 = arith.constant 0 : i32
    %11 = arith.cmpi ne, %10, %c0_i32_9 : i32
    scf.if %11 {
      %c0_10 = arith.constant 0 : index
      %c0_11 = arith.constant 0 : index
      %12 = vector.load %arg6[%c0_10, %c0_11] : memref<256x32xf32, #tpu.memory_space<vmem>>, vector<256x32xf32>
      %13 = arith.truncf %12 : vector<256x32xf32> to vector<256x32xbf16>
      %c0_12 = arith.constant 0 : index
      %c0_13 = arith.constant 0 : index
      %14 = vector.load %arg5[%c0_12, %c0_13] : memref<256x32xbf16, #tpu.memory_space<vmem>>, vector<256x32xbf16>
      tpu.vector_store %arg5[%c0_12, %c0_13], %13 {strides = array<i32>} : memref<256x32xbf16, #tpu.memory_space<vmem>>, vector<256x32xbf16>,
    } else {
    }
    return
  }
  func.func @transform_0(%arg0: i32, %arg1: i32, %arg2: i32) -> (i32, i32) {
    %c0_i32 = arith.constant 0 : i32
    return %arg0, %arg2 : i32, i32
  }
  func.func @transform_1(%arg0: i32, %arg1: i32, %arg2: i32) -> (i32, i32) {
    %c0_i32 = arith.constant 0 : i32
    return %arg2, %arg1 : i32, i32
  }
  func.func @transform_2(%arg0: i32, %arg1: i32, %arg2: i32) -> (i32, i32) {
    %c0_i32 = arith.constant 0 : i32
    return %arg0, %arg1 : i32, i32
  }
}

module attributes {stable_mosaic.version = 11 : i64} {
  func.func @_dw_kernel(%arg0: i32, %arg1: i32, %arg2: memref<1x1x34x18x2xbf16, #tpu.memory_space<vmem>>, %arg3: memref<1x1x34x18x2xbf16, #tpu.memory_space<vmem>>, %arg4: memref<1x1x34x18x2xbf16, #tpu.memory_space<vmem>>, %arg5: memref<3x3x3x2xf32, #tpu.memory_space<vmem>>, %arg6: memref<1x1x32x16x2xbf16, #tpu.memory_space<vmem>>) attributes {dimension_semantics = [#tpu.dimension_semantics<parallel>, #tpu.dimension_semantics<parallel>], iteration_bounds = array<i64: 1, 32>, scalar_prefetch = 0 : i64, scratch_operands = 0 : i64, tpu.core_type = #tpu.core_type<tc>, window_params = [{transform_indices = @transform_0, window_bounds = array<i64: 1, 1, 34, 18, 2>}, {transform_indices = @transform_1, window_bounds = array<i64: 1, 1, 34, 18, 2>}, {transform_indices = @transform_2, window_bounds = array<i64: 1, 1, 34, 18, 2>}, {pipeline_mode = #tpu.pipeline_mode<synchronous>, transform_indices = @transform_3, window_bounds = array<i64: 3, 3, 3, 2>}, {transform_indices = @transform_4, window_bounds = array<i64: 1, 1, 32, 16, 2>}]} {
    %c0 = arith.constant 0 : index
    %c0_0 = arith.constant 0 : index
    %c0_1 = arith.constant 0 : index
    %c0_2 = arith.constant 0 : index
    %0 = vector.load %arg5[%c0, %c0_0, %c0_1, %c0_2] : memref<3x3x3x2xf32, #tpu.memory_space<vmem>>, vector<3x3x3x2xf32>
    %cst = arith.constant 0.000000e+00 : f32
    %1 = vector.broadcast %cst : f32 to vector<32x16x2xf32>
    %c0_3 = arith.constant 0 : index
    %c0_4 = arith.constant 0 : index
    %c0_5 = arith.constant 0 : index
    %c0_6 = arith.constant 0 : index
    %c0_7 = arith.constant 0 : index
    %2 = vector.load %arg2[%c0_3, %c0_4, %c0_5, %c0_6, %c0_7] : memref<1x1x34x18x2xbf16, #tpu.memory_space<vmem>>, vector<1x1x34x18x2xbf16>
    %3 = vector.shape_cast %2 : vector<1x1x34x18x2xbf16> to vector<34x18x2xbf16>
    %4 = arith.extf %3 : vector<34x18x2xbf16> to vector<34x18x2xf32>
    %5 = vector.extract_strided_slice %4 {offsets = [0, 0, 0], sizes = [32, 16, 2], strides = [1, 1, 1]} : vector<34x18x2xf32> to vector<32x16x2xf32>
    %6 = vector.extract_strided_slice %0 {offsets = [0, 0, 0, 0], sizes = [1, 1, 1, 2], strides = [1, 1, 1, 1]} : vector<3x3x3x2xf32> to vector<1x1x1x2xf32>
    %7 = vector.shape_cast %6 : vector<1x1x1x2xf32> to vector<2xf32>
    %8 = vector.shape_cast %7 : vector<2xf32> to vector<1x1x2xf32>
    %9 = vector.broadcast %8 : vector<1x1x2xf32> to vector<32x16x2xf32>
    %10 = arith.mulf %5, %9 : vector<32x16x2xf32>
    %11 = arith.addf %1, %10 : vector<32x16x2xf32>
    %12 = vector.extract_strided_slice %4 {offsets = [0, 1, 0], sizes = [32, 16, 2], strides = [1, 1, 1]} : vector<34x18x2xf32> to vector<32x16x2xf32>
    %13 = vector.extract_strided_slice %0 {offsets = [0, 0, 1, 0], sizes = [1, 1, 1, 2], strides = [1, 1, 1, 1]} : vector<3x3x3x2xf32> to vector<1x1x1x2xf32>
    %14 = vector.shape_cast %13 : vector<1x1x1x2xf32> to vector<2xf32>
    %15 = vector.shape_cast %14 : vector<2xf32> to vector<1x1x2xf32>
    %16 = vector.broadcast %15 : vector<1x1x2xf32> to vector<32x16x2xf32>
    %17 = arith.mulf %12, %16 : vector<32x16x2xf32>
    %18 = arith.addf %11, %17 : vector<32x16x2xf32>
    %19 = vector.extract_strided_slice %4 {offsets = [0, 2, 0], sizes = [32, 16, 2], strides = [1, 1, 1]} : vector<34x18x2xf32> to vector<32x16x2xf32>
    %20 = vector.extract_strided_slice %0 {offsets = [0, 0, 2, 0], sizes = [1, 1, 1, 2], strides = [1, 1, 1, 1]} : vector<3x3x3x2xf32> to vector<1x1x1x2xf32>
    %21 = vector.shape_cast %20 : vector<1x1x1x2xf32> to vector<2xf32>
    %22 = vector.shape_cast %21 : vector<2xf32> to vector<1x1x2xf32>
    %23 = vector.broadcast %22 : vector<1x1x2xf32> to vector<32x16x2xf32>
    %24 = arith.mulf %19, %23 : vector<32x16x2xf32>
    %25 = arith.addf %18, %24 : vector<32x16x2xf32>
    %26 = vector.extract_strided_slice %4 {offsets = [1, 0, 0], sizes = [32, 16, 2], strides = [1, 1, 1]} : vector<34x18x2xf32> to vector<32x16x2xf32>
    %27 = vector.extract_strided_slice %0 {offsets = [0, 1, 0, 0], sizes = [1, 1, 1, 2], strides = [1, 1, 1, 1]} : vector<3x3x3x2xf32> to vector<1x1x1x2xf32>
    %28 = vector.shape_cast %27 : vector<1x1x1x2xf32> to vector<2xf32>
    %29 = vector.shape_cast %28 : vector<2xf32> to vector<1x1x2xf32>
    %30 = vector.broadcast %29 : vector<1x1x2xf32> to vector<32x16x2xf32>
    %31 = arith.mulf %26, %30 : vector<32x16x2xf32>
    %32 = arith.addf %25, %31 : vector<32x16x2xf32>
    %33 = vector.extract_strided_slice %4 {offsets = [1, 1, 0], sizes = [32, 16, 2], strides = [1, 1, 1]} : vector<34x18x2xf32> to vector<32x16x2xf32>
    %34 = vector.extract_strided_slice %0 {offsets = [0, 1, 1, 0], sizes = [1, 1, 1, 2], strides = [1, 1, 1, 1]} : vector<3x3x3x2xf32> to vector<1x1x1x2xf32>
    %35 = vector.shape_cast %34 : vector<1x1x1x2xf32> to vector<2xf32>
    %36 = vector.shape_cast %35 : vector<2xf32> to vector<1x1x2xf32>
    %37 = vector.broadcast %36 : vector<1x1x2xf32> to vector<32x16x2xf32>
    %38 = arith.mulf %33, %37 : vector<32x16x2xf32>
    %39 = arith.addf %32, %38 : vector<32x16x2xf32>
    %40 = vector.extract_strided_slice %4 {offsets = [1, 2, 0], sizes = [32, 16, 2], strides = [1, 1, 1]} : vector<34x18x2xf32> to vector<32x16x2xf32>
    %41 = vector.extract_strided_slice %0 {offsets = [0, 1, 2, 0], sizes = [1, 1, 1, 2], strides = [1, 1, 1, 1]} : vector<3x3x3x2xf32> to vector<1x1x1x2xf32>
    %42 = vector.shape_cast %41 : vector<1x1x1x2xf32> to vector<2xf32>
    %43 = vector.shape_cast %42 : vector<2xf32> to vector<1x1x2xf32>
    %44 = vector.broadcast %43 : vector<1x1x2xf32> to vector<32x16x2xf32>
    %45 = arith.mulf %40, %44 : vector<32x16x2xf32>
    %46 = arith.addf %39, %45 : vector<32x16x2xf32>
    %47 = vector.extract_strided_slice %4 {offsets = [2, 0, 0], sizes = [32, 16, 2], strides = [1, 1, 1]} : vector<34x18x2xf32> to vector<32x16x2xf32>
    %48 = vector.extract_strided_slice %0 {offsets = [0, 2, 0, 0], sizes = [1, 1, 1, 2], strides = [1, 1, 1, 1]} : vector<3x3x3x2xf32> to vector<1x1x1x2xf32>
    %49 = vector.shape_cast %48 : vector<1x1x1x2xf32> to vector<2xf32>
    %50 = vector.shape_cast %49 : vector<2xf32> to vector<1x1x2xf32>
    %51 = vector.broadcast %50 : vector<1x1x2xf32> to vector<32x16x2xf32>
    %52 = arith.mulf %47, %51 : vector<32x16x2xf32>
    %53 = arith.addf %46, %52 : vector<32x16x2xf32>
    %54 = vector.extract_strided_slice %4 {offsets = [2, 1, 0], sizes = [32, 16, 2], strides = [1, 1, 1]} : vector<34x18x2xf32> to vector<32x16x2xf32>
    %55 = vector.extract_strided_slice %0 {offsets = [0, 2, 1, 0], sizes = [1, 1, 1, 2], strides = [1, 1, 1, 1]} : vector<3x3x3x2xf32> to vector<1x1x1x2xf32>
    %56 = vector.shape_cast %55 : vector<1x1x1x2xf32> to vector<2xf32>
    %57 = vector.shape_cast %56 : vector<2xf32> to vector<1x1x2xf32>
    %58 = vector.broadcast %57 : vector<1x1x2xf32> to vector<32x16x2xf32>
    %59 = arith.mulf %54, %58 : vector<32x16x2xf32>
    %60 = arith.addf %53, %59 : vector<32x16x2xf32>
    %61 = vector.extract_strided_slice %4 {offsets = [2, 2, 0], sizes = [32, 16, 2], strides = [1, 1, 1]} : vector<34x18x2xf32> to vector<32x16x2xf32>
    %62 = vector.extract_strided_slice %0 {offsets = [0, 2, 2, 0], sizes = [1, 1, 1, 2], strides = [1, 1, 1, 1]} : vector<3x3x3x2xf32> to vector<1x1x1x2xf32>
    %63 = vector.shape_cast %62 : vector<1x1x1x2xf32> to vector<2xf32>
    %64 = vector.shape_cast %63 : vector<2xf32> to vector<1x1x2xf32>
    %65 = vector.broadcast %64 : vector<1x1x2xf32> to vector<32x16x2xf32>
    %66 = arith.mulf %61, %65 : vector<32x16x2xf32>
    %67 = arith.addf %60, %66 : vector<32x16x2xf32>
    %c0_8 = arith.constant 0 : index
    %c0_9 = arith.constant 0 : index
    %c0_10 = arith.constant 0 : index
    %c0_11 = arith.constant 0 : index
    %c0_12 = arith.constant 0 : index
    %68 = vector.load %arg3[%c0_8, %c0_9, %c0_10, %c0_11, %c0_12] : memref<1x1x34x18x2xbf16, #tpu.memory_space<vmem>>, vector<1x1x34x18x2xbf16>
    %69 = vector.shape_cast %68 : vector<1x1x34x18x2xbf16> to vector<34x18x2xbf16>
    %70 = arith.extf %69 : vector<34x18x2xbf16> to vector<34x18x2xf32>
    %71 = vector.extract_strided_slice %70 {offsets = [0, 0, 0], sizes = [32, 16, 2], strides = [1, 1, 1]} : vector<34x18x2xf32> to vector<32x16x2xf32>
    %72 = vector.extract_strided_slice %0 {offsets = [1, 0, 0, 0], sizes = [1, 1, 1, 2], strides = [1, 1, 1, 1]} : vector<3x3x3x2xf32> to vector<1x1x1x2xf32>
    %73 = vector.shape_cast %72 : vector<1x1x1x2xf32> to vector<2xf32>
    %74 = vector.shape_cast %73 : vector<2xf32> to vector<1x1x2xf32>
    %75 = vector.broadcast %74 : vector<1x1x2xf32> to vector<32x16x2xf32>
    %76 = arith.mulf %71, %75 : vector<32x16x2xf32>
    %77 = arith.addf %67, %76 : vector<32x16x2xf32>
    %78 = vector.extract_strided_slice %70 {offsets = [0, 1, 0], sizes = [32, 16, 2], strides = [1, 1, 1]} : vector<34x18x2xf32> to vector<32x16x2xf32>
    %79 = vector.extract_strided_slice %0 {offsets = [1, 0, 1, 0], sizes = [1, 1, 1, 2], strides = [1, 1, 1, 1]} : vector<3x3x3x2xf32> to vector<1x1x1x2xf32>
    %80 = vector.shape_cast %79 : vector<1x1x1x2xf32> to vector<2xf32>
    %81 = vector.shape_cast %80 : vector<2xf32> to vector<1x1x2xf32>
    %82 = vector.broadcast %81 : vector<1x1x2xf32> to vector<32x16x2xf32>
    %83 = arith.mulf %78, %82 : vector<32x16x2xf32>
    %84 = arith.addf %77, %83 : vector<32x16x2xf32>
    %85 = vector.extract_strided_slice %70 {offsets = [0, 2, 0], sizes = [32, 16, 2], strides = [1, 1, 1]} : vector<34x18x2xf32> to vector<32x16x2xf32>
    %86 = vector.extract_strided_slice %0 {offsets = [1, 0, 2, 0], sizes = [1, 1, 1, 2], strides = [1, 1, 1, 1]} : vector<3x3x3x2xf32> to vector<1x1x1x2xf32>
    %87 = vector.shape_cast %86 : vector<1x1x1x2xf32> to vector<2xf32>
    %88 = vector.shape_cast %87 : vector<2xf32> to vector<1x1x2xf32>
    %89 = vector.broadcast %88 : vector<1x1x2xf32> to vector<32x16x2xf32>
    %90 = arith.mulf %85, %89 : vector<32x16x2xf32>
    %91 = arith.addf %84, %90 : vector<32x16x2xf32>
    %92 = vector.extract_strided_slice %70 {offsets = [1, 0, 0], sizes = [32, 16, 2], strides = [1, 1, 1]} : vector<34x18x2xf32> to vector<32x16x2xf32>
    %93 = vector.extract_strided_slice %0 {offsets = [1, 1, 0, 0], sizes = [1, 1, 1, 2], strides = [1, 1, 1, 1]} : vector<3x3x3x2xf32> to vector<1x1x1x2xf32>
    %94 = vector.shape_cast %93 : vector<1x1x1x2xf32> to vector<2xf32>
    %95 = vector.shape_cast %94 : vector<2xf32> to vector<1x1x2xf32>
    %96 = vector.broadcast %95 : vector<1x1x2xf32> to vector<32x16x2xf32>
    %97 = arith.mulf %92, %96 : vector<32x16x2xf32>
    %98 = arith.addf %91, %97 : vector<32x16x2xf32>
    %99 = vector.extract_strided_slice %70 {offsets = [1, 1, 0], sizes = [32, 16, 2], strides = [1, 1, 1]} : vector<34x18x2xf32> to vector<32x16x2xf32>
    %100 = vector.extract_strided_slice %0 {offsets = [1, 1, 1, 0], sizes = [1, 1, 1, 2], strides = [1, 1, 1, 1]} : vector<3x3x3x2xf32> to vector<1x1x1x2xf32>
    %101 = vector.shape_cast %100 : vector<1x1x1x2xf32> to vector<2xf32>
    %102 = vector.shape_cast %101 : vector<2xf32> to vector<1x1x2xf32>
    %103 = vector.broadcast %102 : vector<1x1x2xf32> to vector<32x16x2xf32>
    %104 = arith.mulf %99, %103 : vector<32x16x2xf32>
    %105 = arith.addf %98, %104 : vector<32x16x2xf32>
    %106 = vector.extract_strided_slice %70 {offsets = [1, 2, 0], sizes = [32, 16, 2], strides = [1, 1, 1]} : vector<34x18x2xf32> to vector<32x16x2xf32>
    %107 = vector.extract_strided_slice %0 {offsets = [1, 1, 2, 0], sizes = [1, 1, 1, 2], strides = [1, 1, 1, 1]} : vector<3x3x3x2xf32> to vector<1x1x1x2xf32>
    %108 = vector.shape_cast %107 : vector<1x1x1x2xf32> to vector<2xf32>
    %109 = vector.shape_cast %108 : vector<2xf32> to vector<1x1x2xf32>
    %110 = vector.broadcast %109 : vector<1x1x2xf32> to vector<32x16x2xf32>
    %111 = arith.mulf %106, %110 : vector<32x16x2xf32>
    %112 = arith.addf %105, %111 : vector<32x16x2xf32>
    %113 = vector.extract_strided_slice %70 {offsets = [2, 0, 0], sizes = [32, 16, 2], strides = [1, 1, 1]} : vector<34x18x2xf32> to vector<32x16x2xf32>
    %114 = vector.extract_strided_slice %0 {offsets = [1, 2, 0, 0], sizes = [1, 1, 1, 2], strides = [1, 1, 1, 1]} : vector<3x3x3x2xf32> to vector<1x1x1x2xf32>
    %115 = vector.shape_cast %114 : vector<1x1x1x2xf32> to vector<2xf32>
    %116 = vector.shape_cast %115 : vector<2xf32> to vector<1x1x2xf32>
    %117 = vector.broadcast %116 : vector<1x1x2xf32> to vector<32x16x2xf32>
    %118 = arith.mulf %113, %117 : vector<32x16x2xf32>
    %119 = arith.addf %112, %118 : vector<32x16x2xf32>
    %120 = vector.extract_strided_slice %70 {offsets = [2, 1, 0], sizes = [32, 16, 2], strides = [1, 1, 1]} : vector<34x18x2xf32> to vector<32x16x2xf32>
    %121 = vector.extract_strided_slice %0 {offsets = [1, 2, 1, 0], sizes = [1, 1, 1, 2], strides = [1, 1, 1, 1]} : vector<3x3x3x2xf32> to vector<1x1x1x2xf32>
    %122 = vector.shape_cast %121 : vector<1x1x1x2xf32> to vector<2xf32>
    %123 = vector.shape_cast %122 : vector<2xf32> to vector<1x1x2xf32>
    %124 = vector.broadcast %123 : vector<1x1x2xf32> to vector<32x16x2xf32>
    %125 = arith.mulf %120, %124 : vector<32x16x2xf32>
    %126 = arith.addf %119, %125 : vector<32x16x2xf32>
    %127 = vector.extract_strided_slice %70 {offsets = [2, 2, 0], sizes = [32, 16, 2], strides = [1, 1, 1]} : vector<34x18x2xf32> to vector<32x16x2xf32>
    %128 = vector.extract_strided_slice %0 {offsets = [1, 2, 2, 0], sizes = [1, 1, 1, 2], strides = [1, 1, 1, 1]} : vector<3x3x3x2xf32> to vector<1x1x1x2xf32>
    %129 = vector.shape_cast %128 : vector<1x1x1x2xf32> to vector<2xf32>
    %130 = vector.shape_cast %129 : vector<2xf32> to vector<1x1x2xf32>
    %131 = vector.broadcast %130 : vector<1x1x2xf32> to vector<32x16x2xf32>
    %132 = arith.mulf %127, %131 : vector<32x16x2xf32>
    %133 = arith.addf %126, %132 : vector<32x16x2xf32>
    %c0_13 = arith.constant 0 : index
    %c0_14 = arith.constant 0 : index
    %c0_15 = arith.constant 0 : index
    %c0_16 = arith.constant 0 : index
    %c0_17 = arith.constant 0 : index
    %134 = vector.load %arg4[%c0_13, %c0_14, %c0_15, %c0_16, %c0_17] : memref<1x1x34x18x2xbf16, #tpu.memory_space<vmem>>, vector<1x1x34x18x2xbf16>
    %135 = vector.shape_cast %134 : vector<1x1x34x18x2xbf16> to vector<34x18x2xbf16>
    %136 = arith.extf %135 : vector<34x18x2xbf16> to vector<34x18x2xf32>
    %137 = vector.extract_strided_slice %136 {offsets = [0, 0, 0], sizes = [32, 16, 2], strides = [1, 1, 1]} : vector<34x18x2xf32> to vector<32x16x2xf32>
    %138 = vector.extract_strided_slice %0 {offsets = [2, 0, 0, 0], sizes = [1, 1, 1, 2], strides = [1, 1, 1, 1]} : vector<3x3x3x2xf32> to vector<1x1x1x2xf32>
    %139 = vector.shape_cast %138 : vector<1x1x1x2xf32> to vector<2xf32>
    %140 = vector.shape_cast %139 : vector<2xf32> to vector<1x1x2xf32>
    %141 = vector.broadcast %140 : vector<1x1x2xf32> to vector<32x16x2xf32>
    %142 = arith.mulf %137, %141 : vector<32x16x2xf32>
    %143 = arith.addf %133, %142 : vector<32x16x2xf32>
    %144 = vector.extract_strided_slice %136 {offsets = [0, 1, 0], sizes = [32, 16, 2], strides = [1, 1, 1]} : vector<34x18x2xf32> to vector<32x16x2xf32>
    %145 = vector.extract_strided_slice %0 {offsets = [2, 0, 1, 0], sizes = [1, 1, 1, 2], strides = [1, 1, 1, 1]} : vector<3x3x3x2xf32> to vector<1x1x1x2xf32>
    %146 = vector.shape_cast %145 : vector<1x1x1x2xf32> to vector<2xf32>
    %147 = vector.shape_cast %146 : vector<2xf32> to vector<1x1x2xf32>
    %148 = vector.broadcast %147 : vector<1x1x2xf32> to vector<32x16x2xf32>
    %149 = arith.mulf %144, %148 : vector<32x16x2xf32>
    %150 = arith.addf %143, %149 : vector<32x16x2xf32>
    %151 = vector.extract_strided_slice %136 {offsets = [0, 2, 0], sizes = [32, 16, 2], strides = [1, 1, 1]} : vector<34x18x2xf32> to vector<32x16x2xf32>
    %152 = vector.extract_strided_slice %0 {offsets = [2, 0, 2, 0], sizes = [1, 1, 1, 2], strides = [1, 1, 1, 1]} : vector<3x3x3x2xf32> to vector<1x1x1x2xf32>
    %153 = vector.shape_cast %152 : vector<1x1x1x2xf32> to vector<2xf32>
    %154 = vector.shape_cast %153 : vector<2xf32> to vector<1x1x2xf32>
    %155 = vector.broadcast %154 : vector<1x1x2xf32> to vector<32x16x2xf32>
    %156 = arith.mulf %151, %155 : vector<32x16x2xf32>
    %157 = arith.addf %150, %156 : vector<32x16x2xf32>
    %158 = vector.extract_strided_slice %136 {offsets = [1, 0, 0], sizes = [32, 16, 2], strides = [1, 1, 1]} : vector<34x18x2xf32> to vector<32x16x2xf32>
    %159 = vector.extract_strided_slice %0 {offsets = [2, 1, 0, 0], sizes = [1, 1, 1, 2], strides = [1, 1, 1, 1]} : vector<3x3x3x2xf32> to vector<1x1x1x2xf32>
    %160 = vector.shape_cast %159 : vector<1x1x1x2xf32> to vector<2xf32>
    %161 = vector.shape_cast %160 : vector<2xf32> to vector<1x1x2xf32>
    %162 = vector.broadcast %161 : vector<1x1x2xf32> to vector<32x16x2xf32>
    %163 = arith.mulf %158, %162 : vector<32x16x2xf32>
    %164 = arith.addf %157, %163 : vector<32x16x2xf32>
    %165 = vector.extract_strided_slice %136 {offsets = [1, 1, 0], sizes = [32, 16, 2], strides = [1, 1, 1]} : vector<34x18x2xf32> to vector<32x16x2xf32>
    %166 = vector.extract_strided_slice %0 {offsets = [2, 1, 1, 0], sizes = [1, 1, 1, 2], strides = [1, 1, 1, 1]} : vector<3x3x3x2xf32> to vector<1x1x1x2xf32>
    %167 = vector.shape_cast %166 : vector<1x1x1x2xf32> to vector<2xf32>
    %168 = vector.shape_cast %167 : vector<2xf32> to vector<1x1x2xf32>
    %169 = vector.broadcast %168 : vector<1x1x2xf32> to vector<32x16x2xf32>
    %170 = arith.mulf %165, %169 : vector<32x16x2xf32>
    %171 = arith.addf %164, %170 : vector<32x16x2xf32>
    %172 = vector.extract_strided_slice %136 {offsets = [1, 2, 0], sizes = [32, 16, 2], strides = [1, 1, 1]} : vector<34x18x2xf32> to vector<32x16x2xf32>
    %173 = vector.extract_strided_slice %0 {offsets = [2, 1, 2, 0], sizes = [1, 1, 1, 2], strides = [1, 1, 1, 1]} : vector<3x3x3x2xf32> to vector<1x1x1x2xf32>
    %174 = vector.shape_cast %173 : vector<1x1x1x2xf32> to vector<2xf32>
    %175 = vector.shape_cast %174 : vector<2xf32> to vector<1x1x2xf32>
    %176 = vector.broadcast %175 : vector<1x1x2xf32> to vector<32x16x2xf32>
    %177 = arith.mulf %172, %176 : vector<32x16x2xf32>
    %178 = arith.addf %171, %177 : vector<32x16x2xf32>
    %179 = vector.extract_strided_slice %136 {offsets = [2, 0, 0], sizes = [32, 16, 2], strides = [1, 1, 1]} : vector<34x18x2xf32> to vector<32x16x2xf32>
    %180 = vector.extract_strided_slice %0 {offsets = [2, 2, 0, 0], sizes = [1, 1, 1, 2], strides = [1, 1, 1, 1]} : vector<3x3x3x2xf32> to vector<1x1x1x2xf32>
    %181 = vector.shape_cast %180 : vector<1x1x1x2xf32> to vector<2xf32>
    %182 = vector.shape_cast %181 : vector<2xf32> to vector<1x1x2xf32>
    %183 = vector.broadcast %182 : vector<1x1x2xf32> to vector<32x16x2xf32>
    %184 = arith.mulf %179, %183 : vector<32x16x2xf32>
    %185 = arith.addf %178, %184 : vector<32x16x2xf32>
    %186 = vector.extract_strided_slice %136 {offsets = [2, 1, 0], sizes = [32, 16, 2], strides = [1, 1, 1]} : vector<34x18x2xf32> to vector<32x16x2xf32>
    %187 = vector.extract_strided_slice %0 {offsets = [2, 2, 1, 0], sizes = [1, 1, 1, 2], strides = [1, 1, 1, 1]} : vector<3x3x3x2xf32> to vector<1x1x1x2xf32>
    %188 = vector.shape_cast %187 : vector<1x1x1x2xf32> to vector<2xf32>
    %189 = vector.shape_cast %188 : vector<2xf32> to vector<1x1x2xf32>
    %190 = vector.broadcast %189 : vector<1x1x2xf32> to vector<32x16x2xf32>
    %191 = arith.mulf %186, %190 : vector<32x16x2xf32>
    %192 = arith.addf %185, %191 : vector<32x16x2xf32>
    %193 = vector.extract_strided_slice %136 {offsets = [2, 2, 0], sizes = [32, 16, 2], strides = [1, 1, 1]} : vector<34x18x2xf32> to vector<32x16x2xf32>
    %194 = vector.extract_strided_slice %0 {offsets = [2, 2, 2, 0], sizes = [1, 1, 1, 2], strides = [1, 1, 1, 1]} : vector<3x3x3x2xf32> to vector<1x1x1x2xf32>
    %195 = vector.shape_cast %194 : vector<1x1x1x2xf32> to vector<2xf32>
    %196 = vector.shape_cast %195 : vector<2xf32> to vector<1x1x2xf32>
    %197 = vector.broadcast %196 : vector<1x1x2xf32> to vector<32x16x2xf32>
    %198 = arith.mulf %193, %197 : vector<32x16x2xf32>
    %199 = arith.addf %192, %198 : vector<32x16x2xf32>
    %200 = arith.truncf %199 : vector<32x16x2xf32> to vector<32x16x2xbf16>
    %c0_18 = arith.constant 0 : index
    %c0_19 = arith.constant 0 : index
    %c0_20 = arith.constant 0 : index
    %c0_21 = arith.constant 0 : index
    %c0_22 = arith.constant 0 : index
    %201 = vector.load %arg6[%c0_18, %c0_19, %c0_20, %c0_21, %c0_22] : memref<1x1x32x16x2xbf16, #tpu.memory_space<vmem>>, vector<1x1x32x16x2xbf16>
    %202 = vector.shape_cast %201 : vector<1x1x32x16x2xbf16> to vector<32x16x2xbf16>
    %203 = vector.shape_cast %200 : vector<32x16x2xbf16> to vector<1x1x32x16x2xbf16>
    tpu.vector_store %arg6[%c0_18, %c0_19, %c0_20, %c0_21, %c0_22], %203 {strides = array<i32>} : memref<1x1x32x16x2xbf16, #tpu.memory_space<vmem>>, vector<1x1x32x16x2xbf16>,
    return
  }
  func.func @transform_0(%arg0: i32, %arg1: i32) -> (i32, i32, i32, i32, i32) {
    %c1_i32 = arith.constant 1 : i32
    %0 = arith.muli %c1_i32, %arg1 : i32
    %c0_i32 = arith.constant 0 : i32
    %1 = arith.addi %0, %c0_i32 : i32
    %c0_i32_0 = arith.constant 0 : i32
    %c0_i32_1 = arith.constant 0 : i32
    %c0_i32_2 = arith.constant 0 : i32
    %c0_i32_3 = arith.constant 0 : i32
    return %arg0, %1, %c0_i32_0, %c0_i32_1, %c0_i32_2 : i32, i32, i32, i32, i32
  }
  func.func @transform_1(%arg0: i32, %arg1: i32) -> (i32, i32, i32, i32, i32) {
    %c1_i32 = arith.constant 1 : i32
    %0 = arith.muli %c1_i32, %arg1 : i32
    %c1_i32_0 = arith.constant 1 : i32
    %1 = arith.addi %0, %c1_i32_0 : i32
    %c0_i32 = arith.constant 0 : i32
    %c0_i32_1 = arith.constant 0 : i32
    %c0_i32_2 = arith.constant 0 : i32
    %c0_i32_3 = arith.constant 0 : i32
    return %arg0, %1, %c0_i32, %c0_i32_1, %c0_i32_2 : i32, i32, i32, i32, i32
  }
  func.func @transform_2(%arg0: i32, %arg1: i32) -> (i32, i32, i32, i32, i32) {
    %c1_i32 = arith.constant 1 : i32
    %0 = arith.muli %c1_i32, %arg1 : i32
    %c2_i32 = arith.constant 2 : i32
    %1 = arith.addi %0, %c2_i32 : i32
    %c0_i32 = arith.constant 0 : i32
    %c0_i32_0 = arith.constant 0 : i32
    %c0_i32_1 = arith.constant 0 : i32
    %c0_i32_2 = arith.constant 0 : i32
    return %arg0, %1, %c0_i32, %c0_i32_0, %c0_i32_1 : i32, i32, i32, i32, i32
  }
  func.func @transform_3(%arg0: i32, %arg1: i32) -> (i32, i32, i32, i32) {
    %c0_i32 = arith.constant 0 : i32
    %c0_i32_0 = arith.constant 0 : i32
    %c0_i32_1 = arith.constant 0 : i32
    %c0_i32_2 = arith.constant 0 : i32
    %c0_i32_3 = arith.constant 0 : i32
    return %c0_i32, %c0_i32_0, %c0_i32_1, %c0_i32_2 : i32, i32, i32, i32
  }
  func.func @transform_4(%arg0: i32, %arg1: i32) -> (i32, i32, i32, i32, i32) {
    %c0_i32 = arith.constant 0 : i32
    %c0_i32_0 = arith.constant 0 : i32
    %c0_i32_1 = arith.constant 0 : i32
    %c0_i32_2 = arith.constant 0 : i32
    return %arg0, %arg1, %c0_i32, %c0_i32_0, %c0_i32_1 : i32, i32, i32, i32, i32
  }
}

</mosaic_0001>

<llo_original>
// kernel: separable_conv3d.3
$region0: #{separable_conv3d.3}
  #allocation0 [shape = 'u32[]', space=smem, size = 0x4, offset = 0x4, fixed_abs, tag = 'smem constant byte address 0x4 - core index']
  #allocation1 [shape = 'u32[144,128]{1,0:T(1,128)}', space=vmem, size = 0x12000, scoped, tag = 'internal scratch']
  #allocation2 [shape = 'f32[256,32]{1,0:T(8,128)}', space=vmem, size = 0x20000, scoped, tag = 'scratch operand']
  %s0 = inlined_call_operand.vmem [shape: bf16[16384,2], index: 0, kind: input, shape index: {}]
  %s1 = inlined_call_operand.vmem [shape: bf16[2,32], index: 1, kind: input, shape index: {}]
  %s2 = inlined_call_operand.hbm [shape: bf16[16384,32], index: 2, kind: output, shape index: {}]
  %s3 = sld [smem:[#allocation0]]
  $region49: #{separable_conv3d.3} parent=0
    _
  %s5 = ssub.s32 1, %s3
  %s6 = scalar_select 0, %s5, %s3
  $region1: #{separable_conv3d.3} parent=0
    #allocation3 [shape = 'u8[131072]{0}', space=vmem, size = 0x20000, scoped, tag = 'output window, operand 0']
    #allocation4 [shape = 's32[2]{0}', space=sflag, size = 0x8, scoped, tag = 'scoped memory for separable_conv3d.3']
    %7 = vsyncpa [#allocation4], 0
    %s8 = scalar_lea.sflag [#allocation4], 1
    %9 = vsyncpa %s8, 0
    loop: start=0, step=1, limit=66
    $region2: #{separable_conv3d.3} parent=1 // loop_pre_header
      _
    $region3: #{separable_conv3d.3} parent=1 // loop_header
      %s11 = sphi 0, %s15
      %p12 = scmp.ge.s32.totalorder %s11, 66
      %s18 = sphi 0, %s37
      %s19 = sphi 0, %s33
      %s20 = sphi 0, %s29
      %s21 = sphi 0, %s18
      %s22 = sphi 0, %s19
      %s23 = sphi 0, %s20
      %s24 = sphi 0, %s21
      %s25 = sphi 0, %s22
      %s26 = sphi 0, %s23
      %s42 = sphi 0, %s44
      %s45 = sphi 0, %s42
      %s46 = sphi 0, %s45
      %s62 = sphi 0, %s46
      %s70 = sphi 0, %s72
      %s73 = sphi 0, %s70
      %s74 = sphi 0, %s73
      %s90 = sphi 0, %s74
      %s98 = sphi 0, %s100
      %s101 = sphi 0, %s98
      %s102 = sphi 0, %s101
      %s118 = sphi 0, %s102
    $region4: #{separable_conv3d.3} parent=1 // loop_header_branch
      %14 = sbr.rel (%p12) target = $region8
    $region5: #{separable_conv3d.3} parent=1 // loop_body
      %s16 = ssub.s32 %s11, 1
      %s17 = ssub.s32 %s11, 2
      %s27 = sadd.s32 1, %s20
      %p28 = scmp.ge.s32.totalorder %s27, 1
      %s29 = scalar_select %p28, 0, %s27
      %s30 = sadd.s32 1, %s19
      %s31 = scalar_select %p28, %s30, %s19
      %p32 = scmp.ge.s32.totalorder %s31, 1
      %s33 = scalar_select %p32, 0, %s31
      %s34 = sadd.s32 1, %s18
      %s35 = scalar_select %p32, %s34, %s18
      %p36 = scmp.ge.s32.totalorder %s35, 64
      %s37 = scalar_select %p36, 0, %s35
      %s38 = ssub.s32 %s18, %s37
      %s39 = ssub.s32 %s20, %s29
      %s40 = sor.u32 %s38, %s39
      %p41 = scmp.eq.s32.totalorder %s40, 0
      %s43 = sadd.s32 %s42, 1
      %s44 = scalar_select %p41, %s42, %s43
      %p47 = pneg %p41
      %p48 = scmp.eq.s32.totalorder %s11, 63
      %p49 = por %p47, %p48
      %p50 = scmp.ne.s32.totalorder %s42, %s45
      %p51 = scmp.eq.s32.totalorder %s11, 0
      %p52 = por %p50, %p51
      %p53 = scmp.ne.s32.totalorder %s42, %s45
      %p54 = scmp.eq.s32.totalorder %s16, 63
      %p55 = por %p53, %p54
      %p56 = scmp.ne.s32.totalorder %s45, %s46
      %p57 = scmp.eq.s32.totalorder %s16, 0
      %p58 = por %p56, %p57
      %p59 = scmp.ne.s32.totalorder %s45, %s46
      %p60 = scmp.eq.s32.totalorder %s17, 63
      %p61 = por %p59, %p60
      %p63 = scmp.ne.s32.totalorder %s46, %s62
      %p64 = scmp.eq.s32.totalorder %s17, 0
      %p65 = por %p63, %p64
      %s66 = ssub.s32 %s20, %s29
      %s67 = ssub.s32 %s19, %s33
      %s68 = sor.u32 %s66, %s67
      %p69 = scmp.eq.s32.totalorder %s68, 0
      %s71 = sadd.s32 %s70, 1
      %s72 = scalar_select %p69, %s70, %s71
      %p75 = pneg %p69
      %p76 = scmp.eq.s32.totalorder %s11, 63
      %p77 = por %p75, %p76
      %p78 = scmp.ne.s32.totalorder %s70, %s73
      %p79 = scmp.eq.s32.totalorder %s11, 0
      %p80 = por %p78, %p79
      %p81 = scmp.ne.s32.totalorder %s70, %s73
      %p82 = scmp.eq.s32.totalorder %s16, 63
      %p83 = por %p81, %p82
      %p84 = scmp.ne.s32.totalorder %s73, %s74
      %p85 = scmp.eq.s32.totalorder %s16, 0
      %p86 = por %p84, %p85
      %p87 = scmp.ne.s32.totalorder %s73, %s74
      %p88 = scmp.eq.s32.totalorder %s17, 63
      %p89 = por %p87, %p88
      %p91 = scmp.ne.s32.totalorder %s74, %s90
      %p92 = scmp.eq.s32.totalorder %s17, 0
      %p93 = por %p91, %p92
      %s94 = ssub.s32 %s18, %s37
      %s95 = ssub.s32 %s19, %s33
      %s96 = sor.u32 %s94, %s95
      %p97 = scmp.eq.s32.totalorder %s96, 0
      %s99 = sadd.s32 %s98, 1
      %s100 = scalar_select %p97, %s98, %s99
      %p103 = pneg %p97
      %p104 = scmp.eq.s32.totalorder %s11, 63
      %p105 = por %p103, %p104
      %p106 = scmp.ne.s32.totalorder %s98, %s101
      %p107 = scmp.eq.s32.totalorder %s11, 0
      %p108 = por %p106, %p107
      %p109 = scmp.ne.s32.totalorder %s98, %s101
      %p110 = scmp.eq.s32.totalorder %s16, 63
      %p111 = por %p109, %p110
      %p112 = scmp.ne.s32.totalorder %s101, %s102
      %p113 = scmp.eq.s32.totalorder %s16, 0
      %p114 = por %p112, %p113
      %p115 = scmp.ne.s32.totalorder %s101, %s102
      %p116 = scmp.eq.s32.totalorder %s17, 63
      %p117 = por %p115, %p116
      %p119 = scmp.ne.s32.totalorder %s102, %s118
      %p120 = scmp.eq.s32.totalorder %s17, 0
      %p121 = por %p119, %p120
      %p122 = scmp.le.s32.totalorder 1, %s11
      %p123 = scmp.lt.s32.totalorder %s11, 65
      %p124 = pnand %p122, %p123
      %p125 = pneg %p124
      // Predicated region
      $region9: #{separable_conv3d.3} parent=5 // pred_check
        _
      $region10: #{separable_conv3d.3} parent=5 // pred_check_branch
        %127 = sbr.rel (%p124) target = $region12
      $region11: #{separable_conv3d.3} parent=5 // pred_region
        %s128 = ssub.s32 %s11, 1
        // Predicated region
        $region13: #{separable_conv3d.3} parent=11 // pred_check
          %p129 = pneg %p86
        $region14: #{separable_conv3d.3} parent=11 // pred_check_branch
          %131 = sbr.rel (%p129) target = $region16
        $region15: #{separable_conv3d.3} parent=11 // pred_region
          %p132 = scmp.lt.s32.totalorder %s23, 0
          %s133 = scalar_select %p132, %s23, 0
          %p134 = scmp.lt.s32.totalorder %s22, 0
          %s135 = scalar_select %p134, %s22, 0
          %s136 = sadd.s32 %s135, %s133
          %s137 = scalar_lea.vmem %s1, %s136
        $region16: #{separable_conv3d.3} parent=11 // pred_fallthru
          _
      $region12: #{separable_conv3d.3} parent=5 // pred_fallthru
        _
      %p138 = scmp.lt.s32.totalorder %s11, 64
      // Predicated region
      $region17: #{separable_conv3d.3} parent=5 // pred_check
        %p139 = pneg %p138
      $region18: #{separable_conv3d.3} parent=5 // pred_check_branch
        %141 = sbr.rel (%p139) target = $region20
      $region19: #{separable_conv3d.3} parent=5 // pred_region
        // Predicated region
        $region21: #{separable_conv3d.3} parent=19 // pred_check
          %p142 = pneg %p52
        $region22: #{separable_conv3d.3} parent=19 // pred_check_branch
          %144 = sbr.rel (%p142) target = $region24
        $region23: #{separable_conv3d.3} parent=19 // pred_region
          %s145 = smul.u32 32, %s18
          %p146 = scmp.lt.s32.totalorder %s145, 2047
          %s147 = scalar_select %p146, %s145, 2047
          %p148 = scmp.lt.s32.totalorder %s20, 0
          %s149 = scalar_select %p148, %s20, 0
          %s150 = sadd.s32 %s149, %s147
          %s151 = smul.addr %s150, 4
          %s152 = scalar_lea.vmem %s0, %s151
          %s153 = smul.u32 32, %s18
        $region24: #{separable_conv3d.3} parent=19 // pred_fallthru
          _
      $region20: #{separable_conv3d.3} parent=5 // pred_fallthru
        _
      %p154 = scmp.le.s32.totalorder 1, %s11
      %p155 = scmp.lt.s32.totalorder %s11, 65
      %p156 = pnand %p154, %p155
      %p157 = pneg %p156
      // Predicated region
      $region25: #{separable_conv3d.3} parent=5 // pred_check
        _
      $region26: #{separable_conv3d.3} parent=5 // pred_check_branch
        %159 = sbr.rel (%p156) target = $region28
      $region27: #{separable_conv3d.3} parent=5 // pred_region
        %s160 = ssub.s32 %s11, 1
        %s161 = smul.u32 32, %s21
        %p162 = scmp.lt.s32.totalorder %s161, 2047
        %s163 = scalar_select %p162, %s161, 2047
        %p164 = scmp.lt.s32.totalorder %s23, 0
        %s165 = scalar_select %p164, %s23, 0
        %s166 = sadd.s32 %s165, %s163
        %s167 = smul.addr %s166, 4
        %s168 = scalar_lea.vmem %s0, %s167
        %p169 = pneg %p58
        %p170 = pneg %p55
        %p171 = scmp.lt.s32.totalorder %s23, 0
        %s172 = scalar_select %p171, %s23, 0
        %p173 = scmp.lt.s32.totalorder %s22, 0
        %s174 = scalar_select %p173, %s22, 0
        %s175 = sadd.s32 %s174, %s172
        %s176 = scalar_lea.vmem %s1, %s175
        %p177 = pneg %p86
        %p178 = pneg %p83
        %p179 = pneg %p114
        %p180 = pneg %p111
        %s181 = sand.u32 %s101, 1
        %s182 = scalar_lea.sflag [#allocation4], %s181
        %s183 = sand.u32 %s101, 1
        %s184 = smul.addr %s183, 128
        %s185 = scalar_lea.vmem [#allocation3], %s184
        %s186 = smul.u32 32, %s21
        %p187 = scmp.lt.s32.totalorder %s186, 2047
        %s188 = scalar_select %p187, %s186, 2047
        %p189 = scmp.lt.s32.totalorder %s23, 0
        %s190 = scalar_select %p189, %s23, 0
        %s191 = sadd.s32 %s190, %s188
        %s192 = smul.addr %s191, 4
        %s193 = scalar_lea.vmem %s0, %s192
        %s194 = smul.u32 32, %s21
        %p195 = scmp.lt.s32.totalorder %s23, 0
        %s196 = scalar_select %p195, %s23, 0
        %p197 = scmp.lt.s32.totalorder %s22, 0
        %s198 = scalar_select %p197, %s22, 0
        %s199 = sadd.s32 %s198, %s196
        %s200 = scalar_lea.vmem %s1, %s199
        %s201 = smul.u32 32, %s21
        %p203 = scmp.eq.s32.totalorder %s23, 0
        // Predicated region
        $region29: #{separable_conv3d.3} parent=27 // pred_check
          %p204 = pneg %p203
        $region30: #{separable_conv3d.3} parent=27 // pred_check_branch
          %206 = sbr.rel (%p204) target = $region32
        $region31: #{separable_conv3d.3} parent=27 // pred_region
          %vm207 = vcmask 261120
          %208 = vst.msk [vmem:[#allocation2] sm:$0xff] %vm207, 0.0
          %209 = vst.msk [vmem:[#allocation2 + $0x8] sm:$0xff] %vm207, 0.0
          %210 = vst.msk [vmem:[#allocation2 + $0x10] sm:$0xff] %vm207, 0.0
          %211 = vst.msk [vmem:[#allocation2 + $0x18] sm:$0xff] %vm207, 0.0
          %212 = vst.msk [vmem:[#allocation2 + $0x20] sm:$0xff] %vm207, 0.0
          %213 = vst.msk [vmem:[#allocation2 + $0x28] sm:$0xff] %vm207, 0.0
          %214 = vst.msk [vmem:[#allocation2 + $0x30] sm:$0xff] %vm207, 0.0
          %215 = vst.msk [vmem:[#allocation2 + $0x38] sm:$0xff] %vm207, 0.0
          %216 = vst.msk [vmem:[#allocation2 + $0x40] sm:$0xff] %vm207, 0.0
          %217 = vst.msk [vmem:[#allocation2 + $0x48] sm:$0xff] %vm207, 0.0
          %218 = vst.msk [vmem:[#allocation2 + $0x50] sm:$0xff] %vm207, 0.0
          %219 = vst.msk [vmem:[#allocation2 + $0x58] sm:$0xff] %vm207, 0.0
          %220 = vst.msk [vmem:[#allocation2 + $0x60] sm:$0xff] %vm207, 0.0
          %221 = vst.msk [vmem:[#allocation2 + $0x68] sm:$0xff] %vm207, 0.0
          %222 = vst.msk [vmem:[#allocation2 + $0x70] sm:$0xff] %vm207, 0.0
          %223 = vst.msk [vmem:[#allocation2 + $0x78] sm:$0xff] %vm207, 0.0
          %224 = vst.msk [vmem:[#allocation2 + $0x80] sm:$0xff] %vm207, 0.0
          %225 = vst.msk [vmem:[#allocation2 + $0x88] sm:$0xff] %vm207, 0.0
          %226 = vst.msk [vmem:[#allocation2 + $0x90] sm:$0xff] %vm207, 0.0
          %227 = vst.msk [vmem:[#allocation2 + $0x98] sm:$0xff] %vm207, 0.0
          %228 = vst.msk [vmem:[#allocation2 + $0xa0] sm:$0xff] %vm207, 0.0
          %229 = vst.msk [vmem:[#allocation2 + $0xa8] sm:$0xff] %vm207, 0.0
          %230 = vst.msk [vmem:[#allocation2 + $0xb0] sm:$0xff] %vm207, 0.0
          %231 = vst.msk [vmem:[#allocation2 + $0xb8] sm:$0xff] %vm207, 0.0
          %232 = vst.msk [vmem:[#allocation2 + $0xc0] sm:$0xff] %vm207, 0.0
          %233 = vst.msk [vmem:[#allocation2 + $0xc8] sm:$0xff] %vm207, 0.0
          %234 = vst.msk [vmem:[#allocation2 + $0xd0] sm:$0xff] %vm207, 0.0
          %235 = vst.msk [vmem:[#allocation2 + $0xd8] sm:$0xff] %vm207, 0.0
          %236 = vst.msk [vmem:[#allocation2 + $0xe0] sm:$0xff] %vm207, 0.0
          %237 = vst.msk [vmem:[#allocation2 + $0xe8] sm:$0xff] %vm207, 0.0
          %238 = vst.msk [vmem:[#allocation2 + $0xf0] sm:$0xff] %vm207, 0.0
          %239 = vst.msk [vmem:[#allocation2 + $0xf8] sm:$0xff] %vm207, 0.0
        $region32: #{separable_conv3d.3} parent=27 // pred_fallthru
          _
        %v240 = vld [vmem:[%s193] sm:$0xf]
        %v241 = vld [vmem:[%s193 + $0x4] sm:$0xf]
        %v242 = vld [vmem:[%s193 + $0x8] sm:$0xf]
        %v243 = vld [vmem:[%s193 + $0xc] sm:$0xf]
        %v244 = vld [vmem:[%s193 + $0x10] sm:$0xf]
        %v245 = vld [vmem:[%s193 + $0x14] sm:$0xf]
        %v246 = vld [vmem:[%s193 + $0x18] sm:$0xf]
        %v247 = vld [vmem:[%s193 + $0x1c] sm:$0xf]
        %v248 = vld [vmem:[%s193 + $0x20] sm:$0xf]
        %v249 = vld [vmem:[%s193 + $0x24] sm:$0xf]
        %v250 = vld [vmem:[%s193 + $0x28] sm:$0xf]
        %v251 = vld [vmem:[%s193 + $0x2c] sm:$0xf]
        %v252 = vld [vmem:[%s193 + $0x30] sm:$0xf]
        %v253 = vld [vmem:[%s193 + $0x34] sm:$0xf]
        %v254 = vld [vmem:[%s193 + $0x38] sm:$0xf]
        %v255 = vld [vmem:[%s193 + $0x3c] sm:$0xf]
        %v256 = vld [vmem:[%s193 + $0x40] sm:$0xf]
        %v257 = vld [vmem:[%s193 + $0x44] sm:$0xf]
        %v258 = vld [vmem:[%s193 + $0x48] sm:$0xf]
        %v259 = vld [vmem:[%s193 + $0x4c] sm:$0xf]
        %v260 = vld [vmem:[%s193 + $0x50] sm:$0xf]
        %v261 = vld [vmem:[%s193 + $0x54] sm:$0xf]
        %v262 = vld [vmem:[%s193 + $0x58] sm:$0xf]
        %v263 = vld [vmem:[%s193 + $0x5c] sm:$0xf]
        %v264 = vld [vmem:[%s193 + $0x60] sm:$0xf]
        %v265 = vld [vmem:[%s193 + $0x64] sm:$0xf]
        %v266 = vld [vmem:[%s193 + $0x68] sm:$0xf]
        %v267 = vld [vmem:[%s193 + $0x6c] sm:$0xf]
        %v268 = vld [vmem:[%s193 + $0x70] sm:$0xf]
        %v269 = vld [vmem:[%s193 + $0x74] sm:$0xf]
        %v270 = vld [vmem:[%s193 + $0x78] sm:$0xf]
        %v271 = vld [vmem:[%s193 + $0x7c] sm:$0xf]
        %v272 = vld [vmem:[#allocation2] sm:$0xff]
        %v273 = vld [vmem:[#allocation2 + $0x8] sm:$0xff]
        %v274 = vld [vmem:[#allocation2 + $0x10] sm:$0xff]
        %v275 = vld [vmem:[#allocation2 + $0x18] sm:$0xff]
        %v276 = vld [vmem:[#allocation2 + $0x20] sm:$0xff]
        %v277 = vld [vmem:[#allocation2 + $0x28] sm:$0xff]
        %v278 = vld [vmem:[#allocation2 + $0x30] sm:$0xff]
        %v279 = vld [vmem:[#allocation2 + $0x38] sm:$0xff]
        %v280 = vld [vmem:[#allocation2 + $0x40] sm:$0xff]
        %v281 = vld [vmem:[#allocation2 + $0x48] sm:$0xff]
        %v282 = vld [vmem:[#allocation2 + $0x50] sm:$0xff]
        %v283 = vld [vmem:[#allocation2 + $0x58] sm:$0xff]
        %v284 = vld [vmem:[#allocation2 + $0x60] sm:$0xff]
        %v285 = vld [vmem:[#allocation2 + $0x68] sm:$0xff]
        %v286 = vld [vmem:[#allocation2 + $0x70] sm:$0xff]
        %v287 = vld [vmem:[#allocation2 + $0x78] sm:$0xff]
        %v288 = vld [vmem:[#allocation2 + $0x80] sm:$0xff]
        %v289 = vld [vmem:[#allocation2 + $0x88] sm:$0xff]
        %v290 = vld [vmem:[#allocation2 + $0x90] sm:$0xff]
        %v291 = vld [vmem:[#allocation2 + $0x98] sm:$0xff]
        %v292 = vld [vmem:[#allocation2 + $0xa0] sm:$0xff]
        %v293 = vld [vmem:[#allocation2 + $0xa8] sm:$0xff]
        %v294 = vld [vmem:[#allocation2 + $0xb0] sm:$0xff]
        %v295 = vld [vmem:[#allocation2 + $0xb8] sm:$0xff]
        %v296 = vld [vmem:[#allocation2 + $0xc0] sm:$0xff]
        %v297 = vld [vmem:[#allocation2 + $0xc8] sm:$0xff]
        %v298 = vld [vmem:[#allocation2 + $0xd0] sm:$0xff]
        %v299 = vld [vmem:[#allocation2 + $0xd8] sm:$0xff]
        %v300 = vld [vmem:[#allocation2 + $0xe0] sm:$0xff]
        %v301 = vld [vmem:[#allocation2 + $0xe8] sm:$0xff]
        %v302 = vld [vmem:[#allocation2 + $0xf0] sm:$0xff]
        %v303 = vld [vmem:[#allocation2 + $0xf8] sm:$0xff]
        %v304 = vld [vmem:[%s200] sm:$0x1]
        %v337 = vunpack.c.l.b16 %v240
        %v338 = vunpack.c.l.b16 %v241
        %v339 = vunpack.c.l.b16 %v242
        %v340 = vunpack.c.l.b16 %v243
        %v341 = vunpack.c.l.b16 %v244
        %v342 = vunpack.c.l.b16 %v245
        %v343 = vunpack.c.l.b16 %v246
        %v344 = vunpack.c.l.b16 %v247
        %v345 = vunpack.c.l.b16 %v248
        %v346 = vunpack.c.l.b16 %v249
        %v347 = vunpack.c.l.b16 %v250
        %v348 = vunpack.c.l.b16 %v251
        %v349 = vunpack.c.l.b16 %v252
        %v350 = vunpack.c.l.b16 %v253
        %v351 = vunpack.c.l.b16 %v254
        %v352 = vunpack.c.l.b16 %v255
        %v353 = vunpack.c.l.b16 %v256
        %v354 = vunpack.c.l.b16 %v257
        %v355 = vunpack.c.l.b16 %v258
        %v356 = vunpack.c.l.b16 %v259
        %v357 = vunpack.c.l.b16 %v260
        %v358 = vunpack.c.l.b16 %v261
        %v359 = vunpack.c.l.b16 %v262
        %v360 = vunpack.c.l.b16 %v263
        %v361 = vunpack.c.l.b16 %v264
        %v362 = vunpack.c.l.b16 %v265
        %v363 = vunpack.c.l.b16 %v266
        %v364 = vunpack.c.l.b16 %v267
        %v365 = vunpack.c.l.b16 %v268
        %v366 = vunpack.c.l.b16 %v269
        %v367 = vunpack.c.l.b16 %v270
        %v368 = vunpack.c.l.b16 %v271
        %v369 = vpack.c.b16 %v338, %v337
        %v370 = vpack.c.b16 %v340, %v339
        %v371 = vpack.c.b16 %v342, %v341
        %v372 = vpack.c.b16 %v344, %v343
        %v373 = vpack.c.b16 %v346, %v345
        %v374 = vpack.c.b16 %v348, %v347
        %v375 = vpack.c.b16 %v350, %v349
        %v376 = vpack.c.b16 %v352, %v351
        %v377 = vpack.c.b16 %v354, %v353
        %v378 = vpack.c.b16 %v356, %v355
        %v379 = vpack.c.b16 %v358, %v357
        %v380 = vpack.c.b16 %v360, %v359
        %v381 = vpack.c.b16 %v362, %v361
        %v382 = vpack.c.b16 %v364, %v363
        %v383 = vpack.c.b16 %v366, %v365
        %v384 = vpack.c.b16 %v368, %v367
        %vm385 = vcmask 15360
        %v387 = vsel %vm385, %v369, 0
        %v390 = vsel %vm385, %v370, 0
        %v393 = vsel %vm385, %v371, 0
        %v396 = vsel %vm385, %v372, 0
        %v399 = vsel %vm385, %v373, 0
        %v402 = vsel %vm385, %v374, 0
        %v405 = vsel %vm385, %v375, 0
        %v408 = vsel %vm385, %v376, 0
        %v411 = vsel %vm385, %v377, 0
        %v414 = vsel %vm385, %v378, 0
        %v417 = vsel %vm385, %v379, 0
        %v420 = vsel %vm385, %v380, 0
        %v423 = vsel %vm385, %v381, 0
        %v426 = vsel %vm385, %v382, 0
        %v429 = vsel %vm385, %v383, 0
        %v432 = vsel %vm385, %v384, 0
        %vm434 = vcmask 1040384
        %v436 = vsel %vm434, %v304, 0
        %438 = vmatprep.subr.bf16.mxu0 0
        %439 = vmatpush1.bf16.msra.mxu0 0
        %440 = vmatprep.subr.bf16.mxu0 0
        %441 = vmatpush1.bf16.msra.mxu0 0
        %442 = vmatprep.subr.bf16.mxu0 0
        %443 = vmatpush1.bf16.msra.mxu0 0
        %444 = vmatprep.subr.bf16.mxu0 0
        %445 = vmatpush1.bf16.msra.mxu0 0
        %446 = vmatprep.subr.bf16.mxu0 0
        %447 = vmatpush1.bf16.msra.mxu0 0
        %448 = vmatprep.subr.bf16.mxu0 0
        %449 = vmatpush1.bf16.msra.mxu0 0
        %450 = vmatprep.subr.bf16.mxu0 0
        %451 = vmatpush1.bf16.msra.mxu0 0
        %452 = vmatprep.subr.bf16.mxu0 0
        %453 = vmatpush1.bf16.msra.mxu0 %v436
        %454 = vmatprep.subr.bf16.mxu0 0
        %455 = vmatpush2.bf16.msra.mxu0 0
        %456 = vmatprep.subr.bf16.mxu0 0
        %457 = vmatpush2.bf16.msra.mxu0 0
        %458 = vmatprep.subr.bf16.mxu0 0
        %459 = vmatpush2.bf16.msra.mxu0 0
        %460 = vmatprep.subr.bf16.mxu0 0
        %461 = vmatpush2.bf16.msra.mxu0 0
        %462 = vmatprep.subr.bf16.mxu0 0
        %463 = vmatpush2.bf16.msra.mxu0 0
        %464 = vmatprep.subr.bf16.mxu0 0
        %465 = vmatpush2.bf16.msra.mxu0 0
        %466 = vmatprep.subr.bf16.mxu0 0
        %467 = vmatpush2.bf16.msra.mxu0 0
        %468 = vmatprep.subr.bf16.mxu0 0
        %469 = vmatpush2.bf16.msra.mxu0 0
        %470 = vmatprep.mubr.bf16.mxu0 0
        %471 = vmatmul.mubr.bf16.gmra.mxu0 %v387
        %v472 = vpop.f32.mrf.mxu0
        %v473 = vadd.f32 0.0, %v472
        %v474 = vpop.f32.mrf.mxu0
        %v475 = vpop.f32.mrf.mxu0
        %v476 = vadd.f32 0.0, %v475
        %v477 = vpop.f32.mrf.mxu0
        %478 = vmatprep.mubr.bf16.mxu0 0
        %479 = vmatmul.mubr.bf16.gmra.mxu0 %v390
        %v480 = vpop.f32.mrf.mxu0
        %v481 = vadd.f32 0.0, %v480
        %v482 = vpop.f32.mrf.mxu0
        %v483 = vpop.f32.mrf.mxu0
        %v484 = vadd.f32 0.0, %v483
        %v485 = vpop.f32.mrf.mxu0
        %486 = vmatprep.mubr.bf16.mxu0 0
        %487 = vmatmul.mubr.bf16.gmra.mxu0 %v393
        %v488 = vpop.f32.mrf.mxu0
        %v489 = vadd.f32 0.0, %v488
        %v490 = vpop.f32.mrf.mxu0
        %v491 = vpop.f32.mrf.mxu0
        %v492 = vadd.f32 0.0, %v491
        %v493 = vpop.f32.mrf.mxu0
        %494 = vmatprep.mubr.bf16.mxu0 0
        %495 = vmatmul.mubr.bf16.gmra.mxu0 %v396
        %v496 = vpop.f32.mrf.mxu0
        %v497 = vadd.f32 0.0, %v496
        %v498 = vpop.f32.mrf.mxu0
        %v499 = vpop.f32.mrf.mxu0
        %v500 = vadd.f32 0.0, %v499
        %v501 = vpop.f32.mrf.mxu0
        %502 = vmatprep.mubr.bf16.mxu0 0
        %503 = vmatmul.mubr.bf16.gmra.mxu0 %v399
        %v504 = vpop.f32.mrf.mxu0
        %v505 = vadd.f32 0.0, %v504
        %v506 = vpop.f32.mrf.mxu0
        %v507 = vpop.f32.mrf.mxu0
        %v508 = vadd.f32 0.0, %v507
        %v509 = vpop.f32.mrf.mxu0
        %510 = vmatprep.mubr.bf16.mxu0 0
        %511 = vmatmul.mubr.bf16.gmra.mxu0 %v402
        %v512 = vpop.f32.mrf.mxu0
        %v513 = vadd.f32 0.0, %v512
        %v514 = vpop.f32.mrf.mxu0
        %v515 = vpop.f32.mrf.mxu0
        %v516 = vadd.f32 0.0, %v515
        %v517 = vpop.f32.mrf.mxu0
        %518 = vmatprep.mubr.bf16.mxu0 0
        %519 = vmatmul.mubr.bf16.gmra.mxu0 %v405
        %v520 = vpop.f32.mrf.mxu0
        %v521 = vadd.f32 0.0, %v520
        %v522 = vpop.f32.mrf.mxu0
        %v523 = vpop.f32.mrf.mxu0
        %v524 = vadd.f32 0.0, %v523
        %v525 = vpop.f32.mrf.mxu0
        %526 = vmatprep.mubr.bf16.mxu0 0
        %527 = vmatmul.mubr.bf16.gmra.mxu0 %v408
        %v528 = vpop.f32.mrf.mxu0
        %v529 = vadd.f32 0.0, %v528
        %v530 = vpop.f32.mrf.mxu0
        %v531 = vpop.f32.mrf.mxu0
        %v532 = vadd.f32 0.0, %v531
        %v533 = vpop.f32.mrf.mxu0
        %534 = vmatprep.mubr.bf16.mxu0 0
        %535 = vmatmul.mubr.bf16.gmra.mxu0 %v411
        %v536 = vpop.f32.mrf.mxu0
        %v537 = vadd.f32 0.0, %v536
        %v538 = vpop.f32.mrf.mxu0
        %v539 = vpop.f32.mrf.mxu0
        %v540 = vadd.f32 0.0, %v539
        %v541 = vpop.f32.mrf.mxu0
        %542 = vmatprep.mubr.bf16.mxu0 0
        %543 = vmatmul.mubr.bf16.gmra.mxu0 %v414
        %v544 = vpop.f32.mrf.mxu0
        %v545 = vadd.f32 0.0, %v544
        %v546 = vpop.f32.mrf.mxu0
        %v547 = vpop.f32.mrf.mxu0
        %v548 = vadd.f32 0.0, %v547
        %v549 = vpop.f32.mrf.mxu0
        %550 = vmatprep.mubr.bf16.mxu0 0
        %551 = vmatmul.mubr.bf16.gmra.mxu0 %v417
        %v552 = vpop.f32.mrf.mxu0
        %v553 = vadd.f32 0.0, %v552
        %v554 = vpop.f32.mrf.mxu0
        %v555 = vpop.f32.mrf.mxu0
        %v556 = vadd.f32 0.0, %v555
        %v557 = vpop.f32.mrf.mxu0
        %558 = vmatprep.mubr.bf16.mxu0 0
        %559 = vmatmul.mubr.bf16.gmra.mxu0 %v420
        %v560 = vpop.f32.mrf.mxu0
        %v561 = vadd.f32 0.0, %v560
        %v562 = vpop.f32.mrf.mxu0
        %v563 = vpop.f32.mrf.mxu0
        %v564 = vadd.f32 0.0, %v563
        %v565 = vpop.f32.mrf.mxu0
        %566 = vmatprep.mubr.bf16.mxu0 0
        %567 = vmatmul.mubr.bf16.gmra.mxu0 %v423
        %v568 = vpop.f32.mrf.mxu0
        %v569 = vadd.f32 0.0, %v568
        %v570 = vpop.f32.mrf.mxu0
        %v571 = vpop.f32.mrf.mxu0
        %v572 = vadd.f32 0.0, %v571
        %v573 = vpop.f32.mrf.mxu0
        %574 = vmatprep.mubr.bf16.mxu0 0
        %575 = vmatmul.mubr.bf16.gmra.mxu0 %v426
        %v576 = vpop.f32.mrf.mxu0
        %v577 = vadd.f32 0.0, %v576
        %v578 = vpop.f32.mrf.mxu0
        %v579 = vpop.f32.mrf.mxu0
        %v580 = vadd.f32 0.0, %v579
        %v581 = vpop.f32.mrf.mxu0
        %582 = vmatprep.mubr.bf16.mxu0 0
        %583 = vmatmul.mubr.bf16.gmra.mxu0 %v429
        %v584 = vpop.f32.mrf.mxu0
        %v585 = vadd.f32 0.0, %v584
        %v586 = vpop.f32.mrf.mxu0
        %v587 = vpop.f32.mrf.mxu0
        %v588 = vadd.f32 0.0, %v587
        %v589 = vpop.f32.mrf.mxu0
        %590 = vmatprep.mubr.bf16.mxu0 0
        %591 = vmatmul.mubr.bf16.gmra.mxu0 %v432
        %v592 = vpop.f32.mrf.mxu0
        %v593 = vadd.f32 0.0, %v592
        %v594 = vpop.f32.mrf.mxu0
        %v595 = vpop.f32.mrf.mxu0
        %v596 = vadd.f32 0.0, %v595
        %v597 = vpop.f32.mrf.mxu0
        %598 = vdwg.mxu0
        %v599 = vadd.f32 %v272, %v473
        %v600 = vadd.f32 %v273, %v476
        %v601 = vadd.f32 %v274, %v481
        %v602 = vadd.f32 %v275, %v484
        %v603 = vadd.f32 %v276, %v489
        %v604 = vadd.f32 %v277, %v492
        %v605 = vadd.f32 %v278, %v497
        %v606 = vadd.f32 %v279, %v500
        %v607 = vadd.f32 %v280, %v505
        %v608 = vadd.f32 %v281, %v508
        %v609 = vadd.f32 %v282, %v513
        %v610 = vadd.f32 %v283, %v516
        %v611 = vadd.f32 %v284, %v521
        %v612 = vadd.f32 %v285, %v524
        %v613 = vadd.f32 %v286, %v529
        %v614 = vadd.f32 %v287, %v532
        %v615 = vadd.f32 %v288, %v537
        %v616 = vadd.f32 %v289, %v540
        %v617 = vadd.f32 %v290, %v545
        %v618 = vadd.f32 %v291, %v548
        %v619 = vadd.f32 %v292, %v553
        %v620 = vadd.f32 %v293, %v556
        %v621 = vadd.f32 %v294, %v561
        %v622 = vadd.f32 %v295, %v564
        %v623 = vadd.f32 %v296, %v569
        %v624 = vadd.f32 %v297, %v572
        %v625 = vadd.f32 %v298, %v577
        %v626 = vadd.f32 %v299, %v580
        %v627 = vadd.f32 %v300, %v585
        %v628 = vadd.f32 %v301, %v588
        %v629 = vadd.f32 %v302, %v593
        %v630 = vadd.f32 %v303, %v596
        %vm631 = vcmask 261120
        %632 = vst.msk [vmem:[#allocation2] sm:$0xff] %vm631, %v599
        %633 = vst.msk [vmem:[#allocation2 + $0x8] sm:$0xff] %vm631, %v600
        %634 = vst.msk [vmem:[#allocation2 + $0x10] sm:$0xff] %vm631, %v601
        %635 = vst.msk [vmem:[#allocation2 + $0x18] sm:$0xff] %vm631, %v602
        %636 = vst.msk [vmem:[#allocation2 + $0x20] sm:$0xff] %vm631, %v603
        %637 = vst.msk [vmem:[#allocation2 + $0x28] sm:$0xff] %vm631, %v604
        %638 = vst.msk [vmem:[#allocation2 + $0x30] sm:$0xff] %vm631, %v605
        %639 = vst.msk [vmem:[#allocation2 + $0x38] sm:$0xff] %vm631, %v606
        %640 = vst.msk [vmem:[#allocation2 + $0x40] sm:$0xff] %vm631, %v607
        %641 = vst.msk [vmem:[#allocation2 + $0x48] sm:$0xff] %vm631, %v608
        %642 = vst.msk [vmem:[#allocation2 + $0x50] sm:$0xff] %vm631, %v609
        %643 = vst.msk [vmem:[#allocation2 + $0x58] sm:$0xff] %vm631, %v610
        %644 = vst.msk [vmem:[#allocation2 + $0x60] sm:$0xff] %vm631, %v611
        %645 = vst.msk [vmem:[#allocation2 + $0x68] sm:$0xff] %vm631, %v612
        %646 = vst.msk [vmem:[#allocation2 + $0x70] sm:$0xff] %vm631, %v613
        %647 = vst.msk [vmem:[#allocation2 + $0x78] sm:$0xff] %vm631, %v614
        %648 = vst.msk [vmem:[#allocation2 + $0x80] sm:$0xff] %vm631, %v615
        %649 = vst.msk [vmem:[#allocation2 + $0x88] sm:$0xff] %vm631, %v616
        %650 = vst.msk [vmem:[#allocation2 + $0x90] sm:$0xff] %vm631, %v617
        %651 = vst.msk [vmem:[#allocation2 + $0x98] sm:$0xff] %vm631, %v618
        %652 = vst.msk [vmem:[#allocation2 + $0xa0] sm:$0xff] %vm631, %v619
        %653 = vst.msk [vmem:[#allocation2 + $0xa8] sm:$0xff] %vm631, %v620
        %654 = vst.msk [vmem:[#allocation2 + $0xb0] sm:$0xff] %vm631, %v621
        %655 = vst.msk [vmem:[#allocation2 + $0xb8] sm:$0xff] %vm631, %v622
        %656 = vst.msk [vmem:[#allocation2 + $0xc0] sm:$0xff] %vm631, %v623
        %657 = vst.msk [vmem:[#allocation2 + $0xc8] sm:$0xff] %vm631, %v624
        %658 = vst.msk [vmem:[#allocation2 + $0xd0] sm:$0xff] %vm631, %v625
        %659 = vst.msk [vmem:[#allocation2 + $0xd8] sm:$0xff] %vm631, %v626
        %660 = vst.msk [vmem:[#allocation2 + $0xe0] sm:$0xff] %vm631, %v627
        %661 = vst.msk [vmem:[#allocation2 + $0xe8] sm:$0xff] %vm631, %v628
        %662 = vst.msk [vmem:[#allocation2 + $0xf0] sm:$0xff] %vm631, %v629
        %663 = vst.msk [vmem:[#allocation2 + $0xf8] sm:$0xff] %vm631, %v630
        // Predicated region
        $region33: #{separable_conv3d.3} parent=27 // pred_check
          %p664 = pneg %p203
        $region34: #{separable_conv3d.3} parent=27 // pred_check_branch
          %666 = sbr.rel (%p664) target = $region36
        $region35: #{separable_conv3d.3} parent=27 // pred_region
          %v667 = vld [vmem:[#allocation2] sm:$0xff]
          %v668 = vld [vmem:[#allocation2 + $0x8] sm:$0xff]
          %v669 = vld [vmem:[#allocation2 + $0x10] sm:$0xff]
          %v670 = vld [vmem:[#allocation2 + $0x18] sm:$0xff]
          %v671 = vld [vmem:[#allocation2 + $0x20] sm:$0xff]
          %v672 = vld [vmem:[#allocation2 + $0x28] sm:$0xff]
          %v673 = vld [vmem:[#allocation2 + $0x30] sm:$0xff]
          %v674 = vld [vmem:[#allocation2 + $0x38] sm:$0xff]
          %v675 = vld [vmem:[#allocation2 + $0x40] sm:$0xff]
          %v676 = vld [vmem:[#allocation2 + $0x48] sm:$0xff]
          %v677 = vld [vmem:[#allocation2 + $0x50] sm:$0xff]
          %v678 = vld [vmem:[#allocation2 + $0x58] sm:$0xff]
          %v679 = vld [vmem:[#allocation2 + $0x60] sm:$0xff]
          %v680 = vld [vmem:[#allocation2 + $0x68] sm:$0xff]
          %v681 = vld [vmem:[#allocation2 + $0x70] sm:$0xff]
          %v682 = vld [vmem:[#allocation2 + $0x78] sm:$0xff]
          %v683 = vld [vmem:[#allocation2 + $0x80] sm:$0xff]
          %v684 = vld [vmem:[#allocation2 + $0x88] sm:$0xff]
          %v685 = vld [vmem:[#allocation2 + $0x90] sm:$0xff]
          %v686 = vld [vmem:[#allocation2 + $0x98] sm:$0xff]
          %v687 = vld [vmem:[#allocation2 + $0xa0] sm:$0xff]
          %v688 = vld [vmem:[#allocation2 + $0xa8] sm:$0xff]
          %v689 = vld [vmem:[#allocation2 + $0xb0] sm:$0xff]
          %v690 = vld [vmem:[#allocation2 + $0xb8] sm:$0xff]
          %v691 = vld [vmem:[#allocation2 + $0xc0] sm:$0xff]
          %v692 = vld [vmem:[#allocation2 + $0xc8] sm:$0xff]
          %v693 = vld [vmem:[#allocation2 + $0xd0] sm:$0xff]
          %v694 = vld [vmem:[#allocation2 + $0xd8] sm:$0xff]
          %v695 = vld [vmem:[#allocation2 + $0xe0] sm:$0xff]
          %v696 = vld [vmem:[#allocation2 + $0xe8] sm:$0xff]
          %v697 = vld [vmem:[#allocation2 + $0xf0] sm:$0xff]
          %v698 = vld [vmem:[#allocation2 + $0xf8] sm:$0xff]
          %v699 = vpack.c.bf16 %v668, %v667
          %v700 = vpack.c.bf16 %v670, %v669
          %v701 = vpack.c.bf16 %v672, %v671
          %v702 = vpack.c.bf16 %v674, %v673
          %v703 = vpack.c.bf16 %v676, %v675
          %v704 = vpack.c.bf16 %v678, %v677
          %v705 = vpack.c.bf16 %v680, %v679
          %v706 = vpack.c.bf16 %v682, %v681
          %v707 = vpack.c.bf16 %v684, %v683
          %v708 = vpack.c.bf16 %v686, %v685
          %v709 = vpack.c.bf16 %v688, %v687
          %v710 = vpack.c.bf16 %v690, %v689
          %v711 = vpack.c.bf16 %v692, %v691
          %v712 = vpack.c.bf16 %v694, %v693
          %v713 = vpack.c.bf16 %v696, %v695
          %v714 = vpack.c.bf16 %v698, %v697
          %v731 = vunpack.c.l.b16 %v699
          %v732 = vunpack.c.h.b16 %v699
          %v733 = vunpack.c.l.b16 %v700
          %v734 = vunpack.c.h.b16 %v700
          %v735 = vunpack.c.l.b16 %v701
          %v736 = vunpack.c.h.b16 %v701
          %v737 = vunpack.c.l.b16 %v702
          %v738 = vunpack.c.h.b16 %v702
          %v739 = vunpack.c.l.b16 %v703
          %v740 = vunpack.c.h.b16 %v703
          %v741 = vunpack.c.l.b16 %v704
          %v742 = vunpack.c.h.b16 %v704
          %v743 = vunpack.c.l.b16 %v705
          %v744 = vunpack.c.h.b16 %v705
          %v745 = vunpack.c.l.b16 %v706
          %v746 = vunpack.c.h.b16 %v706
          %v747 = vunpack.c.l.b16 %v707
          %v748 = vunpack.c.h.b16 %v707
          %v749 = vunpack.c.l.b16 %v708
          %v750 = vunpack.c.h.b16 %v708
          %v751 = vunpack.c.l.b16 %v709
          %v752 = vunpack.c.h.b16 %v709
          %v753 = vunpack.c.l.b16 %v710
          %v754 = vunpack.c.h.b16 %v710
          %v755 = vunpack.c.l.b16 %v711
          %v756 = vunpack.c.h.b16 %v711
          %v757 = vunpack.c.l.b16 %v712
          %v758 = vunpack.c.h.b16 %v712
          %v759 = vunpack.c.l.b16 %v713
          %v760 = vunpack.c.h.b16 %v713
          %v761 = vunpack.c.l.b16 %v714
          %v762 = vunpack.c.h.b16 %v714
          %v763 = vpack.c.b16 %v731, %v731
          %v764 = vpack.c.b16 %v732, %v732
          %v765 = vpack.c.b16 %v733, %v733
          %v766 = vpack.c.b16 %v734, %v734
          %v767 = vpack.c.b16 %v735, %v735
          %v768 = vpack.c.b16 %v736, %v736
          %v769 = vpack.c.b16 %v737, %v737
          %v770 = vpack.c.b16 %v738, %v738
          %v771 = vpack.c.b16 %v739, %v739
          %v772 = vpack.c.b16 %v740, %v740
          %v773 = vpack.c.b16 %v741, %v741
          %v774 = vpack.c.b16 %v742, %v742
          %v775 = vpack.c.b16 %v743, %v743
          %v776 = vpack.c.b16 %v744, %v744
          %v777 = vpack.c.b16 %v745, %v745
          %v778 = vpack.c.b16 %v746, %v746
          %v779 = vpack.c.b16 %v747, %v747
          %v780 = vpack.c.b16 %v748, %v748
          %v781 = vpack.c.b16 %v749, %v749
          %v782 = vpack.c.b16 %v750, %v750
          %v783 = vpack.c.b16 %v751, %v751
          %v784 = vpack.c.b16 %v752, %v752
          %v785 = vpack.c.b16 %v753, %v753
          %v786 = vpack.c.b16 %v754, %v754
          %v787 = vpack.c.b16 %v755, %v755
          %v788 = vpack.c.b16 %v756, %v756
          %v789 = vpack.c.b16 %v757, %v757
          %v790 = vpack.c.b16 %v758, %v758
          %v791 = vpack.c.b16 %v759, %v759
          %v792 = vpack.c.b16 %v760, %v760
          %v793 = vpack.c.b16 %v761, %v761
          %v794 = vpack.c.b16 %v762, %v762
          %vm827 = vcmask 257024
          %828 = vst.msk [vmem:[%s185] sm:$0xf] %vm827, %v763
          %829 = vst.msk [vmem:[%s185 + $0x4] sm:$0xf] %vm827, %v764
          %830 = vst.msk [vmem:[%s185 + $0x8] sm:$0xf] %vm827, %v765
          %831 = vst.msk [vmem:[%s185 + $0xc] sm:$0xf] %vm827, %v766
          %832 = vst.msk [vmem:[%s185 + $0x10] sm:$0xf] %vm827, %v767
          %833 = vst.msk [vmem:[%s185 + $0x14] sm:$0xf] %vm827, %v768
          %834 = vst.msk [vmem:[%s185 + $0x18] sm:$0xf] %vm827, %v769
          %835 = vst.msk [vmem:[%s185 + $0x1c] sm:$0xf] %vm827, %v770
          %836 = vst.msk [vmem:[%s185 + $0x20] sm:$0xf] %vm827, %v771
          %837 = vst.msk [vmem:[%s185 + $0x24] sm:$0xf] %vm827, %v772
          %838 = vst.msk [vmem:[%s185 + $0x28] sm:$0xf] %vm827, %v773
          %839 = vst.msk [vmem:[%s185 + $0x2c] sm:$0xf] %vm827, %v774
          %840 = vst.msk [vmem:[%s185 + $0x30] sm:$0xf] %vm827, %v775
          %841 = vst.msk [vmem:[%s185 + $0x34] sm:$0xf] %vm827, %v776
          %842 = vst.msk [vmem:[%s185 + $0x38] sm:$0xf] %vm827, %v777
          %843 = vst.msk [vmem:[%s185 + $0x3c] sm:$0xf] %vm827, %v778
          %844 = vst.msk [vmem:[%s185 + $0x40] sm:$0xf] %vm827, %v779
          %845 = vst.msk [vmem:[%s185 + $0x44] sm:$0xf] %vm827, %v780
          %846 = vst.msk [vmem:[%s185 + $0x48] sm:$0xf] %vm827, %v781
          %847 = vst.msk [vmem:[%s185 + $0x4c] sm:$0xf] %vm827, %v782
          %848 = vst.msk [vmem:[%s185 + $0x50] sm:$0xf] %vm827, %v783
          %849 = vst.msk [vmem:[%s185 + $0x54] sm:$0xf] %vm827, %v784
          %850 = vst.msk [vmem:[%s185 + $0x58] sm:$0xf] %vm827, %v785
          %851 = vst.msk [vmem:[%s185 + $0x5c] sm:$0xf] %vm827, %v786
          %852 = vst.msk [vmem:[%s185 + $0x60] sm:$0xf] %vm827, %v787
          %853 = vst.msk [vmem:[%s185 + $0x64] sm:$0xf] %vm827, %v788
          %854 = vst.msk [vmem:[%s185 + $0x68] sm:$0xf] %vm827, %v789
          %855 = vst.msk [vmem:[%s185 + $0x6c] sm:$0xf] %vm827, %v790
          %856 = vst.msk [vmem:[%s185 + $0x70] sm:$0xf] %vm827, %v791
          %857 = vst.msk [vmem:[%s185 + $0x74] sm:$0xf] %vm827, %v792
          %858 = vst.msk [vmem:[%s185 + $0x78] sm:$0xf] %vm827, %v793
          %859 = vst.msk [vmem:[%s185 + $0x7c] sm:$0xf] %vm827, %v794
        $region36: #{separable_conv3d.3} parent=27 // pred_fallthru
          _
        %s860 = sand.u32 %s101, 1
        %s861 = scalar_lea.sflag [#allocation4], %s860
        %s862 = sand.u32 %s101, 1
        %s863 = smul.addr %s862, 128
        %s864 = scalar_lea.vmem [#allocation3], %s863
        // Predicated region
        $region37: #{separable_conv3d.3} parent=27 // pred_check
          %p865 = pneg %p111
        $region38: #{separable_conv3d.3} parent=27 // pred_check_branch
          %867 = sbr.rel (%p865) target = $region40
        $region39: #{separable_conv3d.3} parent=27 // pred_region
          %s868 = smul.u32 32, %s21
          %s870 = ssub.s32 2048, 2048
          %871 = vsyncadd %s861, %s870
          %s872 = sadd.s32 %s22, %s868
          %s873 = smul.addr %s872, 64
          %s874 = scalar_lea.hbm %s2, %s873
          %s875 = sshll.u32 %s864, 4
          %s876 = int_to_ptr.vmem [resolvable:$true] %s875
          %881 = dma.vmem_to_hbm [thread:$0]  %s876, 2048, %s874, %s861, 64, 64, 4
        $region40: #{separable_conv3d.3} parent=27 // pred_fallthru
          _
      $region28: #{separable_conv3d.3} parent=5 // pred_fallthru
        _
      %p882 = scmp.le.s32.totalorder 2, %s11
      // Predicated region
      $region41: #{separable_conv3d.3} parent=5 // pred_check
        %p883 = pneg %p882
      $region42: #{separable_conv3d.3} parent=5 // pred_check_branch
        %885 = sbr.rel (%p883) target = $region44
      $region43: #{separable_conv3d.3} parent=5 // pred_region
        %s886 = ssub.s32 %s11, 2
        // Predicated region
        $region45: #{separable_conv3d.3} parent=43 // pred_check
          %p887 = pneg %p117
        $region46: #{separable_conv3d.3} parent=43 // pred_check_branch
          %889 = sbr.rel (%p887) target = $region48
        $region47: #{separable_conv3d.3} parent=43 // pred_region
          %s890 = sand.u32 %s102, 1
          %s891 = scalar_lea.sflag [#allocation4], %s890
          %s892 = sand.u32 %s102, 1
          %s893 = smul.addr %s892, 128
          %s894 = scalar_lea.vmem [#allocation3], %s893
          %895 = dma.done %s891, 2048
        $region48: #{separable_conv3d.3} parent=43 // pred_fallthru
          _
      $region44: #{separable_conv3d.3} parent=5 // pred_fallthru
        _
    $region6: #{separable_conv3d.3} parent=1 // loop_footer
      %s15 = sadd.s32 1, %s11
    $region7: #{separable_conv3d.3} parent=1 // loop_footer_branch
      %10 = sbr.rel target = $region3
    $region8: #{separable_conv3d.3} parent=1 // loop_exit
      _
    %896 = vsyncpa [#allocation4], 1
    %s897 = scalar_lea.sflag [#allocation4], 1
    %898 = vsyncpa %s897, 1

// kernel: separable_conv3d.2
$region0: #{separable_conv3d.2}
  #allocation0 [shape = 'u32[]', space=smem, size = 0x4, offset = 0x4, fixed_abs, tag = 'smem constant byte address 0x4 - core index']
  #allocation1 [shape = 'u32[144,128]{1,0:T(1,128)}', space=vmem, size = 0x12000, scoped, tag = 'internal scratch']
  %s0 = inlined_call_operand.vmem [shape: bf16[1,34,34,18,2], index: 0, kind: input, shape index: {}, may-alias: {0,1,2}]
  %s1 = inlined_call_operand.vmem [shape: bf16[1,34,34,18,2], index: 1, kind: input, shape index: {}, may-alias: {0,1,2}]
  %s2 = inlined_call_operand.vmem [shape: bf16[1,34,34,18,2], index: 2, kind: input, shape index: {}, may-alias: {0,1,2}]
  %s3 = inlined_call_operand.vmem [shape: f32[3,3,3,2], index: 3, kind: input, shape index: {}]
  %s4 = inlined_call_operand.vmem [shape: bf16[1,32,32,16,2], index: 4, kind: output, shape index: {}]
  %s5 = sld [smem:[#allocation0]]
  $region49: #{separable_conv3d.2} parent=0
    _
  %s7 = ssub.s32 1, %s5
  %s8 = scalar_select 0, %s7, %s5
  loop: start=0, step=1, limit=34
  $region2: #{separable_conv3d.2} parent=0 // loop_pre_header
    _
  $region3: #{separable_conv3d.2} parent=0 // loop_header
    %s10 = sphi 0, %s14
    %p11 = scmp.ge.s32.totalorder %s10, 34
    %s17 = sphi 0, %s29
    %s18 = sphi 0, %s25
    %s19 = sphi 0, %s17
    %s20 = sphi 0, %s18
    %s21 = sphi 0, %s19
    %s22 = sphi 0, %s20
    %s34 = sphi 0, %s36
    %s37 = sphi 0, %s34
    %s38 = sphi 0, %s37
    %s54 = sphi 0, %s38
    %s64 = sphi 0, %s66
    %s67 = sphi 0, %s64
    %s68 = sphi 0, %s67
    %s84 = sphi 0, %s68
    %s94 = sphi 0, %s96
    %s97 = sphi 0, %s94
    %s98 = sphi 0, %s97
    %s114 = sphi 0, %s98
    %s118 = sphi 0, %s118
    %s120 = sphi 0, %s118
    %s121 = sphi 0, %s120
    %s135 = sphi 0, %s121
    %s143 = sphi 0, %s145
    %s146 = sphi 0, %s143
    %s147 = sphi 0, %s146
    %s163 = sphi 0, %s147
  $region4: #{separable_conv3d.2} parent=0 // loop_header_branch
    %13 = sbr.rel (%p11) target = $region8
  $region5: #{separable_conv3d.2} parent=0 // loop_body
    %s15 = ssub.s32 %s10, 1
    %s16 = ssub.s32 %s10, 2
    %s23 = sadd.s32 1, %s18
    %p24 = scmp.ge.s32.totalorder %s23, 32
    %s25 = scalar_select %p24, 0, %s23
    %s26 = sadd.s32 1, %s17
    %s27 = scalar_select %p24, %s26, %s17
    %p28 = scmp.ge.s32.totalorder %s27, 1
    %s29 = scalar_select %p28, 0, %s27
    %s30 = ssub.s32 %s17, %s29
    %s31 = ssub.s32 %s18, %s25
    %s32 = sor.u32 %s30, %s31
    %p33 = scmp.eq.s32.totalorder %s32, 0
    %s35 = sadd.s32 %s34, 1
    %s36 = scalar_select %p33, %s34, %s35
    %p39 = pneg %p33
    %p40 = scmp.eq.s32.totalorder %s10, 31
    %p41 = por %p39, %p40
    %p42 = scmp.ne.s32.totalorder %s34, %s37
    %p43 = scmp.eq.s32.totalorder %s10, 0
    %p44 = por %p42, %p43
    %p45 = scmp.ne.s32.totalorder %s34, %s37
    %p46 = scmp.eq.s32.totalorder %s15, 31
    %p47 = por %p45, %p46
    %p48 = scmp.ne.s32.totalorder %s37, %s38
    %p49 = scmp.eq.s32.totalorder %s15, 0
    %p50 = por %p48, %p49
    %p51 = scmp.ne.s32.totalorder %s37, %s38
    %p52 = scmp.eq.s32.totalorder %s16, 31
    %p53 = por %p51, %p52
    %p55 = scmp.ne.s32.totalorder %s38, %s54
    %p56 = scmp.eq.s32.totalorder %s16, 0
    %p57 = por %p55, %p56
    %s58 = sadd.s32 %s18, 1
    %s59 = sadd.s32 %s25, 1
    %s60 = ssub.s32 %s17, %s29
    %s61 = ssub.s32 %s58, %s59
    %s62 = sor.u32 %s60, %s61
    %p63 = scmp.eq.s32.totalorder %s62, 0
    %s65 = sadd.s32 %s64, 1
    %s66 = scalar_select %p63, %s64, %s65
    %p69 = pneg %p63
    %p70 = scmp.eq.s32.totalorder %s10, 31
    %p71 = por %p69, %p70
    %p72 = scmp.ne.s32.totalorder %s64, %s67
    %p73 = scmp.eq.s32.totalorder %s10, 0
    %p74 = por %p72, %p73
    %p75 = scmp.ne.s32.totalorder %s64, %s67
    %p76 = scmp.eq.s32.totalorder %s15, 31
    %p77 = por %p75, %p76
    %p78 = scmp.ne.s32.totalorder %s67, %s68
    %p79 = scmp.eq.s32.totalorder %s15, 0
    %p80 = por %p78, %p79
    %p81 = scmp.ne.s32.totalorder %s67, %s68
    %p82 = scmp.eq.s32.totalorder %s16, 31
    %p83 = por %p81, %p82
    %p85 = scmp.ne.s32.totalorder %s68, %s84
    %p86 = scmp.eq.s32.totalorder %s16, 0
    %p87 = por %p85, %p86
    %s88 = sadd.s32 %s18, 2
    %s89 = sadd.s32 %s25, 2
    %s90 = ssub.s32 %s17, %s29
    %s91 = ssub.s32 %s88, %s89
    %s92 = sor.u32 %s90, %s91
    %p93 = scmp.eq.s32.totalorder %s92, 0
    %s95 = sadd.s32 %s94, 1
    %s96 = scalar_select %p93, %s94, %s95
    %p99 = pneg %p93
    %p100 = scmp.eq.s32.totalorder %s10, 31
    %p101 = por %p99, %p100
    %p102 = scmp.ne.s32.totalorder %s94, %s97
    %p103 = scmp.eq.s32.totalorder %s10, 0
    %p104 = por %p102, %p103
    %p105 = scmp.ne.s32.totalorder %s94, %s97
    %p106 = scmp.eq.s32.totalorder %s15, 31
    %p107 = por %p105, %p106
    %p108 = scmp.ne.s32.totalorder %s97, %s98
    %p109 = scmp.eq.s32.totalorder %s15, 0
    %p110 = por %p108, %p109
    %p111 = scmp.ne.s32.totalorder %s97, %s98
    %p112 = scmp.eq.s32.totalorder %s16, 31
    %p113 = por %p111, %p112
    %p115 = scmp.ne.s32.totalorder %s98, %s114
    %p116 = scmp.eq.s32.totalorder %s16, 0
    %p117 = por %p115, %p116
    %s119 = sadd.s32 %s118, 1
    %p122 = scmp.eq.s32.totalorder %s10, 31
    %p123 = scmp.ne.s32.totalorder %s118, %s120
    %p124 = scmp.eq.s32.totalorder %s10, 0
    %p125 = por %p123, %p124
    %p126 = scmp.ne.s32.totalorder %s118, %s120
    %p127 = scmp.eq.s32.totalorder %s15, 31
    %p128 = por %p126, %p127
    %p129 = scmp.ne.s32.totalorder %s120, %s121
    %p130 = scmp.eq.s32.totalorder %s15, 0
    %p131 = por %p129, %p130
    %p132 = scmp.ne.s32.totalorder %s120, %s121
    %p133 = scmp.eq.s32.totalorder %s16, 31
    %p134 = por %p132, %p133
    %p136 = scmp.ne.s32.totalorder %s121, %s135
    %p137 = scmp.eq.s32.totalorder %s16, 0
    %p138 = por %p136, %p137
    %s139 = ssub.s32 %s17, %s29
    %s140 = ssub.s32 %s18, %s25
    %s141 = sor.u32 %s139, %s140
    %p142 = scmp.eq.s32.totalorder %s141, 0
    %s144 = sadd.s32 %s143, 1
    %s145 = scalar_select %p142, %s143, %s144
    %p148 = pneg %p142
    %p149 = scmp.eq.s32.totalorder %s10, 31
    %p150 = por %p148, %p149
    %p151 = scmp.ne.s32.totalorder %s143, %s146
    %p152 = scmp.eq.s32.totalorder %s10, 0
    %p153 = por %p151, %p152
    %p154 = scmp.ne.s32.totalorder %s143, %s146
    %p155 = scmp.eq.s32.totalorder %s15, 31
    %p156 = por %p154, %p155
    %p157 = scmp.ne.s32.totalorder %s146, %s147
    %p158 = scmp.eq.s32.totalorder %s15, 0
    %p159 = por %p157, %p158
    %p160 = scmp.ne.s32.totalorder %s146, %s147
    %p161 = scmp.eq.s32.totalorder %s16, 31
    %p162 = por %p160, %p161
    %p164 = scmp.ne.s32.totalorder %s147, %s163
    %p165 = scmp.eq.s32.totalorder %s16, 0
    %p166 = por %p164, %p165
    %p167 = scmp.le.s32.totalorder 1, %s10
    %p168 = scmp.lt.s32.totalorder %s10, 33
    %p169 = pnand %p167, %p168
    %p170 = pneg %p169
    // Predicated region
    $region9: #{separable_conv3d.2} parent=5 // pred_check
      _
    $region10: #{separable_conv3d.2} parent=5 // pred_check_branch
      %172 = sbr.rel (%p169) target = $region12
    $region11: #{separable_conv3d.2} parent=5 // pred_region
      %s173 = ssub.s32 %s10, 1
      // Predicated region
      $region13: #{separable_conv3d.2} parent=11 // pred_check
        %p174 = pneg %p131
      $region14: #{separable_conv3d.2} parent=11 // pred_check_branch
        %176 = sbr.rel (%p174) target = $region16
      $region15: #{separable_conv3d.2} parent=11 // pred_region
        _
      $region16: #{separable_conv3d.2} parent=11 // pred_fallthru
        _
    $region12: #{separable_conv3d.2} parent=5 // pred_fallthru
      _
    %p177 = scmp.lt.s32.totalorder %s10, 32
    // Predicated region
    $region17: #{separable_conv3d.2} parent=5 // pred_check
      %p178 = pneg %p177
    $region18: #{separable_conv3d.2} parent=5 // pred_check_branch
      %180 = sbr.rel (%p178) target = $region20
    $region19: #{separable_conv3d.2} parent=5 // pred_region
      // Predicated region
      $region21: #{separable_conv3d.2} parent=19 // pred_check
        %p181 = pneg %p44
      $region22: #{separable_conv3d.2} parent=19 // pred_check_branch
        %183 = sbr.rel (%p181) target = $region24
      $region23: #{separable_conv3d.2} parent=19 // pred_region
        %p184 = scmp.lt.s32.totalorder %s17, 0
        %s185 = scalar_select %p184, %s17, 0
        %p186 = scmp.lt.s32.totalorder %s18, 33
        %s187 = scalar_select %p186, %s18, 33
        %s188 = smul.addr %s187, 102
        %s189 = smul.addr %s185, 3468
        %s190 = sadd.s32 %s188, %s189
        %s191 = smul.addr %s190, 4
        %s192 = scalar_lea.vmem %s0, %s191
      $region24: #{separable_conv3d.2} parent=19 // pred_fallthru
        _
      // Predicated region
      $region25: #{separable_conv3d.2} parent=19 // pred_check
        %p193 = pneg %p74
      $region26: #{separable_conv3d.2} parent=19 // pred_check_branch
        %195 = sbr.rel (%p193) target = $region28
      $region27: #{separable_conv3d.2} parent=19 // pred_region
        %s196 = sadd.s32 %s18, 1
        %p197 = scmp.lt.s32.totalorder %s17, 0
        %s198 = scalar_select %p197, %s17, 0
        %p199 = scmp.lt.s32.totalorder %s196, 33
        %s200 = scalar_select %p199, %s196, 33
        %s201 = smul.addr %s200, 102
        %s202 = smul.addr %s198, 3468
        %s203 = sadd.s32 %s201, %s202
        %s204 = smul.addr %s203, 4
        %s205 = scalar_lea.vmem %s1, %s204
        %s206 = sadd.s32 %s18, 1
      $region28: #{separable_conv3d.2} parent=19 // pred_fallthru
        _
      // Predicated region
      $region29: #{separable_conv3d.2} parent=19 // pred_check
        %p207 = pneg %p104
      $region30: #{separable_conv3d.2} parent=19 // pred_check_branch
        %209 = sbr.rel (%p207) target = $region32
      $region31: #{separable_conv3d.2} parent=19 // pred_region
        %s210 = sadd.s32 %s18, 2
        %p211 = scmp.lt.s32.totalorder %s17, 0
        %s212 = scalar_select %p211, %s17, 0
        %p213 = scmp.lt.s32.totalorder %s210, 33
        %s214 = scalar_select %p213, %s210, 33
        %s215 = smul.addr %s214, 102
        %s216 = smul.addr %s212, 3468
        %s217 = sadd.s32 %s215, %s216
        %s218 = smul.addr %s217, 4
        %s219 = scalar_lea.vmem %s2, %s218
        %s220 = sadd.s32 %s18, 2
      $region32: #{separable_conv3d.2} parent=19 // pred_fallthru
        _
    $region20: #{separable_conv3d.2} parent=5 // pred_fallthru
      _
    %p221 = scmp.le.s32.totalorder 1, %s10
    %p222 = scmp.lt.s32.totalorder %s10, 33
    %p223 = pnand %p221, %p222
    %p224 = pneg %p223
    // Predicated region
    $region33: #{separable_conv3d.2} parent=5 // pred_check
      _
    $region34: #{separable_conv3d.2} parent=5 // pred_check_branch
      %226 = sbr.rel (%p223) target = $region36
    $region35: #{separable_conv3d.2} parent=5 // pred_region
      %s227 = ssub.s32 %s10, 1
      %p228 = scmp.lt.s32.totalorder %s19, 0
      %s229 = scalar_select %p228, %s19, 0
      %p230 = scmp.lt.s32.totalorder %s20, 33
      %s231 = scalar_select %p230, %s20, 33
      %s232 = smul.addr %s231, 102
      %s233 = smul.addr %s229, 3468
      %s234 = sadd.s32 %s232, %s233
      %s235 = smul.addr %s234, 4
      %s236 = scalar_lea.vmem %s0, %s235
      %p237 = pneg %p50
      %p238 = pneg %p47
      %s239 = sadd.s32 %s20, 1
      %p240 = scmp.lt.s32.totalorder %s19, 0
      %s241 = scalar_select %p240, %s19, 0
      %p242 = scmp.lt.s32.totalorder %s239, 33
      %s243 = scalar_select %p242, %s239, 33
      %s244 = smul.addr %s243, 102
      %s245 = smul.addr %s241, 3468
      %s246 = sadd.s32 %s244, %s245
      %s247 = smul.addr %s246, 4
      %s248 = scalar_lea.vmem %s1, %s247
      %p249 = pneg %p80
      %p250 = pneg %p77
      %s251 = sadd.s32 %s20, 2
      %p252 = scmp.lt.s32.totalorder %s19, 0
      %s253 = scalar_select %p252, %s19, 0
      %p254 = scmp.lt.s32.totalorder %s251, 33
      %s255 = scalar_select %p254, %s251, 33
      %s256 = smul.addr %s255, 102
      %s257 = smul.addr %s253, 3468
      %s258 = sadd.s32 %s256, %s257
      %s259 = smul.addr %s258, 4
      %s260 = scalar_lea.vmem %s2, %s259
      %p261 = pneg %p110
      %p262 = pneg %p107
      %p263 = pneg %p131
      %p264 = pneg %p128
      %p265 = pneg %p159
      %p266 = pneg %p156
      %p267 = scmp.lt.s32.totalorder %s19, 0
      %s268 = scalar_select %p267, %s19, 0
      %p269 = scmp.lt.s32.totalorder %s20, 31
      %s270 = scalar_select %p269, %s20, 31
      %s271 = smul.addr %s270, 64
      %s272 = smul.addr %s268, 2048
      %s273 = sadd.s32 %s271, %s272
      %s274 = smul.addr %s273, 4
      %s275 = scalar_lea.vmem %s4, %s274
      %p276 = scmp.lt.s32.totalorder %s19, 0
      %s277 = scalar_select %p276, %s19, 0
      %p278 = scmp.lt.s32.totalorder %s20, 33
      %s279 = scalar_select %p278, %s20, 33
      %s280 = smul.addr %s279, 102
      %s281 = smul.addr %s277, 3468
      %s282 = sadd.s32 %s280, %s281
      %s283 = smul.addr %s282, 4
      %s284 = scalar_lea.vmem %s0, %s283
      %s285 = sadd.s32 %s20, 1
      %p286 = scmp.lt.s32.totalorder %s19, 0
      %s287 = scalar_select %p286, %s19, 0
      %p288 = scmp.lt.s32.totalorder %s285, 33
      %s289 = scalar_select %p288, %s285, 33
      %s290 = smul.addr %s289, 102
      %s291 = smul.addr %s287, 3468
      %s292 = sadd.s32 %s290, %s291
      %s293 = smul.addr %s292, 4
      %s294 = scalar_lea.vmem %s1, %s293
      %s295 = sadd.s32 %s20, 1
      %s296 = sadd.s32 %s20, 2
      %p297 = scmp.lt.s32.totalorder %s19, 0
      %s298 = scalar_select %p297, %s19, 0
      %p299 = scmp.lt.s32.totalorder %s296, 33
      %s300 = scalar_select %p299, %s296, 33
      %s301 = smul.addr %s300, 102
      %s302 = smul.addr %s298, 3468
      %s303 = sadd.s32 %s301, %s302
      %s304 = smul.addr %s303, 4
      %s305 = scalar_lea.vmem %s2, %s304
      %s306 = sadd.s32 %s20, 2
      %p307 = scmp.lt.s32.totalorder %s19, 0
      %s308 = scalar_select %p307, %s19, 0
      %p309 = scmp.lt.s32.totalorder %s20, 31
      %s310 = scalar_select %p309, %s20, 31
      %s311 = smul.addr %s310, 64
      %s312 = smul.addr %s308, 2048
      %s313 = sadd.s32 %s311, %s312
      %s314 = smul.addr %s313, 4
      %s315 = scalar_lea.vmem %s4, %s314
      %v316 = vld [vmem:[%s3] sm:$0x7]
      %v317 = vld [vmem:[%s3 + $0x4] sm:$0x7]
      %v318 = vld [vmem:[%s3 + $0x8] sm:$0x7]
      %v319 = vld [vmem:[%s3 + $0xc] sm:$0x7]
      %v320 = vld [vmem:[%s3 + $0x10] sm:$0x7]
      %v321 = vld [vmem:[%s3 + $0x14] sm:$0x7]
      %v322 = vld [vmem:[%s3 + $0x18] sm:$0x7]
      %v323 = vld [vmem:[%s3 + $0x1c] sm:$0x7]
      %v324 = vld [vmem:[%s3 + $0x20] sm:$0x7]
      %v325 = vld [vmem:[%s284] sm:$0xf]
      %v326 = vld [vmem:[%s284 + $0x4] sm:$0xf]
      %v327 = vld [vmem:[%s284 + $0x8] sm:$0x1]
      %v328 = vld [vmem:[%s284 + $0xc] sm:$0xf]
      %v329 = vld [vmem:[%s284 + $0x10] sm:$0xf]
      %v330 = vld [vmem:[%s284 + $0x14] sm:$0x1]
      %v331 = vld [vmem:[%s284 + $0x18] sm:$0xf]
      %v332 = vld [vmem:[%s284 + $0x1c] sm:$0xf]
      %v333 = vld [vmem:[%s284 + $0x20] sm:$0x1]
      %v334 = vld [vmem:[%s284 + $0x24] sm:$0xf]
      %v335 = vld [vmem:[%s284 + $0x28] sm:$0xf]
      %v336 = vld [vmem:[%s284 + $0x2c] sm:$0x1]
      %v337 = vld [vmem:[%s284 + $0x30] sm:$0xf]
      %v338 = vld [vmem:[%s284 + $0x34] sm:$0xf]
      %v339 = vld [vmem:[%s284 + $0x38] sm:$0x1]
      %v340 = vld [vmem:[%s284 + $0x3c] sm:$0xf]
      %v341 = vld [vmem:[%s284 + $0x40] sm:$0xf]
      %v342 = vld [vmem:[%s284 + $0x44] sm:$0x1]
      %v343 = vld [vmem:[%s284 + $0x48] sm:$0xf]
      %v344 = vld [vmem:[%s284 + $0x4c] sm:$0xf]
      %v345 = vld [vmem:[%s284 + $0x50] sm:$0x1]
      %v346 = vld [vmem:[%s284 + $0x54] sm:$0xf]
      %v347 = vld [vmem:[%s284 + $0x58] sm:$0xf]
      %v348 = vld [vmem:[%s284 + $0x5c] sm:$0x1]
      %v349 = vld [vmem:[%s284 + $0x60] sm:$0xf]
      %v350 = vld [vmem:[%s284 + $0x64] sm:$0xf]
      %v351 = vld [vmem:[%s284 + $0x68] sm:$0x1]
      %v352 = vld [vmem:[%s284 + $0x6c] sm:$0xf]
      %v353 = vld [vmem:[%s284 + $0x70] sm:$0xf]
      %v354 = vld [vmem:[%s284 + $0x74] sm:$0x1]
      %v355 = vld [vmem:[%s284 + $0x78] sm:$0xf]
      %v356 = vld [vmem:[%s284 + $0x7c] sm:$0xf]
      %v357 = vld [vmem:[%s284 + $0x80] sm:$0x1]
      %v358 = vld [vmem:[%s284 + $0x84] sm:$0xf]
      %v359 = vld [vmem:[%s284 + $0x88] sm:$0xf]
      %v360 = vld [vmem:[%s284 + $0x8c] sm:$0x1]
      %v361 = vld [vmem:[%s284 + $0x90] sm:$0xf]
      %v362 = vld [vmem:[%s284 + $0x94] sm:$0xf]
      %v363 = vld [vmem:[%s284 + $0x98] sm:$0x1]
      %v364 = vld [vmem:[%s284 + $0x9c] sm:$0xf]
      %v365 = vld [vmem:[%s284 + $0xa0] sm:$0xf]
      %v366 = vld [vmem:[%s284 + $0xa4] sm:$0x1]
      %v367 = vld [vmem:[%s284 + $0xa8] sm:$0xf]
      %v368 = vld [vmem:[%s284 + $0xac] sm:$0xf]
      %v369 = vld [vmem:[%s284 + $0xb0] sm:$0x1]
      %v370 = vld [vmem:[%s284 + $0xb4] sm:$0xf]
      %v371 = vld [vmem:[%s284 + $0xb8] sm:$0xf]
      %v372 = vld [vmem:[%s284 + $0xbc] sm:$0x1]
      %v373 = vld [vmem:[%s284 + $0xc0] sm:$0xf]
      %v374 = vld [vmem:[%s284 + $0xc4] sm:$0xf]
      %v375 = vld [vmem:[%s284 + $0xc8] sm:$0x1]
      %v376 = vld [vmem:[%s284 + $0xcc] sm:$0xf]
      %v377 = vld [vmem:[%s284 + $0xd0] sm:$0xf]
      %v378 = vld [vmem:[%s284 + $0xd4] sm:$0x1]
      %v379 = vld [vmem:[%s284 + $0xd8] sm:$0xf]
      %v380 = vld [vmem:[%s284 + $0xdc] sm:$0xf]
      %v381 = vld [vmem:[%s284 + $0xe0] sm:$0x1]
      %v382 = vld [vmem:[%s284 + $0xe4] sm:$0xf]
      %v383 = vld [vmem:[%s284 + $0xe8] sm:$0xf]
      %v384 = vld [vmem:[%s284 + $0xec] sm:$0x1]
      %v385 = vld [vmem:[%s284 + $0xf0] sm:$0xf]
      %v386 = vld [vmem:[%s284 + $0xf4] sm:$0xf]
      %v387 = vld [vmem:[%s284 + $0xf8] sm:$0x1]
      %v388 = vld [vmem:[%s284 + $0xfc] sm:$0xf]
      %v389 = vld [vmem:[%s284 + $0x100] sm:$0xf]
      %v390 = vld [vmem:[%s284 + $0x104] sm:$0x1]
      %v391 = vld [vmem:[%s284 + $0x108] sm:$0xf]
      %v392 = vld [vmem:[%s284 + $0x10c] sm:$0xf]
      %v393 = vld [vmem:[%s284 + $0x110] sm:$0x1]
      %v394 = vld [vmem:[%s284 + $0x114] sm:$0xf]
      %v395 = vld [vmem:[%s284 + $0x118] sm:$0xf]
      %v396 = vld [vmem:[%s284 + $0x11c] sm:$0x1]
      %v397 = vld [vmem:[%s284 + $0x120] sm:$0xf]
      %v398 = vld [vmem:[%s284 + $0x124] sm:$0xf]
      %v399 = vld [vmem:[%s284 + $0x128] sm:$0x1]
      %v400 = vld [vmem:[%s284 + $0x12c] sm:$0xf]
      %v401 = vld [vmem:[%s284 + $0x130] sm:$0xf]
      %v402 = vld [vmem:[%s284 + $0x134] sm:$0x1]
      %v403 = vld [vmem:[%s284 + $0x138] sm:$0xf]
      %v404 = vld [vmem:[%s284 + $0x13c] sm:$0xf]
      %v405 = vld [vmem:[%s284 + $0x140] sm:$0x1]
      %v406 = vld [vmem:[%s284 + $0x144] sm:$0xf]
      %v407 = vld [vmem:[%s284 + $0x148] sm:$0xf]
      %v408 = vld [vmem:[%s284 + $0x14c] sm:$0x1]
      %v409 = vld [vmem:[%s284 + $0x150] sm:$0xf]
      %v410 = vld [vmem:[%s284 + $0x154] sm:$0xf]
      %v411 = vld [vmem:[%s284 + $0x158] sm:$0x1]
      %v412 = vld [vmem:[%s284 + $0x15c] sm:$0xf]
      %v413 = vld [vmem:[%s284 + $0x160] sm:$0xf]
      %v414 = vld [vmem:[%s284 + $0x164] sm:$0x1]
      %v415 = vld [vmem:[%s284 + $0x168] sm:$0xf]
      %v416 = vld [vmem:[%s284 + $0x16c] sm:$0xf]
      %v417 = vld [vmem:[%s284 + $0x170] sm:$0x1]
      %v418 = vld [vmem:[%s284 + $0x174] sm:$0xf]
      %v419 = vld [vmem:[%s284 + $0x178] sm:$0xf]
      %v420 = vld [vmem:[%s284 + $0x17c] sm:$0x1]
      %v421 = vld [vmem:[%s284 + $0x180] sm:$0xf]
      %v422 = vld [vmem:[%s284 + $0x184] sm:$0xf]
      %v423 = vld [vmem:[%s284 + $0x188] sm:$0x1]
      %v424 = vld [vmem:[%s284 + $0x18c] sm:$0xf]
      %v425 = vld [vmem:[%s284 + $0x190] sm:$0xf]
      %v426 = vld [vmem:[%s284 + $0x194] sm:$0x1]
      %v427 = vunpack.c.l.bf16 %v325
      %v428 = vunpack.c.l.bf16 %v326
      %v429 = vunpack.c.l.bf16 %v327
      %v430 = vunpack.c.l.bf16 %v328
      %v431 = vunpack.c.l.bf16 %v329
      %v432 = vunpack.c.l.bf16 %v330
      %v433 = vunpack.c.l.bf16 %v331
      %v434 = vunpack.c.l.bf16 %v332
      %v435 = vunpack.c.l.bf16 %v333
      %v436 = vunpack.c.l.bf16 %v334
      %v437 = vunpack.c.l.bf16 %v335
      %v438 = vunpack.c.l.bf16 %v336
      %v439 = vunpack.c.l.bf16 %v337
      %v440 = vunpack.c.l.bf16 %v338
      %v441 = vunpack.c.l.bf16 %v339
      %v442 = vunpack.c.l.bf16 %v340
      %v443 = vunpack.c.l.bf16 %v341
      %v444 = vunpack.c.l.bf16 %v342
      %v445 = vunpack.c.l.bf16 %v343
      %v446 = vunpack.c.l.bf16 %v344
      %v447 = vunpack.c.l.bf16 %v345
      %v448 = vunpack.c.l.bf16 %v346
      %v449 = vunpack.c.l.bf16 %v347
      %v450 = vunpack.c.l.bf16 %v348
      %v451 = vunpack.c.l.bf16 %v349
      %v452 = vunpack.c.l.bf16 %v350
      %v453 = vunpack.c.l.bf16 %v351
      %v454 = vunpack.c.l.bf16 %v352
      %v455 = vunpack.c.l.bf16 %v353
      %v456 = vunpack.c.l.bf16 %v354
      %v457 = vunpack.c.l.bf16 %v355
      %v458 = vunpack.c.l.bf16 %v356
      %v459 = vunpack.c.l.bf16 %v357
      %v460 = vunpack.c.l.bf16 %v358
      %v461 = vunpack.c.l.bf16 %v359
      %v462 = vunpack.c.l.bf16 %v360
      %v463 = vunpack.c.l.bf16 %v361
      %v464 = vunpack.c.l.bf16 %v362
      %v465 = vunpack.c.l.bf16 %v363
      %v466 = vunpack.c.l.bf16 %v364
      %v467 = vunpack.c.l.bf16 %v365
      %v468 = vunpack.c.l.bf16 %v366
      %v469 = vunpack.c.l.bf16 %v367
      %v470 = vunpack.c.l.bf16 %v368
      %v471 = vunpack.c.l.bf16 %v369
      %v472 = vunpack.c.l.bf16 %v370
      %v473 = vunpack.c.l.bf16 %v371
      %v474 = vunpack.c.l.bf16 %v372
      %v475 = vunpack.c.l.bf16 %v373
      %v476 = vunpack.c.l.bf16 %v374
      %v477 = vunpack.c.l.bf16 %v375
      %v478 = vunpack.c.l.bf16 %v376
      %v479 = vunpack.c.l.bf16 %v377
      %v480 = vunpack.c.l.bf16 %v378
      %v481 = vunpack.c.l.bf16 %v379
      %v482 = vunpack.c.l.bf16 %v380
      %v483 = vunpack.c.l.bf16 %v381
      %v484 = vunpack.c.l.bf16 %v382
      %v485 = vunpack.c.l.bf16 %v383
      %v486 = vunpack.c.l.bf16 %v384
      %v487 = vunpack.c.l.bf16 %v385
      %v488 = vunpack.c.l.bf16 %v386
      %v489 = vunpack.c.l.bf16 %v387
      %v490 = vunpack.c.l.bf16 %v388
      %v491 = vunpack.c.l.bf16 %v389
      %v492 = vunpack.c.l.bf16 %v390
      %v493 = vunpack.c.l.bf16 %v391
      %v494 = vunpack.c.l.bf16 %v392
      %v495 = vunpack.c.l.bf16 %v393
      %v496 = vunpack.c.l.bf16 %v394
      %v497 = vunpack.c.l.bf16 %v395
      %v498 = vunpack.c.l.bf16 %v396
      %v499 = vunpack.c.l.bf16 %v397
      %v500 = vunpack.c.l.bf16 %v398
      %v501 = vunpack.c.l.bf16 %v399
      %v502 = vunpack.c.l.bf16 %v400
      %v503 = vunpack.c.l.bf16 %v401
      %v504 = vunpack.c.l.bf16 %v402
      %v505 = vunpack.c.l.bf16 %v403
      %v506 = vunpack.c.l.bf16 %v404
      %v507 = vunpack.c.l.bf16 %v405
      %v508 = vunpack.c.l.bf16 %v406
      %v509 = vunpack.c.l.bf16 %v407
      %v510 = vunpack.c.l.bf16 %v408
      %v511 = vunpack.c.l.bf16 %v409
      %v512 = vunpack.c.l.bf16 %v410
      %v513 = vunpack.c.l.bf16 %v411
      %v514 = vunpack.c.l.bf16 %v412
      %v515 = vunpack.c.l.bf16 %v413
      %v516 = vunpack.c.l.bf16 %v414
      %v517 = vunpack.c.l.bf16 %v415
      %v518 = vunpack.c.l.bf16 %v416
      %v519 = vunpack.c.l.bf16 %v417
      %v520 = vunpack.c.l.bf16 %v418
      %v521 = vunpack.c.l.bf16 %v419
      %v522 = vunpack.c.l.bf16 %v420
      %v523 = vunpack.c.l.bf16 %v421
      %v524 = vunpack.c.l.bf16 %v422
      %v525 = vunpack.c.l.bf16 %v423
      %v526 = vunpack.c.l.bf16 %v424
      %v527 = vunpack.c.l.bf16 %v425
      %v528 = vunpack.c.l.bf16 %v426
      %v529 = vlaneseq
      %v530 = vshrl.u32 %v529, 7
      %v531 = vsub.s32 0, %v530
      %v532 = vrot.slane %v316, %v531
      %v533 = vmul.f32 %v427, %v532
      %v534 = vmul.f32 %v428, %v532
      %v535 = vmul.f32 %v430, %v532
      %v536 = vmul.f32 %v431, %v532
      %v537 = vmul.f32 %v433, %v532
      %v538 = vmul.f32 %v434, %v532
      %v539 = vmul.f32 %v436, %v532
      %v540 = vmul.f32 %v437, %v532
      %v541 = vmul.f32 %v439, %v532
      %v542 = vmul.f32 %v440, %v532
      %v543 = vmul.f32 %v442, %v532
      %v544 = vmul.f32 %v443, %v532
      %v545 = vmul.f32 %v445, %v532
      %v546 = vmul.f32 %v446, %v532
      %v547 = vmul.f32 %v448, %v532
      %v548 = vmul.f32 %v449, %v532
      %v549 = vmul.f32 %v451, %v532
      %v550 = vmul.f32 %v452, %v532
      %v551 = vmul.f32 %v454, %v532
      %v552 = vmul.f32 %v455, %v532
      %v553 = vmul.f32 %v457, %v532
      %v554 = vmul.f32 %v458, %v532
      %v555 = vmul.f32 %v460, %v532
      %v556 = vmul.f32 %v461, %v532
      %v557 = vmul.f32 %v463, %v532
      %v558 = vmul.f32 %v464, %v532
      %v559 = vmul.f32 %v466, %v532
      %v560 = vmul.f32 %v467, %v532
      %v561 = vmul.f32 %v469, %v532
      %v562 = vmul.f32 %v470, %v532
      %v563 = vmul.f32 %v472, %v532
      %v564 = vmul.f32 %v473, %v532
      %v565 = vmul.f32 %v475, %v532
      %v566 = vmul.f32 %v476, %v532
      %v567 = vmul.f32 %v478, %v532
      %v568 = vmul.f32 %v479, %v532
      %v569 = vmul.f32 %v481, %v532
      %v570 = vmul.f32 %v482, %v532
      %v571 = vmul.f32 %v484, %v532
      %v572 = vmul.f32 %v485, %v532
      %v573 = vmul.f32 %v487, %v532
      %v574 = vmul.f32 %v488, %v532
      %v575 = vmul.f32 %v490, %v532
      %v576 = vmul.f32 %v491, %v532
      %v577 = vmul.f32 %v493, %v532
      %v578 = vmul.f32 %v494, %v532
      %v579 = vmul.f32 %v496, %v532
      %v580 = vmul.f32 %v497, %v532
      %v581 = vmul.f32 %v499, %v532
      %v582 = vmul.f32 %v500, %v532
      %v583 = vmul.f32 %v502, %v532
      %v584 = vmul.f32 %v503, %v532
      %v585 = vmul.f32 %v505, %v532
      %v586 = vmul.f32 %v506, %v532
      %v587 = vmul.f32 %v508, %v532
      %v588 = vmul.f32 %v509, %v532
      %v589 = vmul.f32 %v511, %v532
      %v590 = vmul.f32 %v512, %v532
      %v591 = vmul.f32 %v514, %v532
      %v592 = vmul.f32 %v515, %v532
      %v593 = vmul.f32 %v517, %v532
      %v594 = vmul.f32 %v518, %v532
      %v595 = vmul.f32 %v520, %v532
      %v596 = vmul.f32 %v521, %v532
      %v597 = vadd.f32 %v533, 0.0
      %v598 = vadd.f32 %v534, 0.0
      %v599 = vadd.f32 %v535, 0.0
      %v600 = vadd.f32 %v536, 0.0
      %v601 = vadd.f32 %v537, 0.0
      %v602 = vadd.f32 %v538, 0.0
      %v603 = vadd.f32 %v539, 0.0
      %v604 = vadd.f32 %v540, 0.0
      %v605 = vadd.f32 %v541, 0.0
      %v606 = vadd.f32 %v542, 0.0
      %v607 = vadd.f32 %v543, 0.0
      %v608 = vadd.f32 %v544, 0.0
      %v609 = vadd.f32 %v545, 0.0
      %v610 = vadd.f32 %v546, 0.0
      %v611 = vadd.f32 %v547, 0.0
      %v612 = vadd.f32 %v548, 0.0
      %v613 = vadd.f32 %v549, 0.0
      %v614 = vadd.f32 %v550, 0.0
      %v615 = vadd.f32 %v551, 0.0
      %v616 = vadd.f32 %v552, 0.0
      %v617 = vadd.f32 %v553, 0.0
      %v618 = vadd.f32 %v554, 0.0
      %v619 = vadd.f32 %v555, 0.0
      %v620 = vadd.f32 %v556, 0.0
      %v621 = vadd.f32 %v557, 0.0
      %v622 = vadd.f32 %v558, 0.0
      %v623 = vadd.f32 %v559, 0.0
      %v624 = vadd.f32 %v560, 0.0
      %v625 = vadd.f32 %v561, 0.0
      %v626 = vadd.f32 %v562, 0.0
      %v627 = vadd.f32 %v563, 0.0
      %v628 = vadd.f32 %v564, 0.0
      %v629 = vadd.f32 %v565, 0.0
      %v630 = vadd.f32 %v566, 0.0
      %v631 = vadd.f32 %v567, 0.0
      %v632 = vadd.f32 %v568, 0.0
      %v633 = vadd.f32 %v569, 0.0
      %v634 = vadd.f32 %v570, 0.0
      %v635 = vadd.f32 %v571, 0.0
      %v636 = vadd.f32 %v572, 0.0
      %v637 = vadd.f32 %v573, 0.0
      %v638 = vadd.f32 %v574, 0.0
      %v639 = vadd.f32 %v575, 0.0
      %v640 = vadd.f32 %v576, 0.0
      %v641 = vadd.f32 %v577, 0.0
      %v642 = vadd.f32 %v578, 0.0
      %v643 = vadd.f32 %v579, 0.0
      %v644 = vadd.f32 %v580, 0.0
      %v645 = vadd.f32 %v581, 0.0
      %v646 = vadd.f32 %v582, 0.0
      %v647 = vadd.f32 %v583, 0.0
      %v648 = vadd.f32 %v584, 0.0
      %v649 = vadd.f32 %v585, 0.0
      %v650 = vadd.f32 %v586, 0.0
      %v651 = vadd.f32 %v587, 0.0
      %v652 = vadd.f32 %v588, 0.0
      %v653 = vadd.f32 %v589, 0.0
      %v654 = vadd.f32 %v590, 0.0
      %v655 = vadd.f32 %v591, 0.0
      %v656 = vadd.f32 %v592, 0.0
      %v657 = vadd.f32 %v593, 0.0
      %v658 = vadd.f32 %v594, 0.0
      %v659 = vadd.f32 %v595, 0.0
      %v660 = vadd.f32 %v596, 0.0
      %v661 = vlaneseq
      %v662 = vshrl.u32 %v661, 7
      %v663 = vsub.s32 1, %v662
      %v664 = vrot.slane %v316, %v663
      %v665 = vmul.f32 %v427, %v664
      %v666 = vmul.f32 %v428, %v664
      %v667 = vmul.f32 %v429, %v664
      %v668 = vmul.f32 %v430, %v664
      %v669 = vmul.f32 %v431, %v664
      %v670 = vmul.f32 %v432, %v664
      %v671 = vmul.f32 %v433, %v664
      %v672 = vmul.f32 %v434, %v664
      %v673 = vmul.f32 %v435, %v664
      %v674 = vmul.f32 %v436, %v664
      %v675 = vmul.f32 %v437, %v664
      %v676 = vmul.f32 %v438, %v664
      %v677 = vmul.f32 %v439, %v664
      %v678 = vmul.f32 %v440, %v664
      %v679 = vmul.f32 %v441, %v664
      %v680 = vmul.f32 %v442, %v664
      %v681 = vmul.f32 %v443, %v664
      %v682 = vmul.f32 %v444, %v664
      %v683 = vmul.f32 %v445, %v664
      %v684 = vmul.f32 %v446, %v664
      %v685 = vmul.f32 %v447, %v664
      %v686 = vmul.f32 %v448, %v664
      %v687 = vmul.f32 %v449, %v664
      %v688 = vmul.f32 %v450, %v664
      %v689 = vmul.f32 %v451, %v664
      %v690 = vmul.f32 %v452, %v664
      %v691 = vmul.f32 %v453, %v664
      %v692 = vmul.f32 %v454, %v664
      %v693 = vmul.f32 %v455, %v664
      %v694 = vmul.f32 %v456, %v664
      %v695 = vmul.f32 %v457, %v664
      %v696 = vmul.f32 %v458, %v664
      %v697 = vmul.f32 %v459, %v664
      %v698 = vmul.f32 %v460, %v664
      %v699 = vmul.f32 %v461, %v664
      %v700 = vmul.f32 %v462, %v664
      %v701 = vmul.f32 %v463, %v664
      %v702 = vmul.f32 %v464, %v664
      %v703 = vmul.f32 %v465, %v664
      %v704 = vmul.f32 %v466, %v664
      %v705 = vmul.f32 %v467, %v664
      %v706 = vmul.f32 %v468, %v664
      %v707 = vmul.f32 %v469, %v664
      %v708 = vmul.f32 %v470, %v664
      %v709 = vmul.f32 %v471, %v664
      %v710 = vmul.f32 %v472, %v664
      %v711 = vmul.f32 %v473, %v664
      %v712 = vmul.f32 %v474, %v664
      %v713 = vmul.f32 %v475, %v664
      %v714 = vmul.f32 %v476, %v664
      %v715 = vmul.f32 %v477, %v664
      %v716 = vmul.f32 %v478, %v664
      %v717 = vmul.f32 %v479, %v664
      %v718 = vmul.f32 %v480, %v664
      %v719 = vmul.f32 %v481, %v664
      %v720 = vmul.f32 %v482, %v664
      %v721 = vmul.f32 %v483, %v664
      %v722 = vmul.f32 %v484, %v664
      %v723 = vmul.f32 %v485, %v664
      %v724 = vmul.f32 %v486, %v664
      %v725 = vmul.f32 %v487, %v664
      %v726 = vmul.f32 %v488, %v664
      %v727 = vmul.f32 %v489, %v664
      %v728 = vmul.f32 %v490, %v664
      %v729 = vmul.f32 %v491, %v664
      %v730 = vmul.f32 %v492, %v664
      %v731 = vmul.f32 %v493, %v664
      %v732 = vmul.f32 %v494, %v664
      %v733 = vmul.f32 %v495, %v664
      %v734 = vmul.f32 %v496, %v664
      %v735 = vmul.f32 %v497, %v664
      %v736 = vmul.f32 %v498, %v664
      %v737 = vmul.f32 %v499, %v664
      %v738 = vmul.f32 %v500, %v664
      %v739 = vmul.f32 %v501, %v664
      %v740 = vmul.f32 %v502, %v664
      %v741 = vmul.f32 %v503, %v664
      %v742 = vmul.f32 %v504, %v664
      %v743 = vmul.f32 %v505, %v664
      %v744 = vmul.f32 %v506, %v664
      %v745 = vmul.f32 %v507, %v664
      %v746 = vmul.f32 %v508, %v664
      %v747 = vmul.f32 %v509, %v664
      %v748 = vmul.f32 %v510, %v664
      %v749 = vmul.f32 %v511, %v664
      %v750 = vmul.f32 %v512, %v664
      %v751 = vmul.f32 %v513, %v664
      %v752 = vmul.f32 %v514, %v664
      %v753 = vmul.f32 %v515, %v664
      %v754 = vmul.f32 %v516, %v664
      %v755 = vmul.f32 %v517, %v664
      %v756 = vmul.f32 %v518, %v664
      %v757 = vmul.f32 %v519, %v664
      %v758 = vmul.f32 %v520, %v664
      %v759 = vmul.f32 %v521, %v664
      %v760 = vmul.f32 %v522, %v664
      %vm857 = vcmask 1046528
      %v858 = vrot.slane %v665, 1
      %v859 = vrot.slane %v666, 1
      %v860 = vsel %vm857, %v858, %v859
      %v861 = vrot.slane %v667, 1
      %v862 = vsel %vm857, %v859, %v861
      %v863 = vrot.slane %v668, 1
      %v864 = vrot.slane %v669, 1
      %v865 = vsel %vm857, %v863, %v864
      %v866 = vrot.slane %v670, 1
      %v867 = vsel %vm857, %v864, %v866
      %v868 = vrot.slane %v671, 1
      %v869 = vrot.slane %v672, 1
      %v870 = vsel %vm857, %v868, %v869
      %v871 = vrot.slane %v673, 1
      %v872 = vsel %vm857, %v869, %v871
      %v873 = vrot.slane %v674, 1
      %v874 = vrot.slane %v675, 1
      %v875 = vsel %vm857, %v873, %v874
      %v876 = vrot.slane %v676, 1
      %v877 = vsel %vm857, %v874, %v876
      %v878 = vrot.slane %v677, 1
      %v879 = vrot.slane %v678, 1
      %v880 = vsel %vm857, %v878, %v879
      %v881 = vrot.slane %v679, 1
      %v882 = vsel %vm857, %v879, %v881
      %v883 = vrot.slane %v680, 1
      %v884 = vrot.slane %v681, 1
      %v885 = vsel %vm857, %v883, %v884
      %v886 = vrot.slane %v682, 1
      %v887 = vsel %vm857, %v884, %v886
      %v888 = vrot.slane %v683, 1
      %v889 = vrot.slane %v684, 1
      %v890 = vsel %vm857, %v888, %v889
      %v891 = vrot.slane %v685, 1
      %v892 = vsel %vm857, %v889, %v891
      %v893 = vrot.slane %v686, 1
      %v894 = vrot.slane %v687, 1
      %v895 = vsel %vm857, %v893, %v894
      %v896 = vrot.slane %v688, 1
      %v897 = vsel %vm857, %v894, %v896
      %v898 = vrot.slane %v689, 1
      %v899 = vrot.slane %v690, 1
      %v900 = vsel %vm857, %v898, %v899
      %v901 = vrot.slane %v691, 1
      %v902 = vsel %vm857, %v899, %v901
      %v903 = vrot.slane %v692, 1
      %v904 = vrot.slane %v693, 1
      %v905 = vsel %vm857, %v903, %v904
      %v906 = vrot.slane %v694, 1
      %v907 = vsel %vm857, %v904, %v906
      %v908 = vrot.slane %v695, 1
      %v909 = vrot.slane %v696, 1
      %v910 = vsel %vm857, %v908, %v909
      %v911 = vrot.slane %v697, 1
      %v912 = vsel %vm857, %v909, %v911
      %v913 = vrot.slane %v698, 1
      %v914 = vrot.slane %v699, 1
      %v915 = vsel %vm857, %v913, %v914
      %v916 = vrot.slane %v700, 1
      %v917 = vsel %vm857, %v914, %v916
      %v918 = vrot.slane %v701, 1
      %v919 = vrot.slane %v702, 1
      %v920 = vsel %vm857, %v918, %v919
      %v921 = vrot.slane %v703, 1
      %v922 = vsel %vm857, %v919, %v921
      %v923 = vrot.slane %v704, 1
      %v924 = vrot.slane %v705, 1
      %v925 = vsel %vm857, %v923, %v924
      %v926 = vrot.slane %v706, 1
      %v927 = vsel %vm857, %v924, %v926
      %v928 = vrot.slane %v707, 1
      %v929 = vrot.slane %v708, 1
      %v930 = vsel %vm857, %v928, %v929
      %v931 = vrot.slane %v709, 1
      %v932 = vsel %vm857, %v929, %v931
      %v933 = vrot.slane %v710, 1
      %v934 = vrot.slane %v711, 1
      %v935 = vsel %vm857, %v933, %v934
      %v936 = vrot.slane %v712, 1
      %v937 = vsel %vm857, %v934, %v936
      %v938 = vrot.slane %v713, 1
      %v939 = vrot.slane %v714, 1
      %v940 = vsel %vm857, %v938, %v939
      %v941 = vrot.slane %v715, 1
      %v942 = vsel %vm857, %v939, %v941
      %v943 = vrot.slane %v716, 1
      %v944 = vrot.slane %v717, 1
      %v945 = vsel %vm857, %v943, %v944
      %v946 = vrot.slane %v718, 1
      %v947 = vsel %vm857, %v944, %v946
      %v948 = vrot.slane %v719, 1
      %v949 = vrot.slane %v720, 1
      %v950 = vsel %vm857, %v948, %v949
      %v951 = vrot.slane %v721, 1
      %v952 = vsel %vm857, %v949, %v951
      %v953 = vrot.slane %v722, 1
      %v954 = vrot.slane %v723, 1
      %v955 = vsel %vm857, %v953, %v954
      %v956 = vrot.slane %v724, 1
      %v957 = vsel %vm857, %v954, %v956
      %v958 = vrot.slane %v725, 1
      %v959 = vrot.slane %v726, 1
      %v960 = vsel %vm857, %v958, %v959
      %v961 = vrot.slane %v727, 1
      %v962 = vsel %vm857, %v959, %v961
      %v963 = vrot.slane %v728, 1
      %v964 = vrot.slane %v729, 1
      %v965 = vsel %vm857, %v963, %v964
      %v966 = vrot.slane %v730, 1
      %v967 = vsel %vm857, %v964, %v966
      %v968 = vrot.slane %v731, 1
      %v969 = vrot.slane %v732, 1
      %v970 = vsel %vm857, %v968, %v969
      %v971 = vrot.slane %v733, 1
      %v972 = vsel %vm857, %v969, %v971
      %v973 = vrot.slane %v734, 1
      %v974 = vrot.slane %v735, 1
      %v975 = vsel %vm857, %v973, %v974
      %v976 = vrot.slane %v736, 1
      %v977 = vsel %vm857, %v974, %v976
      %v978 = vrot.slane %v737, 1
      %v979 = vrot.slane %v738, 1
      %v980 = vsel %vm857, %v978, %v979
      %v981 = vrot.slane %v739, 1
      %v982 = vsel %vm857, %v979, %v981
      %v983 = vrot.slane %v740, 1
      %v984 = vrot.slane %v741, 1
      %v985 = vsel %vm857, %v983, %v984
      %v986 = vrot.slane %v742, 1
      %v987 = vsel %vm857, %v984, %v986
      %v988 = vrot.slane %v743, 1
      %v989 = vrot.slane %v744, 1
      %v990 = vsel %vm857, %v988, %v989
      %v991 = vrot.slane %v745, 1
      %v992 = vsel %vm857, %v989, %v991
      %v993 = vrot.slane %v746, 1
      %v994 = vrot.slane %v747, 1
      %v995 = vsel %vm857, %v993, %v994
      %v996 = vrot.slane %v748, 1
      %v997 = vsel %vm857, %v994, %v996
      %v998 = vrot.slane %v749, 1
      %v999 = vrot.slane %v750, 1
      %v1000 = vsel %vm857, %v998, %v999
      %v1001 = vrot.slane %v751, 1
      %v1002 = vsel %vm857, %v999, %v1001
      %v1003 = vrot.slane %v752, 1
      %v1004 = vrot.slane %v753, 1
      %v1005 = vsel %vm857, %v1003, %v1004
      %v1006 = vrot.slane %v754, 1
      %v1007 = vsel %vm857, %v1004, %v1006
      %v1008 = vrot.slane %v755, 1
      %v1009 = vrot.slane %v756, 1
      %v1010 = vsel %vm857, %v1008, %v1009
      %v1011 = vrot.slane %v757, 1
      %v1012 = vsel %vm857, %v1009, %v1011
      %v1013 = vrot.slane %v758, 1
      %v1014 = vrot.slane %v759, 1
      %v1015 = vsel %vm857, %v1013, %v1014
      %v1016 = vrot.slane %v760, 1
      %v1017 = vsel %vm857, %v1014, %v1016
      %v1082 = vadd.f32 %v597, %v860
      %v1083 = vadd.f32 %v598, %v862
      %v1084 = vadd.f32 %v599, %v865
      %v1085 = vadd.f32 %v600, %v867
      %v1086 = vadd.f32 %v601, %v870
      %v1087 = vadd.f32 %v602, %v872
      %v1088 = vadd.f32 %v603, %v875
      %v1089 = vadd.f32 %v604, %v877
      %v1090 = vadd.f32 %v605, %v880
      %v1091 = vadd.f32 %v606, %v882
      %v1092 = vadd.f32 %v607, %v885
      %v1093 = vadd.f32 %v608, %v887
      %v1094 = vadd.f32 %v609, %v890
      %v1095 = vadd.f32 %v610, %v892
      %v1096 = vadd.f32 %v611, %v895
      %v1097 = vadd.f32 %v612, %v897
      %v1098 = vadd.f32 %v613, %v900
      %v1099 = vadd.f32 %v614, %v902
      %v1100 = vadd.f32 %v615, %v905
      %v1101 = vadd.f32 %v616, %v907
      %v1102 = vadd.f32 %v617, %v910
      %v1103 = vadd.f32 %v618, %v912
      %v1104 = vadd.f32 %v619, %v915
      %v1105 = vadd.f32 %v620, %v917
      %v1106 = vadd.f32 %v621, %v920
      %v1107 = vadd.f32 %v622, %v922
      %v1108 = vadd.f32 %v623, %v925
      %v1109 = vadd.f32 %v624, %v927
      %v1110 = vadd.f32 %v625, %v930
      %v1111 = vadd.f32 %v626, %v932
      %v1112 = vadd.f32 %v627, %v935
      %v1113 = vadd.f32 %v628, %v937
      %v1114 = vadd.f32 %v629, %v940
      %v1115 = vadd.f32 %v630, %v942
      %v1116 = vadd.f32 %v631, %v945
      %v1117 = vadd.f32 %v632, %v947
      %v1118 = vadd.f32 %v633, %v950
      %v1119 = vadd.f32 %v634, %v952
      %v1120 = vadd.f32 %v635, %v955
      %v1121 = vadd.f32 %v636, %v957
      %v1122 = vadd.f32 %v637, %v960
      %v1123 = vadd.f32 %v638, %v962
      %v1124 = vadd.f32 %v639, %v965
      %v1125 = vadd.f32 %v640, %v967
      %v1126 = vadd.f32 %v641, %v970
      %v1127 = vadd.f32 %v642, %v972
      %v1128 = vadd.f32 %v643, %v975
      %v1129 = vadd.f32 %v644, %v977
      %v1130 = vadd.f32 %v645, %v980
      %v1131 = vadd.f32 %v646, %v982
      %v1132 = vadd.f32 %v647, %v985
      %v1133 = vadd.f32 %v648, %v987
      %v1134 = vadd.f32 %v649, %v990
      %v1135 = vadd.f32 %v650, %v992
      %v1136 = vadd.f32 %v651, %v995
      %v1137 = vadd.f32 %v652, %v997
      %v1138 = vadd.f32 %v653, %v1000
      %v1139 = vadd.f32 %v654, %v1002
      %v1140 = vadd.f32 %v655, %v1005
      %v1141 = vadd.f32 %v656, %v1007
      %v1142 = vadd.f32 %v657, %v1010
      %v1143 = vadd.f32 %v658, %v1012
      %v1144 = vadd.f32 %v659, %v1015
      %v1145 = vadd.f32 %v660, %v1017
      %v1146 = vlaneseq
      %v1147 = vshrl.u32 %v1146, 7
      %v1148 = vsub.s32 2, %v1147
      %v1149 = vrot.slane %v316, %v1148
      %v1150 = vmul.f32 %v427, %v1149
      %v1151 = vmul.f32 %v428, %v1149
      %v1152 = vmul.f32 %v429, %v1149
      %v1153 = vmul.f32 %v430, %v1149
      %v1154 = vmul.f32 %v431, %v1149
      %v1155 = vmul.f32 %v432, %v1149
      %v1156 = vmul.f32 %v433, %v1149
      %v1157 = vmul.f32 %v434, %v1149
      %v1158 = vmul.f32 %v435, %v1149
      %v1159 = vmul.f32 %v436, %v1149
      %v1160 = vmul.f32 %v437, %v1149
      %v1161 = vmul.f32 %v438, %v1149
      %v1162 = vmul.f32 %v439, %v1149
      %v1163 = vmul.f32 %v440, %v1149
      %v1164 = vmul.f32 %v441, %v1149
      %v1165 = vmul.f32 %v442, %v1149
      %v1166 = vmul.f32 %v443, %v1149
      %v1167 = vmul.f32 %v444, %v1149
      %v1168 = vmul.f32 %v445, %v1149
      %v1169 = vmul.f32 %v446, %v1149
      %v1170 = vmul.f32 %v447, %v1149
      %v1171 = vmul.f32 %v448, %v1149
      %v1172 = vmul.f32 %v449, %v1149
      %v1173 = vmul.f32 %v450, %v1149
      %v1174 = vmul.f32 %v451, %v1149
      %v1175 = vmul.f32 %v452, %v1149
      %v1176 = vmul.f32 %v453, %v1149
      %v1177 = vmul.f32 %v454, %v1149
      %v1178 = vmul.f32 %v455, %v1149
      %v1179 = vmul.f32 %v456, %v1149
      %v1180 = vmul.f32 %v457, %v1149
      %v1181 = vmul.f32 %v458, %v1149
      %v1182 = vmul.f32 %v459, %v1149
      %v1183 = vmul.f32 %v460, %v1149
      %v1184 = vmul.f32 %v461, %v1149
      %v1185 = vmul.f32 %v462, %v1149
      %v1186 = vmul.f32 %v463, %v1149
      %v1187 = vmul.f32 %v464, %v1149
      %v1188 = vmul.f32 %v465, %v1149
      %v1189 = vmul.f32 %v466, %v1149
      %v1190 = vmul.f32 %v467, %v1149
      %v1191 = vmul.f32 %v468, %v1149
      %v1192 = vmul.f32 %v469, %v1149
      %v1193 = vmul.f32 %v470, %v1149
      %v1194 = vmul.f32 %v471, %v1149
      %v1195 = vmul.f32 %v472, %v1149
      %v1196 = vmul.f32 %v473, %v1149
      %v1197 = vmul.f32 %v474, %v1149
      %v1198 = vmul.f32 %v475, %v1149
      %v1199 = vmul.f32 %v476, %v1149
      %v1200 = vmul.f32 %v477, %v1149
      %v1201 = vmul.f32 %v478, %v1149
      %v1202 = vmul.f32 %v479, %v1149
      %v1203 = vmul.f32 %v480, %v1149
      %v1204 = vmul.f32 %v481, %v1149
      %v1205 = vmul.f32 %v482, %v1149
      %v1206 = vmul.f32 %v483, %v1149
      %v1207 = vmul.f32 %v484, %v1149
      %v1208 = vmul.f32 %v485, %v1149
      %v1209 = vmul.f32 %v486, %v1149
      %v1210 = vmul.f32 %v487, %v1149
      %v1211 = vmul.f32 %v488, %v1149
      %v1212 = vmul.f32 %v489, %v1149
      %v1213 = vmul.f32 %v490, %v1149
      %v1214 = vmul.f32 %v491, %v1149
      %v1215 = vmul.f32 %v492, %v1149
      %v1216 = vmul.f32 %v493, %v1149
      %v1217 = vmul.f32 %v494, %v1149
      %v1218 = vmul.f32 %v495, %v1149
      %v1219 = vmul.f32 %v496, %v1149
      %v1220 = vmul.f32 %v497, %v1149
      %v1221 = vmul.f32 %v498, %v1149
      %v1222 = vmul.f32 %v499, %v1149
      %v1223 = vmul.f32 %v500, %v1149
      %v1224 = vmul.f32 %v501, %v1149
      %v1225 = vmul.f32 %v502, %v1149
      %v1226 = vmul.f32 %v503, %v1149
      %v1227 = vmul.f32 %v504, %v1149
      %v1228 = vmul.f32 %v505, %v1149
      %v1229 = vmul.f32 %v506, %v1149
      %v1230 = vmul.f32 %v507, %v1149
      %v1231 = vmul.f32 %v508, %v1149
      %v1232 = vmul.f32 %v509, %v1149
      %v1233 = vmul.f32 %v510, %v1149
      %v1234 = vmul.f32 %v511, %v1149
      %v1235 = vmul.f32 %v512, %v1149
      %v1236 = vmul.f32 %v513, %v1149
      %v1237 = vmul.f32 %v514, %v1149
      %v1238 = vmul.f32 %v515, %v1149
      %v1239 = vmul.f32 %v516, %v1149
      %v1240 = vmul.f32 %v517, %v1149
      %v1241 = vmul.f32 %v518, %v1149
      %v1242 = vmul.f32 %v519, %v1149
      %v1243 = vmul.f32 %v520, %v1149
      %v1244 = vmul.f32 %v521, %v1149
      %v1245 = vmul.f32 %v522, %v1149
      %vm1342 = vcmask 1045504
      %v1343 = vrot.slane %v1150, 2
      %v1344 = vrot.slane %v1151, 2
      %v1345 = vsel %vm1342, %v1343, %v1344
      %v1346 = vrot.slane %v1152, 2
      %v1347 = vsel %vm1342, %v1344, %v1346
      %v1348 = vrot.slane %v1153, 2
      %v1349 = vrot.slane %v1154, 2
      %v1350 = vsel %vm1342, %v1348, %v1349
      %v1351 = vrot.slane %v1155, 2
      %v1352 = vsel %vm1342, %v1349, %v1351
      %v1353 = vrot.slane %v1156, 2
      %v1354 = vrot.slane %v1157, 2
      %v1355 = vsel %vm1342, %v1353, %v1354
      %v1356 = vrot.slane %v1158, 2
      %v1357 = vsel %vm1342, %v1354, %v1356
      %v1358 = vrot.slane %v1159, 2
      %v1359 = vrot.slane %v1160, 2
      %v1360 = vsel %vm1342, %v1358, %v1359
      %v1361 = vrot.slane %v1161, 2
      %v1362 = vsel %vm1342, %v1359, %v1361
      %v1363 = vrot.slane %v1162, 2
      %v1364 = vrot.slane %v1163, 2
      %v1365 = vsel %vm1342, %v1363, %v1364
      %v1366 = vrot.slane %v1164, 2
      %v1367 = vsel %vm1342, %v1364, %v1366
      %v1368 = vrot.slane %v1165, 2
      %v1369 = vrot.slane %v1166, 2
      %v1370 = vsel %vm1342, %v1368, %v1369
      %v1371 = vrot.slane %v1167, 2
      %v1372 = vsel %vm1342, %v1369, %v1371
      %v1373 = vrot.slane %v1168, 2
      %v1374 = vrot.slane %v1169, 2
      %v1375 = vsel %vm1342, %v1373, %v1374
      %v1376 = vrot.slane %v1170, 2
      %v1377 = vsel %vm1342, %v1374, %v1376
      %v1378 = vrot.slane %v1171, 2
      %v1379 = vrot.slane %v1172, 2
      %v1380 = vsel %vm1342, %v1378, %v1379
      %v1381 = vrot.slane %v1173, 2
      %v1382 = vsel %vm1342, %v1379, %v1381
      %v1383 = vrot.slane %v1174, 2
      %v1384 = vrot.slane %v1175, 2
      %v1385 = vsel %vm1342, %v1383, %v1384
      %v1386 = vrot.slane %v1176, 2
      %v1387 = vsel %vm1342, %v1384, %v1386
      %v1388 = vrot.slane %v1177, 2
      %v1389 = vrot.slane %v1178, 2
      %v1390 = vsel %vm1342, %v1388, %v1389
      %v1391 = vrot.slane %v1179, 2
      %v1392 = vsel %vm1342, %v1389, %v1391
      %v1393 = vrot.slane %v1180, 2
      %v1394 = vrot.slane %v1181, 2
      %v1395 = vsel %vm1342, %v1393, %v1394
      %v1396 = vrot.slane %v1182, 2
      %v1397 = vsel %vm1342, %v1394, %v1396
      %v1398 = vrot.slane %v1183, 2
      %v1399 = vrot.slane %v1184, 2
      %v1400 = vsel %vm1342, %v1398, %v1399
      %v1401 = vrot.slane %v1185, 2
      %v1402 = vsel %vm1342, %v1399, %v1401
      %v1403 = vrot.slane %v1186, 2
      %v1404 = vrot.slane %v1187, 2
      %v1405 = vsel %vm1342, %v1403, %v1404
      %v1406 = vrot.slane %v1188, 2
      %v1407 = vsel %vm1342, %v1404, %v1406
      %v1408 = vrot.slane %v1189, 2
      %v1409 = vrot.slane %v1190, 2
      %v1410 = vsel %vm1342, %v1408, %v1409
      %v1411 = vrot.slane %v1191, 2
      %v1412 = vsel %vm1342, %v1409, %v1411
      %v1413 = vrot.slane %v1192, 2
      %v1414 = vrot.slane %v1193, 2
      %v1415 = vsel %vm1342, %v1413, %v1414
      %v1416 = vrot.slane %v1194, 2
      %v1417 = vsel %vm1342, %v1414, %v1416
      %v1418 = vrot.slane %v1195, 2
      %v1419 = vrot.slane %v1196, 2
      %v1420 = vsel %vm1342, %v1418, %v1419
      %v1421 = vrot.slane %v1197, 2
      %v1422 = vsel %vm1342, %v1419, %v1421
      %v1423 = vrot.slane %v1198, 2
      %v1424 = vrot.slane %v1199, 2
      %v1425 = vsel %vm1342, %v1423, %v1424
      %v1426 = vrot.slane %v1200, 2
      %v1427 = vsel %vm1342, %v1424, %v1426
      %v1428 = vrot.slane %v1201, 2
      %v1429 = vrot.slane %v1202, 2
      %v1430 = vsel %vm1342, %v1428, %v1429
      %v1431 = vrot.slane %v1203, 2
      %v1432 = vsel %vm1342, %v1429, %v1431
      %v1433 = vrot.slane %v1204, 2
      %v1434 = vrot.slane %v1205, 2
      %v1435 = vsel %vm1342, %v1433, %v1434
      %v1436 = vrot.slane %v1206, 2
      %v1437 = vsel %vm1342, %v1434, %v1436
      %v1438 = vrot.slane %v1207, 2
      %v1439 = vrot.slane %v1208, 2
      %v1440 = vsel %vm1342, %v1438, %v1439
      %v1441 = vrot.slane %v1209, 2
      %v1442 = vsel %vm1342, %v1439, %v1441
      %v1443 = vrot.slane %v1210, 2
      %v1444 = vrot.slane %v1211, 2
      %v1445 = vsel %vm1342, %v1443, %v1444
      %v1446 = vrot.slane %v1212, 2
      %v1447 = vsel %vm1342, %v1444, %v1446
      %v1448 = vrot.slane %v1213, 2
      %v1449 = vrot.slane %v1214, 2
      %v1450 = vsel %vm1342, %v1448, %v1449
      %v1451 = vrot.slane %v1215, 2
      %v1452 = vsel %vm1342, %v1449, %v1451
      %v1453 = vrot.slane %v1216, 2
      %v1454 = vrot.slane %v1217, 2
      %v1455 = vsel %vm1342, %v1453, %v1454
      %v1456 = vrot.slane %v1218, 2
      %v1457 = vsel %vm1342, %v1454, %v1456
      %v1458 = vrot.slane %v1219, 2
      %v1459 = vrot.slane %v1220, 2
      %v1460 = vsel %vm1342, %v1458, %v1459
      %v1461 = vrot.slane %v1221, 2
      %v1462 = vsel %vm1342, %v1459, %v1461
      %v1463 = vrot.slane %v1222, 2
      %v1464 = vrot.slane %v1223, 2
      %v1465 = vsel %vm1342, %v1463, %v1464
      %v1466 = vrot.slane %v1224, 2
      %v1467 = vsel %vm1342, %v1464, %v1466
      %v1468 = vrot.slane %v1225, 2
      %v1469 = vrot.slane %v1226, 2
      %v1470 = vsel %vm1342, %v1468, %v1469
      %v1471 = vrot.slane %v1227, 2
      %v1472 = vsel %vm1342, %v1469, %v1471
      %v1473 = vrot.slane %v1228, 2
      %v1474 = vrot.slane %v1229, 2
      %v1475 = vsel %vm1342, %v1473, %v1474
      %v1476 = vrot.slane %v1230, 2
      %v1477 = vsel %vm1342, %v1474, %v1476
      %v1478 = vrot.slane %v1231, 2
      %v1479 = vrot.slane %v1232, 2
      %v1480 = vsel %vm1342, %v1478, %v1479
      %v1481 = vrot.slane %v1233, 2
      %v1482 = vsel %vm1342, %v1479, %v1481
      %v1483 = vrot.slane %v1234, 2
      %v1484 = vrot.slane %v1235, 2
      %v1485 = vsel %vm1342, %v1483, %v1484
      %v1486 = vrot.slane %v1236, 2
      %v1487 = vsel %vm1342, %v1484, %v1486
      %v1488 = vrot.slane %v1237, 2
      %v1489 = vrot.slane %v1238, 2
      %v1490 = vsel %vm1342, %v1488, %v1489
      %v1491 = vrot.slane %v1239, 2
      %v1492 = vsel %vm1342, %v1489, %v1491
      %v1493 = vrot.slane %v1240, 2
      %v1494 = vrot.slane %v1241, 2
      %v1495 = vsel %vm1342, %v1493, %v1494
      %v1496 = vrot.slane %v1242, 2
      %v1497 = vsel %vm1342, %v1494, %v1496
      %v1498 = vrot.slane %v1243, 2
      %v1499 = vrot.slane %v1244, 2
      %v1500 = vsel %vm1342, %v1498, %v1499
      %v1501 = vrot.slane %v1245, 2
      %v1502 = vsel %vm1342, %v1499, %v1501
      %v1567 = vadd.f32 %v1082, %v1345
      %v1568 = vadd.f32 %v1083, %v1347
      %v1569 = vadd.f32 %v1084, %v1350
      %v1570 = vadd.f32 %v1085, %v1352
      %v1571 = vadd.f32 %v1086, %v1355
      %v1572 = vadd.f32 %v1087, %v1357
      %v1573 = vadd.f32 %v1088, %v1360
      %v1574 = vadd.f32 %v1089, %v1362
      %v1575 = vadd.f32 %v1090, %v1365
      %v1576 = vadd.f32 %v1091, %v1367
      %v1577 = vadd.f32 %v1092, %v1370
      %v1578 = vadd.f32 %v1093, %v1372
      %v1579 = vadd.f32 %v1094, %v1375
      %v1580 = vadd.f32 %v1095, %v1377
      %v1581 = vadd.f32 %v1096, %v1380
      %v1582 = vadd.f32 %v1097, %v1382
      %v1583 = vadd.f32 %v1098, %v1385
      %v1584 = vadd.f32 %v1099, %v1387
      %v1585 = vadd.f32 %v1100, %v1390
      %v1586 = vadd.f32 %v1101, %v1392
      %v1587 = vadd.f32 %v1102, %v1395
      %v1588 = vadd.f32 %v1103, %v1397
      %v1589 = vadd.f32 %v1104, %v1400
      %v1590 = vadd.f32 %v1105, %v1402
      %v1591 = vadd.f32 %v1106, %v1405
      %v1592 = vadd.f32 %v1107, %v1407
      %v1593 = vadd.f32 %v1108, %v1410
      %v1594 = vadd.f32 %v1109, %v1412
      %v1595 = vadd.f32 %v1110, %v1415
      %v1596 = vadd.f32 %v1111, %v1417
      %v1597 = vadd.f32 %v1112, %v1420
      %v1598 = vadd.f32 %v1113, %v1422
      %v1599 = vadd.f32 %v1114, %v1425
      %v1600 = vadd.f32 %v1115, %v1427
      %v1601 = vadd.f32 %v1116, %v1430
      %v1602 = vadd.f32 %v1117, %v1432
      %v1603 = vadd.f32 %v1118, %v1435
      %v1604 = vadd.f32 %v1119, %v1437
      %v1605 = vadd.f32 %v1120, %v1440
      %v1606 = vadd.f32 %v1121, %v1442
      %v1607 = vadd.f32 %v1122, %v1445
      %v1608 = vadd.f32 %v1123, %v1447
      %v1609 = vadd.f32 %v1124, %v1450
      %v1610 = vadd.f32 %v1125, %v1452
      %v1611 = vadd.f32 %v1126, %v1455
      %v1612 = vadd.f32 %v1127, %v1457
      %v1613 = vadd.f32 %v1128, %v1460
      %v1614 = vadd.f32 %v1129, %v1462
      %v1615 = vadd.f32 %v1130, %v1465
      %v1616 = vadd.f32 %v1131, %v1467
      %v1617 = vadd.f32 %v1132, %v1470
      %v1618 = vadd.f32 %v1133, %v1472
      %v1619 = vadd.f32 %v1134, %v1475
      %v1620 = vadd.f32 %v1135, %v1477
      %v1621 = vadd.f32 %v1136, %v1480
      %v1622 = vadd.f32 %v1137, %v1482
      %v1623 = vadd.f32 %v1138, %v1485
      %v1624 = vadd.f32 %v1139, %v1487
      %v1625 = vadd.f32 %v1140, %v1490
      %v1626 = vadd.f32 %v1141, %v1492
      %v1627 = vadd.f32 %v1142, %v1495
      %v1628 = vadd.f32 %v1143, %v1497
      %v1629 = vadd.f32 %v1144, %v1500
      %v1630 = vadd.f32 %v1145, %v1502
      %v1631 = vlaneseq
      %v1632 = vshrl.u32 %v1631, 7
      %v1633 = vsub.s32 0, %v1632
      %v1634 = vrot.slane %v317, %v1633
      %v1635 = vmul.f32 %v430, %v1634
      %v1636 = vmul.f32 %v431, %v1634
      %v1637 = vmul.f32 %v433, %v1634
      %v1638 = vmul.f32 %v434, %v1634
      %v1639 = vmul.f32 %v436, %v1634
      %v1640 = vmul.f32 %v437, %v1634
      %v1641 = vmul.f32 %v439, %v1634
      %v1642 = vmul.f32 %v440, %v1634
      %v1643 = vmul.f32 %v442, %v1634
      %v1644 = vmul.f32 %v443, %v1634
      %v1645 = vmul.f32 %v445, %v1634
      %v1646 = vmul.f32 %v446, %v1634
      %v1647 = vmul.f32 %v448, %v1634
      %v1648 = vmul.f32 %v449, %v1634
      %v1649 = vmul.f32 %v451, %v1634
      %v1650 = vmul.f32 %v452, %v1634
      %v1651 = vmul.f32 %v454, %v1634
      %v1652 = vmul.f32 %v455, %v1634
      %v1653 = vmul.f32 %v457, %v1634
      %v1654 = vmul.f32 %v458, %v1634
      %v1655 = vmul.f32 %v460, %v1634
      %v1656 = vmul.f32 %v461, %v1634
      %v1657 = vmul.f32 %v463, %v1634
      %v1658 = vmul.f32 %v464, %v1634
      %v1659 = vmul.f32 %v466, %v1634
      %v1660 = vmul.f32 %v467, %v1634
      %v1661 = vmul.f32 %v469, %v1634
      %v1662 = vmul.f32 %v470, %v1634
      %v1663 = vmul.f32 %v472, %v1634
      %v1664 = vmul.f32 %v473, %v1634
      %v1665 = vmul.f32 %v475, %v1634
      %v1666 = vmul.f32 %v476, %v1634
      %v1667 = vmul.f32 %v478, %v1634
      %v1668 = vmul.f32 %v479, %v1634
      %v1669 = vmul.f32 %v481, %v1634
      %v1670 = vmul.f32 %v482, %v1634
      %v1671 = vmul.f32 %v484, %v1634
      %v1672 = vmul.f32 %v485, %v1634
      %v1673 = vmul.f32 %v487, %v1634
      %v1674 = vmul.f32 %v488, %v1634
      %v1675 = vmul.f32 %v490, %v1634
      %v1676 = vmul.f32 %v491, %v1634
      %v1677 = vmul.f32 %v493, %v1634
      %v1678 = vmul.f32 %v494, %v1634
      %v1679 = vmul.f32 %v496, %v1634
      %v1680 = vmul.f32 %v497, %v1634
      %v1681 = vmul.f32 %v499, %v1634
      %v1682 = vmul.f32 %v500, %v1634
      %v1683 = vmul.f32 %v502, %v1634
      %v1684 = vmul.f32 %v503, %v1634
      %v1685 = vmul.f32 %v505, %v1634
      %v1686 = vmul.f32 %v506, %v1634
      %v1687 = vmul.f32 %v508, %v1634
      %v1688 = vmul.f32 %v509, %v1634
      %v1689 = vmul.f32 %v511, %v1634
      %v1690 = vmul.f32 %v512, %v1634
      %v1691 = vmul.f32 %v514, %v1634
      %v1692 = vmul.f32 %v515, %v1634
      %v1693 = vmul.f32 %v517, %v1634
      %v1694 = vmul.f32 %v518, %v1634
      %v1695 = vmul.f32 %v520, %v1634
      %v1696 = vmul.f32 %v521, %v1634
      %v1697 = vmul.f32 %v523, %v1634
      %v1698 = vmul.f32 %v524, %v1634
      %v1699 = vadd.f32 %v1567, %v1635
      %v1700 = vadd.f32 %v1568, %v1636
      %v1701 = vadd.f32 %v1569, %v1637
      %v1702 = vadd.f32 %v1570, %v1638
      %v1703 = vadd.f32 %v1571, %v1639
      %v1704 = vadd.f32 %v1572, %v1640
      %v1705 = vadd.f32 %v1573, %v1641
      %v1706 = vadd.f32 %v1574, %v1642
      %v1707 = vadd.f32 %v1575, %v1643
      %v1708 = vadd.f32 %v1576, %v1644
      %v1709 = vadd.f32 %v1577, %v1645
      %v1710 = vadd.f32 %v1578, %v1646
      %v1711 = vadd.f32 %v1579, %v1647
      %v1712 = vadd.f32 %v1580, %v1648
      %v1713 = vadd.f32 %v1581, %v1649
      %v1714 = vadd.f32 %v1582, %v1650
      %v1715 = vadd.f32 %v1583, %v1651
      %v1716 = vadd.f32 %v1584, %v1652
      %v1717 = vadd.f32 %v1585, %v1653
      %v1718 = vadd.f32 %v1586, %v1654
      %v1719 = vadd.f32 %v1587, %v1655
      %v1720 = vadd.f32 %v1588, %v1656
      %v1721 = vadd.f32 %v1589, %v1657
      %v1722 = vadd.f32 %v1590, %v1658
      %v1723 = vadd.f32 %v1591, %v1659
      %v1724 = vadd.f32 %v1592, %v1660
      %v1725 = vadd.f32 %v1593, %v1661
      %v1726 = vadd.f32 %v1594, %v1662
      %v1727 = vadd.f32 %v1595, %v1663
      %v1728 = vadd.f32 %v1596, %v1664
      %v1729 = vadd.f32 %v1597, %v1665
      %v1730 = vadd.f32 %v1598, %v1666
      %v1731 = vadd.f32 %v1599, %v1667
      %v1732 = vadd.f32 %v1600, %v1668
      %v1733 = vadd.f32 %v1601, %v1669
      %v1734 = vadd.f32 %v1602, %v1670
      %v1735 = vadd.f32 %v1603, %v1671
      %v1736 = vadd.f32 %v1604, %v1672
      %v1737 = vadd.f32 %v1605, %v1673
      %v1738 = vadd.f32 %v1606, %v1674
      %v1739 = vadd.f32 %v1607, %v1675
      %v1740 = vadd.f32 %v1608, %v1676
      %v1741 = vadd.f32 %v1609, %v1677
      %v1742 = vadd.f32 %v1610, %v1678
      %v1743 = vadd.f32 %v1611, %v1679
      %v1744 = vadd.f32 %v1612, %v1680
      %v1745 = vadd.f32 %v1613, %v1681
      %v1746 = vadd.f32 %v1614, %v1682
      %v1747 = vadd.f32 %v1615, %v1683
      %v1748 = vadd.f32 %v1616, %v1684
      %v1749 = vadd.f32 %v1617, %v1685
      %v1750 = vadd.f32 %v1618, %v1686
      %v1751 = vadd.f32 %v1619, %v1687
      %v1752 = vadd.f32 %v1620, %v1688
      %v1753 = vadd.f32 %v1621, %v1689
      %v1754 = vadd.f32 %v1622, %v1690
      %v1755 = vadd.f32 %v1623, %v1691
      %v1756 = vadd.f32 %v1624, %v1692
      %v1757 = vadd.f32 %v1625, %v1693
      %v1758 = vadd.f32 %v1626, %v1694
      %v1759 = vadd.f32 %v1627, %v1695
      %v1760 = vadd.f32 %v1628, %v1696
      %v1761 = vadd.f32 %v1629, %v1697
      %v1762 = vadd.f32 %v1630, %v1698
      %v1763 = vlaneseq
      %v1764 = vshrl.u32 %v1763, 7
      %v1765 = vsub.s32 1, %v1764
      %v1766 = vrot.slane %v317, %v1765
      %v1767 = vmul.f32 %v430, %v1766
      %v1768 = vmul.f32 %v431, %v1766
      %v1769 = vmul.f32 %v432, %v1766
      %v1770 = vmul.f32 %v433, %v1766
      %v1771 = vmul.f32 %v434, %v1766
      %v1772 = vmul.f32 %v435, %v1766
      %v1773 = vmul.f32 %v436, %v1766
      %v1774 = vmul.f32 %v437, %v1766
      %v1775 = vmul.f32 %v438, %v1766
      %v1776 = vmul.f32 %v439, %v1766
      %v1777 = vmul.f32 %v440, %v1766
      %v1778 = vmul.f32 %v441, %v1766
      %v1779 = vmul.f32 %v442, %v1766
      %v1780 = vmul.f32 %v443, %v1766
      %v1781 = vmul.f32 %v444, %v1766
      %v1782 = vmul.f32 %v445, %v1766
      %v1783 = vmul.f32 %v446, %v1766
      %v1784 = vmul.f32 %v447, %v1766
      %v1785 = vmul.f32 %v448, %v1766
      %v1786 = vmul.f32 %v449, %v1766
      %v1787 = vmul.f32 %v450, %v1766
      %v1788 = vmul.f32 %v451, %v1766
      %v1789 = vmul.f32 %v452, %v1766
      %v1790 = vmul.f32 %v453, %v1766
      %v1791 = vmul.f32 %v454, %v1766
      %v1792 = vmul.f32 %v455, %v1766
      %v1793 = vmul.f32 %v456, %v1766
      %v1794 = vmul.f32 %v457, %v1766
      %v1795 = vmul.f32 %v458, %v1766
      %v1796 = vmul.f32 %v459, %v1766
      %v1797 = vmul.f32 %v460, %v1766
      %v1798 = vmul.f32 %v461, %v1766
      %v1799 = vmul.f32 %v462, %v1766
      %v1800 = vmul.f32 %v463, %v1766
      %v1801 = vmul.f32 %v464, %v1766
      %v1802 = vmul.f32 %v465, %v1766
      %v1803 = vmul.f32 %v466, %v1766
      %v1804 = vmul.f32 %v467, %v1766
      %v1805 = vmul.f32 %v468, %v1766
      %v1806 = vmul.f32 %v469, %v1766
      %v1807 = vmul.f32 %v470, %v1766
      %v1808 = vmul.f32 %v471, %v1766
      %v1809 = vmul.f32 %v472, %v1766
      %v1810 = vmul.f32 %v473, %v1766
      %v1811 = vmul.f32 %v474, %v1766
      %v1812 = vmul.f32 %v475, %v1766
      %v1813 = vmul.f32 %v476, %v1766
      %v1814 = vmul.f32 %v477, %v1766
      %v1815 = vmul.f32 %v478, %v1766
      %v1816 = vmul.f32 %v479, %v1766
      %v1817 = vmul.f32 %v480, %v1766
      %v1818 = vmul.f32 %v481, %v1766
      %v1819 = vmul.f32 %v482, %v1766
      %v1820 = vmul.f32 %v483, %v1766
      %v1821 = vmul.f32 %v484, %v1766
      %v1822 = vmul.f32 %v485, %v1766
      %v1823 = vmul.f32 %v486, %v1766
      %v1824 = vmul.f32 %v487, %v1766
      %v1825 = vmul.f32 %v488, %v1766
      %v1826 = vmul.f32 %v489, %v1766
      %v1827 = vmul.f32 %v490, %v1766
      %v1828 = vmul.f32 %v491, %v1766
      %v1829 = vmul.f32 %v492, %v1766
      %v1830 = vmul.f32 %v493, %v1766
      %v1831 = vmul.f32 %v494, %v1766
      %v1832 = vmul.f32 %v495, %v1766
      %v1833 = vmul.f32 %v496, %v1766
      %v1834 = vmul.f32 %v497, %v1766
      %v1835 = vmul.f32 %v498, %v1766
      %v1836 = vmul.f32 %v499, %v1766
      %v1837 = vmul.f32 %v500, %v1766
      %v1838 = vmul.f32 %v501, %v1766
      %v1839 = vmul.f32 %v502, %v1766
      %v1840 = vmul.f32 %v503, %v1766
      %v1841 = vmul.f32 %v504, %v1766
      %v1842 = vmul.f32 %v505, %v1766
      %v1843 = vmul.f32 %v506, %v1766
      %v1844 = vmul.f32 %v507, %v1766
      %v1845 = vmul.f32 %v508, %v1766
      %v1846 = vmul.f32 %v509, %v1766
      %v1847 = vmul.f32 %v510, %v1766
      %v1848 = vmul.f32 %v511, %v1766
      %v1849 = vmul.f32 %v512, %v1766
      %v1850 = vmul.f32 %v513, %v1766
      %v1851 = vmul.f32 %v514, %v1766
      %v1852 = vmul.f32 %v515, %v1766
      %v1853 = vmul.f32 %v516, %v1766
      %v1854 = vmul.f32 %v517, %v1766
      %v1855 = vmul.f32 %v518, %v1766
      %v1856 = vmul.f32 %v519, %v1766
      %v1857 = vmul.f32 %v520, %v1766
      %v1858 = vmul.f32 %v521, %v1766
      %v1859 = vmul.f32 %v522, %v1766
      %v1860 = vmul.f32 %v523, %v1766
      %v1861 = vmul.f32 %v524, %v1766
      %v1862 = vmul.f32 %v525, %v1766
      %v1959 = vrot.slane %v1767, 1
      %v1960 = vrot.slane %v1768, 1
      %v1961 = vsel %vm857, %v1959, %v1960
      %v1962 = vrot.slane %v1769, 1
      %v1963 = vsel %vm857, %v1960, %v1962
      %v1964 = vrot.slane %v1770, 1
      %v1965 = vrot.slane %v1771, 1
      %v1966 = vsel %vm857, %v1964, %v1965
      %v1967 = vrot.slane %v1772, 1
      %v1968 = vsel %vm857, %v1965, %v1967
      %v1969 = vrot.slane %v1773, 1
      %v1970 = vrot.slane %v1774, 1
      %v1971 = vsel %vm857, %v1969, %v1970
      %v1972 = vrot.slane %v1775, 1
      %v1973 = vsel %vm857, %v1970, %v1972
      %v1974 = vrot.slane %v1776, 1
      %v1975 = vrot.slane %v1777, 1
      %v1976 = vsel %vm857, %v1974, %v1975
      %v1977 = vrot.slane %v1778, 1
      %v1978 = vsel %vm857, %v1975, %v1977
      %v1979 = vrot.slane %v1779, 1
      %v1980 = vrot.slane %v1780, 1
      %v1981 = vsel %vm857, %v1979, %v1980
      %v1982 = vrot.slane %v1781, 1
      %v1983 = vsel %vm857, %v1980, %v1982
      %v1984 = vrot.slane %v1782, 1
      %v1985 = vrot.slane %v1783, 1
      %v1986 = vsel %vm857, %v1984, %v1985
      %v1987 = vrot.slane %v1784, 1
      %v1988 = vsel %vm857, %v1985, %v1987
      %v1989 = vrot.slane %v1785, 1
      %v1990 = vrot.slane %v1786, 1
      %v1991 = vsel %vm857, %v1989, %v1990
      %v1992 = vrot.slane %v1787, 1
      %v1993 = vsel %vm857, %v1990, %v1992
      %v1994 = vrot.slane %v1788, 1
      %v1995 = vrot.slane %v1789, 1
      %v1996 = vsel %vm857, %v1994, %v1995
      %v1997 = vrot.slane %v1790, 1
      %v1998 = vsel %vm857, %v1995, %v1997
      %v1999 = vrot.slane %v1791, 1
      %v2000 = vrot.slane %v1792, 1
      %v2001 = vsel %vm857, %v1999, %v2000
      %v2002 = vrot.slane %v1793, 1
      %v2003 = vsel %vm857, %v2000, %v2002
      %v2004 = vrot.slane %v1794, 1
      %v2005 = vrot.slane %v1795, 1
      %v2006 = vsel %vm857, %v2004, %v2005
      %v2007 = vrot.slane %v1796, 1
      %v2008 = vsel %vm857, %v2005, %v2007
      %v2009 = vrot.slane %v1797, 1
      %v2010 = vrot.slane %v1798, 1
      %v2011 = vsel %vm857, %v2009, %v2010
      %v2012 = vrot.slane %v1799, 1
      %v2013 = vsel %vm857, %v2010, %v2012
      %v2014 = vrot.slane %v1800, 1
      %v2015 = vrot.slane %v1801, 1
      %v2016 = vsel %vm857, %v2014, %v2015
      %v2017 = vrot.slane %v1802, 1
      %v2018 = vsel %vm857, %v2015, %v2017
      %v2019 = vrot.slane %v1803, 1
      %v2020 = vrot.slane %v1804, 1
      %v2021 = vsel %vm857, %v2019, %v2020
      %v2022 = vrot.slane %v1805, 1
      %v2023 = vsel %vm857, %v2020, %v2022
      %v2024 = vrot.slane %v1806, 1
      %v2025 = vrot.slane %v1807, 1
      %v2026 = vsel %vm857, %v2024, %v2025
      %v2027 = vrot.slane %v1808, 1
      %v2028 = vsel %vm857, %v2025, %v2027
      %v2029 = vrot.slane %v1809, 1
      %v2030 = vrot.slane %v1810, 1
      %v2031 = vsel %vm857, %v2029, %v2030
      %v2032 = vrot.slane %v1811, 1
      %v2033 = vsel %vm857, %v2030, %v2032
      %v2034 = vrot.slane %v1812, 1
      %v2035 = vrot.slane %v1813, 1
      %v2036 = vsel %vm857, %v2034, %v2035
      %v2037 = vrot.slane %v1814, 1
      %v2038 = vsel %vm857, %v2035, %v2037
      %v2039 = vrot.slane %v1815, 1
      %v2040 = vrot.slane %v1816, 1
      %v2041 = vsel %vm857, %v2039, %v2040
      %v2042 = vrot.slane %v1817, 1
      %v2043 = vsel %vm857, %v2040, %v2042
      %v2044 = vrot.slane %v1818, 1
      %v2045 = vrot.slane %v1819, 1
      %v2046 = vsel %vm857, %v2044, %v2045
      %v2047 = vrot.slane %v1820, 1
      %v2048 = vsel %vm857, %v2045, %v2047
      %v2049 = vrot.slane %v1821, 1
      %v2050 = vrot.slane %v1822, 1
      %v2051 = vsel %vm857, %v2049, %v2050
      %v2052 = vrot.slane %v1823, 1
      %v2053 = vsel %vm857, %v2050, %v2052
      %v2054 = vrot.slane %v1824, 1
      %v2055 = vrot.slane %v1825, 1
      %v2056 = vsel %vm857, %v2054, %v2055
      %v2057 = vrot.slane %v1826, 1
      %v2058 = vsel %vm857, %v2055, %v2057
      %v2059 = vrot.slane %v1827, 1
      %v2060 = vrot.slane %v1828, 1
      %v2061 = vsel %vm857, %v2059, %v2060
      %v2062 = vrot.slane %v1829, 1
      %v2063 = vsel %vm857, %v2060, %v2062
      %v2064 = vrot.slane %v1830, 1
      %v2065 = vrot.slane %v1831, 1
      %v2066 = vsel %vm857, %v2064, %v2065
      %v2067 = vrot.slane %v1832, 1
      %v2068 = vsel %vm857, %v2065, %v2067
      %v2069 = vrot.slane %v1833, 1
      %v2070 = vrot.slane %v1834, 1
      %v2071 = vsel %vm857, %v2069, %v2070
      %v2072 = vrot.slane %v1835, 1
      %v2073 = vsel %vm857, %v2070, %v2072
      %v2074 = vrot.slane %v1836, 1
      %v2075 = vrot.slane %v1837, 1
      %v2076 = vsel %vm857, %v2074, %v2075
      %v2077 = vrot.slane %v1838, 1
      %v2078 = vsel %vm857, %v2075, %v2077
      %v2079 = vrot.slane %v1839, 1
      %v2080 = vrot.slane %v1840, 1
      %v2081 = vsel %vm857, %v2079, %v2080
      %v2082 = vrot.slane %v1841, 1
      %v2083 = vsel %vm857, %v2080, %v2082
      %v2084 = vrot.slane %v1842, 1
      %v2085 = vrot.slane %v1843, 1
      %v2086 = vsel %vm857, %v2084, %v2085
      %v2087 = vrot.slane %v1844, 1
      %v2088 = vsel %vm857, %v2085, %v2087
      %v2089 = vrot.slane %v1845, 1
      %v2090 = vrot.slane %v1846, 1
      %v2091 = vsel %vm857, %v2089, %v2090
      %v2092 = vrot.slane %v1847, 1
      %v2093 = vsel %vm857, %v2090, %v2092
      %v2094 = vrot.slane %v1848, 1
      %v2095 = vrot.slane %v1849, 1
      %v2096 = vsel %vm857, %v2094, %v2095
      %v2097 = vrot.slane %v1850, 1
      %v2098 = vsel %vm857, %v2095, %v2097
      %v2099 = vrot.slane %v1851, 1
      %v2100 = vrot.slane %v1852, 1
      %v2101 = vsel %vm857, %v2099, %v2100
      %v2102 = vrot.slane %v1853, 1
      %v2103 = vsel %vm857, %v2100, %v2102
      %v2104 = vrot.slane %v1854, 1
      %v2105 = vrot.slane %v1855, 1
      %v2106 = vsel %vm857, %v2104, %v2105
      %v2107 = vrot.slane %v1856, 1
      %v2108 = vsel %vm857, %v2105, %v2107
      %v2109 = vrot.slane %v1857, 1
      %v2110 = vrot.slane %v1858, 1
      %v2111 = vsel %vm857, %v2109, %v2110
      %v2112 = vrot.slane %v1859, 1
      %v2113 = vsel %vm857, %v2110, %v2112
      %v2114 = vrot.slane %v1860, 1
      %v2115 = vrot.slane %v1861, 1
      %v2116 = vsel %vm857, %v2114, %v2115
      %v2117 = vrot.slane %v1862, 1
      %v2118 = vsel %vm857, %v2115, %v2117
      %v2183 = vadd.f32 %v1699, %v1961
      %v2184 = vadd.f32 %v1700, %v1963
      %v2185 = vadd.f32 %v1701, %v1966
      %v2186 = vadd.f32 %v1702, %v1968
      %v2187 = vadd.f32 %v1703, %v1971
      %v2188 = vadd.f32 %v1704, %v1973
      %v2189 = vadd.f32 %v1705, %v1976
      %v2190 = vadd.f32 %v1706, %v1978
      %v2191 = vadd.f32 %v1707, %v1981
      %v2192 = vadd.f32 %v1708, %v1983
      %v2193 = vadd.f32 %v1709, %v1986
      %v2194 = vadd.f32 %v1710, %v1988
      %v2195 = vadd.f32 %v1711, %v1991
      %v2196 = vadd.f32 %v1712, %v1993
      %v2197 = vadd.f32 %v1713, %v1996
      %v2198 = vadd.f32 %v1714, %v1998
      %v2199 = vadd.f32 %v1715, %v2001
      %v2200 = vadd.f32 %v1716, %v2003
      %v2201 = vadd.f32 %v1717, %v2006
      %v2202 = vadd.f32 %v1718, %v2008
      %v2203 = vadd.f32 %v1719, %v2011
      %v2204 = vadd.f32 %v1720, %v2013
      %v2205 = vadd.f32 %v1721, %v2016
      %v2206 = vadd.f32 %v1722, %v2018
      %v2207 = vadd.f32 %v1723, %v2021
      %v2208 = vadd.f32 %v1724, %v2023
      %v2209 = vadd.f32 %v1725, %v2026
      %v2210 = vadd.f32 %v1726, %v2028
      %v2211 = vadd.f32 %v1727, %v2031
      %v2212 = vadd.f32 %v1728, %v2033
      %v2213 = vadd.f32 %v1729, %v2036
      %v2214 = vadd.f32 %v1730, %v2038
      %v2215 = vadd.f32 %v1731, %v2041
      %v2216 = vadd.f32 %v1732, %v2043
      %v2217 = vadd.f32 %v1733, %v2046
      %v2218 = vadd.f32 %v1734, %v2048
      %v2219 = vadd.f32 %v1735, %v2051
      %v2220 = vadd.f32 %v1736, %v2053
      %v2221 = vadd.f32 %v1737, %v2056
      %v2222 = vadd.f32 %v1738, %v2058
      %v2223 = vadd.f32 %v1739, %v2061
      %v2224 = vadd.f32 %v1740, %v2063
      %v2225 = vadd.f32 %v1741, %v2066
      %v2226 = vadd.f32 %v1742, %v2068
      %v2227 = vadd.f32 %v1743, %v2071
      %v2228 = vadd.f32 %v1744, %v2073
      %v2229 = vadd.f32 %v1745, %v2076
      %v2230 = vadd.f32 %v1746, %v2078
      %v2231 = vadd.f32 %v1747, %v2081
      %v2232 = vadd.f32 %v1748, %v2083
      %v2233 = vadd.f32 %v1749, %v2086
      %v2234 = vadd.f32 %v1750, %v2088
      %v2235 = vadd.f32 %v1751, %v2091
      %v2236 = vadd.f32 %v1752, %v2093
      %v2237 = vadd.f32 %v1753, %v2096
      %v2238 = vadd.f32 %v1754, %v2098
      %v2239 = vadd.f32 %v1755, %v2101
      %v2240 = vadd.f32 %v1756, %v2103
      %v2241 = vadd.f32 %v1757, %v2106
      %v2242 = vadd.f32 %v1758, %v2108
      %v2243 = vadd.f32 %v1759, %v2111
      %v2244 = vadd.f32 %v1760, %v2113
      %v2245 = vadd.f32 %v1761, %v2116
      %v2246 = vadd.f32 %v1762, %v2118
      %v2247 = vlaneseq
      %v2248 = vshrl.u32 %v2247, 7
      %v2249 = vsub.s32 2, %v2248
      %v2250 = vrot.slane %v317, %v2249
      %v2251 = vmul.f32 %v430, %v2250
      %v2252 = vmul.f32 %v431, %v2250
      %v2253 = vmul.f32 %v432, %v2250
      %v2254 = vmul.f32 %v433, %v2250
      %v2255 = vmul.f32 %v434, %v2250
      %v2256 = vmul.f32 %v435, %v2250
      %v2257 = vmul.f32 %v436, %v2250
      %v2258 = vmul.f32 %v437, %v2250
      %v2259 = vmul.f32 %v438, %v2250
      %v2260 = vmul.f32 %v439, %v2250
      %v2261 = vmul.f32 %v440, %v2250
      %v2262 = vmul.f32 %v441, %v2250
      %v2263 = vmul.f32 %v442, %v2250
      %v2264 = vmul.f32 %v443, %v2250
      %v2265 = vmul.f32 %v444, %v2250
      %v2266 = vmul.f32 %v445, %v2250
      %v2267 = vmul.f32 %v446, %v2250
      %v2268 = vmul.f32 %v447, %v2250
      %v2269 = vmul.f32 %v448, %v2250
      %v2270 = vmul.f32 %v449, %v2250
      %v2271 = vmul.f32 %v450, %v2250
      %v2272 = vmul.f32 %v451, %v2250
      %v2273 = vmul.f32 %v452, %v2250
      %v2274 = vmul.f32 %v453, %v2250
      %v2275 = vmul.f32 %v454, %v2250
      %v2276 = vmul.f32 %v455, %v2250
      %v2277 = vmul.f32 %v456, %v2250
      %v2278 = vmul.f32 %v457, %v2250
      %v2279 = vmul.f32 %v458, %v2250
      %v2280 = vmul.f32 %v459, %v2250
      %v2281 = vmul.f32 %v460, %v2250
      %v2282 = vmul.f32 %v461, %v2250
      %v2283 = vmul.f32 %v462, %v2250
      %v2284 = vmul.f32 %v463, %v2250
      %v2285 = vmul.f32 %v464, %v2250
      %v2286 = vmul.f32 %v465, %v2250
      %v2287 = vmul.f32 %v466, %v2250
      %v2288 = vmul.f32 %v467, %v2250
      %v2289 = vmul.f32 %v468, %v2250
      %v2290 = vmul.f32 %v469, %v2250
      %v2291 = vmul.f32 %v470, %v2250
      %v2292 = vmul.f32 %v471, %v2250
      %v2293 = vmul.f32 %v472, %v2250
      %v2294 = vmul.f32 %v473, %v2250
      %v2295 = vmul.f32 %v474, %v2250
      %v2296 = vmul.f32 %v475, %v2250
      %v2297 = vmul.f32 %v476, %v2250
      %v2298 = vmul.f32 %v477, %v2250
      %v2299 = vmul.f32 %v478, %v2250
      %v2300 = vmul.f32 %v479, %v2250
      %v2301 = vmul.f32 %v480, %v2250
      %v2302 = vmul.f32 %v481, %v2250
      %v2303 = vmul.f32 %v482, %v2250
      %v2304 = vmul.f32 %v483, %v2250
      %v2305 = vmul.f32 %v484, %v2250
      %v2306 = vmul.f32 %v485, %v2250
      %v2307 = vmul.f32 %v486, %v2250
      %v2308 = vmul.f32 %v487, %v2250
      %v2309 = vmul.f32 %v488, %v2250
      %v2310 = vmul.f32 %v489, %v2250
      %v2311 = vmul.f32 %v490, %v2250
      %v2312 = vmul.f32 %v491, %v2250
      %v2313 = vmul.f32 %v492, %v2250
      %v2314 = vmul.f32 %v493, %v2250
      %v2315 = vmul.f32 %v494, %v2250
      %v2316 = vmul.f32 %v495, %v2250
      %v2317 = vmul.f32 %v496, %v2250
      %v2318 = vmul.f32 %v497, %v2250
      %v2319 = vmul.f32 %v498, %v2250
      %v2320 = vmul.f32 %v499, %v2250
      %v2321 = vmul.f32 %v500, %v2250
      %v2322 = vmul.f32 %v501, %v2250
      %v2323 = vmul.f32 %v502, %v2250
      %v2324 = vmul.f32 %v503, %v2250
      %v2325 = vmul.f32 %v504, %v2250
      %v2326 = vmul.f32 %v505, %v2250
      %v2327 = vmul.f32 %v506, %v2250
      %v2328 = vmul.f32 %v507, %v2250
      %v2329 = vmul.f32 %v508, %v2250
      %v2330 = vmul.f32 %v509, %v2250
      %v2331 = vmul.f32 %v510, %v2250
      %v2332 = vmul.f32 %v511, %v2250
      %v2333 = vmul.f32 %v512, %v2250
      %v2334 = vmul.f32 %v513, %v2250
      %v2335 = vmul.f32 %v514, %v2250
      %v2336 = vmul.f32 %v515, %v2250
      %v2337 = vmul.f32 %v516, %v2250
      %v2338 = vmul.f32 %v517, %v2250
      %v2339 = vmul.f32 %v518, %v2250
      %v2340 = vmul.f32 %v519, %v2250
      %v2341 = vmul.f32 %v520, %v2250
      %v2342 = vmul.f32 %v521, %v2250
      %v2343 = vmul.f32 %v522, %v2250
      %v2344 = vmul.f32 %v523, %v2250
      %v2345 = vmul.f32 %v524, %v2250
      %v2346 = vmul.f32 %v525, %v2250
      %v2443 = vrot.slane %v2251, 2
      %v2444 = vrot.slane %v2252, 2
      %v2445 = vsel %vm1342, %v2443, %v2444
      %v2446 = vrot.slane %v2253, 2
      %v2447 = vsel %vm1342, %v2444, %v2446
      %v2448 = vrot.slane %v2254, 2
      %v2449 = vrot.slane %v2255, 2
      %v2450 = vsel %vm1342, %v2448, %v2449
      %v2451 = vrot.slane %v2256, 2
      %v2452 = vsel %vm1342, %v2449, %v2451
      %v2453 = vrot.slane %v2257, 2
      %v2454 = vrot.slane %v2258, 2
      %v2455 = vsel %vm1342, %v2453, %v2454
      %v2456 = vrot.slane %v2259, 2
      %v2457 = vsel %vm1342, %v2454, %v2456
      %v2458 = vrot.slane %v2260, 2
      %v2459 = vrot.slane %v2261, 2
      %v2460 = vsel %vm1342, %v2458, %v2459
      %v2461 = vrot.slane %v2262, 2
      %v2462 = vsel %vm1342, %v2459, %v2461
      %v2463 = vrot.slane %v2263, 2
      %v2464 = vrot.slane %v2264, 2
      %v2465 = vsel %vm1342, %v2463, %v2464
      %v2466 = vrot.slane %v2265, 2
      %v2467 = vsel %vm1342, %v2464, %v2466
      %v2468 = vrot.slane %v2266, 2
      %v2469 = vrot.slane %v2267, 2
      %v2470 = vsel %vm1342, %v2468, %v2469
      %v2471 = vrot.slane %v2268, 2
      %v2472 = vsel %vm1342, %v2469, %v2471
      %v2473 = vrot.slane %v2269, 2
      %v2474 = vrot.slane %v2270, 2
      %v2475 = vsel %vm1342, %v2473, %v2474
      %v2476 = vrot.slane %v2271, 2
      %v2477 = vsel %vm1342, %v2474, %v2476
      %v2478 = vrot.slane %v2272, 2
      %v2479 = vrot.slane %v2273, 2
      %v2480 = vsel %vm1342, %v2478, %v2479
      %v2481 = vrot.slane %v2274, 2
      %v2482 = vsel %vm1342, %v2479, %v2481
      %v2483 = vrot.slane %v2275, 2
      %v2484 = vrot.slane %v2276, 2
      %v2485 = vsel %vm1342, %v2483, %v2484
      %v2486 = vrot.slane %v2277, 2
      %v2487 = vsel %vm1342, %v2484, %v2486
      %v2488 = vrot.slane %v2278, 2
      %v2489 = vrot.slane %v2279, 2
      %v2490 = vsel %vm1342, %v2488, %v2489
      %v2491 = vrot.slane %v2280, 2
      %v2492 = vsel %vm1342, %v2489, %v2491
      %v2493 = vrot.slane %v2281, 2
      %v2494 = vrot.slane %v2282, 2
      %v2495 = vsel %vm1342, %v2493, %v2494
      %v2496 = vrot.slane %v2283, 2
      %v2497 = vsel %vm1342, %v2494, %v2496
      %v2498 = vrot.slane %v2284, 2
      %v2499 = vrot.slane %v2285, 2
      %v2500 = vsel %vm1342, %v2498, %v2499
      %v2501 = vrot.slane %v2286, 2
      %v2502 = vsel %vm1342, %v2499, %v2501
      %v2503 = vrot.slane %v2287, 2
      %v2504 = vrot.slane %v2288, 2
      %v2505 = vsel %vm1342, %v2503, %v2504
      %v2506 = vrot.slane %v2289, 2
      %v2507 = vsel %vm1342, %v2504, %v2506
      %v2508 = vrot.slane %v2290, 2
      %v2509 = vrot.slane %v2291, 2
      %v2510 = vsel %vm1342, %v2508, %v2509
      %v2511 = vrot.slane %v2292, 2
      %v2512 = vsel %vm1342, %v2509, %v2511
      %v2513 = vrot.slane %v2293, 2
      %v2514 = vrot.slane %v2294, 2
      %v2515 = vsel %vm1342, %v2513, %v2514
      %v2516 = vrot.slane %v2295, 2
      %v2517 = vsel %vm1342, %v2514, %v2516
      %v2518 = vrot.slane %v2296, 2
      %v2519 = vrot.slane %v2297, 2
      %v2520 = vsel %vm1342, %v2518, %v2519
      %v2521 = vrot.slane %v2298, 2
      %v2522 = vsel %vm1342, %v2519, %v2521
      %v2523 = vrot.slane %v2299, 2
      %v2524 = vrot.slane %v2300, 2
      %v2525 = vsel %vm1342, %v2523, %v2524
      %v2526 = vrot.slane %v2301, 2
      %v2527 = vsel %vm1342, %v2524, %v2526
      %v2528 = vrot.slane %v2302, 2
      %v2529 = vrot.slane %v2303, 2
      %v2530 = vsel %vm1342, %v2528, %v2529
      %v2531 = vrot.slane %v2304, 2
      %v2532 = vsel %vm1342, %v2529, %v2531
      %v2533 = vrot.slane %v2305, 2
      %v2534 = vrot.slane %v2306, 2
      %v2535 = vsel %vm1342, %v2533, %v2534
      %v2536 = vrot.slane %v2307, 2
      %v2537 = vsel %vm1342, %v2534, %v2536
      %v2538 = vrot.slane %v2308, 2
      %v2539 = vrot.slane %v2309, 2
      %v2540 = vsel %vm1342, %v2538, %v2539
      %v2541 = vrot.slane %v2310, 2
      %v2542 = vsel %vm1342, %v2539, %v2541
      %v2543 = vrot.slane %v2311, 2
      %v2544 = vrot.slane %v2312, 2
      %v2545 = vsel %vm1342, %v2543, %v2544
      %v2546 = vrot.slane %v2313, 2
      %v2547 = vsel %vm1342, %v2544, %v2546
      %v2548 = vrot.slane %v2314, 2
      %v2549 = vrot.slane %v2315, 2
      %v2550 = vsel %vm1342, %v2548, %v2549
      %v2551 = vrot.slane %v2316, 2
      %v2552 = vsel %vm1342, %v2549, %v2551
      %v2553 = vrot.slane %v2317, 2
      %v2554 = vrot.slane %v2318, 2
      %v2555 = vsel %vm1342, %v2553, %v2554
      %v2556 = vrot.slane %v2319, 2
      %v2557 = vsel %vm1342, %v2554, %v2556
      %v2558 = vrot.slane %v2320, 2
      %v2559 = vrot.slane %v2321, 2
      %v2560 = vsel %vm1342, %v2558, %v2559
      %v2561 = vrot.slane %v2322, 2
      %v2562 = vsel %vm1342, %v2559, %v2561
      %v2563 = vrot.slane %v2323, 2
      %v2564 = vrot.slane %v2324, 2
      %v2565 = vsel %vm1342, %v2563, %v2564
      %v2566 = vrot.slane %v2325, 2
      %v2567 = vsel %vm1342, %v2564, %v2566
      %v2568 = vrot.slane %v2326, 2
      %v2569 = vrot.slane %v2327, 2
      %v2570 = vsel %vm1342, %v2568, %v2569
      %v2571 = vrot.slane %v2328, 2
      %v2572 = vsel %vm1342, %v2569, %v2571
      %v2573 = vrot.slane %v2329, 2
      %v2574 = vrot.slane %v2330, 2
      %v2575 = vsel %vm1342, %v2573, %v2574
      %v2576 = vrot.slane %v2331, 2
      %v2577 = vsel %vm1342, %v2574, %v2576
      %v2578 = vrot.slane %v2332, 2
      %v2579 = vrot.slane %v2333, 2
      %v2580 = vsel %vm1342, %v2578, %v2579
      %v2581 = vrot.slane %v2334, 2
      %v2582 = vsel %vm1342, %v2579, %v2581
      %v2583 = vrot.slane %v2335, 2
      %v2584 = vrot.slane %v2336, 2
      %v2585 = vsel %vm1342, %v2583, %v2584
      %v2586 = vrot.slane %v2337, 2
      %v2587 = vsel %vm1342, %v2584, %v2586
      %v2588 = vrot.slane %v2338, 2
      %v2589 = vrot.slane %v2339, 2
      %v2590 = vsel %vm1342, %v2588, %v2589
      %v2591 = vrot.slane %v2340, 2
      %v2592 = vsel %vm1342, %v2589, %v2591
      %v2593 = vrot.slane %v2341, 2
      %v2594 = vrot.slane %v2342, 2
      %v2595 = vsel %vm1342, %v2593, %v2594
      %v2596 = vrot.slane %v2343, 2
      %v2597 = vsel %vm1342, %v2594, %v2596
      %v2598 = vrot.slane %v2344, 2
      %v2599 = vrot.slane %v2345, 2
      %v2600 = vsel %vm1342, %v2598, %v2599
      %v2601 = vrot.slane %v2346, 2
      %v2602 = vsel %vm1342, %v2599, %v2601
      %v2667 = vadd.f32 %v2183, %v2445
      %v2668 = vadd.f32 %v2184, %v2447
      %v2669 = vadd.f32 %v2185, %v2450
      %v2670 = vadd.f32 %v2186, %v2452
      %v2671 = vadd.f32 %v2187, %v2455
      %v2672 = vadd.f32 %v2188, %v2457
      %v2673 = vadd.f32 %v2189, %v2460
      %v2674 = vadd.f32 %v2190, %v2462
      %v2675 = vadd.f32 %v2191, %v2465
      %v2676 = vadd.f32 %v2192, %v2467
      %v2677 = vadd.f32 %v2193, %v2470
      %v2678 = vadd.f32 %v2194, %v2472
      %v2679 = vadd.f32 %v2195, %v2475
      %v2680 = vadd.f32 %v2196, %v2477
      %v2681 = vadd.f32 %v2197, %v2480
      %v2682 = vadd.f32 %v2198, %v2482
      %v2683 = vadd.f32 %v2199, %v2485
      %v2684 = vadd.f32 %v2200, %v2487
      %v2685 = vadd.f32 %v2201, %v2490
      %v2686 = vadd.f32 %v2202, %v2492
      %v2687 = vadd.f32 %v2203, %v2495
      %v2688 = vadd.f32 %v2204, %v2497
      %v2689 = vadd.f32 %v2205, %v2500
      %v2690 = vadd.f32 %v2206, %v2502
      %v2691 = vadd.f32 %v2207, %v2505
      %v2692 = vadd.f32 %v2208, %v2507
      %v2693 = vadd.f32 %v2209, %v2510
      %v2694 = vadd.f32 %v2210, %v2512
      %v2695 = vadd.f32 %v2211, %v2515
      %v2696 = vadd.f32 %v2212, %v2517
      %v2697 = vadd.f32 %v2213, %v2520
      %v2698 = vadd.f32 %v2214, %v2522
      %v2699 = vadd.f32 %v2215, %v2525
      %v2700 = vadd.f32 %v2216, %v2527
      %v2701 = vadd.f32 %v2217, %v2530
      %v2702 = vadd.f32 %v2218, %v2532
      %v2703 = vadd.f32 %v2219, %v2535
      %v2704 = vadd.f32 %v2220, %v2537
      %v2705 = vadd.f32 %v2221, %v2540
      %v2706 = vadd.f32 %v2222, %v2542
      %v2707 = vadd.f32 %v2223, %v2545
      %v2708 = vadd.f32 %v2224, %v2547
      %v2709 = vadd.f32 %v2225, %v2550
      %v2710 = vadd.f32 %v2226, %v2552
      %v2711 = vadd.f32 %v2227, %v2555
      %v2712 = vadd.f32 %v2228, %v2557
      %v2713 = vadd.f32 %v2229, %v2560
      %v2714 = vadd.f32 %v2230, %v2562
      %v2715 = vadd.f32 %v2231, %v2565
      %v2716 = vadd.f32 %v2232, %v2567
      %v2717 = vadd.f32 %v2233, %v2570
      %v2718 = vadd.f32 %v2234, %v2572
      %v2719 = vadd.f32 %v2235, %v2575
      %v2720 = vadd.f32 %v2236, %v2577
      %v2721 = vadd.f32 %v2237, %v2580
      %v2722 = vadd.f32 %v2238, %v2582
      %v2723 = vadd.f32 %v2239, %v2585
      %v2724 = vadd.f32 %v2240, %v2587
      %v2725 = vadd.f32 %v2241, %v2590
      %v2726 = vadd.f32 %v2242, %v2592
      %v2727 = vadd.f32 %v2243, %v2595
      %v2728 = vadd.f32 %v2244, %v2597
      %v2729 = vadd.f32 %v2245, %v2600
      %v2730 = vadd.f32 %v2246, %v2602
      %v2731 = vlaneseq
      %v2732 = vshrl.u32 %v2731, 7
      %v2733 = vsub.s32 0, %v2732
      %v2734 = vrot.slane %v318, %v2733
      %v2735 = vmul.f32 %v433, %v2734
      %v2736 = vmul.f32 %v434, %v2734
      %v2737 = vmul.f32 %v436, %v2734
      %v2738 = vmul.f32 %v437, %v2734
      %v2739 = vmul.f32 %v439, %v2734
      %v2740 = vmul.f32 %v440, %v2734
      %v2741 = vmul.f32 %v442, %v2734
      %v2742 = vmul.f32 %v443, %v2734
      %v2743 = vmul.f32 %v445, %v2734
      %v2744 = vmul.f32 %v446, %v2734
      %v2745 = vmul.f32 %v448, %v2734
      %v2746 = vmul.f32 %v449, %v2734
      %v2747 = vmul.f32 %v451, %v2734
      %v2748 = vmul.f32 %v452, %v2734
      %v2749 = vmul.f32 %v454, %v2734
      %v2750 = vmul.f32 %v455, %v2734
      %v2751 = vmul.f32 %v457, %v2734
      %v2752 = vmul.f32 %v458, %v2734
      %v2753 = vmul.f32 %v460, %v2734
      %v2754 = vmul.f32 %v461, %v2734
      %v2755 = vmul.f32 %v463, %v2734
      %v2756 = vmul.f32 %v464, %v2734
      %v2757 = vmul.f32 %v466, %v2734
      %v2758 = vmul.f32 %v467, %v2734
      %v2759 = vmul.f32 %v469, %v2734
      %v2760 = vmul.f32 %v470, %v2734
      %v2761 = vmul.f32 %v472, %v2734
      %v2762 = vmul.f32 %v473, %v2734
      %v2763 = vmul.f32 %v475, %v2734
      %v2764 = vmul.f32 %v476, %v2734
      %v2765 = vmul.f32 %v478, %v2734
      %v2766 = vmul.f32 %v479, %v2734
      %v2767 = vmul.f32 %v481, %v2734
      %v2768 = vmul.f32 %v482, %v2734
      %v2769 = vmul.f32 %v484, %v2734
      %v2770 = vmul.f32 %v485, %v2734
      %v2771 = vmul.f32 %v487, %v2734
      %v2772 = vmul.f32 %v488, %v2734
      %v2773 = vmul.f32 %v490, %v2734
      %v2774 = vmul.f32 %v491, %v2734
      %v2775 = vmul.f32 %v493, %v2734
      %v2776 = vmul.f32 %v494, %v2734
      %v2777 = vmul.f32 %v496, %v2734
      %v2778 = vmul.f32 %v497, %v2734
      %v2779 = vmul.f32 %v499, %v2734
      %v2780 = vmul.f32 %v500, %v2734
      %v2781 = vmul.f32 %v502, %v2734
      %v2782 = vmul.f32 %v503, %v2734
      %v2783 = vmul.f32 %v505, %v2734
      %v2784 = vmul.f32 %v506, %v2734
      %v2785 = vmul.f32 %v508, %v2734
      %v2786 = vmul.f32 %v509, %v2734
      %v2787 = vmul.f32 %v511, %v2734
      %v2788 = vmul.f32 %v512, %v2734
      %v2789 = vmul.f32 %v514, %v2734
      %v2790 = vmul.f32 %v515, %v2734
      %v2791 = vmul.f32 %v517, %v2734
      %v2792 = vmul.f32 %v518, %v2734
      %v2793 = vmul.f32 %v520, %v2734
      %v2794 = vmul.f32 %v521, %v2734
      %v2795 = vmul.f32 %v523, %v2734
      %v2796 = vmul.f32 %v524, %v2734
      %v2797 = vmul.f32 %v526, %v2734
      %v2798 = vmul.f32 %v527, %v2734
      %v2799 = vadd.f32 %v2667, %v2735
      %v2800 = vadd.f32 %v2668, %v2736
      %v2801 = vadd.f32 %v2669, %v2737
      %v2802 = vadd.f32 %v2670, %v2738
      %v2803 = vadd.f32 %v2671, %v2739
      %v2804 = vadd.f32 %v2672, %v2740
      %v2805 = vadd.f32 %v2673, %v2741
      %v2806 = vadd.f32 %v2674, %v2742
      %v2807 = vadd.f32 %v2675, %v2743
      %v2808 = vadd.f32 %v2676, %v2744
      %v2809 = vadd.f32 %v2677, %v2745
      %v2810 = vadd.f32 %v2678, %v2746
      %v2811 = vadd.f32 %v2679, %v2747
      %v2812 = vadd.f32 %v2680, %v2748
      %v2813 = vadd.f32 %v2681, %v2749
      %v2814 = vadd.f32 %v2682, %v2750
      %v2815 = vadd.f32 %v2683, %v2751
      %v2816 = vadd.f32 %v2684, %v2752
      %v2817 = vadd.f32 %v2685, %v2753
      %v2818 = vadd.f32 %v2686, %v2754
      %v2819 = vadd.f32 %v2687, %v2755
      %v2820 = vadd.f32 %v2688, %v2756
      %v2821 = vadd.f32 %v2689, %v2757
      %v2822 = vadd.f32 %v2690, %v2758
      %v2823 = vadd.f32 %v2691, %v2759
      %v2824 = vadd.f32 %v2692, %v2760
      %v2825 = vadd.f32 %v2693, %v2761
      %v2826 = vadd.f32 %v2694, %v2762
      %v2827 = vadd.f32 %v2695, %v2763
      %v2828 = vadd.f32 %v2696, %v2764
      %v2829 = vadd.f32 %v2697, %v2765
      %v2830 = vadd.f32 %v2698, %v2766
      %v2831 = vadd.f32 %v2699, %v2767
      %v2832 = vadd.f32 %v2700, %v2768
      %v2833 = vadd.f32 %v2701, %v2769
      %v2834 = vadd.f32 %v2702, %v2770
      %v2835 = vadd.f32 %v2703, %v2771
      %v2836 = vadd.f32 %v2704, %v2772
      %v2837 = vadd.f32 %v2705, %v2773
      %v2838 = vadd.f32 %v2706, %v2774
      %v2839 = vadd.f32 %v2707, %v2775
      %v2840 = vadd.f32 %v2708, %v2776
      %v2841 = vadd.f32 %v2709, %v2777
      %v2842 = vadd.f32 %v2710, %v2778
      %v2843 = vadd.f32 %v2711, %v2779
      %v2844 = vadd.f32 %v2712, %v2780
      %v2845 = vadd.f32 %v2713, %v2781
      %v2846 = vadd.f32 %v2714, %v2782
      %v2847 = vadd.f32 %v2715, %v2783
      %v2848 = vadd.f32 %v2716, %v2784
      %v2849 = vadd.f32 %v2717, %v2785
      %v2850 = vadd.f32 %v2718, %v2786
      %v2851 = vadd.f32 %v2719, %v2787
      %v2852 = vadd.f32 %v2720, %v2788
      %v2853 = vadd.f32 %v2721, %v2789
      %v2854 = vadd.f32 %v2722, %v2790
      %v2855 = vadd.f32 %v2723, %v2791
      %v2856 = vadd.f32 %v2724, %v2792
      %v2857 = vadd.f32 %v2725, %v2793
      %v2858 = vadd.f32 %v2726, %v2794
      %v2859 = vadd.f32 %v2727, %v2795
      %v2860 = vadd.f32 %v2728, %v2796
      %v2861 = vadd.f32 %v2729, %v2797
      %v2862 = vadd.f32 %v2730, %v2798
      %v2863 = vlaneseq
      %v2864 = vshrl.u32 %v2863, 7
      %v2865 = vsub.s32 1, %v2864
      %v2866 = vrot.slane %v318, %v2865
      %v2867 = vmul.f32 %v433, %v2866
      %v2868 = vmul.f32 %v434, %v2866
      %v2869 = vmul.f32 %v435, %v2866
      %v2870 = vmul.f32 %v436, %v2866
      %v2871 = vmul.f32 %v437, %v2866
      %v2872 = vmul.f32 %v438, %v2866
      %v2873 = vmul.f32 %v439, %v2866
      %v2874 = vmul.f32 %v440, %v2866
      %v2875 = vmul.f32 %v441, %v2866
      %v2876 = vmul.f32 %v442, %v2866
      %v2877 = vmul.f32 %v443, %v2866
      %v2878 = vmul.f32 %v444, %v2866
      %v2879 = vmul.f32 %v445, %v2866
      %v2880 = vmul.f32 %v446, %v2866
      %v2881 = vmul.f32 %v447, %v2866
      %v2882 = vmul.f32 %v448, %v2866
      %v2883 = vmul.f32 %v449, %v2866
      %v2884 = vmul.f32 %v450, %v2866
      %v2885 = vmul.f32 %v451, %v2866
      %v2886 = vmul.f32 %v452, %v2866
      %v2887 = vmul.f32 %v453, %v2866
      %v2888 = vmul.f32 %v454, %v2866
      %v2889 = vmul.f32 %v455, %v2866
      %v2890 = vmul.f32 %v456, %v2866
      %v2891 = vmul.f32 %v457, %v2866
      %v2892 = vmul.f32 %v458, %v2866
      %v2893 = vmul.f32 %v459, %v2866
      %v2894 = vmul.f32 %v460, %v2866
      %v2895 = vmul.f32 %v461, %v2866
      %v2896 = vmul.f32 %v462, %v2866
      %v2897 = vmul.f32 %v463, %v2866
      %v2898 = vmul.f32 %v464, %v2866
      %v2899 = vmul.f32 %v465, %v2866
      %v2900 = vmul.f32 %v466, %v2866
      %v2901 = vmul.f32 %v467, %v2866
      %v2902 = vmul.f32 %v468, %v2866
      %v2903 = vmul.f32 %v469, %v2866
      %v2904 = vmul.f32 %v470, %v2866
      %v2905 = vmul.f32 %v471, %v2866
      %v2906 = vmul.f32 %v472, %v2866
      %v2907 = vmul.f32 %v473, %v2866
      %v2908 = vmul.f32 %v474, %v2866
      %v2909 = vmul.f32 %v475, %v2866
      %v2910 = vmul.f32 %v476, %v2866
      %v2911 = vmul.f32 %v477, %v2866
      %v2912 = vmul.f32 %v478, %v2866
      %v2913 = vmul.f32 %v479, %v2866
      %v2914 = vmul.f32 %v480, %v2866
      %v2915 = vmul.f32 %v481, %v2866
      %v2916 = vmul.f32 %v482, %v2866
      %v2917 = vmul.f32 %v483, %v2866
      %v2918 = vmul.f32 %v484, %v2866
      %v2919 = vmul.f32 %v485, %v2866
      %v2920 = vmul.f32 %v486, %v2866
      %v2921 = vmul.f32 %v487, %v2866
      %v2922 = vmul.f32 %v488, %v2866
      %v2923 = vmul.f32 %v489, %v2866
      %v2924 = vmul.f32 %v490, %v2866
      %v2925 = vmul.f32 %v491, %v2866
      %v2926 = vmul.f32 %v492, %v2866
      %v2927 = vmul.f32 %v493, %v2866
      %v2928 = vmul.f32 %v494, %v2866
      %v2929 = vmul.f32 %v495, %v2866
      %v2930 = vmul.f32 %v496, %v2866
      %v2931 = vmul.f32 %v497, %v2866
      %v2932 = vmul.f32 %v498, %v2866
      %v2933 = vmul.f32 %v499, %v2866
      %v2934 = vmul.f32 %v500, %v2866
      %v2935 = vmul.f32 %v501, %v2866
      %v2936 = vmul.f32 %v502, %v2866
      %v2937 = vmul.f32 %v503, %v2866
      %v2938 = vmul.f32 %v504, %v2866
      %v2939 = vmul.f32 %v505, %v2866
      %v2940 = vmul.f32 %v506, %v2866
      %v2941 = vmul.f32 %v507, %v2866
      %v2942 = vmul.f32 %v508, %v2866
      %v2943 = vmul.f32 %v509, %v2866
      %v2944 = vmul.f32 %v510, %v2866
      %v2945 = vmul.f32 %v511, %v2866
      %v2946 = vmul.f32 %v512, %v2866
      %v2947 = vmul.f32 %v513, %v2866
      %v2948 = vmul.f32 %v514, %v2866
      %v2949 = vmul.f32 %v515, %v2866
      %v2950 = vmul.f32 %v516, %v2866
      %v2951 = vmul.f32 %v517, %v2866
      %v2952 = vmul.f32 %v518, %v2866
      %v2953 = vmul.f32 %v519, %v2866
      %v2954 = vmul.f32 %v520, %v2866
      %v2955 = vmul.f32 %v521, %v2866
      %v2956 = vmul.f32 %v522, %v2866
      %v2957 = vmul.f32 %v523, %v2866
      %v2958 = vmul.f32 %v524, %v2866
      %v2959 = vmul.f32 %v525, %v2866
      %v2960 = vmul.f32 %v526, %v2866
      %v2961 = vmul.f32 %v527, %v2866
      %v2962 = vmul.f32 %v528, %v2866
      %v3059 = vrot.slane %v2867, 1
      %v3060 = vrot.slane %v2868, 1
      %v3061 = vsel %vm857, %v3059, %v3060
      %v3062 = vrot.slane %v2869, 1
      %v3063 = vsel %vm857, %v3060, %v3062
      %v3064 = vrot.slane %v2870, 1
      %v3065 = vrot.slane %v2871, 1
      %v3066 = vsel %vm857, %v3064, %v3065
      %v3067 = vrot.slane %v2872, 1
      %v3068 = vsel %vm857, %v3065, %v3067
      %v3069 = vrot.slane %v2873, 1
      %v3070 = vrot.slane %v2874, 1
      %v3071 = vsel %vm857, %v3069, %v3070
      %v3072 = vrot.slane %v2875, 1
      %v3073 = vsel %vm857, %v3070, %v3072
      %v3074 = vrot.slane %v2876, 1
      %v3075 = vrot.slane %v2877, 1
      %v3076 = vsel %vm857, %v3074, %v3075
      %v3077 = vrot.slane %v2878, 1
      %v3078 = vsel %vm857, %v3075, %v3077
      %v3079 = vrot.slane %v2879, 1
      %v3080 = vrot.slane %v2880, 1
      %v3081 = vsel %vm857, %v3079, %v3080
      %v3082 = vrot.slane %v2881, 1
      %v3083 = vsel %vm857, %v3080, %v3082
      %v3084 = vrot.slane %v2882, 1
      %v3085 = vrot.slane %v2883, 1
      %v3086 = vsel %vm857, %v3084, %v3085
      %v3087 = vrot.slane %v2884, 1
      %v3088 = vsel %vm857, %v3085, %v3087
      %v3089 = vrot.slane %v2885, 1
      %v3090 = vrot.slane %v2886, 1
      %v3091 = vsel %vm857, %v3089, %v3090
      %v3092 = vrot.slane %v2887, 1
      %v3093 = vsel %vm857, %v3090, %v3092
      %v3094 = vrot.slane %v2888, 1
      %v3095 = vrot.slane %v2889, 1
      %v3096 = vsel %vm857, %v3094, %v3095
      %v3097 = vrot.slane %v2890, 1
      %v3098 = vsel %vm857, %v3095, %v3097
      %v3099 = vrot.slane %v2891, 1
      %v3100 = vrot.slane %v2892, 1
      %v3101 = vsel %vm857, %v3099, %v3100
      %v3102 = vrot.slane %v2893, 1
      %v3103 = vsel %vm857, %v3100, %v3102
      %v3104 = vrot.slane %v2894, 1
      %v3105 = vrot.slane %v2895, 1
      %v3106 = vsel %vm857, %v3104, %v3105
      %v3107 = vrot.slane %v2896, 1
      %v3108 = vsel %vm857, %v3105, %v3107
      %v3109 = vrot.slane %v2897, 1
      %v3110 = vrot.slane %v2898, 1
      %v3111 = vsel %vm857, %v3109, %v3110
      %v3112 = vrot.slane %v2899, 1
      %v3113 = vsel %vm857, %v3110, %v3112
      %v3114 = vrot.slane %v2900, 1
      %v3115 = vrot.slane %v2901, 1
      %v3116 = vsel %vm857, %v3114, %v3115
      %v3117 = vrot.slane %v2902, 1
      %v3118 = vsel %vm857, %v3115, %v3117
      %v3119 = vrot.slane %v2903, 1
      %v3120 = vrot.slane %v2904, 1
      %v3121 = vsel %vm857, %v3119, %v3120
      %v3122 = vrot.slane %v2905, 1
      %v3123 = vsel %vm857, %v3120, %v3122
      %v3124 = vrot.slane %v2906, 1
      %v3125 = vrot.slane %v2907, 1
      %v3126 = vsel %vm857, %v3124, %v3125
      %v3127 = vrot.slane %v2908, 1
      %v3128 = vsel %vm857, %v3125, %v3127
      %v3129 = vrot.slane %v2909, 1
      %v3130 = vrot.slane %v2910, 1
      %v3131 = vsel %vm857, %v3129, %v3130
      %v3132 = vrot.slane %v2911, 1
      %v3133 = vsel %vm857, %v3130, %v3132
      %v3134 = vrot.slane %v2912, 1
      %v3135 = vrot.slane %v2913, 1
      %v3136 = vsel %vm857, %v3134, %v3135
      %v3137 = vrot.slane %v2914, 1
      %v3138 = vsel %vm857, %v3135, %v3137
      %v3139 = vrot.slane %v2915, 1
      %v3140 = vrot.slane %v2916, 1
      %v3141 = vsel %vm857, %v3139, %v3140
      %v3142 = vrot.slane %v2917, 1
      %v3143 = vsel %vm857, %v3140, %v3142
      %v3144 = vrot.slane %v2918, 1
      %v3145 = vrot.slane %v2919, 1
      %v3146 = vsel %vm857, %v3144, %v3145
      %v3147 = vrot.slane %v2920, 1
      %v3148 = vsel %vm857, %v3145, %v3147
      %v3149 = vrot.slane %v2921, 1
      %v3150 = vrot.slane %v2922, 1
      %v3151 = vsel %vm857, %v3149, %v3150
      %v3152 = vrot.slane %v2923, 1
      %v3153 = vsel %vm857, %v3150, %v3152
      %v3154 = vrot.slane %v2924, 1
      %v3155 = vrot.slane %v2925, 1
      %v3156 = vsel %vm857, %v3154, %v3155
      %v3157 = vrot.slane %v2926, 1
      %v3158 = vsel %vm857, %v3155, %v3157
      %v3159 = vrot.slane %v2927, 1
      %v3160 = vrot.slane %v2928, 1
      %v3161 = vsel %vm857, %v3159, %v3160
      %v3162 = vrot.slane %v2929, 1
      %v3163 = vsel %vm857, %v3160, %v3162
      %v3164 = vrot.slane %v2930, 1
      %v3165 = vrot.slane %v2931, 1
      %v3166 = vsel %vm857, %v3164, %v3165
      %v3167 = vrot.slane %v2932, 1
      %v3168 = vsel %vm857, %v3165, %v3167
      %v3169 = vrot.slane %v2933, 1
      %v3170 = vrot.slane %v2934, 1
      %v3171 = vsel %vm857, %v3169, %v3170
      %v3172 = vrot.slane %v2935, 1
      %v3173 = vsel %vm857, %v3170, %v3172
      %v3174 = vrot.slane %v2936, 1
      %v3175 = vrot.slane %v2937, 1
      %v3176 = vsel %vm857, %v3174, %v3175
      %v3177 = vrot.slane %v2938, 1
      %v3178 = vsel %vm857, %v3175, %v3177
      %v3179 = vrot.slane %v2939, 1
      %v3180 = vrot.slane %v2940, 1
      %v3181 = vsel %vm857, %v3179, %v3180
      %v3182 = vrot.slane %v2941, 1
      %v3183 = vsel %vm857, %v3180, %v3182
      %v3184 = vrot.slane %v2942, 1
      %v3185 = vrot.slane %v2943, 1
      %v3186 = vsel %vm857, %v3184, %v3185
      %v3187 = vrot.slane %v2944, 1
      %v3188 = vsel %vm857, %v3185, %v3187
      %v3189 = vrot.slane %v2945, 1
      %v3190 = vrot.slane %v2946, 1
      %v3191 = vsel %vm857, %v3189, %v3190
      %v3192 = vrot.slane %v2947, 1
      %v3193 = vsel %vm857, %v3190, %v3192
      %v3194 = vrot.slane %v2948, 1
      %v3195 = vrot.slane %v2949, 1
      %v3196 = vsel %vm857, %v3194, %v3195
      %v3197 = vrot.slane %v2950, 1
      %v3198 = vsel %vm857, %v3195, %v3197
      %v3199 = vrot.slane %v2951, 1
      %v3200 = vrot.slane %v2952, 1
      %v3201 = vsel %vm857, %v3199, %v3200
      %v3202 = vrot.slane %v2953, 1
      %v3203 = vsel %vm857, %v3200, %v3202
      %v3204 = vrot.slane %v2954, 1
      %v3205 = vrot.slane %v2955, 1
      %v3206 = vsel %vm857, %v3204, %v3205
      %v3207 = vrot.slane %v2956, 1
      %v3208 = vsel %vm857, %v3205, %v3207
      %v3209 = vrot.slane %v2957, 1
      %v3210 = vrot.slane %v2958, 1
      %v3211 = vsel %vm857, %v3209, %v3210
      %v3212 = vrot.slane %v2959, 1
      %v3213 = vsel %vm857, %v3210, %v3212
      %v3214 = vrot.slane %v2960, 1
      %v3215 = vrot.slane %v2961, 1
      %v3216 = vsel %vm857, %v3214, %v3215
      %v3217 = vrot.slane %v2962, 1
      %v3218 = vsel %vm857, %v3215, %v3217
      %v3283 = vadd.f32 %v2799, %v3061
      %v3284 = vadd.f32 %v2800, %v3063
      %v3285 = vadd.f32 %v2801, %v3066
      %v3286 = vadd.f32 %v2802, %v3068
      %v3287 = vadd.f32 %v2803, %v3071
      %v3288 = vadd.f32 %v2804, %v3073
      %v3289 = vadd.f32 %v2805, %v3076
      %v3290 = vadd.f32 %v2806, %v3078
      %v3291 = vadd.f32 %v2807, %v3081
      %v3292 = vadd.f32 %v2808, %v3083
      %v3293 = vadd.f32 %v2809, %v3086
      %v3294 = vadd.f32 %v2810, %v3088
      %v3295 = vadd.f32 %v2811, %v3091
      %v3296 = vadd.f32 %v2812, %v3093
      %v3297 = vadd.f32 %v2813, %v3096
      %v3298 = vadd.f32 %v2814, %v3098
      %v3299 = vadd.f32 %v2815, %v3101
      %v3300 = vadd.f32 %v2816, %v3103
      %v3301 = vadd.f32 %v2817, %v3106
      %v3302 = vadd.f32 %v2818, %v3108
      %v3303 = vadd.f32 %v2819, %v3111
      %v3304 = vadd.f32 %v2820, %v3113
      %v3305 = vadd.f32 %v2821, %v3116
      %v3306 = vadd.f32 %v2822, %v3118
      %v3307 = vadd.f32 %v2823, %v3121
      %v3308 = vadd.f32 %v2824, %v3123
      %v3309 = vadd.f32 %v2825, %v3126
      %v3310 = vadd.f32 %v2826, %v3128
      %v3311 = vadd.f32 %v2827, %v3131
      %v3312 = vadd.f32 %v2828, %v3133
      %v3313 = vadd.f32 %v2829, %v3136
      %v3314 = vadd.f32 %v2830, %v3138
      %v3315 = vadd.f32 %v2831, %v3141
      %v3316 = vadd.f32 %v2832, %v3143
      %v3317 = vadd.f32 %v2833, %v3146
      %v3318 = vadd.f32 %v2834, %v3148
      %v3319 = vadd.f32 %v2835, %v3151
      %v3320 = vadd.f32 %v2836, %v3153
      %v3321 = vadd.f32 %v2837, %v3156
      %v3322 = vadd.f32 %v2838, %v3158
      %v3323 = vadd.f32 %v2839, %v3161
      %v3324 = vadd.f32 %v2840, %v3163
      %v3325 = vadd.f32 %v2841, %v3166
      %v3326 = vadd.f32 %v2842, %v3168
      %v3327 = vadd.f32 %v2843, %v3171
      %v3328 = vadd.f32 %v2844, %v3173
      %v3329 = vadd.f32 %v2845, %v3176
      %v3330 = vadd.f32 %v2846, %v3178
      %v3331 = vadd.f32 %v2847, %v3181
      %v3332 = vadd.f32 %v2848, %v3183
      %v3333 = vadd.f32 %v2849, %v3186
      %v3334 = vadd.f32 %v2850, %v3188
      %v3335 = vadd.f32 %v2851, %v3191
      %v3336 = vadd.f32 %v2852, %v3193
      %v3337 = vadd.f32 %v2853, %v3196
      %v3338 = vadd.f32 %v2854, %v3198
      %v3339 = vadd.f32 %v2855, %v3201
      %v3340 = vadd.f32 %v2856, %v3203
      %v3341 = vadd.f32 %v2857, %v3206
      %v3342 = vadd.f32 %v2858, %v3208
      %v3343 = vadd.f32 %v2859, %v3211
      %v3344 = vadd.f32 %v2860, %v3213
      %v3345 = vadd.f32 %v2861, %v3216
      %v3346 = vadd.f32 %v2862, %v3218
      %v3347 = vlaneseq
      %v3348 = vshrl.u32 %v3347, 7
      %v3349 = vsub.s32 2, %v3348
      %v3350 = vrot.slane %v318, %v3349
      %v3351 = vmul.f32 %v433, %v3350
      %v3352 = vmul.f32 %v434, %v3350
      %v3353 = vmul.f32 %v435, %v3350
      %v3354 = vmul.f32 %v436, %v3350
      %v3355 = vmul.f32 %v437, %v3350
      %v3356 = vmul.f32 %v438, %v3350
      %v3357 = vmul.f32 %v439, %v3350
      %v3358 = vmul.f32 %v440, %v3350
      %v3359 = vmul.f32 %v441, %v3350
      %v3360 = vmul.f32 %v442, %v3350
      %v3361 = vmul.f32 %v443, %v3350
      %v3362 = vmul.f32 %v444, %v3350
      %v3363 = vmul.f32 %v445, %v3350
      %v3364 = vmul.f32 %v446, %v3350
      %v3365 = vmul.f32 %v447, %v3350
      %v3366 = vmul.f32 %v448, %v3350
      %v3367 = vmul.f32 %v449, %v3350
      %v3368 = vmul.f32 %v450, %v3350
      %v3369 = vmul.f32 %v451, %v3350
      %v3370 = vmul.f32 %v452, %v3350
      %v3371 = vmul.f32 %v453, %v3350
      %v3372 = vmul.f32 %v454, %v3350
      %v3373 = vmul.f32 %v455, %v3350
      %v3374 = vmul.f32 %v456, %v3350
      %v3375 = vmul.f32 %v457, %v3350
      %v3376 = vmul.f32 %v458, %v3350
      %v3377 = vmul.f32 %v459, %v3350
      %v3378 = vmul.f32 %v460, %v3350
      %v3379 = vmul.f32 %v461, %v3350
      %v3380 = vmul.f32 %v462, %v3350
      %v3381 = vmul.f32 %v463, %v3350
      %v3382 = vmul.f32 %v464, %v3350
      %v3383 = vmul.f32 %v465, %v3350
      %v3384 = vmul.f32 %v466, %v3350
      %v3385 = vmul.f32 %v467, %v3350
      %v3386 = vmul.f32 %v468, %v3350
      %v3387 = vmul.f32 %v469, %v3350
      %v3388 = vmul.f32 %v470, %v3350
      %v3389 = vmul.f32 %v471, %v3350
      %v3390 = vmul.f32 %v472, %v3350
      %v3391 = vmul.f32 %v473, %v3350
      %v3392 = vmul.f32 %v474, %v3350
      %v3393 = vmul.f32 %v475, %v3350
      %v3394 = vmul.f32 %v476, %v3350
      %v3395 = vmul.f32 %v477, %v3350
      %v3396 = vmul.f32 %v478, %v3350
      %v3397 = vmul.f32 %v479, %v3350
      %v3398 = vmul.f32 %v480, %v3350
      %v3399 = vmul.f32 %v481, %v3350
      %v3400 = vmul.f32 %v482, %v3350
      %v3401 = vmul.f32 %v483, %v3350
      %v3402 = vmul.f32 %v484, %v3350
      %v3403 = vmul.f32 %v485, %v3350
      %v3404 = vmul.f32 %v486, %v3350
      %v3405 = vmul.f32 %v487, %v3350
      %v3406 = vmul.f32 %v488, %v3350
      %v3407 = vmul.f32 %v489, %v3350
      %v3408 = vmul.f32 %v490, %v3350
      %v3409 = vmul.f32 %v491, %v3350
      %v3410 = vmul.f32 %v492, %v3350
      %v3411 = vmul.f32 %v493, %v3350
      %v3412 = vmul.f32 %v494, %v3350
      %v3413 = vmul.f32 %v495, %v3350
      %v3414 = vmul.f32 %v496, %v3350
      %v3415 = vmul.f32 %v497, %v3350
      %v3416 = vmul.f32 %v498, %v3350
      %v3417 = vmul.f32 %v499, %v3350
      %v3418 = vmul.f32 %v500, %v3350
      %v3419 = vmul.f32 %v501, %v3350
      %v3420 = vmul.f32 %v502, %v3350
      %v3421 = vmul.f32 %v503, %v3350
      %v3422 = vmul.f32 %v504, %v3350
      %v3423 = vmul.f32 %v505, %v3350
      %v3424 = vmul.f32 %v506, %v3350
      %v3425 = vmul.f32 %v507, %v3350
      %v3426 = vmul.f32 %v508, %v3350
      %v3427 = vmul.f32 %v509, %v3350
      %v3428 = vmul.f32 %v510, %v3350
      %v3429 = vmul.f32 %v511, %v3350
      %v3430 = vmul.f32 %v512, %v3350
      %v3431 = vmul.f32 %v513, %v3350
      %v3432 = vmul.f32 %v514, %v3350
      %v3433 = vmul.f32 %v515, %v3350
      %v3434 = vmul.f32 %v516, %v3350
      %v3435 = vmul.f32 %v517, %v3350
      %v3436 = vmul.f32 %v518, %v3350
      %v3437 = vmul.f32 %v519, %v3350
      %v3438 = vmul.f32 %v520, %v3350
      %v3439 = vmul.f32 %v521, %v3350
      %v3440 = vmul.f32 %v522, %v3350
      %v3441 = vmul.f32 %v523, %v3350
      %v3442 = vmul.f32 %v524, %v3350
      %v3443 = vmul.f32 %v525, %v3350
      %v3444 = vmul.f32 %v526, %v3350
      %v3445 = vmul.f32 %v527, %v3350
      %v3446 = vmul.f32 %v528, %v3350
      %v3543 = vrot.slane %v3351, 2
      %v3544 = vrot.slane %v3352, 2
      %v3545 = vsel %vm1342, %v3543, %v3544
      %v3546 = vrot.slane %v3353, 2
      %v3547 = vsel %vm1342, %v3544, %v3546
      %v3548 = vrot.slane %v3354, 2
      %v3549 = vrot.slane %v3355, 2
      %v3550 = vsel %vm1342, %v3548, %v3549
      %v3551 = vrot.slane %v3356, 2
      %v3552 = vsel %vm1342, %v3549, %v3551
      %v3553 = vrot.slane %v3357, 2
      %v3554 = vrot.slane %v3358, 2
      %v3555 = vsel %vm1342, %v3553, %v3554
      %v3556 = vrot.slane %v3359, 2
      %v3557 = vsel %vm1342, %v3554, %v3556
      %v3558 = vrot.slane %v3360, 2
      %v3559 = vrot.slane %v3361, 2
      %v3560 = vsel %vm1342, %v3558, %v3559
      %v3561 = vrot.slane %v3362, 2
      %v3562 = vsel %vm1342, %v3559, %v3561
      %v3563 = vrot.slane %v3363, 2
      %v3564 = vrot.slane %v3364, 2
      %v3565 = vsel %vm1342, %v3563, %v3564
      %v3566 = vrot.slane %v3365, 2
      %v3567 = vsel %vm1342, %v3564, %v3566
      %v3568 = vrot.slane %v3366, 2
      %v3569 = vrot.slane %v3367, 2
      %v3570 = vsel %vm1342, %v3568, %v3569
      %v3571 = vrot.slane %v3368, 2
      %v3572 = vsel %vm1342, %v3569, %v3571
      %v3573 = vrot.slane %v3369, 2
      %v3574 = vrot.slane %v3370, 2
      %v3575 = vsel %vm1342, %v3573, %v3574
      %v3576 = vrot.slane %v3371, 2
      %v3577 = vsel %vm1342, %v3574, %v3576
      %v3578 = vrot.slane %v3372, 2
      %v3579 = vrot.slane %v3373, 2
      %v3580 = vsel %vm1342, %v3578, %v3579
      %v3581 = vrot.slane %v3374, 2
      %v3582 = vsel %vm1342, %v3579, %v3581
      %v3583 = vrot.slane %v3375, 2
      %v3584 = vrot.slane %v3376, 2
      %v3585 = vsel %vm1342, %v3583, %v3584
      %v3586 = vrot.slane %v3377, 2
      %v3587 = vsel %vm1342, %v3584, %v3586
      %v3588 = vrot.slane %v3378, 2
      %v3589 = vrot.slane %v3379, 2
      %v3590 = vsel %vm1342, %v3588, %v3589
      %v3591 = vrot.slane %v3380, 2
      %v3592 = vsel %vm1342, %v3589, %v3591
      %v3593 = vrot.slane %v3381, 2
      %v3594 = vrot.slane %v3382, 2
      %v3595 = vsel %vm1342, %v3593, %v3594
      %v3596 = vrot.slane %v3383, 2
      %v3597 = vsel %vm1342, %v3594, %v3596
      %v3598 = vrot.slane %v3384, 2
      %v3599 = vrot.slane %v3385, 2
      %v3600 = vsel %vm1342, %v3598, %v3599
      %v3601 = vrot.slane %v3386, 2
      %v3602 = vsel %vm1342, %v3599, %v3601
      %v3603 = vrot.slane %v3387, 2
      %v3604 = vrot.slane %v3388, 2
      %v3605 = vsel %vm1342, %v3603, %v3604
      %v3606 = vrot.slane %v3389, 2
      %v3607 = vsel %vm1342, %v3604, %v3606
      %v3608 = vrot.slane %v3390, 2
      %v3609 = vrot.slane %v3391, 2
      %v3610 = vsel %vm1342, %v3608, %v3609
      %v3611 = vrot.slane %v3392, 2
      %v3612 = vsel %vm1342, %v3609, %v3611
      %v3613 = vrot.slane %v3393, 2
      %v3614 = vrot.slane %v3394, 2
      %v3615 = vsel %vm1342, %v3613, %v3614
      %v3616 = vrot.slane %v3395, 2
      %v3617 = vsel %vm1342, %v3614, %v3616
      %v3618 = vrot.slane %v3396, 2
      %v3619 = vrot.slane %v3397, 2
      %v3620 = vsel %vm1342, %v3618, %v3619
      %v3621 = vrot.slane %v3398, 2
      %v3622 = vsel %vm1342, %v3619, %v3621
      %v3623 = vrot.slane %v3399, 2
      %v3624 = vrot.slane %v3400, 2
      %v3625 = vsel %vm1342, %v3623, %v3624
      %v3626 = vrot.slane %v3401, 2
      %v3627 = vsel %vm1342, %v3624, %v3626
      %v3628 = vrot.slane %v3402, 2
      %v3629 = vrot.slane %v3403, 2
      %v3630 = vsel %vm1342, %v3628, %v3629
      %v3631 = vrot.slane %v3404, 2
      %v3632 = vsel %vm1342, %v3629, %v3631
      %v3633 = vrot.slane %v3405, 2
      %v3634 = vrot.slane %v3406, 2
      %v3635 = vsel %vm1342, %v3633, %v3634
      %v3636 = vrot.slane %v3407, 2
      %v3637 = vsel %vm1342, %v3634, %v3636
      %v3638 = vrot.slane %v3408, 2
      %v3639 = vrot.slane %v3409, 2
      %v3640 = vsel %vm1342, %v3638, %v3639
      %v3641 = vrot.slane %v3410, 2
      %v3642 = vsel %vm1342, %v3639, %v3641
      %v3643 = vrot.slane %v3411, 2
      %v3644 = vrot.slane %v3412, 2
      %v3645 = vsel %vm1342, %v3643, %v3644
      %v3646 = vrot.slane %v3413, 2
      %v3647 = vsel %vm1342, %v3644, %v3646
      %v3648 = vrot.slane %v3414, 2
      %v3649 = vrot.slane %v3415, 2
      %v3650 = vsel %vm1342, %v3648, %v3649
      %v3651 = vrot.slane %v3416, 2
      %v3652 = vsel %vm1342, %v3649, %v3651
      %v3653 = vrot.slane %v3417, 2
      %v3654 = vrot.slane %v3418, 2
      %v3655 = vsel %vm1342, %v3653, %v3654
      %v3656 = vrot.slane %v3419, 2
      %v3657 = vsel %vm1342, %v3654, %v3656
      %v3658 = vrot.slane %v3420, 2
      %v3659 = vrot.slane %v3421, 2
      %v3660 = vsel %vm1342, %v3658, %v3659
      %v3661 = vrot.slane %v3422, 2
      %v3662 = vsel %vm1342, %v3659, %v3661
      %v3663 = vrot.slane %v3423, 2
      %v3664 = vrot.slane %v3424, 2
      %v3665 = vsel %vm1342, %v3663, %v3664
      %v3666 = vrot.slane %v3425, 2
      %v3667 = vsel %vm1342, %v3664, %v3666
      %v3668 = vrot.slane %v3426, 2
      %v3669 = vrot.slane %v3427, 2
      %v3670 = vsel %vm1342, %v3668, %v3669
      %v3671 = vrot.slane %v3428, 2
      %v3672 = vsel %vm1342, %v3669, %v3671
      %v3673 = vrot.slane %v3429, 2
      %v3674 = vrot.slane %v3430, 2
      %v3675 = vsel %vm1342, %v3673, %v3674
      %v3676 = vrot.slane %v3431, 2
      %v3677 = vsel %vm1342, %v3674, %v3676
      %v3678 = vrot.slane %v3432, 2
      %v3679 = vrot.slane %v3433, 2
      %v3680 = vsel %vm1342, %v3678, %v3679
      %v3681 = vrot.slane %v3434, 2
      %v3682 = vsel %vm1342, %v3679, %v3681
      %v3683 = vrot.slane %v3435, 2
      %v3684 = vrot.slane %v3436, 2
      %v3685 = vsel %vm1342, %v3683, %v3684
      %v3686 = vrot.slane %v3437, 2
      %v3687 = vsel %vm1342, %v3684, %v3686
      %v3688 = vrot.slane %v3438, 2
      %v3689 = vrot.slane %v3439, 2
      %v3690 = vsel %vm1342, %v3688, %v3689
      %v3691 = vrot.slane %v3440, 2
      %v3692 = vsel %vm1342, %v3689, %v3691
      %v3693 = vrot.slane %v3441, 2
      %v3694 = vrot.slane %v3442, 2
      %v3695 = vsel %vm1342, %v3693, %v3694
      %v3696 = vrot.slane %v3443, 2
      %v3697 = vsel %vm1342, %v3694, %v3696
      %v3698 = vrot.slane %v3444, 2
      %v3699 = vrot.slane %v3445, 2
      %v3700 = vsel %vm1342, %v3698, %v3699
      %v3701 = vrot.slane %v3446, 2
      %v3702 = vsel %vm1342, %v3699, %v3701
      %v3767 = vadd.f32 %v3283, %v3545
      %v3768 = vadd.f32 %v3284, %v3547
      %v3769 = vadd.f32 %v3285, %v3550
      %v3770 = vadd.f32 %v3286, %v3552
      %v3771 = vadd.f32 %v3287, %v3555
      %v3772 = vadd.f32 %v3288, %v3557
      %v3773 = vadd.f32 %v3289, %v3560
      %v3774 = vadd.f32 %v3290, %v3562
      %v3775 = vadd.f32 %v3291, %v3565
      %v3776 = vadd.f32 %v3292, %v3567
      %v3777 = vadd.f32 %v3293, %v3570
      %v3778 = vadd.f32 %v3294, %v3572
      %v3779 = vadd.f32 %v3295, %v3575
      %v3780 = vadd.f32 %v3296, %v3577
      %v3781 = vadd.f32 %v3297, %v3580
      %v3782 = vadd.f32 %v3298, %v3582
      %v3783 = vadd.f32 %v3299, %v3585
      %v3784 = vadd.f32 %v3300, %v3587
      %v3785 = vadd.f32 %v3301, %v3590
      %v3786 = vadd.f32 %v3302, %v3592
      %v3787 = vadd.f32 %v3303, %v3595
      %v3788 = vadd.f32 %v3304, %v3597
      %v3789 = vadd.f32 %v3305, %v3600
      %v3790 = vadd.f32 %v3306, %v3602
      %v3791 = vadd.f32 %v3307, %v3605
      %v3792 = vadd.f32 %v3308, %v3607
      %v3793 = vadd.f32 %v3309, %v3610
      %v3794 = vadd.f32 %v3310, %v3612
      %v3795 = vadd.f32 %v3311, %v3615
      %v3796 = vadd.f32 %v3312, %v3617
      %v3797 = vadd.f32 %v3313, %v3620
      %v3798 = vadd.f32 %v3314, %v3622
      %v3799 = vadd.f32 %v3315, %v3625
      %v3800 = vadd.f32 %v3316, %v3627
      %v3801 = vadd.f32 %v3317, %v3630
      %v3802 = vadd.f32 %v3318, %v3632
      %v3803 = vadd.f32 %v3319, %v3635
      %v3804 = vadd.f32 %v3320, %v3637
      %v3805 = vadd.f32 %v3321, %v3640
      %v3806 = vadd.f32 %v3322, %v3642
      %v3807 = vadd.f32 %v3323, %v3645
      %v3808 = vadd.f32 %v3324, %v3647
      %v3809 = vadd.f32 %v3325, %v3650
      %v3810 = vadd.f32 %v3326, %v3652
      %v3811 = vadd.f32 %v3327, %v3655
      %v3812 = vadd.f32 %v3328, %v3657
      %v3813 = vadd.f32 %v3329, %v3660
      %v3814 = vadd.f32 %v3330, %v3662
      %v3815 = vadd.f32 %v3331, %v3665
      %v3816 = vadd.f32 %v3332, %v3667
      %v3817 = vadd.f32 %v3333, %v3670
      %v3818 = vadd.f32 %v3334, %v3672
      %v3819 = vadd.f32 %v3335, %v3675
      %v3820 = vadd.f32 %v3336, %v3677
      %v3821 = vadd.f32 %v3337, %v3680
      %v3822 = vadd.f32 %v3338, %v3682
      %v3823 = vadd.f32 %v3339, %v3685
      %v3824 = vadd.f32 %v3340, %v3687
      %v3825 = vadd.f32 %v3341, %v3690
      %v3826 = vadd.f32 %v3342, %v3692
      %v3827 = vadd.f32 %v3343, %v3695
      %v3828 = vadd.f32 %v3344, %v3697
      %v3829 = vadd.f32 %v3345, %v3700
      %v3830 = vadd.f32 %v3346, %v3702
      %v3831 = vld [vmem:[%s294] sm:$0xf]
      %v3832 = vld [vmem:[%s294 + $0x4] sm:$0xf]
      %v3833 = vld [vmem:[%s294 + $0x8] sm:$0x1]
      %v3834 = vld [vmem:[%s294 + $0xc] sm:$0xf]
      %v3835 = vld [vmem:[%s294 + $0x10] sm:$0xf]
      %v3836 = vld [vmem:[%s294 + $0x14] sm:$0x1]
      %v3837 = vld [vmem:[%s294 + $0x18] sm:$0xf]
      %v3838 = vld [vmem:[%s294 + $0x1c] sm:$0xf]
      %v3839 = vld [vmem:[%s294 + $0x20] sm:$0x1]
      %v3840 = vld [vmem:[%s294 + $0x24] sm:$0xf]
      %v3841 = vld [vmem:[%s294 + $0x28] sm:$0xf]
      %v3842 = vld [vmem:[%s294 + $0x2c] sm:$0x1]
      %v3843 = vld [vmem:[%s294 + $0x30] sm:$0xf]
      %v3844 = vld [vmem:[%s294 + $0x34] sm:$0xf]
      %v3845 = vld [vmem:[%s294 + $0x38] sm:$0x1]
      %v3846 = vld [vmem:[%s294 + $0x3c] sm:$0xf]
      %v3847 = vld [vmem:[%s294 + $0x40] sm:$0xf]
      %v3848 = vld [vmem:[%s294 + $0x44] sm:$0x1]
      %v3849 = vld [vmem:[%s294 + $0x48] sm:$0xf]
      %v3850 = vld [vmem:[%s294 + $0x4c] sm:$0xf]
      %v3851 = vld [vmem:[%s294 + $0x50] sm:$0x1]
      %v3852 = vld [vmem:[%s294 + $0x54] sm:$0xf]
      %v3853 = vld [vmem:[%s294 + $0x58] sm:$0xf]
      %v3854 = vld [vmem:[%s294 + $0x5c] sm:$0x1]
      %v3855 = vld [vmem:[%s294 + $0x60] sm:$0xf]
      %v3856 = vld [vmem:[%s294 + $0x64] sm:$0xf]
      %v3857 = vld [vmem:[%s294 + $0x68] sm:$0x1]
      %v3858 = vld [vmem:[%s294 + $0x6c] sm:$0xf]
      %v3859 = vld [vmem:[%s294 + $0x70] sm:$0xf]
      %v3860 = vld [vmem:[%s294 + $0x74] sm:$0x1]
      %v3861 = vld [vmem:[%s294 + $0x78] sm:$0xf]
      %v3862 = vld [vmem:[%s294 + $0x7c] sm:$0xf]
      %v3863 = vld [vmem:[%s294 + $0x80] sm:$0x1]
      %v3864 = vld [vmem:[%s294 + $0x84] sm:$0xf]
      %v3865 = vld [vmem:[%s294 + $0x88] sm:$0xf]
      %v3866 = vld [vmem:[%s294 + $0x8c] sm:$0x1]
      %v3867 = vld [vmem:[%s294 + $0x90] sm:$0xf]
      %v3868 = vld [vmem:[%s294 + $0x94] sm:$0xf]
      %v3869 = vld [vmem:[%s294 + $0x98] sm:$0x1]
      %v3870 = vld [vmem:[%s294 + $0x9c] sm:$0xf]
      %v3871 = vld [vmem:[%s294 + $0xa0] sm:$0xf]
      %v3872 = vld [vmem:[%s294 + $0xa4] sm:$0x1]
      %v3873 = vld [vmem:[%s294 + $0xa8] sm:$0xf]
      %v3874 = vld [vmem:[%s294 + $0xac] sm:$0xf]
      %v3875 = vld [vmem:[%s294 + $0xb0] sm:$0x1]
      %v3876 = vld [vmem:[%s294 + $0xb4] sm:$0xf]
      %v3877 = vld [vmem:[%s294 + $0xb8] sm:$0xf]
      %v3878 = vld [vmem:[%s294 + $0xbc] sm:$0x1]
      %v3879 = vld [vmem:[%s294 + $0xc0] sm:$0xf]
      %v3880 = vld [vmem:[%s294 + $0xc4] sm:$0xf]
      %v3881 = vld [vmem:[%s294 + $0xc8] sm:$0x1]
      %v3882 = vld [vmem:[%s294 + $0xcc] sm:$0xf]
      %v3883 = vld [vmem:[%s294 + $0xd0] sm:$0xf]
      %v3884 = vld [vmem:[%s294 + $0xd4] sm:$0x1]
      %v3885 = vld [vmem:[%s294 + $0xd8] sm:$0xf]
      %v3886 = vld [vmem:[%s294 + $0xdc] sm:$0xf]
      %v3887 = vld [vmem:[%s294 + $0xe0] sm:$0x1]
      %v3888 = vld [vmem:[%s294 + $0xe4] sm:$0xf]
      %v3889 = vld [vmem:[%s294 + $0xe8] sm:$0xf]
      %v3890 = vld [vmem:[%s294 + $0xec] sm:$0x1]
      %v3891 = vld [vmem:[%s294 + $0xf0] sm:$0xf]
      %v3892 = vld [vmem:[%s294 + $0xf4] sm:$0xf]
      %v3893 = vld [vmem:[%s294 + $0xf8] sm:$0x1]
      %v3894 = vld [vmem:[%s294 + $0xfc] sm:$0xf]
      %v3895 = vld [vmem:[%s294 + $0x100] sm:$0xf]
      %v3896 = vld [vmem:[%s294 + $0x104] sm:$0x1]
      %v3897 = vld [vmem:[%s294 + $0x108] sm:$0xf]
      %v3898 = vld [vmem:[%s294 + $0x10c] sm:$0xf]
      %v3899 = vld [vmem:[%s294 + $0x110] sm:$0x1]
      %v3900 = vld [vmem:[%s294 + $0x114] sm:$0xf]
      %v3901 = vld [vmem:[%s294 + $0x118] sm:$0xf]
      %v3902 = vld [vmem:[%s294 + $0x11c] sm:$0x1]
      %v3903 = vld [vmem:[%s294 + $0x120] sm:$0xf]
      %v3904 = vld [vmem:[%s294 + $0x124] sm:$0xf]
      %v3905 = vld [vmem:[%s294 + $0x128] sm:$0x1]
      %v3906 = vld [vmem:[%s294 + $0x12c] sm:$0xf]
      %v3907 = vld [vmem:[%s294 + $0x130] sm:$0xf]
      %v3908 = vld [vmem:[%s294 + $0x134] sm:$0x1]
      %v3909 = vld [vmem:[%s294 + $0x138] sm:$0xf]
      %v3910 = vld [vmem:[%s294 + $0x13c] sm:$0xf]
      %v3911 = vld [vmem:[%s294 + $0x140] sm:$0x1]
      %v3912 = vld [vmem:[%s294 + $0x144] sm:$0xf]
      %v3913 = vld [vmem:[%s294 + $0x148] sm:$0xf]
      %v3914 = vld [vmem:[%s294 + $0x14c] sm:$0x1]
      %v3915 = vld [vmem:[%s294 + $0x150] sm:$0xf]
      %v3916 = vld [vmem:[%s294 + $0x154] sm:$0xf]
      %v3917 = vld [vmem:[%s294 + $0x158] sm:$0x1]
      %v3918 = vld [vmem:[%s294 + $0x15c] sm:$0xf]
      %v3919 = vld [vmem:[%s294 + $0x160] sm:$0xf]
      %v3920 = vld [vmem:[%s294 + $0x164] sm:$0x1]
      %v3921 = vld [vmem:[%s294 + $0x168] sm:$0xf]
      %v3922 = vld [vmem:[%s294 + $0x16c] sm:$0xf]
      %v3923 = vld [vmem:[%s294 + $0x170] sm:$0x1]
      %v3924 = vld [vmem:[%s294 + $0x174] sm:$0xf]
      %v3925 = vld [vmem:[%s294 + $0x178] sm:$0xf]
      %v3926 = vld [vmem:[%s294 + $0x17c] sm:$0x1]
      %v3927 = vld [vmem:[%s294 + $0x180] sm:$0xf]
      %v3928 = vld [vmem:[%s294 + $0x184] sm:$0xf]
      %v3929 = vld [vmem:[%s294 + $0x188] sm:$0x1]
      %v3930 = vld [vmem:[%s294 + $0x18c] sm:$0xf]
      %v3931 = vld [vmem:[%s294 + $0x190] sm:$0xf]
      %v3932 = vld [vmem:[%s294 + $0x194] sm:$0x1]
      %v3933 = vunpack.c.l.bf16 %v3831
      %v3934 = vunpack.c.l.bf16 %v3832
      %v3935 = vunpack.c.l.bf16 %v3833
      %v3936 = vunpack.c.l.bf16 %v3834
      %v3937 = vunpack.c.l.bf16 %v3835
      %v3938 = vunpack.c.l.bf16 %v3836
      %v3939 = vunpack.c.l.bf16 %v3837
      %v3940 = vunpack.c.l.bf16 %v3838
      %v3941 = vunpack.c.l.bf16 %v3839
      %v3942 = vunpack.c.l.bf16 %v3840
      %v3943 = vunpack.c.l.bf16 %v3841
      %v3944 = vunpack.c.l.bf16 %v3842
      %v3945 = vunpack.c.l.bf16 %v3843
      %v3946 = vunpack.c.l.bf16 %v3844
      %v3947 = vunpack.c.l.bf16 %v3845
      %v3948 = vunpack.c.l.bf16 %v3846
      %v3949 = vunpack.c.l.bf16 %v3847
      %v3950 = vunpack.c.l.bf16 %v3848
      %v3951 = vunpack.c.l.bf16 %v3849
      %v3952 = vunpack.c.l.bf16 %v3850
      %v3953 = vunpack.c.l.bf16 %v3851
      %v3954 = vunpack.c.l.bf16 %v3852
      %v3955 = vunpack.c.l.bf16 %v3853
      %v3956 = vunpack.c.l.bf16 %v3854
      %v3957 = vunpack.c.l.bf16 %v3855
      %v3958 = vunpack.c.l.bf16 %v3856
      %v3959 = vunpack.c.l.bf16 %v3857
      %v3960 = vunpack.c.l.bf16 %v3858
      %v3961 = vunpack.c.l.bf16 %v3859
      %v3962 = vunpack.c.l.bf16 %v3860
      %v3963 = vunpack.c.l.bf16 %v3861
      %v3964 = vunpack.c.l.bf16 %v3862
      %v3965 = vunpack.c.l.bf16 %v3863
      %v3966 = vunpack.c.l.bf16 %v3864
      %v3967 = vunpack.c.l.bf16 %v3865
      %v3968 = vunpack.c.l.bf16 %v3866
      %v3969 = vunpack.c.l.bf16 %v3867
      %v3970 = vunpack.c.l.bf16 %v3868
      %v3971 = vunpack.c.l.bf16 %v3869
      %v3972 = vunpack.c.l.bf16 %v3870
      %v3973 = vunpack.c.l.bf16 %v3871
      %v3974 = vunpack.c.l.bf16 %v3872
      %v3975 = vunpack.c.l.bf16 %v3873
      %v3976 = vunpack.c.l.bf16 %v3874
      %v3977 = vunpack.c.l.bf16 %v3875
      %v3978 = vunpack.c.l.bf16 %v3876
      %v3979 = vunpack.c.l.bf16 %v3877
      %v3980 = vunpack.c.l.bf16 %v3878
      %v3981 = vunpack.c.l.bf16 %v3879
      %v3982 = vunpack.c.l.bf16 %v3880
      %v3983 = vunpack.c.l.bf16 %v3881
      %v3984 = vunpack.c.l.bf16 %v3882
      %v3985 = vunpack.c.l.bf16 %v3883
      %v3986 = vunpack.c.l.bf16 %v3884
      %v3987 = vunpack.c.l.bf16 %v3885
      %v3988 = vunpack.c.l.bf16 %v3886
      %v3989 = vunpack.c.l.bf16 %v3887
      %v3990 = vunpack.c.l.bf16 %v3888
      %v3991 = vunpack.c.l.bf16 %v3889
      %v3992 = vunpack.c.l.bf16 %v3890
      %v3993 = vunpack.c.l.bf16 %v3891
      %v3994 = vunpack.c.l.bf16 %v3892
      %v3995 = vunpack.c.l.bf16 %v3893
      %v3996 = vunpack.c.l.bf16 %v3894
      %v3997 = vunpack.c.l.bf16 %v3895
      %v3998 = vunpack.c.l.bf16 %v3896
      %v3999 = vunpack.c.l.bf16 %v3897
      %v4000 = vunpack.c.l.bf16 %v3898
      %v4001 = vunpack.c.l.bf16 %v3899
      %v4002 = vunpack.c.l.bf16 %v3900
      %v4003 = vunpack.c.l.bf16 %v3901
      %v4004 = vunpack.c.l.bf16 %v3902
      %v4005 = vunpack.c.l.bf16 %v3903
      %v4006 = vunpack.c.l.bf16 %v3904
      %v4007 = vunpack.c.l.bf16 %v3905
      %v4008 = vunpack.c.l.bf16 %v3906
      %v4009 = vunpack.c.l.bf16 %v3907
      %v4010 = vunpack.c.l.bf16 %v3908
      %v4011 = vunpack.c.l.bf16 %v3909
      %v4012 = vunpack.c.l.bf16 %v3910
      %v4013 = vunpack.c.l.bf16 %v3911
      %v4014 = vunpack.c.l.bf16 %v3912
      %v4015 = vunpack.c.l.bf16 %v3913
      %v4016 = vunpack.c.l.bf16 %v3914
      %v4017 = vunpack.c.l.bf16 %v3915
      %v4018 = vunpack.c.l.bf16 %v3916
      %v4019 = vunpack.c.l.bf16 %v3917
      %v4020 = vunpack.c.l.bf16 %v3918
      %v4021 = vunpack.c.l.bf16 %v3919
      %v4022 = vunpack.c.l.bf16 %v3920
      %v4023 = vunpack.c.l.bf16 %v3921
      %v4024 = vunpack.c.l.bf16 %v3922
      %v4025 = vunpack.c.l.bf16 %v3923
      %v4026 = vunpack.c.l.bf16 %v3924
      %v4027 = vunpack.c.l.bf16 %v3925
      %v4028 = vunpack.c.l.bf16 %v3926
      %v4029 = vunpack.c.l.bf16 %v3927
      %v4030 = vunpack.c.l.bf16 %v3928
      %v4031 = vunpack.c.l.bf16 %v3929
      %v4032 = vunpack.c.l.bf16 %v3930
      %v4033 = vunpack.c.l.bf16 %v3931
      %v4034 = vunpack.c.l.bf16 %v3932
      %v4035 = vlaneseq
      %v4036 = vshrl.u32 %v4035, 7
      %v4037 = vsub.s32 0, %v4036
      %v4038 = vrot.slane %v319, %v4037
      %v4039 = vmul.f32 %v3933, %v4038
      %v4040 = vmul.f32 %v3934, %v4038
      %v4041 = vmul.f32 %v3936, %v4038
      %v4042 = vmul.f32 %v3937, %v4038
      %v4043 = vmul.f32 %v3939, %v4038
      %v4044 = vmul.f32 %v3940, %v4038
      %v4045 = vmul.f32 %v3942, %v4038
      %v4046 = vmul.f32 %v3943, %v4038
      %v4047 = vmul.f32 %v3945, %v4038
      %v4048 = vmul.f32 %v3946, %v4038
      %v4049 = vmul.f32 %v3948, %v4038
      %v4050 = vmul.f32 %v3949, %v4038
      %v4051 = vmul.f32 %v3951, %v4038
      %v4052 = vmul.f32 %v3952, %v4038
      %v4053 = vmul.f32 %v3954, %v4038
      %v4054 = vmul.f32 %v3955, %v4038
      %v4055 = vmul.f32 %v3957, %v4038
      %v4056 = vmul.f32 %v3958, %v4038
      %v4057 = vmul.f32 %v3960, %v4038
      %v4058 = vmul.f32 %v3961, %v4038
      %v4059 = vmul.f32 %v3963, %v4038
      %v4060 = vmul.f32 %v3964, %v4038
      %v4061 = vmul.f32 %v3966, %v4038
      %v4062 = vmul.f32 %v3967, %v4038
      %v4063 = vmul.f32 %v3969, %v4038
      %v4064 = vmul.f32 %v3970, %v4038
      %v4065 = vmul.f32 %v3972, %v4038
      %v4066 = vmul.f32 %v3973, %v4038
      %v4067 = vmul.f32 %v3975, %v4038
      %v4068 = vmul.f32 %v3976, %v4038
      %v4069 = vmul.f32 %v3978, %v4038
      %v4070 = vmul.f32 %v3979, %v4038
      %v4071 = vmul.f32 %v3981, %v4038
      %v4072 = vmul.f32 %v3982, %v4038
      %v4073 = vmul.f32 %v3984, %v4038
      %v4074 = vmul.f32 %v3985, %v4038
      %v4075 = vmul.f32 %v3987, %v4038
      %v4076 = vmul.f32 %v3988, %v4038
      %v4077 = vmul.f32 %v3990, %v4038
      %v4078 = vmul.f32 %v3991, %v4038
      %v4079 = vmul.f32 %v3993, %v4038
      %v4080 = vmul.f32 %v3994, %v4038
      %v4081 = vmul.f32 %v3996, %v4038
      %v4082 = vmul.f32 %v3997, %v4038
      %v4083 = vmul.f32 %v3999, %v4038
      %v4084 = vmul.f32 %v4000, %v4038
      %v4085 = vmul.f32 %v4002, %v4038
      %v4086 = vmul.f32 %v4003, %v4038
      %v4087 = vmul.f32 %v4005, %v4038
      %v4088 = vmul.f32 %v4006, %v4038
      %v4089 = vmul.f32 %v4008, %v4038
      %v4090 = vmul.f32 %v4009, %v4038
      %v4091 = vmul.f32 %v4011, %v4038
      %v4092 = vmul.f32 %v4012, %v4038
      %v4093 = vmul.f32 %v4014, %v4038
      %v4094 = vmul.f32 %v4015, %v4038
      %v4095 = vmul.f32 %v4017, %v4038
      %v4096 = vmul.f32 %v4018, %v4038
      %v4097 = vmul.f32 %v4020, %v4038
      %v4098 = vmul.f32 %v4021, %v4038
      %v4099 = vmul.f32 %v4023, %v4038
      %v4100 = vmul.f32 %v4024, %v4038
      %v4101 = vmul.f32 %v4026, %v4038
      %v4102 = vmul.f32 %v4027, %v4038
      %v4103 = vadd.f32 %v3767, %v4039
      %v4104 = vadd.f32 %v3768, %v4040
      %v4105 = vadd.f32 %v3769, %v4041
      %v4106 = vadd.f32 %v3770, %v4042
      %v4107 = vadd.f32 %v3771, %v4043
      %v4108 = vadd.f32 %v3772, %v4044
      %v4109 = vadd.f32 %v3773, %v4045
      %v4110 = vadd.f32 %v3774, %v4046
      %v4111 = vadd.f32 %v3775, %v4047
      %v4112 = vadd.f32 %v3776, %v4048
      %v4113 = vadd.f32 %v3777, %v4049
      %v4114 = vadd.f32 %v3778, %v4050
      %v4115 = vadd.f32 %v3779, %v4051
      %v4116 = vadd.f32 %v3780, %v4052
      %v4117 = vadd.f32 %v3781, %v4053
      %v4118 = vadd.f32 %v3782, %v4054
      %v4119 = vadd.f32 %v3783, %v4055
      %v4120 = vadd.f32 %v3784, %v4056
      %v4121 = vadd.f32 %v3785, %v4057
      %v4122 = vadd.f32 %v3786, %v4058
      %v4123 = vadd.f32 %v3787, %v4059
      %v4124 = vadd.f32 %v3788, %v4060
      %v4125 = vadd.f32 %v3789, %v4061
      %v4126 = vadd.f32 %v3790, %v4062
      %v4127 = vadd.f32 %v3791, %v4063
      %v4128 = vadd.f32 %v3792, %v4064
      %v4129 = vadd.f32 %v3793, %v4065
      %v4130 = vadd.f32 %v3794, %v4066
      %v4131 = vadd.f32 %v3795, %v4067
      %v4132 = vadd.f32 %v3796, %v4068
      %v4133 = vadd.f32 %v3797, %v4069
      %v4134 = vadd.f32 %v3798, %v4070
      %v4135 = vadd.f32 %v3799, %v4071
      %v4136 = vadd.f32 %v3800, %v4072
      %v4137 = vadd.f32 %v3801, %v4073
      %v4138 = vadd.f32 %v3802, %v4074
      %v4139 = vadd.f32 %v3803, %v4075
      %v4140 = vadd.f32 %v3804, %v4076
      %v4141 = vadd.f32 %v3805, %v4077
      %v4142 = vadd.f32 %v3806, %v4078
      %v4143 = vadd.f32 %v3807, %v4079
      %v4144 = vadd.f32 %v3808, %v4080
      %v4145 = vadd.f32 %v3809, %v4081
      %v4146 = vadd.f32 %v3810, %v4082
      %v4147 = vadd.f32 %v3811, %v4083
      %v4148 = vadd.f32 %v3812, %v4084
      %v4149 = vadd.f32 %v3813, %v4085
      %v4150 = vadd.f32 %v3814, %v4086
      %v4151 = vadd.f32 %v3815, %v4087
      %v4152 = vadd.f32 %v3816, %v4088
      %v4153 = vadd.f32 %v3817, %v4089
      %v4154 = vadd.f32 %v3818, %v4090
      %v4155 = vadd.f32 %v3819, %v4091
      %v4156 = vadd.f32 %v3820, %v4092
      %v4157 = vadd.f32 %v3821, %v4093
      %v4158 = vadd.f32 %v3822, %v4094
      %v4159 = vadd.f32 %v3823, %v4095
      %v4160 = vadd.f32 %v3824, %v4096
      %v4161 = vadd.f32 %v3825, %v4097
      %v4162 = vadd.f32 %v3826, %v4098
      %v4163 = vadd.f32 %v3827, %v4099
      %v4164 = vadd.f32 %v3828, %v4100
      %v4165 = vadd.f32 %v3829, %v4101
      %v4166 = vadd.f32 %v3830, %v4102
      %v4167 = vlaneseq
      %v4168 = vshrl.u32 %v4167, 7
      %v4169 = vsub.s32 1, %v4168
      %v4170 = vrot.slane %v319, %v4169
      %v4171 = vmul.f32 %v3933, %v4170
      %v4172 = vmul.f32 %v3934, %v4170
      %v4173 = vmul.f32 %v3935, %v4170
      %v4174 = vmul.f32 %v3936, %v4170
      %v4175 = vmul.f32 %v3937, %v4170
      %v4176 = vmul.f32 %v3938, %v4170
      %v4177 = vmul.f32 %v3939, %v4170
      %v4178 = vmul.f32 %v3940, %v4170
      %v4179 = vmul.f32 %v3941, %v4170
      %v4180 = vmul.f32 %v3942, %v4170
      %v4181 = vmul.f32 %v3943, %v4170
      %v4182 = vmul.f32 %v3944, %v4170
      %v4183 = vmul.f32 %v3945, %v4170
      %v4184 = vmul.f32 %v3946, %v4170
      %v4185 = vmul.f32 %v3947, %v4170
      %v4186 = vmul.f32 %v3948, %v4170
      %v4187 = vmul.f32 %v3949, %v4170
      %v4188 = vmul.f32 %v3950, %v4170
      %v4189 = vmul.f32 %v3951, %v4170
      %v4190 = vmul.f32 %v3952, %v4170
      %v4191 = vmul.f32 %v3953, %v4170
      %v4192 = vmul.f32 %v3954, %v4170
      %v4193 = vmul.f32 %v3955, %v4170
      %v4194 = vmul.f32 %v3956, %v4170
      %v4195 = vmul.f32 %v3957, %v4170
      %v4196 = vmul.f32 %v3958, %v4170
      %v4197 = vmul.f32 %v3959, %v4170
      %v4198 = vmul.f32 %v3960, %v4170
      %v4199 = vmul.f32 %v3961, %v4170
      %v4200 = vmul.f32 %v3962, %v4170
      %v4201 = vmul.f32 %v3963, %v4170
      %v4202 = vmul.f32 %v3964, %v4170
      %v4203 = vmul.f32 %v3965, %v4170
      %v4204 = vmul.f32 %v3966, %v4170
      %v4205 = vmul.f32 %v3967, %v4170
      %v4206 = vmul.f32 %v3968, %v4170
      %v4207 = vmul.f32 %v3969, %v4170
      %v4208 = vmul.f32 %v3970, %v4170
      %v4209 = vmul.f32 %v3971, %v4170
      %v4210 = vmul.f32 %v3972, %v4170
      %v4211 = vmul.f32 %v3973, %v4170
      %v4212 = vmul.f32 %v3974, %v4170
      %v4213 = vmul.f32 %v3975, %v4170
      %v4214 = vmul.f32 %v3976, %v4170
      %v4215 = vmul.f32 %v3977, %v4170
      %v4216 = vmul.f32 %v3978, %v4170
      %v4217 = vmul.f32 %v3979, %v4170
      %v4218 = vmul.f32 %v3980, %v4170
      %v4219 = vmul.f32 %v3981, %v4170
      %v4220 = vmul.f32 %v3982, %v4170
      %v4221 = vmul.f32 %v3983, %v4170
      %v4222 = vmul.f32 %v3984, %v4170
      %v4223 = vmul.f32 %v3985, %v4170
      %v4224 = vmul.f32 %v3986, %v4170
      %v4225 = vmul.f32 %v3987, %v4170
      %v4226 = vmul.f32 %v3988, %v4170
      %v4227 = vmul.f32 %v3989, %v4170
      %v4228 = vmul.f32 %v3990, %v4170
      %v4229 = vmul.f32 %v3991, %v4170
      %v4230 = vmul.f32 %v3992, %v4170
      %v4231 = vmul.f32 %v3993, %v4170
      %v4232 = vmul.f32 %v3994, %v4170
      %v4233 = vmul.f32 %v3995, %v4170
      %v4234 = vmul.f32 %v3996, %v4170
      %v4235 = vmul.f32 %v3997, %v4170
      %v4236 = vmul.f32 %v3998, %v4170
      %v4237 = vmul.f32 %v3999, %v4170
      %v4238 = vmul.f32 %v4000, %v4170
      %v4239 = vmul.f32 %v4001, %v4170
      %v4240 = vmul.f32 %v4002, %v4170
      %v4241 = vmul.f32 %v4003, %v4170
      %v4242 = vmul.f32 %v4004, %v4170
      %v4243 = vmul.f32 %v4005, %v4170
      %v4244 = vmul.f32 %v4006, %v4170
      %v4245 = vmul.f32 %v4007, %v4170
      %v4246 = vmul.f32 %v4008, %v4170
      %v4247 = vmul.f32 %v4009, %v4170
      %v4248 = vmul.f32 %v4010, %v4170
      %v4249 = vmul.f32 %v4011, %v4170
      %v4250 = vmul.f32 %v4012, %v4170
      %v4251 = vmul.f32 %v4013, %v4170
      %v4252 = vmul.f32 %v4014, %v4170
      %v4253 = vmul.f32 %v4015, %v4170
      %v4254 = vmul.f32 %v4016, %v4170
      %v4255 = vmul.f32 %v4017, %v4170
      %v4256 = vmul.f32 %v4018, %v4170
      %v4257 = vmul.f32 %v4019, %v4170
      %v4258 = vmul.f32 %v4020, %v4170
      %v4259 = vmul.f32 %v4021, %v4170
      %v4260 = vmul.f32 %v4022, %v4170
      %v4261 = vmul.f32 %v4023, %v4170
      %v4262 = vmul.f32 %v4024, %v4170
      %v4263 = vmul.f32 %v4025, %v4170
      %v4264 = vmul.f32 %v4026, %v4170
      %v4265 = vmul.f32 %v4027, %v4170
      %v4266 = vmul.f32 %v4028, %v4170
      %v4363 = vrot.slane %v4171, 1
      %v4364 = vrot.slane %v4172, 1
      %v4365 = vsel %vm857, %v4363, %v4364
      %v4366 = vrot.slane %v4173, 1
      %v4367 = vsel %vm857, %v4364, %v4366
      %v4368 = vrot.slane %v4174, 1
      %v4369 = vrot.slane %v4175, 1
      %v4370 = vsel %vm857, %v4368, %v4369
      %v4371 = vrot.slane %v4176, 1
      %v4372 = vsel %vm857, %v4369, %v4371
      %v4373 = vrot.slane %v4177, 1
      %v4374 = vrot.slane %v4178, 1
      %v4375 = vsel %vm857, %v4373, %v4374
      %v4376 = vrot.slane %v4179, 1
      %v4377 = vsel %vm857, %v4374, %v4376
      %v4378 = vrot.slane %v4180, 1
      %v4379 = vrot.slane %v4181, 1
      %v4380 = vsel %vm857, %v4378, %v4379
      %v4381 = vrot.slane %v4182, 1
      %v4382 = vsel %vm857, %v4379, %v4381
      %v4383 = vrot.slane %v4183, 1
      %v4384 = vrot.slane %v4184, 1
      %v4385 = vsel %vm857, %v4383, %v4384
      %v4386 = vrot.slane %v4185, 1
      %v4387 = vsel %vm857, %v4384, %v4386
      %v4388 = vrot.slane %v4186, 1
      %v4389 = vrot.slane %v4187, 1
      %v4390 = vsel %vm857, %v4388, %v4389
      %v4391 = vrot.slane %v4188, 1
      %v4392 = vsel %vm857, %v4389, %v4391
      %v4393 = vrot.slane %v4189, 1
      %v4394 = vrot.slane %v4190, 1
      %v4395 = vsel %vm857, %v4393, %v4394
      %v4396 = vrot.slane %v4191, 1
      %v4397 = vsel %vm857, %v4394, %v4396
      %v4398 = vrot.slane %v4192, 1
      %v4399 = vrot.slane %v4193, 1
      %v4400 = vsel %vm857, %v4398, %v4399
      %v4401 = vrot.slane %v4194, 1
      %v4402 = vsel %vm857, %v4399, %v4401
      %v4403 = vrot.slane %v4195, 1
      %v4404 = vrot.slane %v4196, 1
      %v4405 = vsel %vm857, %v4403, %v4404
      %v4406 = vrot.slane %v4197, 1
      %v4407 = vsel %vm857, %v4404, %v4406
      %v4408 = vrot.slane %v4198, 1
      %v4409 = vrot.slane %v4199, 1
      %v4410 = vsel %vm857, %v4408, %v4409
      %v4411 = vrot.slane %v4200, 1
      %v4412 = vsel %vm857, %v4409, %v4411
      %v4413 = vrot.slane %v4201, 1
      %v4414 = vrot.slane %v4202, 1
      %v4415 = vsel %vm857, %v4413, %v4414
      %v4416 = vrot.slane %v4203, 1
      %v4417 = vsel %vm857, %v4414, %v4416
      %v4418 = vrot.slane %v4204, 1
      %v4419 = vrot.slane %v4205, 1
      %v4420 = vsel %vm857, %v4418, %v4419
      %v4421 = vrot.slane %v4206, 1
      %v4422 = vsel %vm857, %v4419, %v4421
      %v4423 = vrot.slane %v4207, 1
      %v4424 = vrot.slane %v4208, 1
      %v4425 = vsel %vm857, %v4423, %v4424
      %v4426 = vrot.slane %v4209, 1
      %v4427 = vsel %vm857, %v4424, %v4426
      %v4428 = vrot.slane %v4210, 1
      %v4429 = vrot.slane %v4211, 1
      %v4430 = vsel %vm857, %v4428, %v4429
      %v4431 = vrot.slane %v4212, 1
      %v4432 = vsel %vm857, %v4429, %v4431
      %v4433 = vrot.slane %v4213, 1
      %v4434 = vrot.slane %v4214, 1
      %v4435 = vsel %vm857, %v4433, %v4434
      %v4436 = vrot.slane %v4215, 1
      %v4437 = vsel %vm857, %v4434, %v4436
      %v4438 = vrot.slane %v4216, 1
      %v4439 = vrot.slane %v4217, 1
      %v4440 = vsel %vm857, %v4438, %v4439
      %v4441 = vrot.slane %v4218, 1
      %v4442 = vsel %vm857, %v4439, %v4441
      %v4443 = vrot.slane %v4219, 1
      %v4444 = vrot.slane %v4220, 1
      %v4445 = vsel %vm857, %v4443, %v4444
      %v4446 = vrot.slane %v4221, 1
      %v4447 = vsel %vm857, %v4444, %v4446
      %v4448 = vrot.slane %v4222, 1
      %v4449 = vrot.slane %v4223, 1
      %v4450 = vsel %vm857, %v4448, %v4449
      %v4451 = vrot.slane %v4224, 1
      %v4452 = vsel %vm857, %v4449, %v4451
      %v4453 = vrot.slane %v4225, 1
      %v4454 = vrot.slane %v4226, 1
      %v4455 = vsel %vm857, %v4453, %v4454
      %v4456 = vrot.slane %v4227, 1
      %v4457 = vsel %vm857, %v4454, %v4456
      %v4458 = vrot.slane %v4228, 1
      %v4459 = vrot.slane %v4229, 1
      %v4460 = vsel %vm857, %v4458, %v4459
      %v4461 = vrot.slane %v4230, 1
      %v4462 = vsel %vm857, %v4459, %v4461
      %v4463 = vrot.slane %v4231, 1
      %v4464 = vrot.slane %v4232, 1
      %v4465 = vsel %vm857, %v4463, %v4464
      %v4466 = vrot.slane %v4233, 1
      %v4467 = vsel %vm857, %v4464, %v4466
      %v4468 = vrot.slane %v4234, 1
      %v4469 = vrot.slane %v4235, 1
      %v4470 = vsel %vm857, %v4468, %v4469
      %v4471 = vrot.slane %v4236, 1
      %v4472 = vsel %vm857, %v4469, %v4471
      %v4473 = vrot.slane %v4237, 1
      %v4474 = vrot.slane %v4238, 1
      %v4475 = vsel %vm857, %v4473, %v4474
      %v4476 = vrot.slane %v4239, 1
      %v4477 = vsel %vm857, %v4474, %v4476
      %v4478 = vrot.slane %v4240, 1
      %v4479 = vrot.slane %v4241, 1
      %v4480 = vsel %vm857, %v4478, %v4479
      %v4481 = vrot.slane %v4242, 1
      %v4482 = vsel %vm857, %v4479, %v4481
      %v4483 = vrot.slane %v4243, 1
      %v4484 = vrot.slane %v4244, 1
      %v4485 = vsel %vm857, %v4483, %v4484
      %v4486 = vrot.slane %v4245, 1
      %v4487 = vsel %vm857, %v4484, %v4486
      %v4488 = vrot.slane %v4246, 1
      %v4489 = vrot.slane %v4247, 1
      %v4490 = vsel %vm857, %v4488, %v4489
      %v4491 = vrot.slane %v4248, 1
      %v4492 = vsel %vm857, %v4489, %v4491
      %v4493 = vrot.slane %v4249, 1
      %v4494 = vrot.slane %v4250, 1
      %v4495 = vsel %vm857, %v4493, %v4494
      %v4496 = vrot.slane %v4251, 1
      %v4497 = vsel %vm857, %v4494, %v4496
      %v4498 = vrot.slane %v4252, 1
      %v4499 = vrot.slane %v4253, 1
      %v4500 = vsel %vm857, %v4498, %v4499
      %v4501 = vrot.slane %v4254, 1
      %v4502 = vsel %vm857, %v4499, %v4501
      %v4503 = vrot.slane %v4255, 1
      %v4504 = vrot.slane %v4256, 1
      %v4505 = vsel %vm857, %v4503, %v4504
      %v4506 = vrot.slane %v4257, 1
      %v4507 = vsel %vm857, %v4504, %v4506
      %v4508 = vrot.slane %v4258, 1
      %v4509 = vrot.slane %v4259, 1
      %v4510 = vsel %vm857, %v4508, %v4509
      %v4511 = vrot.slane %v4260, 1
      %v4512 = vsel %vm857, %v4509, %v4511
      %v4513 = vrot.slane %v4261, 1
      %v4514 = vrot.slane %v4262, 1
      %v4515 = vsel %vm857, %v4513, %v4514
      %v4516 = vrot.slane %v4263, 1
      %v4517 = vsel %vm857, %v4514, %v4516
      %v4518 = vrot.slane %v4264, 1
      %v4519 = vrot.slane %v4265, 1
      %v4520 = vsel %vm857, %v4518, %v4519
      %v4521 = vrot.slane %v4266, 1
      %v4522 = vsel %vm857, %v4519, %v4521
      %v4587 = vadd.f32 %v4103, %v4365
      %v4588 = vadd.f32 %v4104, %v4367
      %v4589 = vadd.f32 %v4105, %v4370
      %v4590 = vadd.f32 %v4106, %v4372
      %v4591 = vadd.f32 %v4107, %v4375
      %v4592 = vadd.f32 %v4108, %v4377
      %v4593 = vadd.f32 %v4109, %v4380
      %v4594 = vadd.f32 %v4110, %v4382
      %v4595 = vadd.f32 %v4111, %v4385
      %v4596 = vadd.f32 %v4112, %v4387
      %v4597 = vadd.f32 %v4113, %v4390
      %v4598 = vadd.f32 %v4114, %v4392
      %v4599 = vadd.f32 %v4115, %v4395
      %v4600 = vadd.f32 %v4116, %v4397
      %v4601 = vadd.f32 %v4117, %v4400
      %v4602 = vadd.f32 %v4118, %v4402
      %v4603 = vadd.f32 %v4119, %v4405
      %v4604 = vadd.f32 %v4120, %v4407
      %v4605 = vadd.f32 %v4121, %v4410
      %v4606 = vadd.f32 %v4122, %v4412
      %v4607 = vadd.f32 %v4123, %v4415
      %v4608 = vadd.f32 %v4124, %v4417
      %v4609 = vadd.f32 %v4125, %v4420
      %v4610 = vadd.f32 %v4126, %v4422
      %v4611 = vadd.f32 %v4127, %v4425
      %v4612 = vadd.f32 %v4128, %v4427
      %v4613 = vadd.f32 %v4129, %v4430
      %v4614 = vadd.f32 %v4130, %v4432
      %v4615 = vadd.f32 %v4131, %v4435
      %v4616 = vadd.f32 %v4132, %v4437
      %v4617 = vadd.f32 %v4133, %v4440
      %v4618 = vadd.f32 %v4134, %v4442
      %v4619 = vadd.f32 %v4135, %v4445
      %v4620 = vadd.f32 %v4136, %v4447
      %v4621 = vadd.f32 %v4137, %v4450
      %v4622 = vadd.f32 %v4138, %v4452
      %v4623 = vadd.f32 %v4139, %v4455
      %v4624 = vadd.f32 %v4140, %v4457
      %v4625 = vadd.f32 %v4141, %v4460
      %v4626 = vadd.f32 %v4142, %v4462
      %v4627 = vadd.f32 %v4143, %v4465
      %v4628 = vadd.f32 %v4144, %v4467
      %v4629 = vadd.f32 %v4145, %v4470
      %v4630 = vadd.f32 %v4146, %v4472
      %v4631 = vadd.f32 %v4147, %v4475
      %v4632 = vadd.f32 %v4148, %v4477
      %v4633 = vadd.f32 %v4149, %v4480
      %v4634 = vadd.f32 %v4150, %v4482
      %v4635 = vadd.f32 %v4151, %v4485
      %v4636 = vadd.f32 %v4152, %v4487
      %v4637 = vadd.f32 %v4153, %v4490
      %v4638 = vadd.f32 %v4154, %v4492
      %v4639 = vadd.f32 %v4155, %v4495
      %v4640 = vadd.f32 %v4156, %v4497
      %v4641 = vadd.f32 %v4157, %v4500
      %v4642 = vadd.f32 %v4158, %v4502
      %v4643 = vadd.f32 %v4159, %v4505
      %v4644 = vadd.f32 %v4160, %v4507
      %v4645 = vadd.f32 %v4161, %v4510
      %v4646 = vadd.f32 %v4162, %v4512
      %v4647 = vadd.f32 %v4163, %v4515
      %v4648 = vadd.f32 %v4164, %v4517
      %v4649 = vadd.f32 %v4165, %v4520
      %v4650 = vadd.f32 %v4166, %v4522
      %v4651 = vlaneseq
      %v4652 = vshrl.u32 %v4651, 7
      %v4653 = vsub.s32 2, %v4652
      %v4654 = vrot.slane %v319, %v4653
      %v4655 = vmul.f32 %v3933, %v4654
      %v4656 = vmul.f32 %v3934, %v4654
      %v4657 = vmul.f32 %v3935, %v4654
      %v4658 = vmul.f32 %v3936, %v4654
      %v4659 = vmul.f32 %v3937, %v4654
      %v4660 = vmul.f32 %v3938, %v4654
      %v4661 = vmul.f32 %v3939, %v4654
      %v4662 = vmul.f32 %v3940, %v4654
      %v4663 = vmul.f32 %v3941, %v4654
      %v4664 = vmul.f32 %v3942, %v4654
      %v4665 = vmul.f32 %v3943, %v4654
      %v4666 = vmul.f32 %v3944, %v4654
      %v4667 = vmul.f32 %v3945, %v4654
      %v4668 = vmul.f32 %v3946, %v4654
      %v4669 = vmul.f32 %v3947, %v4654
      %v4670 = vmul.f32 %v3948, %v4654
      %v4671 = vmul.f32 %v3949, %v4654
      %v4672 = vmul.f32 %v3950, %v4654
      %v4673 = vmul.f32 %v3951, %v4654
      %v4674 = vmul.f32 %v3952, %v4654
      %v4675 = vmul.f32 %v3953, %v4654
      %v4676 = vmul.f32 %v3954, %v4654
      %v4677 = vmul.f32 %v3955, %v4654
      %v4678 = vmul.f32 %v3956, %v4654
      %v4679 = vmul.f32 %v3957, %v4654
      %v4680 = vmul.f32 %v3958, %v4654
      %v4681 = vmul.f32 %v3959, %v4654
      %v4682 = vmul.f32 %v3960, %v4654
      %v4683 = vmul.f32 %v3961, %v4654
      %v4684 = vmul.f32 %v3962, %v4654
      %v4685 = vmul.f32 %v3963, %v4654
      %v4686 = vmul.f32 %v3964, %v4654
      %v4687 = vmul.f32 %v3965, %v4654
      %v4688 = vmul.f32 %v3966, %v4654
      %v4689 = vmul.f32 %v3967, %v4654
      %v4690 = vmul.f32 %v3968, %v4654
      %v4691 = vmul.f32 %v3969, %v4654
      %v4692 = vmul.f32 %v3970, %v4654
      %v4693 = vmul.f32 %v3971, %v4654
      %v4694 = vmul.f32 %v3972, %v4654
      %v4695 = vmul.f32 %v3973, %v4654
      %v4696 = vmul.f32 %v3974, %v4654
      %v4697 = vmul.f32 %v3975, %v4654
      %v4698 = vmul.f32 %v3976, %v4654
      %v4699 = vmul.f32 %v3977, %v4654
      %v4700 = vmul.f32 %v3978, %v4654
      %v4701 = vmul.f32 %v3979, %v4654
      %v4702 = vmul.f32 %v3980, %v4654
      %v4703 = vmul.f32 %v3981, %v4654
      %v4704 = vmul.f32 %v3982, %v4654
      %v4705 = vmul.f32 %v3983, %v4654
      %v4706 = vmul.f32 %v3984, %v4654
      %v4707 = vmul.f32 %v3985, %v4654
      %v4708 = vmul.f32 %v3986, %v4654
      %v4709 = vmul.f32 %v3987, %v4654
      %v4710 = vmul.f32 %v3988, %v4654
      %v4711 = vmul.f32 %v3989, %v4654
      %v4712 = vmul.f32 %v3990, %v4654
      %v4713 = vmul.f32 %v3991, %v4654
      %v4714 = vmul.f32 %v3992, %v4654
      %v4715 = vmul.f32 %v3993, %v4654
      %v4716 = vmul.f32 %v3994, %v4654
      %v4717 = vmul.f32 %v3995, %v4654
      %v4718 = vmul.f32 %v3996, %v4654
      %v4719 = vmul.f32 %v3997, %v4654
      %v4720 = vmul.f32 %v3998, %v4654
      %v4721 = vmul.f32 %v3999, %v4654
      %v4722 = vmul.f32 %v4000, %v4654
      %v4723 = vmul.f32 %v4001, %v4654
      %v4724 = vmul.f32 %v4002, %v4654
      %v4725 = vmul.f32 %v4003, %v4654
      %v4726 = vmul.f32 %v4004, %v4654
      %v4727 = vmul.f32 %v4005, %v4654
      %v4728 = vmul.f32 %v4006, %v4654
      %v4729 = vmul.f32 %v4007, %v4654
      %v4730 = vmul.f32 %v4008, %v4654
      %v4731 = vmul.f32 %v4009, %v4654
      %v4732 = vmul.f32 %v4010, %v4654
      %v4733 = vmul.f32 %v4011, %v4654
      %v4734 = vmul.f32 %v4012, %v4654
      %v4735 = vmul.f32 %v4013, %v4654
      %v4736 = vmul.f32 %v4014, %v4654
      %v4737 = vmul.f32 %v4015, %v4654
      %v4738 = vmul.f32 %v4016, %v4654
      %v4739 = vmul.f32 %v4017, %v4654
      %v4740 = vmul.f32 %v4018, %v4654
      %v4741 = vmul.f32 %v4019, %v4654
      %v4742 = vmul.f32 %v4020, %v4654
      %v4743 = vmul.f32 %v4021, %v4654
      %v4744 = vmul.f32 %v4022, %v4654
      %v4745 = vmul.f32 %v4023, %v4654
      %v4746 = vmul.f32 %v4024, %v4654
      %v4747 = vmul.f32 %v4025, %v4654
      %v4748 = vmul.f32 %v4026, %v4654
      %v4749 = vmul.f32 %v4027, %v4654
      %v4750 = vmul.f32 %v4028, %v4654
      %v4847 = vrot.slane %v4655, 2
      %v4848 = vrot.slane %v4656, 2
      %v4849 = vsel %vm1342, %v4847, %v4848
      %v4850 = vrot.slane %v4657, 2
      %v4851 = vsel %vm1342, %v4848, %v4850
      %v4852 = vrot.slane %v4658, 2
      %v4853 = vrot.slane %v4659, 2
      %v4854 = vsel %vm1342, %v4852, %v4853
      %v4855 = vrot.slane %v4660, 2
      %v4856 = vsel %vm1342, %v4853, %v4855
      %v4857 = vrot.slane %v4661, 2
      %v4858 = vrot.slane %v4662, 2
      %v4859 = vsel %vm1342, %v4857, %v4858
      %v4860 = vrot.slane %v4663, 2
      %v4861 = vsel %vm1342, %v4858, %v4860
      %v4862 = vrot.slane %v4664, 2
      %v4863 = vrot.slane %v4665, 2
      %v4864 = vsel %vm1342, %v4862, %v4863
      %v4865 = vrot.slane %v4666, 2
      %v4866 = vsel %vm1342, %v4863, %v4865
      %v4867 = vrot.slane %v4667, 2
      %v4868 = vrot.slane %v4668, 2
      %v4869 = vsel %vm1342, %v4867, %v4868
      %v4870 = vrot.slane %v4669, 2
      %v4871 = vsel %vm1342, %v4868, %v4870
      %v4872 = vrot.slane %v4670, 2
      %v4873 = vrot.slane %v4671, 2
      %v4874 = vsel %vm1342, %v4872, %v4873
      %v4875 = vrot.slane %v4672, 2
      %v4876 = vsel %vm1342, %v4873, %v4875
      %v4877 = vrot.slane %v4673, 2
      %v4878 = vrot.slane %v4674, 2
      %v4879 = vsel %vm1342, %v4877, %v4878
      %v4880 = vrot.slane %v4675, 2
      %v4881 = vsel %vm1342, %v4878, %v4880
      %v4882 = vrot.slane %v4676, 2
      %v4883 = vrot.slane %v4677, 2
      %v4884 = vsel %vm1342, %v4882, %v4883
      %v4885 = vrot.slane %v4678, 2
      %v4886 = vsel %vm1342, %v4883, %v4885
      %v4887 = vrot.slane %v4679, 2
      %v4888 = vrot.slane %v4680, 2
      %v4889 = vsel %vm1342, %v4887, %v4888
      %v4890 = vrot.slane %v4681, 2
      %v4891 = vsel %vm1342, %v4888, %v4890
      %v4892 = vrot.slane %v4682, 2
      %v4893 = vrot.slane %v4683, 2
      %v4894 = vsel %vm1342, %v4892, %v4893
      %v4895 = vrot.slane %v4684, 2
      %v4896 = vsel %vm1342, %v4893, %v4895
      %v4897 = vrot.slane %v4685, 2
      %v4898 = vrot.slane %v4686, 2
      %v4899 = vsel %vm1342, %v4897, %v4898
      %v4900 = vrot.slane %v4687, 2
      %v4901 = vsel %vm1342, %v4898, %v4900
      %v4902 = vrot.slane %v4688, 2
      %v4903 = vrot.slane %v4689, 2
      %v4904 = vsel %vm1342, %v4902, %v4903
      %v4905 = vrot.slane %v4690, 2
      %v4906 = vsel %vm1342, %v4903, %v4905
      %v4907 = vrot.slane %v4691, 2
      %v4908 = vrot.slane %v4692, 2
      %v4909 = vsel %vm1342, %v4907, %v4908
      %v4910 = vrot.slane %v4693, 2
      %v4911 = vsel %vm1342, %v4908, %v4910
      %v4912 = vrot.slane %v4694, 2
      %v4913 = vrot.slane %v4695, 2
      %v4914 = vsel %vm1342, %v4912, %v4913
      %v4915 = vrot.slane %v4696, 2
      %v4916 = vsel %vm1342, %v4913, %v4915
      %v4917 = vrot.slane %v4697, 2
      %v4918 = vrot.slane %v4698, 2
      %v4919 = vsel %vm1342, %v4917, %v4918
      %v4920 = vrot.slane %v4699, 2
      %v4921 = vsel %vm1342, %v4918, %v4920
      %v4922 = vrot.slane %v4700, 2
      %v4923 = vrot.slane %v4701, 2
      %v4924 = vsel %vm1342, %v4922, %v4923
      %v4925 = vrot.slane %v4702, 2
      %v4926 = vsel %vm1342, %v4923, %v4925
      %v4927 = vrot.slane %v4703, 2
      %v4928 = vrot.slane %v4704, 2
      %v4929 = vsel %vm1342, %v4927, %v4928
      %v4930 = vrot.slane %v4705, 2
      %v4931 = vsel %vm1342, %v4928, %v4930
      %v4932 = vrot.slane %v4706, 2
      %v4933 = vrot.slane %v4707, 2
      %v4934 = vsel %vm1342, %v4932, %v4933
      %v4935 = vrot.slane %v4708, 2
      %v4936 = vsel %vm1342, %v4933, %v4935
      %v4937 = vrot.slane %v4709, 2
      %v4938 = vrot.slane %v4710, 2
      %v4939 = vsel %vm1342, %v4937, %v4938
      %v4940 = vrot.slane %v4711, 2
      %v4941 = vsel %vm1342, %v4938, %v4940
      %v4942 = vrot.slane %v4712, 2
      %v4943 = vrot.slane %v4713, 2
      %v4944 = vsel %vm1342, %v4942, %v4943
      %v4945 = vrot.slane %v4714, 2
      %v4946 = vsel %vm1342, %v4943, %v4945
      %v4947 = vrot.slane %v4715, 2
      %v4948 = vrot.slane %v4716, 2
      %v4949 = vsel %vm1342, %v4947, %v4948
      %v4950 = vrot.slane %v4717, 2
      %v4951 = vsel %vm1342, %v4948, %v4950
      %v4952 = vrot.slane %v4718, 2
      %v4953 = vrot.slane %v4719, 2
      %v4954 = vsel %vm1342, %v4952, %v4953
      %v4955 = vrot.slane %v4720, 2
      %v4956 = vsel %vm1342, %v4953, %v4955
      %v4957 = vrot.slane %v4721, 2
      %v4958 = vrot.slane %v4722, 2
      %v4959 = vsel %vm1342, %v4957, %v4958
      %v4960 = vrot.slane %v4723, 2
      %v4961 = vsel %vm1342, %v4958, %v4960
      %v4962 = vrot.slane %v4724, 2
      %v4963 = vrot.slane %v4725, 2
      %v4964 = vsel %vm1342, %v4962, %v4963
      %v4965 = vrot.slane %v4726, 2
      %v4966 = vsel %vm1342, %v4963, %v4965
      %v4967 = vrot.slane %v4727, 2
      %v4968 = vrot.slane %v4728, 2
      %v4969 = vsel %vm1342, %v4967, %v4968
      %v4970 = vrot.slane %v4729, 2
      %v4971 = vsel %vm1342, %v4968, %v4970
      %v4972 = vrot.slane %v4730, 2
      %v4973 = vrot.slane %v4731, 2
      %v4974 = vsel %vm1342, %v4972, %v4973
      %v4975 = vrot.slane %v4732, 2
      %v4976 = vsel %vm1342, %v4973, %v4975
      %v4977 = vrot.slane %v4733, 2
      %v4978 = vrot.slane %v4734, 2
      %v4979 = vsel %vm1342, %v4977, %v4978
      %v4980 = vrot.slane %v4735, 2
      %v4981 = vsel %vm1342, %v4978, %v4980
      %v4982 = vrot.slane %v4736, 2
      %v4983 = vrot.slane %v4737, 2
      %v4984 = vsel %vm1342, %v4982, %v4983
      %v4985 = vrot.slane %v4738, 2
      %v4986 = vsel %vm1342, %v4983, %v4985
      %v4987 = vrot.slane %v4739, 2
      %v4988 = vrot.slane %v4740, 2
      %v4989 = vsel %vm1342, %v4987, %v4988
      %v4990 = vrot.slane %v4741, 2
      %v4991 = vsel %vm1342, %v4988, %v4990
      %v4992 = vrot.slane %v4742, 2
      %v4993 = vrot.slane %v4743, 2
      %v4994 = vsel %vm1342, %v4992, %v4993
      %v4995 = vrot.slane %v4744, 2
      %v4996 = vsel %vm1342, %v4993, %v4995
      %v4997 = vrot.slane %v4745, 2
      %v4998 = vrot.slane %v4746, 2
      %v4999 = vsel %vm1342, %v4997, %v4998
      %v5000 = vrot.slane %v4747, 2
      %v5001 = vsel %vm1342, %v4998, %v5000
      %v5002 = vrot.slane %v4748, 2
      %v5003 = vrot.slane %v4749, 2
      %v5004 = vsel %vm1342, %v5002, %v5003
      %v5005 = vrot.slane %v4750, 2
      %v5006 = vsel %vm1342, %v5003, %v5005
      %v5071 = vadd.f32 %v4587, %v4849
      %v5072 = vadd.f32 %v4588, %v4851
      %v5073 = vadd.f32 %v4589, %v4854
      %v5074 = vadd.f32 %v4590, %v4856
      %v5075 = vadd.f32 %v4591, %v4859
      %v5076 = vadd.f32 %v4592, %v4861
      %v5077 = vadd.f32 %v4593, %v4864
      %v5078 = vadd.f32 %v4594, %v4866
      %v5079 = vadd.f32 %v4595, %v4869
      %v5080 = vadd.f32 %v4596, %v4871
      %v5081 = vadd.f32 %v4597, %v4874
      %v5082 = vadd.f32 %v4598, %v4876
      %v5083 = vadd.f32 %v4599, %v4879
      %v5084 = vadd.f32 %v4600, %v4881
      %v5085 = vadd.f32 %v4601, %v4884
      %v5086 = vadd.f32 %v4602, %v4886
      %v5087 = vadd.f32 %v4603, %v4889
      %v5088 = vadd.f32 %v4604, %v4891
      %v5089 = vadd.f32 %v4605, %v4894
      %v5090 = vadd.f32 %v4606, %v4896
      %v5091 = vadd.f32 %v4607, %v4899
      %v5092 = vadd.f32 %v4608, %v4901
      %v5093 = vadd.f32 %v4609, %v4904
      %v5094 = vadd.f32 %v4610, %v4906
      %v5095 = vadd.f32 %v4611, %v4909
      %v5096 = vadd.f32 %v4612, %v4911
      %v5097 = vadd.f32 %v4613, %v4914
      %v5098 = vadd.f32 %v4614, %v4916
      %v5099 = vadd.f32 %v4615, %v4919
      %v5100 = vadd.f32 %v4616, %v4921
      %v5101 = vadd.f32 %v4617, %v4924
      %v5102 = vadd.f32 %v4618, %v4926
      %v5103 = vadd.f32 %v4619, %v4929
      %v5104 = vadd.f32 %v4620, %v4931
      %v5105 = vadd.f32 %v4621, %v4934
      %v5106 = vadd.f32 %v4622, %v4936
      %v5107 = vadd.f32 %v4623, %v4939
      %v5108 = vadd.f32 %v4624, %v4941
      %v5109 = vadd.f32 %v4625, %v4944
      %v5110 = vadd.f32 %v4626, %v4946
      %v5111 = vadd.f32 %v4627, %v4949
      %v5112 = vadd.f32 %v4628, %v4951
      %v5113 = vadd.f32 %v4629, %v4954
      %v5114 = vadd.f32 %v4630, %v4956
      %v5115 = vadd.f32 %v4631, %v4959
      %v5116 = vadd.f32 %v4632, %v4961
      %v5117 = vadd.f32 %v4633, %v4964
      %v5118 = vadd.f32 %v4634, %v4966
      %v5119 = vadd.f32 %v4635, %v4969
      %v5120 = vadd.f32 %v4636, %v4971
      %v5121 = vadd.f32 %v4637, %v4974
      %v5122 = vadd.f32 %v4638, %v4976
      %v5123 = vadd.f32 %v4639, %v4979
      %v5124 = vadd.f32 %v4640, %v4981
      %v5125 = vadd.f32 %v4641, %v4984
      %v5126 = vadd.f32 %v4642, %v4986
      %v5127 = vadd.f32 %v4643, %v4989
      %v5128 = vadd.f32 %v4644, %v4991
      %v5129 = vadd.f32 %v4645, %v4994
      %v5130 = vadd.f32 %v4646, %v4996
      %v5131 = vadd.f32 %v4647, %v4999
      %v5132 = vadd.f32 %v4648, %v5001
      %v5133 = vadd.f32 %v4649, %v5004
      %v5134 = vadd.f32 %v4650, %v5006
      %v5135 = vlaneseq
      %v5136 = vshrl.u32 %v5135, 7
      %v5137 = vsub.s32 0, %v5136
      %v5138 = vrot.slane %v320, %v5137
      %v5139 = vmul.f32 %v3936, %v5138
      %v5140 = vmul.f32 %v3937, %v5138
      %v5141 = vmul.f32 %v3939, %v5138
      %v5142 = vmul.f32 %v3940, %v5138
      %v5143 = vmul.f32 %v3942, %v5138
      %v5144 = vmul.f32 %v3943, %v5138
      %v5145 = vmul.f32 %v3945, %v5138
      %v5146 = vmul.f32 %v3946, %v5138
      %v5147 = vmul.f32 %v3948, %v5138
      %v5148 = vmul.f32 %v3949, %v5138
      %v5149 = vmul.f32 %v3951, %v5138
      %v5150 = vmul.f32 %v3952, %v5138
      %v5151 = vmul.f32 %v3954, %v5138
      %v5152 = vmul.f32 %v3955, %v5138
      %v5153 = vmul.f32 %v3957, %v5138
      %v5154 = vmul.f32 %v3958, %v5138
      %v5155 = vmul.f32 %v3960, %v5138
      %v5156 = vmul.f32 %v3961, %v5138
      %v5157 = vmul.f32 %v3963, %v5138
      %v5158 = vmul.f32 %v3964, %v5138
      %v5159 = vmul.f32 %v3966, %v5138
      %v5160 = vmul.f32 %v3967, %v5138
      %v5161 = vmul.f32 %v3969, %v5138
      %v5162 = vmul.f32 %v3970, %v5138
      %v5163 = vmul.f32 %v3972, %v5138
      %v5164 = vmul.f32 %v3973, %v5138
      %v5165 = vmul.f32 %v3975, %v5138
      %v5166 = vmul.f32 %v3976, %v5138
      %v5167 = vmul.f32 %v3978, %v5138
      %v5168 = vmul.f32 %v3979, %v5138
      %v5169 = vmul.f32 %v3981, %v5138
      %v5170 = vmul.f32 %v3982, %v5138
      %v5171 = vmul.f32 %v3984, %v5138
      %v5172 = vmul.f32 %v3985, %v5138
      %v5173 = vmul.f32 %v3987, %v5138
      %v5174 = vmul.f32 %v3988, %v5138
      %v5175 = vmul.f32 %v3990, %v5138
      %v5176 = vmul.f32 %v3991, %v5138
      %v5177 = vmul.f32 %v3993, %v5138
      %v5178 = vmul.f32 %v3994, %v5138
      %v5179 = vmul.f32 %v3996, %v5138
      %v5180 = vmul.f32 %v3997, %v5138
      %v5181 = vmul.f32 %v3999, %v5138
      %v5182 = vmul.f32 %v4000, %v5138
      %v5183 = vmul.f32 %v4002, %v5138
      %v5184 = vmul.f32 %v4003, %v5138
      %v5185 = vmul.f32 %v4005, %v5138
      %v5186 = vmul.f32 %v4006, %v5138
      %v5187 = vmul.f32 %v4008, %v5138
      %v5188 = vmul.f32 %v4009, %v5138
      %v5189 = vmul.f32 %v4011, %v5138
      %v5190 = vmul.f32 %v4012, %v5138
      %v5191 = vmul.f32 %v4014, %v5138
      %v5192 = vmul.f32 %v4015, %v5138
      %v5193 = vmul.f32 %v4017, %v5138
      %v5194 = vmul.f32 %v4018, %v5138
      %v5195 = vmul.f32 %v4020, %v5138
      %v5196 = vmul.f32 %v4021, %v5138
      %v5197 = vmul.f32 %v4023, %v5138
      %v5198 = vmul.f32 %v4024, %v5138
      %v5199 = vmul.f32 %v4026, %v5138
      %v5200 = vmul.f32 %v4027, %v5138
      %v5201 = vmul.f32 %v4029, %v5138
      %v5202 = vmul.f32 %v4030, %v5138
      %v5203 = vadd.f32 %v5071, %v5139
      %v5204 = vadd.f32 %v5072, %v5140
      %v5205 = vadd.f32 %v5073, %v5141
      %v5206 = vadd.f32 %v5074, %v5142
      %v5207 = vadd.f32 %v5075, %v5143
      %v5208 = vadd.f32 %v5076, %v5144
      %v5209 = vadd.f32 %v5077, %v5145
      %v5210 = vadd.f32 %v5078, %v5146
      %v5211 = vadd.f32 %v5079, %v5147
      %v5212 = vadd.f32 %v5080, %v5148
      %v5213 = vadd.f32 %v5081, %v5149
      %v5214 = vadd.f32 %v5082, %v5150
      %v5215 = vadd.f32 %v5083, %v5151
      %v5216 = vadd.f32 %v5084, %v5152
      %v5217 = vadd.f32 %v5085, %v5153
      %v5218 = vadd.f32 %v5086, %v5154
      %v5219 = vadd.f32 %v5087, %v5155
      %v5220 = vadd.f32 %v5088, %v5156
      %v5221 = vadd.f32 %v5089, %v5157
      %v5222 = vadd.f32 %v5090, %v5158
      %v5223 = vadd.f32 %v5091, %v5159
      %v5224 = vadd.f32 %v5092, %v5160
      %v5225 = vadd.f32 %v5093, %v5161
      %v5226 = vadd.f32 %v5094, %v5162
      %v5227 = vadd.f32 %v5095, %v5163
      %v5228 = vadd.f32 %v5096, %v5164
      %v5229 = vadd.f32 %v5097, %v5165
      %v5230 = vadd.f32 %v5098, %v5166
      %v5231 = vadd.f32 %v5099, %v5167
      %v5232 = vadd.f32 %v5100, %v5168
      %v5233 = vadd.f32 %v5101, %v5169
      %v5234 = vadd.f32 %v5102, %v5170
      %v5235 = vadd.f32 %v5103, %v5171
      %v5236 = vadd.f32 %v5104, %v5172
      %v5237 = vadd.f32 %v5105, %v5173
      %v5238 = vadd.f32 %v5106, %v5174
      %v5239 = vadd.f32 %v5107, %v5175
      %v5240 = vadd.f32 %v5108, %v5176
      %v5241 = vadd.f32 %v5109, %v5177
      %v5242 = vadd.f32 %v5110, %v5178
      %v5243 = vadd.f32 %v5111, %v5179
      %v5244 = vadd.f32 %v5112, %v5180
      %v5245 = vadd.f32 %v5113, %v5181
      %v5246 = vadd.f32 %v5114, %v5182
      %v5247 = vadd.f32 %v5115, %v5183
      %v5248 = vadd.f32 %v5116, %v5184
      %v5249 = vadd.f32 %v5117, %v5185
      %v5250 = vadd.f32 %v5118, %v5186
      %v5251 = vadd.f32 %v5119, %v5187
      %v5252 = vadd.f32 %v5120, %v5188
      %v5253 = vadd.f32 %v5121, %v5189
      %v5254 = vadd.f32 %v5122, %v5190
      %v5255 = vadd.f32 %v5123, %v5191
      %v5256 = vadd.f32 %v5124, %v5192
      %v5257 = vadd.f32 %v5125, %v5193
      %v5258 = vadd.f32 %v5126, %v5194
      %v5259 = vadd.f32 %v5127, %v5195
      %v5260 = vadd.f32 %v5128, %v5196
      %v5261 = vadd.f32 %v5129, %v5197
      %v5262 = vadd.f32 %v5130, %v5198
      %v5263 = vadd.f32 %v5131, %v5199
      %v5264 = vadd.f32 %v5132, %v5200
      %v5265 = vadd.f32 %v5133, %v5201
      %v5266 = vadd.f32 %v5134, %v5202
      %v5267 = vlaneseq
      %v5268 = vshrl.u32 %v5267, 7
      %v5269 = vsub.s32 1, %v5268
      %v5270 = vrot.slane %v320, %v5269
      %v5271 = vmul.f32 %v3936, %v5270
      %v5272 = vmul.f32 %v3937, %v5270
      %v5273 = vmul.f32 %v3938, %v5270
      %v5274 = vmul.f32 %v3939, %v5270
      %v5275 = vmul.f32 %v3940, %v5270
      %v5276 = vmul.f32 %v3941, %v5270
      %v5277 = vmul.f32 %v3942, %v5270
      %v5278 = vmul.f32 %v3943, %v5270
      %v5279 = vmul.f32 %v3944, %v5270
      %v5280 = vmul.f32 %v3945, %v5270
      %v5281 = vmul.f32 %v3946, %v5270
      %v5282 = vmul.f32 %v3947, %v5270
      %v5283 = vmul.f32 %v3948, %v5270
      %v5284 = vmul.f32 %v3949, %v5270
      %v5285 = vmul.f32 %v3950, %v5270
      %v5286 = vmul.f32 %v3951, %v5270
      %v5287 = vmul.f32 %v3952, %v5270
      %v5288 = vmul.f32 %v3953, %v5270
      %v5289 = vmul.f32 %v3954, %v5270
      %v5290 = vmul.f32 %v3955, %v5270
      %v5291 = vmul.f32 %v3956, %v5270
      %v5292 = vmul.f32 %v3957, %v5270
      %v5293 = vmul.f32 %v3958, %v5270
      %v5294 = vmul.f32 %v3959, %v5270
      %v5295 = vmul.f32 %v3960, %v5270
      %v5296 = vmul.f32 %v3961, %v5270
      %v5297 = vmul.f32 %v3962, %v5270
      %v5298 = vmul.f32 %v3963, %v5270
      %v5299 = vmul.f32 %v3964, %v5270
      %v5300 = vmul.f32 %v3965, %v5270
      %v5301 = vmul.f32 %v3966, %v5270
      %v5302 = vmul.f32 %v3967, %v5270
      %v5303 = vmul.f32 %v3968, %v5270
      %v5304 = vmul.f32 %v3969, %v5270
      %v5305 = vmul.f32 %v3970, %v5270
      %v5306 = vmul.f32 %v3971, %v5270
      %v5307 = vmul.f32 %v3972, %v5270
      %v5308 = vmul.f32 %v3973, %v5270
      %v5309 = vmul.f32 %v3974, %v5270
      %v5310 = vmul.f32 %v3975, %v5270
      %v5311 = vmul.f32 %v3976, %v5270
      %v5312 = vmul.f32 %v3977, %v5270
      %v5313 = vmul.f32 %v3978, %v5270
      %v5314 = vmul.f32 %v3979, %v5270
      %v5315 = vmul.f32 %v3980, %v5270
      %v5316 = vmul.f32 %v3981, %v5270
      %v5317 = vmul.f32 %v3982, %v5270
      %v5318 = vmul.f32 %v3983, %v5270
      %v5319 = vmul.f32 %v3984, %v5270
      %v5320 = vmul.f32 %v3985, %v5270
      %v5321 = vmul.f32 %v3986, %v5270
      %v5322 = vmul.f32 %v3987, %v5270
      %v5323 = vmul.f32 %v3988, %v5270
      %v5324 = vmul.f32 %v3989, %v5270
      %v5325 = vmul.f32 %v3990, %v5270
      %v5326 = vmul.f32 %v3991, %v5270
      %v5327 = vmul.f32 %v3992, %v5270
      %v5328 = vmul.f32 %v3993, %v5270
      %v5329 = vmul.f32 %v3994, %v5270
      %v5330 = vmul.f32 %v3995, %v5270
      %v5331 = vmul.f32 %v3996, %v5270
      %v5332 = vmul.f32 %v3997, %v5270
      %v5333 = vmul.f32 %v3998, %v5270
      %v5334 = vmul.f32 %v3999, %v5270
      %v5335 = vmul.f32 %v4000, %v5270
      %v5336 = vmul.f32 %v4001, %v5270
      %v5337 = vmul.f32 %v4002, %v5270
      %v5338 = vmul.f32 %v4003, %v5270
      %v5339 = vmul.f32 %v4004, %v5270
      %v5340 = vmul.f32 %v4005, %v5270
      %v5341 = vmul.f32 %v4006, %v5270
      %v5342 = vmul.f32 %v4007, %v5270
      %v5343 = vmul.f32 %v4008, %v5270
      %v5344 = vmul.f32 %v4009, %v5270
      %v5345 = vmul.f32 %v4010, %v5270
      %v5346 = vmul.f32 %v4011, %v5270
      %v5347 = vmul.f32 %v4012, %v5270
      %v5348 = vmul.f32 %v4013, %v5270
      %v5349 = vmul.f32 %v4014, %v5270
      %v5350 = vmul.f32 %v4015, %v5270
      %v5351 = vmul.f32 %v4016, %v5270
      %v5352 = vmul.f32 %v4017, %v5270
      %v5353 = vmul.f32 %v4018, %v5270
      %v5354 = vmul.f32 %v4019, %v5270
      %v5355 = vmul.f32 %v4020, %v5270
      %v5356 = vmul.f32 %v4021, %v5270
      %v5357 = vmul.f32 %v4022, %v5270
      %v5358 = vmul.f32 %v4023, %v5270
      %v5359 = vmul.f32 %v4024, %v5270
      %v5360 = vmul.f32 %v4025, %v5270
      %v5361 = vmul.f32 %v4026, %v5270
      %v5362 = vmul.f32 %v4027, %v5270
      %v5363 = vmul.f32 %v4028, %v5270
      %v5364 = vmul.f32 %v4029, %v5270
      %v5365 = vmul.f32 %v4030, %v5270
      %v5366 = vmul.f32 %v4031, %v5270
      %v5463 = vrot.slane %v5271, 1
      %v5464 = vrot.slane %v5272, 1
      %v5465 = vsel %vm857, %v5463, %v5464
      %v5466 = vrot.slane %v5273, 1
      %v5467 = vsel %vm857, %v5464, %v5466
      %v5468 = vrot.slane %v5274, 1
      %v5469 = vrot.slane %v5275, 1
      %v5470 = vsel %vm857, %v5468, %v5469
      %v5471 = vrot.slane %v5276, 1
      %v5472 = vsel %vm857, %v5469, %v5471
      %v5473 = vrot.slane %v5277, 1
      %v5474 = vrot.slane %v5278, 1
      %v5475 = vsel %vm857, %v5473, %v5474
      %v5476 = vrot.slane %v5279, 1
      %v5477 = vsel %vm857, %v5474, %v5476
      %v5478 = vrot.slane %v5280, 1
      %v5479 = vrot.slane %v5281, 1
      %v5480 = vsel %vm857, %v5478, %v5479
      %v5481 = vrot.slane %v5282, 1
      %v5482 = vsel %vm857, %v5479, %v5481
      %v5483 = vrot.slane %v5283, 1
      %v5484 = vrot.slane %v5284, 1
      %v5485 = vsel %vm857, %v5483, %v5484
      %v5486 = vrot.slane %v5285, 1
      %v5487 = vsel %vm857, %v5484, %v5486
      %v5488 = vrot.slane %v5286, 1
      %v5489 = vrot.slane %v5287, 1
      %v5490 = vsel %vm857, %v5488, %v5489
      %v5491 = vrot.slane %v5288, 1
      %v5492 = vsel %vm857, %v5489, %v5491
      %v5493 = vrot.slane %v5289, 1
      %v5494 = vrot.slane %v5290, 1
      %v5495 = vsel %vm857, %v5493, %v5494
      %v5496 = vrot.slane %v5291, 1
      %v5497 = vsel %vm857, %v5494, %v5496
      %v5498 = vrot.slane %v5292, 1
      %v5499 = vrot.slane %v5293, 1
      %v5500 = vsel %vm857, %v5498, %v5499
      %v5501 = vrot.slane %v5294, 1
      %v5502 = vsel %vm857, %v5499, %v5501
      %v5503 = vrot.slane %v5295, 1
      %v5504 = vrot.slane %v5296, 1
      %v5505 = vsel %vm857, %v5503, %v5504
      %v5506 = vrot.slane %v5297, 1
      %v5507 = vsel %vm857, %v5504, %v5506
      %v5508 = vrot.slane %v5298, 1
      %v5509 = vrot.slane %v5299, 1
      %v5510 = vsel %vm857, %v5508, %v5509
      %v5511 = vrot.slane %v5300, 1
      %v5512 = vsel %vm857, %v5509, %v5511
      %v5513 = vrot.slane %v5301, 1
      %v5514 = vrot.slane %v5302, 1
      %v5515 = vsel %vm857, %v5513, %v5514
      %v5516 = vrot.slane %v5303, 1
      %v5517 = vsel %vm857, %v5514, %v5516
      %v5518 = vrot.slane %v5304, 1
      %v5519 = vrot.slane %v5305, 1
      %v5520 = vsel %vm857, %v5518, %v5519
      %v5521 = vrot.slane %v5306, 1
      %v5522 = vsel %vm857, %v5519, %v5521
      %v5523 = vrot.slane %v5307, 1
      %v5524 = vrot.slane %v5308, 1
      %v5525 = vsel %vm857, %v5523, %v5524
      %v5526 = vrot.slane %v5309, 1
      %v5527 = vsel %vm857, %v5524, %v5526
      %v5528 = vrot.slane %v5310, 1
      %v5529 = vrot.slane %v5311, 1
      %v5530 = vsel %vm857, %v5528, %v5529
      %v5531 = vrot.slane %v5312, 1
      %v5532 = vsel %vm857, %v5529, %v5531
      %v5533 = vrot.slane %v5313, 1
      %v5534 = vrot.slane %v5314, 1
      %v5535 = vsel %vm857, %v5533, %v5534
      %v5536 = vrot.slane %v5315, 1
      %v5537 = vsel %vm857, %v5534, %v5536
      %v5538 = vrot.slane %v5316, 1
      %v5539 = vrot.slane %v5317, 1
      %v5540 = vsel %vm857, %v5538, %v5539
      %v5541 = vrot.slane %v5318, 1
      %v5542 = vsel %vm857, %v5539, %v5541
      %v5543 = vrot.slane %v5319, 1
      %v5544 = vrot.slane %v5320, 1
      %v5545 = vsel %vm857, %v5543, %v5544
      %v5546 = vrot.slane %v5321, 1
      %v5547 = vsel %vm857, %v5544, %v5546
      %v5548 = vrot.slane %v5322, 1
      %v5549 = vrot.slane %v5323, 1
      %v5550 = vsel %vm857, %v5548, %v5549
      %v5551 = vrot.slane %v5324, 1
      %v5552 = vsel %vm857, %v5549, %v5551
      %v5553 = vrot.slane %v5325, 1
      %v5554 = vrot.slane %v5326, 1
      %v5555 = vsel %vm857, %v5553, %v5554
      %v5556 = vrot.slane %v5327, 1
      %v5557 = vsel %vm857, %v5554, %v5556
      %v5558 = vrot.slane %v5328, 1
      %v5559 = vrot.slane %v5329, 1
      %v5560 = vsel %vm857, %v5558, %v5559
      %v5561 = vrot.slane %v5330, 1
      %v5562 = vsel %vm857, %v5559, %v5561
      %v5563 = vrot.slane %v5331, 1
      %v5564 = vrot.slane %v5332, 1
      %v5565 = vsel %vm857, %v5563, %v5564
      %v5566 = vrot.slane %v5333, 1
      %v5567 = vsel %vm857, %v5564, %v5566
      %v5568 = vrot.slane %v5334, 1
      %v5569 = vrot.slane %v5335, 1
      %v5570 = vsel %vm857, %v5568, %v5569
      %v5571 = vrot.slane %v5336, 1
      %v5572 = vsel %vm857, %v5569, %v5571
      %v5573 = vrot.slane %v5337, 1
      %v5574 = vrot.slane %v5338, 1
      %v5575 = vsel %vm857, %v5573, %v5574
      %v5576 = vrot.slane %v5339, 1
      %v5577 = vsel %vm857, %v5574, %v5576
      %v5578 = vrot.slane %v5340, 1
      %v5579 = vrot.slane %v5341, 1
      %v5580 = vsel %vm857, %v5578, %v5579
      %v5581 = vrot.slane %v5342, 1
      %v5582 = vsel %vm857, %v5579, %v5581
      %v5583 = vrot.slane %v5343, 1
      %v5584 = vrot.slane %v5344, 1
      %v5585 = vsel %vm857, %v5583, %v5584
      %v5586 = vrot.slane %v5345, 1
      %v5587 = vsel %vm857, %v5584, %v5586
      %v5588 = vrot.slane %v5346, 1
      %v5589 = vrot.slane %v5347, 1
      %v5590 = vsel %vm857, %v5588, %v5589
      %v5591 = vrot.slane %v5348, 1
      %v5592 = vsel %vm857, %v5589, %v5591
      %v5593 = vrot.slane %v5349, 1
      %v5594 = vrot.slane %v5350, 1
      %v5595 = vsel %vm857, %v5593, %v5594
      %v5596 = vrot.slane %v5351, 1
      %v5597 = vsel %vm857, %v5594, %v5596
      %v5598 = vrot.slane %v5352, 1
      %v5599 = vrot.slane %v5353, 1
      %v5600 = vsel %vm857, %v5598, %v5599
      %v5601 = vrot.slane %v5354, 1
      %v5602 = vsel %vm857, %v5599, %v5601
      %v5603 = vrot.slane %v5355, 1
      %v5604 = vrot.slane %v5356, 1
      %v5605 = vsel %vm857, %v5603, %v5604
      %v5606 = vrot.slane %v5357, 1
      %v5607 = vsel %vm857, %v5604, %v5606
      %v5608 = vrot.slane %v5358, 1
      %v5609 = vrot.slane %v5359, 1
      %v5610 = vsel %vm857, %v5608, %v5609
      %v5611 = vrot.slane %v5360, 1
      %v5612 = vsel %vm857, %v5609, %v5611
      %v5613 = vrot.slane %v5361, 1
      %v5614 = vrot.slane %v5362, 1
      %v5615 = vsel %vm857, %v5613, %v5614
      %v5616 = vrot.slane %v5363, 1
      %v5617 = vsel %vm857, %v5614, %v5616
      %v5618 = vrot.slane %v5364, 1
      %v5619 = vrot.slane %v5365, 1
      %v5620 = vsel %vm857, %v5618, %v5619
      %v5621 = vrot.slane %v5366, 1
      %v5622 = vsel %vm857, %v5619, %v5621
      %v5687 = vadd.f32 %v5203, %v5465
      %v5688 = vadd.f32 %v5204, %v5467
      %v5689 = vadd.f32 %v5205, %v5470
      %v5690 = vadd.f32 %v5206, %v5472
      %v5691 = vadd.f32 %v5207, %v5475
      %v5692 = vadd.f32 %v5208, %v5477
      %v5693 = vadd.f32 %v5209, %v5480
      %v5694 = vadd.f32 %v5210, %v5482
      %v5695 = vadd.f32 %v5211, %v5485
      %v5696 = vadd.f32 %v5212, %v5487
      %v5697 = vadd.f32 %v5213, %v5490
      %v5698 = vadd.f32 %v5214, %v5492
      %v5699 = vadd.f32 %v5215, %v5495
      %v5700 = vadd.f32 %v5216, %v5497
      %v5701 = vadd.f32 %v5217, %v5500
      %v5702 = vadd.f32 %v5218, %v5502
      %v5703 = vadd.f32 %v5219, %v5505
      %v5704 = vadd.f32 %v5220, %v5507
      %v5705 = vadd.f32 %v5221, %v5510
      %v5706 = vadd.f32 %v5222, %v5512
      %v5707 = vadd.f32 %v5223, %v5515
      %v5708 = vadd.f32 %v5224, %v5517
      %v5709 = vadd.f32 %v5225, %v5520
      %v5710 = vadd.f32 %v5226, %v5522
      %v5711 = vadd.f32 %v5227, %v5525
      %v5712 = vadd.f32 %v5228, %v5527
      %v5713 = vadd.f32 %v5229, %v5530
      %v5714 = vadd.f32 %v5230, %v5532
      %v5715 = vadd.f32 %v5231, %v5535
      %v5716 = vadd.f32 %v5232, %v5537
      %v5717 = vadd.f32 %v5233, %v5540
      %v5718 = vadd.f32 %v5234, %v5542
      %v5719 = vadd.f32 %v5235, %v5545
      %v5720 = vadd.f32 %v5236, %v5547
      %v5721 = vadd.f32 %v5237, %v5550
      %v5722 = vadd.f32 %v5238, %v5552
      %v5723 = vadd.f32 %v5239, %v5555
      %v5724 = vadd.f32 %v5240, %v5557
      %v5725 = vadd.f32 %v5241, %v5560
      %v5726 = vadd.f32 %v5242, %v5562
      %v5727 = vadd.f32 %v5243, %v5565
      %v5728 = vadd.f32 %v5244, %v5567
      %v5729 = vadd.f32 %v5245, %v5570
      %v5730 = vadd.f32 %v5246, %v5572
      %v5731 = vadd.f32 %v5247, %v5575
      %v5732 = vadd.f32 %v5248, %v5577
      %v5733 = vadd.f32 %v5249, %v5580
      %v5734 = vadd.f32 %v5250, %v5582
      %v5735 = vadd.f32 %v5251, %v5585
      %v5736 = vadd.f32 %v5252, %v5587
      %v5737 = vadd.f32 %v5253, %v5590
      %v5738 = vadd.f32 %v5254, %v5592
      %v5739 = vadd.f32 %v5255, %v5595
      %v5740 = vadd.f32 %v5256, %v5597
      %v5741 = vadd.f32 %v5257, %v5600
      %v5742 = vadd.f32 %v5258, %v5602
      %v5743 = vadd.f32 %v5259, %v5605
      %v5744 = vadd.f32 %v5260, %v5607
      %v5745 = vadd.f32 %v5261, %v5610
      %v5746 = vadd.f32 %v5262, %v5612
      %v5747 = vadd.f32 %v5263, %v5615
      %v5748 = vadd.f32 %v5264, %v5617
      %v5749 = vadd.f32 %v5265, %v5620
      %v5750 = vadd.f32 %v5266, %v5622
      %v5751 = vlaneseq
      %v5752 = vshrl.u32 %v5751, 7
      %v5753 = vsub.s32 2, %v5752
      %v5754 = vrot.slane %v320, %v5753
      %v5755 = vmul.f32 %v3936, %v5754
      %v5756 = vmul.f32 %v3937, %v5754
      %v5757 = vmul.f32 %v3938, %v5754
      %v5758 = vmul.f32 %v3939, %v5754
      %v5759 = vmul.f32 %v3940, %v5754
      %v5760 = vmul.f32 %v3941, %v5754
      %v5761 = vmul.f32 %v3942, %v5754
      %v5762 = vmul.f32 %v3943, %v5754
      %v5763 = vmul.f32 %v3944, %v5754
      %v5764 = vmul.f32 %v3945, %v5754
      %v5765 = vmul.f32 %v3946, %v5754
      %v5766 = vmul.f32 %v3947, %v5754
      %v5767 = vmul.f32 %v3948, %v5754
      %v5768 = vmul.f32 %v3949, %v5754
      %v5769 = vmul.f32 %v3950, %v5754
      %v5770 = vmul.f32 %v3951, %v5754
      %v5771 = vmul.f32 %v3952, %v5754
      %v5772 = vmul.f32 %v3953, %v5754
      %v5773 = vmul.f32 %v3954, %v5754
      %v5774 = vmul.f32 %v3955, %v5754
      %v5775 = vmul.f32 %v3956, %v5754
      %v5776 = vmul.f32 %v3957, %v5754
      %v5777 = vmul.f32 %v3958, %v5754
      %v5778 = vmul.f32 %v3959, %v5754
      %v5779 = vmul.f32 %v3960, %v5754
      %v5780 = vmul.f32 %v3961, %v5754
      %v5781 = vmul.f32 %v3962, %v5754
      %v5782 = vmul.f32 %v3963, %v5754
      %v5783 = vmul.f32 %v3964, %v5754
      %v5784 = vmul.f32 %v3965, %v5754
      %v5785 = vmul.f32 %v3966, %v5754
      %v5786 = vmul.f32 %v3967, %v5754
      %v5787 = vmul.f32 %v3968, %v5754
      %v5788 = vmul.f32 %v3969, %v5754
      %v5789 = vmul.f32 %v3970, %v5754
      %v5790 = vmul.f32 %v3971, %v5754
      %v5791 = vmul.f32 %v3972, %v5754
      %v5792 = vmul.f32 %v3973, %v5754
      %v5793 = vmul.f32 %v3974, %v5754
      %v5794 = vmul.f32 %v3975, %v5754
      %v5795 = vmul.f32 %v3976, %v5754
      %v5796 = vmul.f32 %v3977, %v5754
      %v5797 = vmul.f32 %v3978, %v5754
      %v5798 = vmul.f32 %v3979, %v5754
      %v5799 = vmul.f32 %v3980, %v5754
      %v5800 = vmul.f32 %v3981, %v5754
      %v5801 = vmul.f32 %v3982, %v5754
      %v5802 = vmul.f32 %v3983, %v5754
      %v5803 = vmul.f32 %v3984, %v5754
      %v5804 = vmul.f32 %v3985, %v5754
      %v5805 = vmul.f32 %v3986, %v5754
      %v5806 = vmul.f32 %v3987, %v5754
      %v5807 = vmul.f32 %v3988, %v5754
      %v5808 = vmul.f32 %v3989, %v5754
      %v5809 = vmul.f32 %v3990, %v5754
      %v5810 = vmul.f32 %v3991, %v5754
      %v5811 = vmul.f32 %v3992, %v5754
      %v5812 = vmul.f32 %v3993, %v5754
      %v5813 = vmul.f32 %v3994, %v5754
      %v5814 = vmul.f32 %v3995, %v5754
      %v5815 = vmul.f32 %v3996, %v5754
      %v5816 = vmul.f32 %v3997, %v5754
      %v5817 = vmul.f32 %v3998, %v5754
      %v5818 = vmul.f32 %v3999, %v5754
      %v5819 = vmul.f32 %v4000, %v5754
      %v5820 = vmul.f32 %v4001, %v5754
      %v5821 = vmul.f32 %v4002, %v5754
      %v5822 = vmul.f32 %v4003, %v5754
      %v5823 = vmul.f32 %v4004, %v5754
      %v5824 = vmul.f32 %v4005, %v5754
      %v5825 = vmul.f32 %v4006, %v5754
      %v5826 = vmul.f32 %v4007, %v5754
      %v5827 = vmul.f32 %v4008, %v5754
      %v5828 = vmul.f32 %v4009, %v5754
      %v5829 = vmul.f32 %v4010, %v5754
      %v5830 = vmul.f32 %v4011, %v5754
      %v5831 = vmul.f32 %v4012, %v5754
      %v5832 = vmul.f32 %v4013, %v5754
      %v5833 = vmul.f32 %v4014, %v5754
      %v5834 = vmul.f32 %v4015, %v5754
      %v5835 = vmul.f32 %v4016, %v5754
      %v5836 = vmul.f32 %v4017, %v5754
      %v5837 = vmul.f32 %v4018, %v5754
      %v5838 = vmul.f32 %v4019, %v5754
      %v5839 = vmul.f32 %v4020, %v5754
      %v5840 = vmul.f32 %v4021, %v5754
      %v5841 = vmul.f32 %v4022, %v5754
      %v5842 = vmul.f32 %v4023, %v5754
      %v5843 = vmul.f32 %v4024, %v5754
      %v5844 = vmul.f32 %v4025, %v5754
      %v5845 = vmul.f32 %v4026, %v5754
      %v5846 = vmul.f32 %v4027, %v5754
      %v5847 = vmul.f32 %v4028, %v5754
      %v5848 = vmul.f32 %v4029, %v5754
      %v5849 = vmul.f32 %v4030, %v5754
      %v5850 = vmul.f32 %v4031, %v5754
      %v5947 = vrot.slane %v5755, 2
      %v5948 = vrot.slane %v5756, 2
      %v5949 = vsel %vm1342, %v5947, %v5948
      %v5950 = vrot.slane %v5757, 2
      %v5951 = vsel %vm1342, %v5948, %v5950
      %v5952 = vrot.slane %v5758, 2
      %v5953 = vrot.slane %v5759, 2
      %v5954 = vsel %vm1342, %v5952, %v5953
      %v5955 = vrot.slane %v5760, 2
      %v5956 = vsel %vm1342, %v5953, %v5955
      %v5957 = vrot.slane %v5761, 2
      %v5958 = vrot.slane %v5762, 2
      %v5959 = vsel %vm1342, %v5957, %v5958
      %v5960 = vrot.slane %v5763, 2
      %v5961 = vsel %vm1342, %v5958, %v5960
      %v5962 = vrot.slane %v5764, 2
      %v5963 = vrot.slane %v5765, 2
      %v5964 = vsel %vm1342, %v5962, %v5963
      %v5965 = vrot.slane %v5766, 2
      %v5966 = vsel %vm1342, %v5963, %v5965
      %v5967 = vrot.slane %v5767, 2
      %v5968 = vrot.slane %v5768, 2
      %v5969 = vsel %vm1342, %v5967, %v5968
      %v5970 = vrot.slane %v5769, 2
      %v5971 = vsel %vm1342, %v5968, %v5970
      %v5972 = vrot.slane %v5770, 2
      %v5973 = vrot.slane %v5771, 2
      %v5974 = vsel %vm1342, %v5972, %v5973
      %v5975 = vrot.slane %v5772, 2
      %v5976 = vsel %vm1342, %v5973, %v5975
      %v5977 = vrot.slane %v5773, 2
      %v5978 = vrot.slane %v5774, 2
      %v5979 = vsel %vm1342, %v5977, %v5978
      %v5980 = vrot.slane %v5775, 2
      %v5981 = vsel %vm1342, %v5978, %v5980
      %v5982 = vrot.slane %v5776, 2
      %v5983 = vrot.slane %v5777, 2
      %v5984 = vsel %vm1342, %v5982, %v5983
      %v5985 = vrot.slane %v5778, 2
      %v5986 = vsel %vm1342, %v5983, %v5985
      %v5987 = vrot.slane %v5779, 2
      %v5988 = vrot.slane %v5780, 2
      %v5989 = vsel %vm1342, %v5987, %v5988
      %v5990 = vrot.slane %v5781, 2
      %v5991 = vsel %vm1342, %v5988, %v5990
      %v5992 = vrot.slane %v5782, 2
      %v5993 = vrot.slane %v5783, 2
      %v5994 = vsel %vm1342, %v5992, %v5993
      %v5995 = vrot.slane %v5784, 2
      %v5996 = vsel %vm1342, %v5993, %v5995
      %v5997 = vrot.slane %v5785, 2
      %v5998 = vrot.slane %v5786, 2
      %v5999 = vsel %vm1342, %v5997, %v5998
      %v6000 = vrot.slane %v5787, 2
      %v6001 = vsel %vm1342, %v5998, %v6000
      %v6002 = vrot.slane %v5788, 2
      %v6003 = vrot.slane %v5789, 2
      %v6004 = vsel %vm1342, %v6002, %v6003
      %v6005 = vrot.slane %v5790, 2
      %v6006 = vsel %vm1342, %v6003, %v6005
      %v6007 = vrot.slane %v5791, 2
      %v6008 = vrot.slane %v5792, 2
      %v6009 = vsel %vm1342, %v6007, %v6008
      %v6010 = vrot.slane %v5793, 2
      %v6011 = vsel %vm1342, %v6008, %v6010
      %v6012 = vrot.slane %v5794, 2
      %v6013 = vrot.slane %v5795, 2
      %v6014 = vsel %vm1342, %v6012, %v6013
      %v6015 = vrot.slane %v5796, 2
      %v6016 = vsel %vm1342, %v6013, %v6015
      %v6017 = vrot.slane %v5797, 2
      %v6018 = vrot.slane %v5798, 2
      %v6019 = vsel %vm1342, %v6017, %v6018
      %v6020 = vrot.slane %v5799, 2
      %v6021 = vsel %vm1342, %v6018, %v6020
      %v6022 = vrot.slane %v5800, 2
      %v6023 = vrot.slane %v5801, 2
      %v6024 = vsel %vm1342, %v6022, %v6023
      %v6025 = vrot.slane %v5802, 2
      %v6026 = vsel %vm1342, %v6023, %v6025
      %v6027 = vrot.slane %v5803, 2
      %v6028 = vrot.slane %v5804, 2
      %v6029 = vsel %vm1342, %v6027, %v6028
      %v6030 = vrot.slane %v5805, 2
      %v6031 = vsel %vm1342, %v6028, %v6030
      %v6032 = vrot.slane %v5806, 2
      %v6033 = vrot.slane %v5807, 2
      %v6034 = vsel %vm1342, %v6032, %v6033
      %v6035 = vrot.slane %v5808, 2
      %v6036 = vsel %vm1342, %v6033, %v6035
      %v6037 = vrot.slane %v5809, 2
      %v6038 = vrot.slane %v5810, 2
      %v6039 = vsel %vm1342, %v6037, %v6038
      %v6040 = vrot.slane %v5811, 2
      %v6041 = vsel %vm1342, %v6038, %v6040
      %v6042 = vrot.slane %v5812, 2
      %v6043 = vrot.slane %v5813, 2
      %v6044 = vsel %vm1342, %v6042, %v6043
      %v6045 = vrot.slane %v5814, 2
      %v6046 = vsel %vm1342, %v6043, %v6045
      %v6047 = vrot.slane %v5815, 2
      %v6048 = vrot.slane %v5816, 2
      %v6049 = vsel %vm1342, %v6047, %v6048
      %v6050 = vrot.slane %v5817, 2
      %v6051 = vsel %vm1342, %v6048, %v6050
      %v6052 = vrot.slane %v5818, 2
      %v6053 = vrot.slane %v5819, 2
      %v6054 = vsel %vm1342, %v6052, %v6053
      %v6055 = vrot.slane %v5820, 2
      %v6056 = vsel %vm1342, %v6053, %v6055
      %v6057 = vrot.slane %v5821, 2
      %v6058 = vrot.slane %v5822, 2
      %v6059 = vsel %vm1342, %v6057, %v6058
      %v6060 = vrot.slane %v5823, 2
      %v6061 = vsel %vm1342, %v6058, %v6060
      %v6062 = vrot.slane %v5824, 2
      %v6063 = vrot.slane %v5825, 2
      %v6064 = vsel %vm1342, %v6062, %v6063
      %v6065 = vrot.slane %v5826, 2
      %v6066 = vsel %vm1342, %v6063, %v6065
      %v6067 = vrot.slane %v5827, 2
      %v6068 = vrot.slane %v5828, 2
      %v6069 = vsel %vm1342, %v6067, %v6068
      %v6070 = vrot.slane %v5829, 2
      %v6071 = vsel %vm1342, %v6068, %v6070
      %v6072 = vrot.slane %v5830, 2
      %v6073 = vrot.slane %v5831, 2
      %v6074 = vsel %vm1342, %v6072, %v6073
      %v6075 = vrot.slane %v5832, 2
      %v6076 = vsel %vm1342, %v6073, %v6075
      %v6077 = vrot.slane %v5833, 2
      %v6078 = vrot.slane %v5834, 2
      %v6079 = vsel %vm1342, %v6077, %v6078
      %v6080 = vrot.slane %v5835, 2
      %v6081 = vsel %vm1342, %v6078, %v6080
      %v6082 = vrot.slane %v5836, 2
      %v6083 = vrot.slane %v5837, 2
      %v6084 = vsel %vm1342, %v6082, %v6083
      %v6085 = vrot.slane %v5838, 2
      %v6086 = vsel %vm1342, %v6083, %v6085
      %v6087 = vrot.slane %v5839, 2
      %v6088 = vrot.slane %v5840, 2
      %v6089 = vsel %vm1342, %v6087, %v6088
      %v6090 = vrot.slane %v5841, 2
      %v6091 = vsel %vm1342, %v6088, %v6090
      %v6092 = vrot.slane %v5842, 2
      %v6093 = vrot.slane %v5843, 2
      %v6094 = vsel %vm1342, %v6092, %v6093
      %v6095 = vrot.slane %v5844, 2
      %v6096 = vsel %vm1342, %v6093, %v6095
      %v6097 = vrot.slane %v5845, 2
      %v6098 = vrot.slane %v5846, 2
      %v6099 = vsel %vm1342, %v6097, %v6098
      %v6100 = vrot.slane %v5847, 2
      %v6101 = vsel %vm1342, %v6098, %v6100
      %v6102 = vrot.slane %v5848, 2
      %v6103 = vrot.slane %v5849, 2
      %v6104 = vsel %vm1342, %v6102, %v6103
      %v6105 = vrot.slane %v5850, 2
      %v6106 = vsel %vm1342, %v6103, %v6105
      %v6171 = vadd.f32 %v5687, %v5949
      %v6172 = vadd.f32 %v5688, %v5951
      %v6173 = vadd.f32 %v5689, %v5954
      %v6174 = vadd.f32 %v5690, %v5956
      %v6175 = vadd.f32 %v5691, %v5959
      %v6176 = vadd.f32 %v5692, %v5961
      %v6177 = vadd.f32 %v5693, %v5964
      %v6178 = vadd.f32 %v5694, %v5966
      %v6179 = vadd.f32 %v5695, %v5969
      %v6180 = vadd.f32 %v5696, %v5971
      %v6181 = vadd.f32 %v5697, %v5974
      %v6182 = vadd.f32 %v5698, %v5976
      %v6183 = vadd.f32 %v5699, %v5979
      %v6184 = vadd.f32 %v5700, %v5981
      %v6185 = vadd.f32 %v5701, %v5984
      %v6186 = vadd.f32 %v5702, %v5986
      %v6187 = vadd.f32 %v5703, %v5989
      %v6188 = vadd.f32 %v5704, %v5991
      %v6189 = vadd.f32 %v5705, %v5994
      %v6190 = vadd.f32 %v5706, %v5996
      %v6191 = vadd.f32 %v5707, %v5999
      %v6192 = vadd.f32 %v5708, %v6001
      %v6193 = vadd.f32 %v5709, %v6004
      %v6194 = vadd.f32 %v5710, %v6006
      %v6195 = vadd.f32 %v5711, %v6009
      %v6196 = vadd.f32 %v5712, %v6011
      %v6197 = vadd.f32 %v5713, %v6014
      %v6198 = vadd.f32 %v5714, %v6016
      %v6199 = vadd.f32 %v5715, %v6019
      %v6200 = vadd.f32 %v5716, %v6021
      %v6201 = vadd.f32 %v5717, %v6024
      %v6202 = vadd.f32 %v5718, %v6026
      %v6203 = vadd.f32 %v5719, %v6029
      %v6204 = vadd.f32 %v5720, %v6031
      %v6205 = vadd.f32 %v5721, %v6034
      %v6206 = vadd.f32 %v5722, %v6036
      %v6207 = vadd.f32 %v5723, %v6039
      %v6208 = vadd.f32 %v5724, %v6041
      %v6209 = vadd.f32 %v5725, %v6044
      %v6210 = vadd.f32 %v5726, %v6046
      %v6211 = vadd.f32 %v5727, %v6049
      %v6212 = vadd.f32 %v5728, %v6051
      %v6213 = vadd.f32 %v5729, %v6054
      %v6214 = vadd.f32 %v5730, %v6056
      %v6215 = vadd.f32 %v5731, %v6059
      %v6216 = vadd.f32 %v5732, %v6061
      %v6217 = vadd.f32 %v5733, %v6064
      %v6218 = vadd.f32 %v5734, %v6066
      %v6219 = vadd.f32 %v5735, %v6069
      %v6220 = vadd.f32 %v5736, %v6071
      %v6221 = vadd.f32 %v5737, %v6074
      %v6222 = vadd.f32 %v5738, %v6076
      %v6223 = vadd.f32 %v5739, %v6079
      %v6224 = vadd.f32 %v5740, %v6081
      %v6225 = vadd.f32 %v5741, %v6084
      %v6226 = vadd.f32 %v5742, %v6086
      %v6227 = vadd.f32 %v5743, %v6089
      %v6228 = vadd.f32 %v5744, %v6091
      %v6229 = vadd.f32 %v5745, %v6094
      %v6230 = vadd.f32 %v5746, %v6096
      %v6231 = vadd.f32 %v5747, %v6099
      %v6232 = vadd.f32 %v5748, %v6101
      %v6233 = vadd.f32 %v5749, %v6104
      %v6234 = vadd.f32 %v5750, %v6106
      %v6235 = vlaneseq
      %v6236 = vshrl.u32 %v6235, 7
      %v6237 = vsub.s32 0, %v6236
      %v6238 = vrot.slane %v321, %v6237
      %v6239 = vmul.f32 %v3939, %v6238
      %v6240 = vmul.f32 %v3940, %v6238
      %v6241 = vmul.f32 %v3942, %v6238
      %v6242 = vmul.f32 %v3943, %v6238
      %v6243 = vmul.f32 %v3945, %v6238
      %v6244 = vmul.f32 %v3946, %v6238
      %v6245 = vmul.f32 %v3948, %v6238
      %v6246 = vmul.f32 %v3949, %v6238
      %v6247 = vmul.f32 %v3951, %v6238
      %v6248 = vmul.f32 %v3952, %v6238
      %v6249 = vmul.f32 %v3954, %v6238
      %v6250 = vmul.f32 %v3955, %v6238
      %v6251 = vmul.f32 %v3957, %v6238
      %v6252 = vmul.f32 %v3958, %v6238
      %v6253 = vmul.f32 %v3960, %v6238
      %v6254 = vmul.f32 %v3961, %v6238
      %v6255 = vmul.f32 %v3963, %v6238
      %v6256 = vmul.f32 %v3964, %v6238
      %v6257 = vmul.f32 %v3966, %v6238
      %v6258 = vmul.f32 %v3967, %v6238
      %v6259 = vmul.f32 %v3969, %v6238
      %v6260 = vmul.f32 %v3970, %v6238
      %v6261 = vmul.f32 %v3972, %v6238
      %v6262 = vmul.f32 %v3973, %v6238
      %v6263 = vmul.f32 %v3975, %v6238
      %v6264 = vmul.f32 %v3976, %v6238
      %v6265 = vmul.f32 %v3978, %v6238
      %v6266 = vmul.f32 %v3979, %v6238
      %v6267 = vmul.f32 %v3981, %v6238
      %v6268 = vmul.f32 %v3982, %v6238
      %v6269 = vmul.f32 %v3984, %v6238
      %v6270 = vmul.f32 %v3985, %v6238
      %v6271 = vmul.f32 %v3987, %v6238
      %v6272 = vmul.f32 %v3988, %v6238
      %v6273 = vmul.f32 %v3990, %v6238
      %v6274 = vmul.f32 %v3991, %v6238
      %v6275 = vmul.f32 %v3993, %v6238
      %v6276 = vmul.f32 %v3994, %v6238
      %v6277 = vmul.f32 %v3996, %v6238
      %v6278 = vmul.f32 %v3997, %v6238
      %v6279 = vmul.f32 %v3999, %v6238
      %v6280 = vmul.f32 %v4000, %v6238
      %v6281 = vmul.f32 %v4002, %v6238
      %v6282 = vmul.f32 %v4003, %v6238
      %v6283 = vmul.f32 %v4005, %v6238
      %v6284 = vmul.f32 %v4006, %v6238
      %v6285 = vmul.f32 %v4008, %v6238
      %v6286 = vmul.f32 %v4009, %v6238
      %v6287 = vmul.f32 %v4011, %v6238
      %v6288 = vmul.f32 %v4012, %v6238
      %v6289 = vmul.f32 %v4014, %v6238
      %v6290 = vmul.f32 %v4015, %v6238
      %v6291 = vmul.f32 %v4017, %v6238
      %v6292 = vmul.f32 %v4018, %v6238
      %v6293 = vmul.f32 %v4020, %v6238
      %v6294 = vmul.f32 %v4021, %v6238
      %v6295 = vmul.f32 %v4023, %v6238
      %v6296 = vmul.f32 %v4024, %v6238
      %v6297 = vmul.f32 %v4026, %v6238
      %v6298 = vmul.f32 %v4027, %v6238
      %v6299 = vmul.f32 %v4029, %v6238
      %v6300 = vmul.f32 %v4030, %v6238
      %v6301 = vmul.f32 %v4032, %v6238
      %v6302 = vmul.f32 %v4033, %v6238
      %v6303 = vadd.f32 %v6171, %v6239
      %v6304 = vadd.f32 %v6172, %v6240
      %v6305 = vadd.f32 %v6173, %v6241
      %v6306 = vadd.f32 %v6174, %v6242
      %v6307 = vadd.f32 %v6175, %v6243
      %v6308 = vadd.f32 %v6176, %v6244
      %v6309 = vadd.f32 %v6177, %v6245
      %v6310 = vadd.f32 %v6178, %v6246
      %v6311 = vadd.f32 %v6179, %v6247
      %v6312 = vadd.f32 %v6180, %v6248
      %v6313 = vadd.f32 %v6181, %v6249
      %v6314 = vadd.f32 %v6182, %v6250
      %v6315 = vadd.f32 %v6183, %v6251
      %v6316 = vadd.f32 %v6184, %v6252
      %v6317 = vadd.f32 %v6185, %v6253
      %v6318 = vadd.f32 %v6186, %v6254
      %v6319 = vadd.f32 %v6187, %v6255
      %v6320 = vadd.f32 %v6188, %v6256
      %v6321 = vadd.f32 %v6189, %v6257
      %v6322 = vadd.f32 %v6190, %v6258
      %v6323 = vadd.f32 %v6191, %v6259
      %v6324 = vadd.f32 %v6192, %v6260
      %v6325 = vadd.f32 %v6193, %v6261
      %v6326 = vadd.f32 %v6194, %v6262
      %v6327 = vadd.f32 %v6195, %v6263
      %v6328 = vadd.f32 %v6196, %v6264
      %v6329 = vadd.f32 %v6197, %v6265
      %v6330 = vadd.f32 %v6198, %v6266
      %v6331 = vadd.f32 %v6199, %v6267
      %v6332 = vadd.f32 %v6200, %v6268
      %v6333 = vadd.f32 %v6201, %v6269
      %v6334 = vadd.f32 %v6202, %v6270
      %v6335 = vadd.f32 %v6203, %v6271
      %v6336 = vadd.f32 %v6204, %v6272
      %v6337 = vadd.f32 %v6205, %v6273
      %v6338 = vadd.f32 %v6206, %v6274
      %v6339 = vadd.f32 %v6207, %v6275
      %v6340 = vadd.f32 %v6208, %v6276
      %v6341 = vadd.f32 %v6209, %v6277
      %v6342 = vadd.f32 %v6210, %v6278
      %v6343 = vadd.f32 %v6211, %v6279
      %v6344 = vadd.f32 %v6212, %v6280
      %v6345 = vadd.f32 %v6213, %v6281
      %v6346 = vadd.f32 %v6214, %v6282
      %v6347 = vadd.f32 %v6215, %v6283
      %v6348 = vadd.f32 %v6216, %v6284
      %v6349 = vadd.f32 %v6217, %v6285
      %v6350 = vadd.f32 %v6218, %v6286
      %v6351 = vadd.f32 %v6219, %v6287
      %v6352 = vadd.f32 %v6220, %v6288
      %v6353 = vadd.f32 %v6221, %v6289
      %v6354 = vadd.f32 %v6222, %v6290
      %v6355 = vadd.f32 %v6223, %v6291
      %v6356 = vadd.f32 %v6224, %v6292
      %v6357 = vadd.f32 %v6225, %v6293
      %v6358 = vadd.f32 %v6226, %v6294
      %v6359 = vadd.f32 %v6227, %v6295
      %v6360 = vadd.f32 %v6228, %v6296
      %v6361 = vadd.f32 %v6229, %v6297
      %v6362 = vadd.f32 %v6230, %v6298
      %v6363 = vadd.f32 %v6231, %v6299
      %v6364 = vadd.f32 %v6232, %v6300
      %v6365 = vadd.f32 %v6233, %v6301
      %v6366 = vadd.f32 %v6234, %v6302
      %v6367 = vlaneseq
      %v6368 = vshrl.u32 %v6367, 7
      %v6369 = vsub.s32 1, %v6368
      %v6370 = vrot.slane %v321, %v6369
      %v6371 = vmul.f32 %v3939, %v6370
      %v6372 = vmul.f32 %v3940, %v6370
      %v6373 = vmul.f32 %v3941, %v6370
      %v6374 = vmul.f32 %v3942, %v6370
      %v6375 = vmul.f32 %v3943, %v6370
      %v6376 = vmul.f32 %v3944, %v6370
      %v6377 = vmul.f32 %v3945, %v6370
      %v6378 = vmul.f32 %v3946, %v6370
      %v6379 = vmul.f32 %v3947, %v6370
      %v6380 = vmul.f32 %v3948, %v6370
      %v6381 = vmul.f32 %v3949, %v6370
      %v6382 = vmul.f32 %v3950, %v6370
      %v6383 = vmul.f32 %v3951, %v6370
      %v6384 = vmul.f32 %v3952, %v6370
      %v6385 = vmul.f32 %v3953, %v6370
      %v6386 = vmul.f32 %v3954, %v6370
      %v6387 = vmul.f32 %v3955, %v6370
      %v6388 = vmul.f32 %v3956, %v6370
      %v6389 = vmul.f32 %v3957, %v6370
      %v6390 = vmul.f32 %v3958, %v6370
      %v6391 = vmul.f32 %v3959, %v6370
      %v6392 = vmul.f32 %v3960, %v6370
      %v6393 = vmul.f32 %v3961, %v6370
      %v6394 = vmul.f32 %v3962, %v6370
      %v6395 = vmul.f32 %v3963, %v6370
      %v6396 = vmul.f32 %v3964, %v6370
      %v6397 = vmul.f32 %v3965, %v6370
      %v6398 = vmul.f32 %v3966, %v6370
      %v6399 = vmul.f32 %v3967, %v6370
      %v6400 = vmul.f32 %v3968, %v6370
      %v6401 = vmul.f32 %v3969, %v6370
      %v6402 = vmul.f32 %v3970, %v6370
      %v6403 = vmul.f32 %v3971, %v6370
      %v6404 = vmul.f32 %v3972, %v6370
      %v6405 = vmul.f32 %v3973, %v6370
      %v6406 = vmul.f32 %v3974, %v6370
      %v6407 = vmul.f32 %v3975, %v6370
      %v6408 = vmul.f32 %v3976, %v6370
      %v6409 = vmul.f32 %v3977, %v6370
      %v6410 = vmul.f32 %v3978, %v6370
      %v6411 = vmul.f32 %v3979, %v6370
      %v6412 = vmul.f32 %v3980, %v6370
      %v6413 = vmul.f32 %v3981, %v6370
      %v6414 = vmul.f32 %v3982, %v6370
      %v6415 = vmul.f32 %v3983, %v6370
      %v6416 = vmul.f32 %v3984, %v6370
      %v6417 = vmul.f32 %v3985, %v6370
      %v6418 = vmul.f32 %v3986, %v6370
      %v6419 = vmul.f32 %v3987, %v6370
      %v6420 = vmul.f32 %v3988, %v6370
      %v6421 = vmul.f32 %v3989, %v6370
      %v6422 = vmul.f32 %v3990, %v6370
      %v6423 = vmul.f32 %v3991, %v6370
      %v6424 = vmul.f32 %v3992, %v6370
      %v6425 = vmul.f32 %v3993, %v6370
      %v6426 = vmul.f32 %v3994, %v6370
      %v6427 = vmul.f32 %v3995, %v6370
      %v6428 = vmul.f32 %v3996, %v6370
      %v6429 = vmul.f32 %v3997, %v6370
      %v6430 = vmul.f32 %v3998, %v6370
      %v6431 = vmul.f32 %v3999, %v6370
      %v6432 = vmul.f32 %v4000, %v6370
      %v6433 = vmul.f32 %v4001, %v6370
      %v6434 = vmul.f32 %v4002, %v6370
      %v6435 = vmul.f32 %v4003, %v6370
      %v6436 = vmul.f32 %v4004, %v6370
      %v6437 = vmul.f32 %v4005, %v6370
      %v6438 = vmul.f32 %v4006, %v6370
      %v6439 = vmul.f32 %v4007, %v6370
      %v6440 = vmul.f32 %v4008, %v6370
      %v6441 = vmul.f32 %v4009, %v6370
      %v6442 = vmul.f32 %v4010, %v6370
      %v6443 = vmul.f32 %v4011, %v6370
      %v6444 = vmul.f32 %v4012, %v6370
      %v6445 = vmul.f32 %v4013, %v6370
      %v6446 = vmul.f32 %v4014, %v6370
      %v6447 = vmul.f32 %v4015, %v6370
      %v6448 = vmul.f32 %v4016, %v6370
      %v6449 = vmul.f32 %v4017, %v6370
      %v6450 = vmul.f32 %v4018, %v6370
      %v6451 = vmul.f32 %v4019, %v6370
      %v6452 = vmul.f32 %v4020, %v6370
      %v6453 = vmul.f32 %v4021, %v6370
      %v6454 = vmul.f32 %v4022, %v6370
      %v6455 = vmul.f32 %v4023, %v6370
      %v6456 = vmul.f32 %v4024, %v6370
      %v6457 = vmul.f32 %v4025, %v6370
      %v6458 = vmul.f32 %v4026, %v6370
      %v6459 = vmul.f32 %v4027, %v6370
      %v6460 = vmul.f32 %v4028, %v6370
      %v6461 = vmul.f32 %v4029, %v6370
      %v6462 = vmul.f32 %v4030, %v6370
      %v6463 = vmul.f32 %v4031, %v6370
      %v6464 = vmul.f32 %v4032, %v6370
      %v6465 = vmul.f32 %v4033, %v6370
      %v6466 = vmul.f32 %v4034, %v6370
      %v6563 = vrot.slane %v6371, 1
      %v6564 = vrot.slane %v6372, 1
      %v6565 = vsel %vm857, %v6563, %v6564
      %v6566 = vrot.slane %v6373, 1
      %v6567 = vsel %vm857, %v6564, %v6566
      %v6568 = vrot.slane %v6374, 1
      %v6569 = vrot.slane %v6375, 1
      %v6570 = vsel %vm857, %v6568, %v6569
      %v6571 = vrot.slane %v6376, 1
      %v6572 = vsel %vm857, %v6569, %v6571
      %v6573 = vrot.slane %v6377, 1
      %v6574 = vrot.slane %v6378, 1
      %v6575 = vsel %vm857, %v6573, %v6574
      %v6576 = vrot.slane %v6379, 1
      %v6577 = vsel %vm857, %v6574, %v6576
      %v6578 = vrot.slane %v6380, 1
      %v6579 = vrot.slane %v6381, 1
      %v6580 = vsel %vm857, %v6578, %v6579
      %v6581 = vrot.slane %v6382, 1
      %v6582 = vsel %vm857, %v6579, %v6581
      %v6583 = vrot.slane %v6383, 1
      %v6584 = vrot.slane %v6384, 1
      %v6585 = vsel %vm857, %v6583, %v6584
      %v6586 = vrot.slane %v6385, 1
      %v6587 = vsel %vm857, %v6584, %v6586
      %v6588 = vrot.slane %v6386, 1
      %v6589 = vrot.slane %v6387, 1
      %v6590 = vsel %vm857, %v6588, %v6589
      %v6591 = vrot.slane %v6388, 1
      %v6592 = vsel %vm857, %v6589, %v6591
      %v6593 = vrot.slane %v6389, 1
      %v6594 = vrot.slane %v6390, 1
      %v6595 = vsel %vm857, %v6593, %v6594
      %v6596 = vrot.slane %v6391, 1
      %v6597 = vsel %vm857, %v6594, %v6596
      %v6598 = vrot.slane %v6392, 1
      %v6599 = vrot.slane %v6393, 1
      %v6600 = vsel %vm857, %v6598, %v6599
      %v6601 = vrot.slane %v6394, 1
      %v6602 = vsel %vm857, %v6599, %v6601
      %v6603 = vrot.slane %v6395, 1
      %v6604 = vrot.slane %v6396, 1
      %v6605 = vsel %vm857, %v6603, %v6604
      %v6606 = vrot.slane %v6397, 1
      %v6607 = vsel %vm857, %v6604, %v6606
      %v6608 = vrot.slane %v6398, 1
      %v6609 = vrot.slane %v6399, 1
      %v6610 = vsel %vm857, %v6608, %v6609
      %v6611 = vrot.slane %v6400, 1
      %v6612 = vsel %vm857, %v6609, %v6611
      %v6613 = vrot.slane %v6401, 1
      %v6614 = vrot.slane %v6402, 1
      %v6615 = vsel %vm857, %v6613, %v6614
      %v6616 = vrot.slane %v6403, 1
      %v6617 = vsel %vm857, %v6614, %v6616
      %v6618 = vrot.slane %v6404, 1
      %v6619 = vrot.slane %v6405, 1
      %v6620 = vsel %vm857, %v6618, %v6619
      %v6621 = vrot.slane %v6406, 1
      %v6622 = vsel %vm857, %v6619, %v6621
      %v6623 = vrot.slane %v6407, 1
      %v6624 = vrot.slane %v6408, 1
      %v6625 = vsel %vm857, %v6623, %v6624
      %v6626 = vrot.slane %v6409, 1
      %v6627 = vsel %vm857, %v6624, %v6626
      %v6628 = vrot.slane %v6410, 1
      %v6629 = vrot.slane %v6411, 1
      %v6630 = vsel %vm857, %v6628, %v6629
      %v6631 = vrot.slane %v6412, 1
      %v6632 = vsel %vm857, %v6629, %v6631
      %v6633 = vrot.slane %v6413, 1
      %v6634 = vrot.slane %v6414, 1
      %v6635 = vsel %vm857, %v6633, %v6634
      %v6636 = vrot.slane %v6415, 1
      %v6637 = vsel %vm857, %v6634, %v6636
      %v6638 = vrot.slane %v6416, 1
      %v6639 = vrot.slane %v6417, 1
      %v6640 = vsel %vm857, %v6638, %v6639
      %v6641 = vrot.slane %v6418, 1
      %v6642 = vsel %vm857, %v6639, %v6641
      %v6643 = vrot.slane %v6419, 1
      %v6644 = vrot.slane %v6420, 1
      %v6645 = vsel %vm857, %v6643, %v6644
      %v6646 = vrot.slane %v6421, 1
      %v6647 = vsel %vm857, %v6644, %v6646
      %v6648 = vrot.slane %v6422, 1
      %v6649 = vrot.slane %v6423, 1
      %v6650 = vsel %vm857, %v6648, %v6649
      %v6651 = vrot.slane %v6424, 1
      %v6652 = vsel %vm857, %v6649, %v6651
      %v6653 = vrot.slane %v6425, 1
      %v6654 = vrot.slane %v6426, 1
      %v6655 = vsel %vm857, %v6653, %v6654
      %v6656 = vrot.slane %v6427, 1
      %v6657 = vsel %vm857, %v6654, %v6656
      %v6658 = vrot.slane %v6428, 1
      %v6659 = vrot.slane %v6429, 1
      %v6660 = vsel %vm857, %v6658, %v6659
      %v6661 = vrot.slane %v6430, 1
      %v6662 = vsel %vm857, %v6659, %v6661
      %v6663 = vrot.slane %v6431, 1
      %v6664 = vrot.slane %v6432, 1
      %v6665 = vsel %vm857, %v6663, %v6664
      %v6666 = vrot.slane %v6433, 1
      %v6667 = vsel %vm857, %v6664, %v6666
      %v6668 = vrot.slane %v6434, 1
      %v6669 = vrot.slane %v6435, 1
      %v6670 = vsel %vm857, %v6668, %v6669
      %v6671 = vrot.slane %v6436, 1
      %v6672 = vsel %vm857, %v6669, %v6671
      %v6673 = vrot.slane %v6437, 1
      %v6674 = vrot.slane %v6438, 1
      %v6675 = vsel %vm857, %v6673, %v6674
      %v6676 = vrot.slane %v6439, 1
      %v6677 = vsel %vm857, %v6674, %v6676
      %v6678 = vrot.slane %v6440, 1
      %v6679 = vrot.slane %v6441, 1
      %v6680 = vsel %vm857, %v6678, %v6679
      %v6681 = vrot.slane %v6442, 1
      %v6682 = vsel %vm857, %v6679, %v6681
      %v6683 = vrot.slane %v6443, 1
      %v6684 = vrot.slane %v6444, 1
      %v6685 = vsel %vm857, %v6683, %v6684
      %v6686 = vrot.slane %v6445, 1
      %v6687 = vsel %vm857, %v6684, %v6686
      %v6688 = vrot.slane %v6446, 1
      %v6689 = vrot.slane %v6447, 1
      %v6690 = vsel %vm857, %v6688, %v6689
      %v6691 = vrot.slane %v6448, 1
      %v6692 = vsel %vm857, %v6689, %v6691
      %v6693 = vrot.slane %v6449, 1
      %v6694 = vrot.slane %v6450, 1
      %v6695 = vsel %vm857, %v6693, %v6694
      %v6696 = vrot.slane %v6451, 1
      %v6697 = vsel %vm857, %v6694, %v6696
      %v6698 = vrot.slane %v6452, 1
      %v6699 = vrot.slane %v6453, 1
      %v6700 = vsel %vm857, %v6698, %v6699
      %v6701 = vrot.slane %v6454, 1
      %v6702 = vsel %vm857, %v6699, %v6701
      %v6703 = vrot.slane %v6455, 1
      %v6704 = vrot.slane %v6456, 1
      %v6705 = vsel %vm857, %v6703, %v6704
      %v6706 = vrot.slane %v6457, 1
      %v6707 = vsel %vm857, %v6704, %v6706
      %v6708 = vrot.slane %v6458, 1
      %v6709 = vrot.slane %v6459, 1
      %v6710 = vsel %vm857, %v6708, %v6709
      %v6711 = vrot.slane %v6460, 1
      %v6712 = vsel %vm857, %v6709, %v6711
      %v6713 = vrot.slane %v6461, 1
      %v6714 = vrot.slane %v6462, 1
      %v6715 = vsel %vm857, %v6713, %v6714
      %v6716 = vrot.slane %v6463, 1
      %v6717 = vsel %vm857, %v6714, %v6716
      %v6718 = vrot.slane %v6464, 1
      %v6719 = vrot.slane %v6465, 1
      %v6720 = vsel %vm857, %v6718, %v6719
      %v6721 = vrot.slane %v6466, 1
      %v6722 = vsel %vm857, %v6719, %v6721
      %v6787 = vadd.f32 %v6303, %v6565
      %v6788 = vadd.f32 %v6304, %v6567
      %v6789 = vadd.f32 %v6305, %v6570
      %v6790 = vadd.f32 %v6306, %v6572
      %v6791 = vadd.f32 %v6307, %v6575
      %v6792 = vadd.f32 %v6308, %v6577
      %v6793 = vadd.f32 %v6309, %v6580
      %v6794 = vadd.f32 %v6310, %v6582
      %v6795 = vadd.f32 %v6311, %v6585
      %v6796 = vadd.f32 %v6312, %v6587
      %v6797 = vadd.f32 %v6313, %v6590
      %v6798 = vadd.f32 %v6314, %v6592
      %v6799 = vadd.f32 %v6315, %v6595
      %v6800 = vadd.f32 %v6316, %v6597
      %v6801 = vadd.f32 %v6317, %v6600
      %v6802 = vadd.f32 %v6318, %v6602
      %v6803 = vadd.f32 %v6319, %v6605
      %v6804 = vadd.f32 %v6320, %v6607
      %v6805 = vadd.f32 %v6321, %v6610
      %v6806 = vadd.f32 %v6322, %v6612
      %v6807 = vadd.f32 %v6323, %v6615
      %v6808 = vadd.f32 %v6324, %v6617
      %v6809 = vadd.f32 %v6325, %v6620
      %v6810 = vadd.f32 %v6326, %v6622
      %v6811 = vadd.f32 %v6327, %v6625
      %v6812 = vadd.f32 %v6328, %v6627
      %v6813 = vadd.f32 %v6329, %v6630
      %v6814 = vadd.f32 %v6330, %v6632
      %v6815 = vadd.f32 %v6331, %v6635
      %v6816 = vadd.f32 %v6332, %v6637
      %v6817 = vadd.f32 %v6333, %v6640
      %v6818 = vadd.f32 %v6334, %v6642
      %v6819 = vadd.f32 %v6335, %v6645
      %v6820 = vadd.f32 %v6336, %v6647
      %v6821 = vadd.f32 %v6337, %v6650
      %v6822 = vadd.f32 %v6338, %v6652
      %v6823 = vadd.f32 %v6339, %v6655
      %v6824 = vadd.f32 %v6340, %v6657
      %v6825 = vadd.f32 %v6341, %v6660
      %v6826 = vadd.f32 %v6342, %v6662
      %v6827 = vadd.f32 %v6343, %v6665
      %v6828 = vadd.f32 %v6344, %v6667
      %v6829 = vadd.f32 %v6345, %v6670
      %v6830 = vadd.f32 %v6346, %v6672
      %v6831 = vadd.f32 %v6347, %v6675
      %v6832 = vadd.f32 %v6348, %v6677
      %v6833 = vadd.f32 %v6349, %v6680
      %v6834 = vadd.f32 %v6350, %v6682
      %v6835 = vadd.f32 %v6351, %v6685
      %v6836 = vadd.f32 %v6352, %v6687
      %v6837 = vadd.f32 %v6353, %v6690
      %v6838 = vadd.f32 %v6354, %v6692
      %v6839 = vadd.f32 %v6355, %v6695
      %v6840 = vadd.f32 %v6356, %v6697
      %v6841 = vadd.f32 %v6357, %v6700
      %v6842 = vadd.f32 %v6358, %v6702
      %v6843 = vadd.f32 %v6359, %v6705
      %v6844 = vadd.f32 %v6360, %v6707
      %v6845 = vadd.f32 %v6361, %v6710
      %v6846 = vadd.f32 %v6362, %v6712
      %v6847 = vadd.f32 %v6363, %v6715
      %v6848 = vadd.f32 %v6364, %v6717
      %v6849 = vadd.f32 %v6365, %v6720
      %v6850 = vadd.f32 %v6366, %v6722
      %v6851 = vlaneseq
      %v6852 = vshrl.u32 %v6851, 7
      %v6853 = vsub.s32 2, %v6852
      %v6854 = vrot.slane %v321, %v6853
      %v6855 = vmul.f32 %v3939, %v6854
      %v6856 = vmul.f32 %v3940, %v6854
      %v6857 = vmul.f32 %v3941, %v6854
      %v6858 = vmul.f32 %v3942, %v6854
      %v6859 = vmul.f32 %v3943, %v6854
      %v6860 = vmul.f32 %v3944, %v6854
      %v6861 = vmul.f32 %v3945, %v6854
      %v6862 = vmul.f32 %v3946, %v6854
      %v6863 = vmul.f32 %v3947, %v6854
      %v6864 = vmul.f32 %v3948, %v6854
      %v6865 = vmul.f32 %v3949, %v6854
      %v6866 = vmul.f32 %v3950, %v6854
      %v6867 = vmul.f32 %v3951, %v6854
      %v6868 = vmul.f32 %v3952, %v6854
      %v6869 = vmul.f32 %v3953, %v6854
      %v6870 = vmul.f32 %v3954, %v6854
      %v6871 = vmul.f32 %v3955, %v6854
      %v6872 = vmul.f32 %v3956, %v6854
      %v6873 = vmul.f32 %v3957, %v6854
      %v6874 = vmul.f32 %v3958, %v6854
      %v6875 = vmul.f32 %v3959, %v6854
      %v6876 = vmul.f32 %v3960, %v6854
      %v6877 = vmul.f32 %v3961, %v6854
      %v6878 = vmul.f32 %v3962, %v6854
      %v6879 = vmul.f32 %v3963, %v6854
      %v6880 = vmul.f32 %v3964, %v6854
      %v6881 = vmul.f32 %v3965, %v6854
      %v6882 = vmul.f32 %v3966, %v6854
      %v6883 = vmul.f32 %v3967, %v6854
      %v6884 = vmul.f32 %v3968, %v6854
      %v6885 = vmul.f32 %v3969, %v6854
      %v6886 = vmul.f32 %v3970, %v6854
      %v6887 = vmul.f32 %v3971, %v6854
      %v6888 = vmul.f32 %v3972, %v6854
      %v6889 = vmul.f32 %v3973, %v6854
      %v6890 = vmul.f32 %v3974, %v6854
      %v6891 = vmul.f32 %v3975, %v6854
      %v6892 = vmul.f32 %v3976, %v6854
      %v6893 = vmul.f32 %v3977, %v6854
      %v6894 = vmul.f32 %v3978, %v6854
      %v6895 = vmul.f32 %v3979, %v6854
      %v6896 = vmul.f32 %v3980, %v6854
      %v6897 = vmul.f32 %v3981, %v6854
      %v6898 = vmul.f32 %v3982, %v6854
      %v6899 = vmul.f32 %v3983, %v6854
      %v6900 = vmul.f32 %v3984, %v6854
      %v6901 = vmul.f32 %v3985, %v6854
      %v6902 = vmul.f32 %v3986, %v6854
      %v6903 = vmul.f32 %v3987, %v6854
      %v6904 = vmul.f32 %v3988, %v6854
      %v6905 = vmul.f32 %v3989, %v6854
      %v6906 = vmul.f32 %v3990, %v6854
      %v6907 = vmul.f32 %v3991, %v6854
      %v6908 = vmul.f32 %v3992, %v6854
      %v6909 = vmul.f32 %v3993, %v6854
      %v6910 = vmul.f32 %v3994, %v6854
      %v6911 = vmul.f32 %v3995, %v6854
      %v6912 = vmul.f32 %v3996, %v6854
      %v6913 = vmul.f32 %v3997, %v6854
      %v6914 = vmul.f32 %v3998, %v6854
      %v6915 = vmul.f32 %v3999, %v6854
      %v6916 = vmul.f32 %v4000, %v6854
      %v6917 = vmul.f32 %v4001, %v6854
      %v6918 = vmul.f32 %v4002, %v6854
      %v6919 = vmul.f32 %v4003, %v6854
      %v6920 = vmul.f32 %v4004, %v6854
      %v6921 = vmul.f32 %v4005, %v6854
      %v6922 = vmul.f32 %v4006, %v6854
      %v6923 = vmul.f32 %v4007, %v6854
      %v6924 = vmul.f32 %v4008, %v6854
      %v6925 = vmul.f32 %v4009, %v6854
      %v6926 = vmul.f32 %v4010, %v6854
      %v6927 = vmul.f32 %v4011, %v6854
      %v6928 = vmul.f32 %v4012, %v6854
      %v6929 = vmul.f32 %v4013, %v6854
      %v6930 = vmul.f32 %v4014, %v6854
      %v6931 = vmul.f32 %v4015, %v6854
      %v6932 = vmul.f32 %v4016, %v6854
      %v6933 = vmul.f32 %v4017, %v6854
      %v6934 = vmul.f32 %v4018, %v6854
      %v6935 = vmul.f32 %v4019, %v6854
      %v6936 = vmul.f32 %v4020, %v6854
      %v6937 = vmul.f32 %v4021, %v6854
      %v6938 = vmul.f32 %v4022, %v6854
      %v6939 = vmul.f32 %v4023, %v6854
      %v6940 = vmul.f32 %v4024, %v6854
      %v6941 = vmul.f32 %v4025, %v6854
      %v6942 = vmul.f32 %v4026, %v6854
      %v6943 = vmul.f32 %v4027, %v6854
      %v6944 = vmul.f32 %v4028, %v6854
      %v6945 = vmul.f32 %v4029, %v6854
      %v6946 = vmul.f32 %v4030, %v6854
      %v6947 = vmul.f32 %v4031, %v6854
      %v6948 = vmul.f32 %v4032, %v6854
      %v6949 = vmul.f32 %v4033, %v6854
      %v6950 = vmul.f32 %v4034, %v6854
      %v7047 = vrot.slane %v6855, 2
      %v7048 = vrot.slane %v6856, 2
      %v7049 = vsel %vm1342, %v7047, %v7048
      %v7050 = vrot.slane %v6857, 2
      %v7051 = vsel %vm1342, %v7048, %v7050
      %v7052 = vrot.slane %v6858, 2
      %v7053 = vrot.slane %v6859, 2
      %v7054 = vsel %vm1342, %v7052, %v7053
      %v7055 = vrot.slane %v6860, 2
      %v7056 = vsel %vm1342, %v7053, %v7055
      %v7057 = vrot.slane %v6861, 2
      %v7058 = vrot.slane %v6862, 2
      %v7059 = vsel %vm1342, %v7057, %v7058
      %v7060 = vrot.slane %v6863, 2
      %v7061 = vsel %vm1342, %v7058, %v7060
      %v7062 = vrot.slane %v6864, 2
      %v7063 = vrot.slane %v6865, 2
      %v7064 = vsel %vm1342, %v7062, %v7063
      %v7065 = vrot.slane %v6866, 2
      %v7066 = vsel %vm1342, %v7063, %v7065
      %v7067 = vrot.slane %v6867, 2
      %v7068 = vrot.slane %v6868, 2
      %v7069 = vsel %vm1342, %v7067, %v7068
      %v7070 = vrot.slane %v6869, 2
      %v7071 = vsel %vm1342, %v7068, %v7070
      %v7072 = vrot.slane %v6870, 2
      %v7073 = vrot.slane %v6871, 2
      %v7074 = vsel %vm1342, %v7072, %v7073
      %v7075 = vrot.slane %v6872, 2
      %v7076 = vsel %vm1342, %v7073, %v7075
      %v7077 = vrot.slane %v6873, 2
      %v7078 = vrot.slane %v6874, 2
      %v7079 = vsel %vm1342, %v7077, %v7078
      %v7080 = vrot.slane %v6875, 2
      %v7081 = vsel %vm1342, %v7078, %v7080
      %v7082 = vrot.slane %v6876, 2
      %v7083 = vrot.slane %v6877, 2
      %v7084 = vsel %vm1342, %v7082, %v7083
      %v7085 = vrot.slane %v6878, 2
      %v7086 = vsel %vm1342, %v7083, %v7085
      %v7087 = vrot.slane %v6879, 2
      %v7088 = vrot.slane %v6880, 2
      %v7089 = vsel %vm1342, %v7087, %v7088
      %v7090 = vrot.slane %v6881, 2
      %v7091 = vsel %vm1342, %v7088, %v7090
      %v7092 = vrot.slane %v6882, 2
      %v7093 = vrot.slane %v6883, 2
      %v7094 = vsel %vm1342, %v7092, %v7093
      %v7095 = vrot.slane %v6884, 2
      %v7096 = vsel %vm1342, %v7093, %v7095
      %v7097 = vrot.slane %v6885, 2
      %v7098 = vrot.slane %v6886, 2
      %v7099 = vsel %vm1342, %v7097, %v7098
      %v7100 = vrot.slane %v6887, 2
      %v7101 = vsel %vm1342, %v7098, %v7100
      %v7102 = vrot.slane %v6888, 2
      %v7103 = vrot.slane %v6889, 2
      %v7104 = vsel %vm1342, %v7102, %v7103
      %v7105 = vrot.slane %v6890, 2
      %v7106 = vsel %vm1342, %v7103, %v7105
      %v7107 = vrot.slane %v6891, 2
      %v7108 = vrot.slane %v6892, 2
      %v7109 = vsel %vm1342, %v7107, %v7108
      %v7110 = vrot.slane %v6893, 2
      %v7111 = vsel %vm1342, %v7108, %v7110
      %v7112 = vrot.slane %v6894, 2
      %v7113 = vrot.slane %v6895, 2
      %v7114 = vsel %vm1342, %v7112, %v7113
      %v7115 = vrot.slane %v6896, 2
      %v7116 = vsel %vm1342, %v7113, %v7115
      %v7117 = vrot.slane %v6897, 2
      %v7118 = vrot.slane %v6898, 2
      %v7119 = vsel %vm1342, %v7117, %v7118
      %v7120 = vrot.slane %v6899, 2
      %v7121 = vsel %vm1342, %v7118, %v7120
      %v7122 = vrot.slane %v6900, 2
      %v7123 = vrot.slane %v6901, 2
      %v7124 = vsel %vm1342, %v7122, %v7123
      %v7125 = vrot.slane %v6902, 2
      %v7126 = vsel %vm1342, %v7123, %v7125
      %v7127 = vrot.slane %v6903, 2
      %v7128 = vrot.slane %v6904, 2
      %v7129 = vsel %vm1342, %v7127, %v7128
      %v7130 = vrot.slane %v6905, 2
      %v7131 = vsel %vm1342, %v7128, %v7130
      %v7132 = vrot.slane %v6906, 2
      %v7133 = vrot.slane %v6907, 2
      %v7134 = vsel %vm1342, %v7132, %v7133
      %v7135 = vrot.slane %v6908, 2
      %v7136 = vsel %vm1342, %v7133, %v7135
      %v7137 = vrot.slane %v6909, 2
      %v7138 = vrot.slane %v6910, 2
      %v7139 = vsel %vm1342, %v7137, %v7138
      %v7140 = vrot.slane %v6911, 2
      %v7141 = vsel %vm1342, %v7138, %v7140
      %v7142 = vrot.slane %v6912, 2
      %v7143 = vrot.slane %v6913, 2
      %v7144 = vsel %vm1342, %v7142, %v7143
      %v7145 = vrot.slane %v6914, 2
      %v7146 = vsel %vm1342, %v7143, %v7145
      %v7147 = vrot.slane %v6915, 2
      %v7148 = vrot.slane %v6916, 2
      %v7149 = vsel %vm1342, %v7147, %v7148
      %v7150 = vrot.slane %v6917, 2
      %v7151 = vsel %vm1342, %v7148, %v7150
      %v7152 = vrot.slane %v6918, 2
      %v7153 = vrot.slane %v6919, 2
      %v7154 = vsel %vm1342, %v7152, %v7153
      %v7155 = vrot.slane %v6920, 2
      %v7156 = vsel %vm1342, %v7153, %v7155
      %v7157 = vrot.slane %v6921, 2
      %v7158 = vrot.slane %v6922, 2
      %v7159 = vsel %vm1342, %v7157, %v7158
      %v7160 = vrot.slane %v6923, 2
      %v7161 = vsel %vm1342, %v7158, %v7160
      %v7162 = vrot.slane %v6924, 2
      %v7163 = vrot.slane %v6925, 2
      %v7164 = vsel %vm1342, %v7162, %v7163
      %v7165 = vrot.slane %v6926, 2
      %v7166 = vsel %vm1342, %v7163, %v7165
      %v7167 = vrot.slane %v6927, 2
      %v7168 = vrot.slane %v6928, 2
      %v7169 = vsel %vm1342, %v7167, %v7168
      %v7170 = vrot.slane %v6929, 2
      %v7171 = vsel %vm1342, %v7168, %v7170
      %v7172 = vrot.slane %v6930, 2
      %v7173 = vrot.slane %v6931, 2
      %v7174 = vsel %vm1342, %v7172, %v7173
      %v7175 = vrot.slane %v6932, 2
      %v7176 = vsel %vm1342, %v7173, %v7175
      %v7177 = vrot.slane %v6933, 2
      %v7178 = vrot.slane %v6934, 2
      %v7179 = vsel %vm1342, %v7177, %v7178
      %v7180 = vrot.slane %v6935, 2
      %v7181 = vsel %vm1342, %v7178, %v7180
      %v7182 = vrot.slane %v6936, 2
      %v7183 = vrot.slane %v6937, 2
      %v7184 = vsel %vm1342, %v7182, %v7183
      %v7185 = vrot.slane %v6938, 2
      %v7186 = vsel %vm1342, %v7183, %v7185
      %v7187 = vrot.slane %v6939, 2
      %v7188 = vrot.slane %v6940, 2
      %v7189 = vsel %vm1342, %v7187, %v7188
      %v7190 = vrot.slane %v6941, 2
      %v7191 = vsel %vm1342, %v7188, %v7190
      %v7192 = vrot.slane %v6942, 2
      %v7193 = vrot.slane %v6943, 2
      %v7194 = vsel %vm1342, %v7192, %v7193
      %v7195 = vrot.slane %v6944, 2
      %v7196 = vsel %vm1342, %v7193, %v7195
      %v7197 = vrot.slane %v6945, 2
      %v7198 = vrot.slane %v6946, 2
      %v7199 = vsel %vm1342, %v7197, %v7198
      %v7200 = vrot.slane %v6947, 2
      %v7201 = vsel %vm1342, %v7198, %v7200
      %v7202 = vrot.slane %v6948, 2
      %v7203 = vrot.slane %v6949, 2
      %v7204 = vsel %vm1342, %v7202, %v7203
      %v7205 = vrot.slane %v6950, 2
      %v7206 = vsel %vm1342, %v7203, %v7205
      %v7271 = vadd.f32 %v6787, %v7049
      %v7272 = vadd.f32 %v6788, %v7051
      %v7273 = vadd.f32 %v6789, %v7054
      %v7274 = vadd.f32 %v6790, %v7056
      %v7275 = vadd.f32 %v6791, %v7059
      %v7276 = vadd.f32 %v6792, %v7061
      %v7277 = vadd.f32 %v6793, %v7064
      %v7278 = vadd.f32 %v6794, %v7066
      %v7279 = vadd.f32 %v6795, %v7069
      %v7280 = vadd.f32 %v6796, %v7071
      %v7281 = vadd.f32 %v6797, %v7074
      %v7282 = vadd.f32 %v6798, %v7076
      %v7283 = vadd.f32 %v6799, %v7079
      %v7284 = vadd.f32 %v6800, %v7081
      %v7285 = vadd.f32 %v6801, %v7084
      %v7286 = vadd.f32 %v6802, %v7086
      %v7287 = vadd.f32 %v6803, %v7089
      %v7288 = vadd.f32 %v6804, %v7091
      %v7289 = vadd.f32 %v6805, %v7094
      %v7290 = vadd.f32 %v6806, %v7096
      %v7291 = vadd.f32 %v6807, %v7099
      %v7292 = vadd.f32 %v6808, %v7101
      %v7293 = vadd.f32 %v6809, %v7104
      %v7294 = vadd.f32 %v6810, %v7106
      %v7295 = vadd.f32 %v6811, %v7109
      %v7296 = vadd.f32 %v6812, %v7111
      %v7297 = vadd.f32 %v6813, %v7114
      %v7298 = vadd.f32 %v6814, %v7116
      %v7299 = vadd.f32 %v6815, %v7119
      %v7300 = vadd.f32 %v6816, %v7121
      %v7301 = vadd.f32 %v6817, %v7124
      %v7302 = vadd.f32 %v6818, %v7126
      %v7303 = vadd.f32 %v6819, %v7129
      %v7304 = vadd.f32 %v6820, %v7131
      %v7305 = vadd.f32 %v6821, %v7134
      %v7306 = vadd.f32 %v6822, %v7136
      %v7307 = vadd.f32 %v6823, %v7139
      %v7308 = vadd.f32 %v6824, %v7141
      %v7309 = vadd.f32 %v6825, %v7144
      %v7310 = vadd.f32 %v6826, %v7146
      %v7311 = vadd.f32 %v6827, %v7149
      %v7312 = vadd.f32 %v6828, %v7151
      %v7313 = vadd.f32 %v6829, %v7154
      %v7314 = vadd.f32 %v6830, %v7156
      %v7315 = vadd.f32 %v6831, %v7159
      %v7316 = vadd.f32 %v6832, %v7161
      %v7317 = vadd.f32 %v6833, %v7164
      %v7318 = vadd.f32 %v6834, %v7166
      %v7319 = vadd.f32 %v6835, %v7169
      %v7320 = vadd.f32 %v6836, %v7171
      %v7321 = vadd.f32 %v6837, %v7174
      %v7322 = vadd.f32 %v6838, %v7176
      %v7323 = vadd.f32 %v6839, %v7179
      %v7324 = vadd.f32 %v6840, %v7181
      %v7325 = vadd.f32 %v6841, %v7184
      %v7326 = vadd.f32 %v6842, %v7186
      %v7327 = vadd.f32 %v6843, %v7189
      %v7328 = vadd.f32 %v6844, %v7191
      %v7329 = vadd.f32 %v6845, %v7194
      %v7330 = vadd.f32 %v6846, %v7196
      %v7331 = vadd.f32 %v6847, %v7199
      %v7332 = vadd.f32 %v6848, %v7201
      %v7333 = vadd.f32 %v6849, %v7204
      %v7334 = vadd.f32 %v6850, %v7206
      %v7335 = vld [vmem:[%s305] sm:$0xf]
      %v7336 = vld [vmem:[%s305 + $0x4] sm:$0xf]
      %v7337 = vld [vmem:[%s305 + $0x8] sm:$0x1]
      %v7338 = vld [vmem:[%s305 + $0xc] sm:$0xf]
      %v7339 = vld [vmem:[%s305 + $0x10] sm:$0xf]
      %v7340 = vld [vmem:[%s305 + $0x14] sm:$0x1]
      %v7341 = vld [vmem:[%s305 + $0x18] sm:$0xf]
      %v7342 = vld [vmem:[%s305 + $0x1c] sm:$0xf]
      %v7343 = vld [vmem:[%s305 + $0x20] sm:$0x1]
      %v7344 = vld [vmem:[%s305 + $0x24] sm:$0xf]
      %v7345 = vld [vmem:[%s305 + $0x28] sm:$0xf]
      %v7346 = vld [vmem:[%s305 + $0x2c] sm:$0x1]
      %v7347 = vld [vmem:[%s305 + $0x30] sm:$0xf]
      %v7348 = vld [vmem:[%s305 + $0x34] sm:$0xf]
      %v7349 = vld [vmem:[%s305 + $0x38] sm:$0x1]
      %v7350 = vld [vmem:[%s305 + $0x3c] sm:$0xf]
      %v7351 = vld [vmem:[%s305 + $0x40] sm:$0xf]
      %v7352 = vld [vmem:[%s305 + $0x44] sm:$0x1]
      %v7353 = vld [vmem:[%s305 + $0x48] sm:$0xf]
      %v7354 = vld [vmem:[%s305 + $0x4c] sm:$0xf]
      %v7355 = vld [vmem:[%s305 + $0x50] sm:$0x1]
      %v7356 = vld [vmem:[%s305 + $0x54] sm:$0xf]
      %v7357 = vld [vmem:[%s305 + $0x58] sm:$0xf]
      %v7358 = vld [vmem:[%s305 + $0x5c] sm:$0x1]
      %v7359 = vld [vmem:[%s305 + $0x60] sm:$0xf]
      %v7360 = vld [vmem:[%s305 + $0x64] sm:$0xf]
      %v7361 = vld [vmem:[%s305 + $0x68] sm:$0x1]
      %v7362 = vld [vmem:[%s305 + $0x6c] sm:$0xf]
      %v7363 = vld [vmem:[%s305 + $0x70] sm:$0xf]
      %v7364 = vld [vmem:[%s305 + $0x74] sm:$0x1]
      %v7365 = vld [vmem:[%s305 + $0x78] sm:$0xf]
      %v7366 = vld [vmem:[%s305 + $0x7c] sm:$0xf]
      %v7367 = vld [vmem:[%s305 + $0x80] sm:$0x1]
      %v7368 = vld [vmem:[%s305 + $0x84] sm:$0xf]
      %v7369 = vld [vmem:[%s305 + $0x88] sm:$0xf]
      %v7370 = vld [vmem:[%s305 + $0x8c] sm:$0x1]
      %v7371 = vld [vmem:[%s305 + $0x90] sm:$0xf]
      %v7372 = vld [vmem:[%s305 + $0x94] sm:$0xf]
      %v7373 = vld [vmem:[%s305 + $0x98] sm:$0x1]
      %v7374 = vld [vmem:[%s305 + $0x9c] sm:$0xf]
      %v7375 = vld [vmem:[%s305 + $0xa0] sm:$0xf]
      %v7376 = vld [vmem:[%s305 + $0xa4] sm:$0x1]
      %v7377 = vld [vmem:[%s305 + $0xa8] sm:$0xf]
      %v7378 = vld [vmem:[%s305 + $0xac] sm:$0xf]
      %v7379 = vld [vmem:[%s305 + $0xb0] sm:$0x1]
      %v7380 = vld [vmem:[%s305 + $0xb4] sm:$0xf]
      %v7381 = vld [vmem:[%s305 + $0xb8] sm:$0xf]
      %v7382 = vld [vmem:[%s305 + $0xbc] sm:$0x1]
      %v7383 = vld [vmem:[%s305 + $0xc0] sm:$0xf]
      %v7384 = vld [vmem:[%s305 + $0xc4] sm:$0xf]
      %v7385 = vld [vmem:[%s305 + $0xc8] sm:$0x1]
      %v7386 = vld [vmem:[%s305 + $0xcc] sm:$0xf]
      %v7387 = vld [vmem:[%s305 + $0xd0] sm:$0xf]
      %v7388 = vld [vmem:[%s305 + $0xd4] sm:$0x1]
      %v7389 = vld [vmem:[%s305 + $0xd8] sm:$0xf]
      %v7390 = vld [vmem:[%s305 + $0xdc] sm:$0xf]
      %v7391 = vld [vmem:[%s305 + $0xe0] sm:$0x1]
      %v7392 = vld [vmem:[%s305 + $0xe4] sm:$0xf]
      %v7393 = vld [vmem:[%s305 + $0xe8] sm:$0xf]
      %v7394 = vld [vmem:[%s305 + $0xec] sm:$0x1]
      %v7395 = vld [vmem:[%s305 + $0xf0] sm:$0xf]
      %v7396 = vld [vmem:[%s305 + $0xf4] sm:$0xf]
      %v7397 = vld [vmem:[%s305 + $0xf8] sm:$0x1]
      %v7398 = vld [vmem:[%s305 + $0xfc] sm:$0xf]
      %v7399 = vld [vmem:[%s305 + $0x100] sm:$0xf]
      %v7400 = vld [vmem:[%s305 + $0x104] sm:$0x1]
      %v7401 = vld [vmem:[%s305 + $0x108] sm:$0xf]
      %v7402 = vld [vmem:[%s305 + $0x10c] sm:$0xf]
      %v7403 = vld [vmem:[%s305 + $0x110] sm:$0x1]
      %v7404 = vld [vmem:[%s305 + $0x114] sm:$0xf]
      %v7405 = vld [vmem:[%s305 + $0x118] sm:$0xf]
      %v7406 = vld [vmem:[%s305 + $0x11c] sm:$0x1]
      %v7407 = vld [vmem:[%s305 + $0x120] sm:$0xf]
      %v7408 = vld [vmem:[%s305 + $0x124] sm:$0xf]
      %v7409 = vld [vmem:[%s305 + $0x128] sm:$0x1]
      %v7410 = vld [vmem:[%s305 + $0x12c] sm:$0xf]
      %v7411 = vld [vmem:[%s305 + $0x130] sm:$0xf]
      %v7412 = vld [vmem:[%s305 + $0x134] sm:$0x1]
      %v7413 = vld [vmem:[%s305 + $0x138] sm:$0xf]
      %v7414 = vld [vmem:[%s305 + $0x13c] sm:$0xf]
      %v7415 = vld [vmem:[%s305 + $0x140] sm:$0x1]
      %v7416 = vld [vmem:[%s305 + $0x144] sm:$0xf]
      %v7417 = vld [vmem:[%s305 + $0x148] sm:$0xf]
      %v7418 = vld [vmem:[%s305 + $0x14c] sm:$0x1]
      %v7419 = vld [vmem:[%s305 + $0x150] sm:$0xf]
      %v7420 = vld [vmem:[%s305 + $0x154] sm:$0xf]
      %v7421 = vld [vmem:[%s305 + $0x158] sm:$0x1]
      %v7422 = vld [vmem:[%s305 + $0x15c] sm:$0xf]
      %v7423 = vld [vmem:[%s305 + $0x160] sm:$0xf]
      %v7424 = vld [vmem:[%s305 + $0x164] sm:$0x1]
      %v7425 = vld [vmem:[%s305 + $0x168] sm:$0xf]
      %v7426 = vld [vmem:[%s305 + $0x16c] sm:$0xf]
      %v7427 = vld [vmem:[%s305 + $0x170] sm:$0x1]
      %v7428 = vld [vmem:[%s305 + $0x174] sm:$0xf]
      %v7429 = vld [vmem:[%s305 + $0x178] sm:$0xf]
      %v7430 = vld [vmem:[%s305 + $0x17c] sm:$0x1]
      %v7431 = vld [vmem:[%s305 + $0x180] sm:$0xf]
      %v7432 = vld [vmem:[%s305 + $0x184] sm:$0xf]
      %v7433 = vld [vmem:[%s305 + $0x188] sm:$0x1]
      %v7434 = vld [vmem:[%s305 + $0x18c] sm:$0xf]
      %v7435 = vld [vmem:[%s305 + $0x190] sm:$0xf]
      %v7436 = vld [vmem:[%s305 + $0x194] sm:$0x1]
      %v7437 = vunpack.c.l.bf16 %v7335
      %v7438 = vunpack.c.l.bf16 %v7336
      %v7439 = vunpack.c.l.bf16 %v7337
      %v7440 = vunpack.c.l.bf16 %v7338
      %v7441 = vunpack.c.l.bf16 %v7339
      %v7442 = vunpack.c.l.bf16 %v7340
      %v7443 = vunpack.c.l.bf16 %v7341
      %v7444 = vunpack.c.l.bf16 %v7342
      %v7445 = vunpack.c.l.bf16 %v7343
      %v7446 = vunpack.c.l.bf16 %v7344
      %v7447 = vunpack.c.l.bf16 %v7345
      %v7448 = vunpack.c.l.bf16 %v7346
      %v7449 = vunpack.c.l.bf16 %v7347
      %v7450 = vunpack.c.l.bf16 %v7348
      %v7451 = vunpack.c.l.bf16 %v7349
      %v7452 = vunpack.c.l.bf16 %v7350
      %v7453 = vunpack.c.l.bf16 %v7351
      %v7454 = vunpack.c.l.bf16 %v7352
      %v7455 = vunpack.c.l.bf16 %v7353
      %v7456 = vunpack.c.l.bf16 %v7354
      %v7457 = vunpack.c.l.bf16 %v7355
      %v7458 = vunpack.c.l.bf16 %v7356
      %v7459 = vunpack.c.l.bf16 %v7357
      %v7460 = vunpack.c.l.bf16 %v7358
      %v7461 = vunpack.c.l.bf16 %v7359
      %v7462 = vunpack.c.l.bf16 %v7360
      %v7463 = vunpack.c.l.bf16 %v7361
      %v7464 = vunpack.c.l.bf16 %v7362
      %v7465 = vunpack.c.l.bf16 %v7363
      %v7466 = vunpack.c.l.bf16 %v7364
      %v7467 = vunpack.c.l.bf16 %v7365
      %v7468 = vunpack.c.l.bf16 %v7366
      %v7469 = vunpack.c.l.bf16 %v7367
      %v7470 = vunpack.c.l.bf16 %v7368
      %v7471 = vunpack.c.l.bf16 %v7369
      %v7472 = vunpack.c.l.bf16 %v7370
      %v7473 = vunpack.c.l.bf16 %v7371
      %v7474 = vunpack.c.l.bf16 %v7372
      %v7475 = vunpack.c.l.bf16 %v7373
      %v7476 = vunpack.c.l.bf16 %v7374
      %v7477 = vunpack.c.l.bf16 %v7375
      %v7478 = vunpack.c.l.bf16 %v7376
      %v7479 = vunpack.c.l.bf16 %v7377
      %v7480 = vunpack.c.l.bf16 %v7378
      %v7481 = vunpack.c.l.bf16 %v7379
      %v7482 = vunpack.c.l.bf16 %v7380
      %v7483 = vunpack.c.l.bf16 %v7381
      %v7484 = vunpack.c.l.bf16 %v7382
      %v7485 = vunpack.c.l.bf16 %v7383
      %v7486 = vunpack.c.l.bf16 %v7384
      %v7487 = vunpack.c.l.bf16 %v7385
      %v7488 = vunpack.c.l.bf16 %v7386
      %v7489 = vunpack.c.l.bf16 %v7387
      %v7490 = vunpack.c.l.bf16 %v7388
      %v7491 = vunpack.c.l.bf16 %v7389
      %v7492 = vunpack.c.l.bf16 %v7390
      %v7493 = vunpack.c.l.bf16 %v7391
      %v7494 = vunpack.c.l.bf16 %v7392
      %v7495 = vunpack.c.l.bf16 %v7393
      %v7496 = vunpack.c.l.bf16 %v7394
      %v7497 = vunpack.c.l.bf16 %v7395
      %v7498 = vunpack.c.l.bf16 %v7396
      %v7499 = vunpack.c.l.bf16 %v7397
      %v7500 = vunpack.c.l.bf16 %v7398
      %v7501 = vunpack.c.l.bf16 %v7399
      %v7502 = vunpack.c.l.bf16 %v7400
      %v7503 = vunpack.c.l.bf16 %v7401
      %v7504 = vunpack.c.l.bf16 %v7402
      %v7505 = vunpack.c.l.bf16 %v7403
      %v7506 = vunpack.c.l.bf16 %v7404
      %v7507 = vunpack.c.l.bf16 %v7405
      %v7508 = vunpack.c.l.bf16 %v7406
      %v7509 = vunpack.c.l.bf16 %v7407
      %v7510 = vunpack.c.l.bf16 %v7408
      %v7511 = vunpack.c.l.bf16 %v7409
      %v7512 = vunpack.c.l.bf16 %v7410
      %v7513 = vunpack.c.l.bf16 %v7411
      %v7514 = vunpack.c.l.bf16 %v7412
      %v7515 = vunpack.c.l.bf16 %v7413
      %v7516 = vunpack.c.l.bf16 %v7414
      %v7517 = vunpack.c.l.bf16 %v7415
      %v7518 = vunpack.c.l.bf16 %v7416
      %v7519 = vunpack.c.l.bf16 %v7417
      %v7520 = vunpack.c.l.bf16 %v7418
      %v7521 = vunpack.c.l.bf16 %v7419
      %v7522 = vunpack.c.l.bf16 %v7420
      %v7523 = vunpack.c.l.bf16 %v7421
      %v7524 = vunpack.c.l.bf16 %v7422
      %v7525 = vunpack.c.l.bf16 %v7423
      %v7526 = vunpack.c.l.bf16 %v7424
      %v7527 = vunpack.c.l.bf16 %v7425
      %v7528 = vunpack.c.l.bf16 %v7426
      %v7529 = vunpack.c.l.bf16 %v7427
      %v7530 = vunpack.c.l.bf16 %v7428
      %v7531 = vunpack.c.l.bf16 %v7429
      %v7532 = vunpack.c.l.bf16 %v7430
      %v7533 = vunpack.c.l.bf16 %v7431
      %v7534 = vunpack.c.l.bf16 %v7432
      %v7535 = vunpack.c.l.bf16 %v7433
      %v7536 = vunpack.c.l.bf16 %v7434
      %v7537 = vunpack.c.l.bf16 %v7435
      %v7538 = vunpack.c.l.bf16 %v7436
      %v7539 = vlaneseq
      %v7540 = vshrl.u32 %v7539, 7
      %v7541 = vsub.s32 0, %v7540
      %v7542 = vrot.slane %v322, %v7541
      %v7543 = vmul.f32 %v7437, %v7542
      %v7544 = vmul.f32 %v7438, %v7542
      %v7545 = vmul.f32 %v7440, %v7542
      %v7546 = vmul.f32 %v7441, %v7542
      %v7547 = vmul.f32 %v7443, %v7542
      %v7548 = vmul.f32 %v7444, %v7542
      %v7549 = vmul.f32 %v7446, %v7542
      %v7550 = vmul.f32 %v7447, %v7542
      %v7551 = vmul.f32 %v7449, %v7542
      %v7552 = vmul.f32 %v7450, %v7542
      %v7553 = vmul.f32 %v7452, %v7542
      %v7554 = vmul.f32 %v7453, %v7542
      %v7555 = vmul.f32 %v7455, %v7542
      %v7556 = vmul.f32 %v7456, %v7542
      %v7557 = vmul.f32 %v7458, %v7542
      %v7558 = vmul.f32 %v7459, %v7542
      %v7559 = vmul.f32 %v7461, %v7542
      %v7560 = vmul.f32 %v7462, %v7542
      %v7561 = vmul.f32 %v7464, %v7542
      %v7562 = vmul.f32 %v7465, %v7542
      %v7563 = vmul.f32 %v7467, %v7542
      %v7564 = vmul.f32 %v7468, %v7542
      %v7565 = vmul.f32 %v7470, %v7542
      %v7566 = vmul.f32 %v7471, %v7542
      %v7567 = vmul.f32 %v7473, %v7542
      %v7568 = vmul.f32 %v7474, %v7542
      %v7569 = vmul.f32 %v7476, %v7542
      %v7570 = vmul.f32 %v7477, %v7542
      %v7571 = vmul.f32 %v7479, %v7542
      %v7572 = vmul.f32 %v7480, %v7542
      %v7573 = vmul.f32 %v7482, %v7542
      %v7574 = vmul.f32 %v7483, %v7542
      %v7575 = vmul.f32 %v7485, %v7542
      %v7576 = vmul.f32 %v7486, %v7542
      %v7577 = vmul.f32 %v7488, %v7542
      %v7578 = vmul.f32 %v7489, %v7542
      %v7579 = vmul.f32 %v7491, %v7542
      %v7580 = vmul.f32 %v7492, %v7542
      %v7581 = vmul.f32 %v7494, %v7542
      %v7582 = vmul.f32 %v7495, %v7542
      %v7583 = vmul.f32 %v7497, %v7542
      %v7584 = vmul.f32 %v7498, %v7542
      %v7585 = vmul.f32 %v7500, %v7542
      %v7586 = vmul.f32 %v7501, %v7542
      %v7587 = vmul.f32 %v7503, %v7542
      %v7588 = vmul.f32 %v7504, %v7542
      %v7589 = vmul.f32 %v7506, %v7542
      %v7590 = vmul.f32 %v7507, %v7542
      %v7591 = vmul.f32 %v7509, %v7542
      %v7592 = vmul.f32 %v7510, %v7542
      %v7593 = vmul.f32 %v7512, %v7542
      %v7594 = vmul.f32 %v7513, %v7542
      %v7595 = vmul.f32 %v7515, %v7542
      %v7596 = vmul.f32 %v7516, %v7542
      %v7597 = vmul.f32 %v7518, %v7542
      %v7598 = vmul.f32 %v7519, %v7542
      %v7599 = vmul.f32 %v7521, %v7542
      %v7600 = vmul.f32 %v7522, %v7542
      %v7601 = vmul.f32 %v7524, %v7542
      %v7602 = vmul.f32 %v7525, %v7542
      %v7603 = vmul.f32 %v7527, %v7542
      %v7604 = vmul.f32 %v7528, %v7542
      %v7605 = vmul.f32 %v7530, %v7542
      %v7606 = vmul.f32 %v7531, %v7542
      %v7607 = vadd.f32 %v7271, %v7543
      %v7608 = vadd.f32 %v7272, %v7544
      %v7609 = vadd.f32 %v7273, %v7545
      %v7610 = vadd.f32 %v7274, %v7546
      %v7611 = vadd.f32 %v7275, %v7547
      %v7612 = vadd.f32 %v7276, %v7548
      %v7613 = vadd.f32 %v7277, %v7549
      %v7614 = vadd.f32 %v7278, %v7550
      %v7615 = vadd.f32 %v7279, %v7551
      %v7616 = vadd.f32 %v7280, %v7552
      %v7617 = vadd.f32 %v7281, %v7553
      %v7618 = vadd.f32 %v7282, %v7554
      %v7619 = vadd.f32 %v7283, %v7555
      %v7620 = vadd.f32 %v7284, %v7556
      %v7621 = vadd.f32 %v7285, %v7557
      %v7622 = vadd.f32 %v7286, %v7558
      %v7623 = vadd.f32 %v7287, %v7559
      %v7624 = vadd.f32 %v7288, %v7560
      %v7625 = vadd.f32 %v7289, %v7561
      %v7626 = vadd.f32 %v7290, %v7562
      %v7627 = vadd.f32 %v7291, %v7563
      %v7628 = vadd.f32 %v7292, %v7564
      %v7629 = vadd.f32 %v7293, %v7565
      %v7630 = vadd.f32 %v7294, %v7566
      %v7631 = vadd.f32 %v7295, %v7567
      %v7632 = vadd.f32 %v7296, %v7568
      %v7633 = vadd.f32 %v7297, %v7569
      %v7634 = vadd.f32 %v7298, %v7570
      %v7635 = vadd.f32 %v7299, %v7571
      %v7636 = vadd.f32 %v7300, %v7572
      %v7637 = vadd.f32 %v7301, %v7573
      %v7638 = vadd.f32 %v7302, %v7574
      %v7639 = vadd.f32 %v7303, %v7575
      %v7640 = vadd.f32 %v7304, %v7576
      %v7641 = vadd.f32 %v7305, %v7577
      %v7642 = vadd.f32 %v7306, %v7578
      %v7643 = vadd.f32 %v7307, %v7579
      %v7644 = vadd.f32 %v7308, %v7580
      %v7645 = vadd.f32 %v7309, %v7581
      %v7646 = vadd.f32 %v7310, %v7582
      %v7647 = vadd.f32 %v7311, %v7583
      %v7648 = vadd.f32 %v7312, %v7584
      %v7649 = vadd.f32 %v7313, %v7585
      %v7650 = vadd.f32 %v7314, %v7586
      %v7651 = vadd.f32 %v7315, %v7587
      %v7652 = vadd.f32 %v7316, %v7588
      %v7653 = vadd.f32 %v7317, %v7589
      %v7654 = vadd.f32 %v7318, %v7590
      %v7655 = vadd.f32 %v7319, %v7591
      %v7656 = vadd.f32 %v7320, %v7592
      %v7657 = vadd.f32 %v7321, %v7593
      %v7658 = vadd.f32 %v7322, %v7594
      %v7659 = vadd.f32 %v7323, %v7595
      %v7660 = vadd.f32 %v7324, %v7596
      %v7661 = vadd.f32 %v7325, %v7597
      %v7662 = vadd.f32 %v7326, %v7598
      %v7663 = vadd.f32 %v7327, %v7599
      %v7664 = vadd.f32 %v7328, %v7600
      %v7665 = vadd.f32 %v7329, %v7601
      %v7666 = vadd.f32 %v7330, %v7602
      %v7667 = vadd.f32 %v7331, %v7603
      %v7668 = vadd.f32 %v7332, %v7604
      %v7669 = vadd.f32 %v7333, %v7605
      %v7670 = vadd.f32 %v7334, %v7606
      %v7671 = vlaneseq
      %v7672 = vshrl.u32 %v7671, 7
      %v7673 = vsub.s32 1, %v7672
      %v7674 = vrot.slane %v322, %v7673
      %v7675 = vmul.f32 %v7437, %v7674
      %v7676 = vmul.f32 %v7438, %v7674
      %v7677 = vmul.f32 %v7439, %v7674
      %v7678 = vmul.f32 %v7440, %v7674
      %v7679 = vmul.f32 %v7441, %v7674
      %v7680 = vmul.f32 %v7442, %v7674
      %v7681 = vmul.f32 %v7443, %v7674
      %v7682 = vmul.f32 %v7444, %v7674
      %v7683 = vmul.f32 %v7445, %v7674
      %v7684 = vmul.f32 %v7446, %v7674
      %v7685 = vmul.f32 %v7447, %v7674
      %v7686 = vmul.f32 %v7448, %v7674
      %v7687 = vmul.f32 %v7449, %v7674
      %v7688 = vmul.f32 %v7450, %v7674
      %v7689 = vmul.f32 %v7451, %v7674
      %v7690 = vmul.f32 %v7452, %v7674
      %v7691 = vmul.f32 %v7453, %v7674
      %v7692 = vmul.f32 %v7454, %v7674
      %v7693 = vmul.f32 %v7455, %v7674
      %v7694 = vmul.f32 %v7456, %v7674
      %v7695 = vmul.f32 %v7457, %v7674
      %v7696 = vmul.f32 %v7458, %v7674
      %v7697 = vmul.f32 %v7459, %v7674
      %v7698 = vmul.f32 %v7460, %v7674
      %v7699 = vmul.f32 %v7461, %v7674
      %v7700 = vmul.f32 %v7462, %v7674
      %v7701 = vmul.f32 %v7463, %v7674
      %v7702 = vmul.f32 %v7464, %v7674
      %v7703 = vmul.f32 %v7465, %v7674
      %v7704 = vmul.f32 %v7466, %v7674
      %v7705 = vmul.f32 %v7467, %v7674
      %v7706 = vmul.f32 %v7468, %v7674
      %v7707 = vmul.f32 %v7469, %v7674
      %v7708 = vmul.f32 %v7470, %v7674
      %v7709 = vmul.f32 %v7471, %v7674
      %v7710 = vmul.f32 %v7472, %v7674
      %v7711 = vmul.f32 %v7473, %v7674
      %v7712 = vmul.f32 %v7474, %v7674
      %v7713 = vmul.f32 %v7475, %v7674
      %v7714 = vmul.f32 %v7476, %v7674
      %v7715 = vmul.f32 %v7477, %v7674
      %v7716 = vmul.f32 %v7478, %v7674
      %v7717 = vmul.f32 %v7479, %v7674
      %v7718 = vmul.f32 %v7480, %v7674
      %v7719 = vmul.f32 %v7481, %v7674
      %v7720 = vmul.f32 %v7482, %v7674
      %v7721 = vmul.f32 %v7483, %v7674
      %v7722 = vmul.f32 %v7484, %v7674
      %v7723 = vmul.f32 %v7485, %v7674
      %v7724 = vmul.f32 %v7486, %v7674
      %v7725 = vmul.f32 %v7487, %v7674
      %v7726 = vmul.f32 %v7488, %v7674
      %v7727 = vmul.f32 %v7489, %v7674
      %v7728 = vmul.f32 %v7490, %v7674
      %v7729 = vmul.f32 %v7491, %v7674
      %v7730 = vmul.f32 %v7492, %v7674
      %v7731 = vmul.f32 %v7493, %v7674
      %v7732 = vmul.f32 %v7494, %v7674
      %v7733 = vmul.f32 %v7495, %v7674
      %v7734 = vmul.f32 %v7496, %v7674
      %v7735 = vmul.f32 %v7497, %v7674
      %v7736 = vmul.f32 %v7498, %v7674
      %v7737 = vmul.f32 %v7499, %v7674
      %v7738 = vmul.f32 %v7500, %v7674
      %v7739 = vmul.f32 %v7501, %v7674
      %v7740 = vmul.f32 %v7502, %v7674
      %v7741 = vmul.f32 %v7503, %v7674
      %v7742 = vmul.f32 %v7504, %v7674
      %v7743 = vmul.f32 %v7505, %v7674
      %v7744 = vmul.f32 %v7506, %v7674
      %v7745 = vmul.f32 %v7507, %v7674
      %v7746 = vmul.f32 %v7508, %v7674
      %v7747 = vmul.f32 %v7509, %v7674
      %v7748 = vmul.f32 %v7510, %v7674
      %v7749 = vmul.f32 %v7511, %v7674
      %v7750 = vmul.f32 %v7512, %v7674
      %v7751 = vmul.f32 %v7513, %v7674
      %v7752 = vmul.f32 %v7514, %v7674
      %v7753 = vmul.f32 %v7515, %v7674
      %v7754 = vmul.f32 %v7516, %v7674
      %v7755 = vmul.f32 %v7517, %v7674
      %v7756 = vmul.f32 %v7518, %v7674
      %v7757 = vmul.f32 %v7519, %v7674
      %v7758 = vmul.f32 %v7520, %v7674
      %v7759 = vmul.f32 %v7521, %v7674
      %v7760 = vmul.f32 %v7522, %v7674
      %v7761 = vmul.f32 %v7523, %v7674
      %v7762 = vmul.f32 %v7524, %v7674
      %v7763 = vmul.f32 %v7525, %v7674
      %v7764 = vmul.f32 %v7526, %v7674
      %v7765 = vmul.f32 %v7527, %v7674
      %v7766 = vmul.f32 %v7528, %v7674
      %v7767 = vmul.f32 %v7529, %v7674
      %v7768 = vmul.f32 %v7530, %v7674
      %v7769 = vmul.f32 %v7531, %v7674
      %v7770 = vmul.f32 %v7532, %v7674
      %v7867 = vrot.slane %v7675, 1
      %v7868 = vrot.slane %v7676, 1
      %v7869 = vsel %vm857, %v7867, %v7868
      %v7870 = vrot.slane %v7677, 1
      %v7871 = vsel %vm857, %v7868, %v7870
      %v7872 = vrot.slane %v7678, 1
      %v7873 = vrot.slane %v7679, 1
      %v7874 = vsel %vm857, %v7872, %v7873
      %v7875 = vrot.slane %v7680, 1
      %v7876 = vsel %vm857, %v7873, %v7875
      %v7877 = vrot.slane %v7681, 1
      %v7878 = vrot.slane %v7682, 1
      %v7879 = vsel %vm857, %v7877, %v7878
      %v7880 = vrot.slane %v7683, 1
      %v7881 = vsel %vm857, %v7878, %v7880
      %v7882 = vrot.slane %v7684, 1
      %v7883 = vrot.slane %v7685, 1
      %v7884 = vsel %vm857, %v7882, %v7883
      %v7885 = vrot.slane %v7686, 1
      %v7886 = vsel %vm857, %v7883, %v7885
      %v7887 = vrot.slane %v7687, 1
      %v7888 = vrot.slane %v7688, 1
      %v7889 = vsel %vm857, %v7887, %v7888
      %v7890 = vrot.slane %v7689, 1
      %v7891 = vsel %vm857, %v7888, %v7890
      %v7892 = vrot.slane %v7690, 1
      %v7893 = vrot.slane %v7691, 1
      %v7894 = vsel %vm857, %v7892, %v7893
      %v7895 = vrot.slane %v7692, 1
      %v7896 = vsel %vm857, %v7893, %v7895
      %v7897 = vrot.slane %v7693, 1
      %v7898 = vrot.slane %v7694, 1
      %v7899 = vsel %vm857, %v7897, %v7898
      %v7900 = vrot.slane %v7695, 1
      %v7901 = vsel %vm857, %v7898, %v7900
      %v7902 = vrot.slane %v7696, 1
      %v7903 = vrot.slane %v7697, 1
      %v7904 = vsel %vm857, %v7902, %v7903
      %v7905 = vrot.slane %v7698, 1
      %v7906 = vsel %vm857, %v7903, %v7905
      %v7907 = vrot.slane %v7699, 1
      %v7908 = vrot.slane %v7700, 1
      %v7909 = vsel %vm857, %v7907, %v7908
      %v7910 = vrot.slane %v7701, 1
      %v7911 = vsel %vm857, %v7908, %v7910
      %v7912 = vrot.slane %v7702, 1
      %v7913 = vrot.slane %v7703, 1
      %v7914 = vsel %vm857, %v7912, %v7913
      %v7915 = vrot.slane %v7704, 1
      %v7916 = vsel %vm857, %v7913, %v7915
      %v7917 = vrot.slane %v7705, 1
      %v7918 = vrot.slane %v7706, 1
      %v7919 = vsel %vm857, %v7917, %v7918
      %v7920 = vrot.slane %v7707, 1
      %v7921 = vsel %vm857, %v7918, %v7920
      %v7922 = vrot.slane %v7708, 1
      %v7923 = vrot.slane %v7709, 1
      %v7924 = vsel %vm857, %v7922, %v7923
      %v7925 = vrot.slane %v7710, 1
      %v7926 = vsel %vm857, %v7923, %v7925
      %v7927 = vrot.slane %v7711, 1
      %v7928 = vrot.slane %v7712, 1
      %v7929 = vsel %vm857, %v7927, %v7928
      %v7930 = vrot.slane %v7713, 1
      %v7931 = vsel %vm857, %v7928, %v7930
      %v7932 = vrot.slane %v7714, 1
      %v7933 = vrot.slane %v7715, 1
      %v7934 = vsel %vm857, %v7932, %v7933
      %v7935 = vrot.slane %v7716, 1
      %v7936 = vsel %vm857, %v7933, %v7935
      %v7937 = vrot.slane %v7717, 1
      %v7938 = vrot.slane %v7718, 1
      %v7939 = vsel %vm857, %v7937, %v7938
      %v7940 = vrot.slane %v7719, 1
      %v7941 = vsel %vm857, %v7938, %v7940
      %v7942 = vrot.slane %v7720, 1
      %v7943 = vrot.slane %v7721, 1
      %v7944 = vsel %vm857, %v7942, %v7943
      %v7945 = vrot.slane %v7722, 1
      %v7946 = vsel %vm857, %v7943, %v7945
      %v7947 = vrot.slane %v7723, 1
      %v7948 = vrot.slane %v7724, 1
      %v7949 = vsel %vm857, %v7947, %v7948
      %v7950 = vrot.slane %v7725, 1
      %v7951 = vsel %vm857, %v7948, %v7950
      %v7952 = vrot.slane %v7726, 1
      %v7953 = vrot.slane %v7727, 1
      %v7954 = vsel %vm857, %v7952, %v7953
      %v7955 = vrot.slane %v7728, 1
      %v7956 = vsel %vm857, %v7953, %v7955
      %v7957 = vrot.slane %v7729, 1
      %v7958 = vrot.slane %v7730, 1
      %v7959 = vsel %vm857, %v7957, %v7958
      %v7960 = vrot.slane %v7731, 1
      %v7961 = vsel %vm857, %v7958, %v7960
      %v7962 = vrot.slane %v7732, 1
      %v7963 = vrot.slane %v7733, 1
      %v7964 = vsel %vm857, %v7962, %v7963
      %v7965 = vrot.slane %v7734, 1
      %v7966 = vsel %vm857, %v7963, %v7965
      %v7967 = vrot.slane %v7735, 1
      %v7968 = vrot.slane %v7736, 1
      %v7969 = vsel %vm857, %v7967, %v7968
      %v7970 = vrot.slane %v7737, 1
      %v7971 = vsel %vm857, %v7968, %v7970
      %v7972 = vrot.slane %v7738, 1
      %v7973 = vrot.slane %v7739, 1
      %v7974 = vsel %vm857, %v7972, %v7973
      %v7975 = vrot.slane %v7740, 1
      %v7976 = vsel %vm857, %v7973, %v7975
      %v7977 = vrot.slane %v7741, 1
      %v7978 = vrot.slane %v7742, 1
      %v7979 = vsel %vm857, %v7977, %v7978
      %v7980 = vrot.slane %v7743, 1
      %v7981 = vsel %vm857, %v7978, %v7980
      %v7982 = vrot.slane %v7744, 1
      %v7983 = vrot.slane %v7745, 1
      %v7984 = vsel %vm857, %v7982, %v7983
      %v7985 = vrot.slane %v7746, 1
      %v7986 = vsel %vm857, %v7983, %v7985
      %v7987 = vrot.slane %v7747, 1
      %v7988 = vrot.slane %v7748, 1
      %v7989 = vsel %vm857, %v7987, %v7988
      %v7990 = vrot.slane %v7749, 1
      %v7991 = vsel %vm857, %v7988, %v7990
      %v7992 = vrot.slane %v7750, 1
      %v7993 = vrot.slane %v7751, 1
      %v7994 = vsel %vm857, %v7992, %v7993
      %v7995 = vrot.slane %v7752, 1
      %v7996 = vsel %vm857, %v7993, %v7995
      %v7997 = vrot.slane %v7753, 1
      %v7998 = vrot.slane %v7754, 1
      %v7999 = vsel %vm857, %v7997, %v7998
      %v8000 = vrot.slane %v7755, 1
      %v8001 = vsel %vm857, %v7998, %v8000
      %v8002 = vrot.slane %v7756, 1
      %v8003 = vrot.slane %v7757, 1
      %v8004 = vsel %vm857, %v8002, %v8003
      %v8005 = vrot.slane %v7758, 1
      %v8006 = vsel %vm857, %v8003, %v8005
      %v8007 = vrot.slane %v7759, 1
      %v8008 = vrot.slane %v7760, 1
      %v8009 = vsel %vm857, %v8007, %v8008
      %v8010 = vrot.slane %v7761, 1
      %v8011 = vsel %vm857, %v8008, %v8010
      %v8012 = vrot.slane %v7762, 1
      %v8013 = vrot.slane %v7763, 1
      %v8014 = vsel %vm857, %v8012, %v8013
      %v8015 = vrot.slane %v7764, 1
      %v8016 = vsel %vm857, %v8013, %v8015
      %v8017 = vrot.slane %v7765, 1
      %v8018 = vrot.slane %v7766, 1
      %v8019 = vsel %vm857, %v8017, %v8018
      %v8020 = vrot.slane %v7767, 1
      %v8021 = vsel %vm857, %v8018, %v8020
      %v8022 = vrot.slane %v7768, 1
      %v8023 = vrot.slane %v7769, 1
      %v8024 = vsel %vm857, %v8022, %v8023
      %v8025 = vrot.slane %v7770, 1
      %v8026 = vsel %vm857, %v8023, %v8025
      %v8091 = vadd.f32 %v7607, %v7869
      %v8092 = vadd.f32 %v7608, %v7871
      %v8093 = vadd.f32 %v7609, %v7874
      %v8094 = vadd.f32 %v7610, %v7876
      %v8095 = vadd.f32 %v7611, %v7879
      %v8096 = vadd.f32 %v7612, %v7881
      %v8097 = vadd.f32 %v7613, %v7884
      %v8098 = vadd.f32 %v7614, %v7886
      %v8099 = vadd.f32 %v7615, %v7889
      %v8100 = vadd.f32 %v7616, %v7891
      %v8101 = vadd.f32 %v7617, %v7894
      %v8102 = vadd.f32 %v7618, %v7896
      %v8103 = vadd.f32 %v7619, %v7899
      %v8104 = vadd.f32 %v7620, %v7901
      %v8105 = vadd.f32 %v7621, %v7904
      %v8106 = vadd.f32 %v7622, %v7906
      %v8107 = vadd.f32 %v7623, %v7909
      %v8108 = vadd.f32 %v7624, %v7911
      %v8109 = vadd.f32 %v7625, %v7914
      %v8110 = vadd.f32 %v7626, %v7916
      %v8111 = vadd.f32 %v7627, %v7919
      %v8112 = vadd.f32 %v7628, %v7921
      %v8113 = vadd.f32 %v7629, %v7924
      %v8114 = vadd.f32 %v7630, %v7926
      %v8115 = vadd.f32 %v7631, %v7929
      %v8116 = vadd.f32 %v7632, %v7931
      %v8117 = vadd.f32 %v7633, %v7934
      %v8118 = vadd.f32 %v7634, %v7936
      %v8119 = vadd.f32 %v7635, %v7939
      %v8120 = vadd.f32 %v7636, %v7941
      %v8121 = vadd.f32 %v7637, %v7944
      %v8122 = vadd.f32 %v7638, %v7946
      %v8123 = vadd.f32 %v7639, %v7949
      %v8124 = vadd.f32 %v7640, %v7951
      %v8125 = vadd.f32 %v7641, %v7954
      %v8126 = vadd.f32 %v7642, %v7956
      %v8127 = vadd.f32 %v7643, %v7959
      %v8128 = vadd.f32 %v7644, %v7961
      %v8129 = vadd.f32 %v7645, %v7964
      %v8130 = vadd.f32 %v7646, %v7966
      %v8131 = vadd.f32 %v7647, %v7969
      %v8132 = vadd.f32 %v7648, %v7971
      %v8133 = vadd.f32 %v7649, %v7974
      %v8134 = vadd.f32 %v7650, %v7976
      %v8135 = vadd.f32 %v7651, %v7979
      %v8136 = vadd.f32 %v7652, %v7981
      %v8137 = vadd.f32 %v7653, %v7984
      %v8138 = vadd.f32 %v7654, %v7986
      %v8139 = vadd.f32 %v7655, %v7989
      %v8140 = vadd.f32 %v7656, %v7991
      %v8141 = vadd.f32 %v7657, %v7994
      %v8142 = vadd.f32 %v7658, %v7996
      %v8143 = vadd.f32 %v7659, %v7999
      %v8144 = vadd.f32 %v7660, %v8001
      %v8145 = vadd.f32 %v7661, %v8004
      %v8146 = vadd.f32 %v7662, %v8006
      %v8147 = vadd.f32 %v7663, %v8009
      %v8148 = vadd.f32 %v7664, %v8011
      %v8149 = vadd.f32 %v7665, %v8014
      %v8150 = vadd.f32 %v7666, %v8016
      %v8151 = vadd.f32 %v7667, %v8019
      %v8152 = vadd.f32 %v7668, %v8021
      %v8153 = vadd.f32 %v7669, %v8024
      %v8154 = vadd.f32 %v7670, %v8026
      %v8155 = vlaneseq
      %v8156 = vshrl.u32 %v8155, 7
      %v8157 = vsub.s32 2, %v8156
      %v8158 = vrot.slane %v322, %v8157
      %v8159 = vmul.f32 %v7437, %v8158
      %v8160 = vmul.f32 %v7438, %v8158
      %v8161 = vmul.f32 %v7439, %v8158
      %v8162 = vmul.f32 %v7440, %v8158
      %v8163 = vmul.f32 %v7441, %v8158
      %v8164 = vmul.f32 %v7442, %v8158
      %v8165 = vmul.f32 %v7443, %v8158
      %v8166 = vmul.f32 %v7444, %v8158
      %v8167 = vmul.f32 %v7445, %v8158
      %v8168 = vmul.f32 %v7446, %v8158
      %v8169 = vmul.f32 %v7447, %v8158
      %v8170 = vmul.f32 %v7448, %v8158
      %v8171 = vmul.f32 %v7449, %v8158
      %v8172 = vmul.f32 %v7450, %v8158
      %v8173 = vmul.f32 %v7451, %v8158
      %v8174 = vmul.f32 %v7452, %v8158
      %v8175 = vmul.f32 %v7453, %v8158
      %v8176 = vmul.f32 %v7454, %v8158
      %v8177 = vmul.f32 %v7455, %v8158
      %v8178 = vmul.f32 %v7456, %v8158
      %v8179 = vmul.f32 %v7457, %v8158
      %v8180 = vmul.f32 %v7458, %v8158
      %v8181 = vmul.f32 %v7459, %v8158
      %v8182 = vmul.f32 %v7460, %v8158
      %v8183 = vmul.f32 %v7461, %v8158
      %v8184 = vmul.f32 %v7462, %v8158
      %v8185 = vmul.f32 %v7463, %v8158
      %v8186 = vmul.f32 %v7464, %v8158
      %v8187 = vmul.f32 %v7465, %v8158
      %v8188 = vmul.f32 %v7466, %v8158
      %v8189 = vmul.f32 %v7467, %v8158
      %v8190 = vmul.f32 %v7468, %v8158
      %v8191 = vmul.f32 %v7469, %v8158
      %v8192 = vmul.f32 %v7470, %v8158
      %v8193 = vmul.f32 %v7471, %v8158
      %v8194 = vmul.f32 %v7472, %v8158
      %v8195 = vmul.f32 %v7473, %v8158
      %v8196 = vmul.f32 %v7474, %v8158
      %v8197 = vmul.f32 %v7475, %v8158
      %v8198 = vmul.f32 %v7476, %v8158
      %v8199 = vmul.f32 %v7477, %v8158
      %v8200 = vmul.f32 %v7478, %v8158
      %v8201 = vmul.f32 %v7479, %v8158
      %v8202 = vmul.f32 %v7480, %v8158
      %v8203 = vmul.f32 %v7481, %v8158
      %v8204 = vmul.f32 %v7482, %v8158
      %v8205 = vmul.f32 %v7483, %v8158
      %v8206 = vmul.f32 %v7484, %v8158
      %v8207 = vmul.f32 %v7485, %v8158
      %v8208 = vmul.f32 %v7486, %v8158
      %v8209 = vmul.f32 %v7487, %v8158
      %v8210 = vmul.f32 %v7488, %v8158
      %v8211 = vmul.f32 %v7489, %v8158
      %v8212 = vmul.f32 %v7490, %v8158
      %v8213 = vmul.f32 %v7491, %v8158
      %v8214 = vmul.f32 %v7492, %v8158
      %v8215 = vmul.f32 %v7493, %v8158
      %v8216 = vmul.f32 %v7494, %v8158
      %v8217 = vmul.f32 %v7495, %v8158
      %v8218 = vmul.f32 %v7496, %v8158
      %v8219 = vmul.f32 %v7497, %v8158
      %v8220 = vmul.f32 %v7498, %v8158
      %v8221 = vmul.f32 %v7499, %v8158
      %v8222 = vmul.f32 %v7500, %v8158
      %v8223 = vmul.f32 %v7501, %v8158
      %v8224 = vmul.f32 %v7502, %v8158
      %v8225 = vmul.f32 %v7503, %v8158
      %v8226 = vmul.f32 %v7504, %v8158
      %v8227 = vmul.f32 %v7505, %v8158
      %v8228 = vmul.f32 %v7506, %v8158
      %v8229 = vmul.f32 %v7507, %v8158
      %v8230 = vmul.f32 %v7508, %v8158
      %v8231 = vmul.f32 %v7509, %v8158
      %v8232 = vmul.f32 %v7510, %v8158
      %v8233 = vmul.f32 %v7511, %v8158
      %v8234 = vmul.f32 %v7512, %v8158
      %v8235 = vmul.f32 %v7513, %v8158
      %v8236 = vmul.f32 %v7514, %v8158
      %v8237 = vmul.f32 %v7515, %v8158
      %v8238 = vmul.f32 %v7516, %v8158
      %v8239 = vmul.f32 %v7517, %v8158
      %v8240 = vmul.f32 %v7518, %v8158
      %v8241 = vmul.f32 %v7519, %v8158
      %v8242 = vmul.f32 %v7520, %v8158
      %v8243 = vmul.f32 %v7521, %v8158
      %v8244 = vmul.f32 %v7522, %v8158
      %v8245 = vmul.f32 %v7523, %v8158
      %v8246 = vmul.f32 %v7524, %v8158
      %v8247 = vmul.f32 %v7525, %v8158
      %v8248 = vmul.f32 %v7526, %v8158
      %v8249 = vmul.f32 %v7527, %v8158
      %v8250 = vmul.f32 %v7528, %v8158
      %v8251 = vmul.f32 %v7529, %v8158
      %v8252 = vmul.f32 %v7530, %v8158
      %v8253 = vmul.f32 %v7531, %v8158
      %v8254 = vmul.f32 %v7532, %v8158
      %v8351 = vrot.slane %v8159, 2
      %v8352 = vrot.slane %v8160, 2
      %v8353 = vsel %vm1342, %v8351, %v8352
      %v8354 = vrot.slane %v8161, 2
      %v8355 = vsel %vm1342, %v8352, %v8354
      %v8356 = vrot.slane %v8162, 2
      %v8357 = vrot.slane %v8163, 2
      %v8358 = vsel %vm1342, %v8356, %v8357
      %v8359 = vrot.slane %v8164, 2
      %v8360 = vsel %vm1342, %v8357, %v8359
      %v8361 = vrot.slane %v8165, 2
      %v8362 = vrot.slane %v8166, 2
      %v8363 = vsel %vm1342, %v8361, %v8362
      %v8364 = vrot.slane %v8167, 2
      %v8365 = vsel %vm1342, %v8362, %v8364
      %v8366 = vrot.slane %v8168, 2
      %v8367 = vrot.slane %v8169, 2
      %v8368 = vsel %vm1342, %v8366, %v8367
      %v8369 = vrot.slane %v8170, 2
      %v8370 = vsel %vm1342, %v8367, %v8369
      %v8371 = vrot.slane %v8171, 2
      %v8372 = vrot.slane %v8172, 2
      %v8373 = vsel %vm1342, %v8371, %v8372
      %v8374 = vrot.slane %v8173, 2
      %v8375 = vsel %vm1342, %v8372, %v8374
      %v8376 = vrot.slane %v8174, 2
      %v8377 = vrot.slane %v8175, 2
      %v8378 = vsel %vm1342, %v8376, %v8377
      %v8379 = vrot.slane %v8176, 2
      %v8380 = vsel %vm1342, %v8377, %v8379
      %v8381 = vrot.slane %v8177, 2
      %v8382 = vrot.slane %v8178, 2
      %v8383 = vsel %vm1342, %v8381, %v8382
      %v8384 = vrot.slane %v8179, 2
      %v8385 = vsel %vm1342, %v8382, %v8384
      %v8386 = vrot.slane %v8180, 2
      %v8387 = vrot.slane %v8181, 2
      %v8388 = vsel %vm1342, %v8386, %v8387
      %v8389 = vrot.slane %v8182, 2
      %v8390 = vsel %vm1342, %v8387, %v8389
      %v8391 = vrot.slane %v8183, 2
      %v8392 = vrot.slane %v8184, 2
      %v8393 = vsel %vm1342, %v8391, %v8392
      %v8394 = vrot.slane %v8185, 2
      %v8395 = vsel %vm1342, %v8392, %v8394
      %v8396 = vrot.slane %v8186, 2
      %v8397 = vrot.slane %v8187, 2
      %v8398 = vsel %vm1342, %v8396, %v8397
      %v8399 = vrot.slane %v8188, 2
      %v8400 = vsel %vm1342, %v8397, %v8399
      %v8401 = vrot.slane %v8189, 2
      %v8402 = vrot.slane %v8190, 2
      %v8403 = vsel %vm1342, %v8401, %v8402
      %v8404 = vrot.slane %v8191, 2
      %v8405 = vsel %vm1342, %v8402, %v8404
      %v8406 = vrot.slane %v8192, 2
      %v8407 = vrot.slane %v8193, 2
      %v8408 = vsel %vm1342, %v8406, %v8407
      %v8409 = vrot.slane %v8194, 2
      %v8410 = vsel %vm1342, %v8407, %v8409
      %v8411 = vrot.slane %v8195, 2
      %v8412 = vrot.slane %v8196, 2
      %v8413 = vsel %vm1342, %v8411, %v8412
      %v8414 = vrot.slane %v8197, 2
      %v8415 = vsel %vm1342, %v8412, %v8414
      %v8416 = vrot.slane %v8198, 2
      %v8417 = vrot.slane %v8199, 2
      %v8418 = vsel %vm1342, %v8416, %v8417
      %v8419 = vrot.slane %v8200, 2
      %v8420 = vsel %vm1342, %v8417, %v8419
      %v8421 = vrot.slane %v8201, 2
      %v8422 = vrot.slane %v8202, 2
      %v8423 = vsel %vm1342, %v8421, %v8422
      %v8424 = vrot.slane %v8203, 2
      %v8425 = vsel %vm1342, %v8422, %v8424
      %v8426 = vrot.slane %v8204, 2
      %v8427 = vrot.slane %v8205, 2
      %v8428 = vsel %vm1342, %v8426, %v8427
      %v8429 = vrot.slane %v8206, 2
      %v8430 = vsel %vm1342, %v8427, %v8429
      %v8431 = vrot.slane %v8207, 2
      %v8432 = vrot.slane %v8208, 2
      %v8433 = vsel %vm1342, %v8431, %v8432
      %v8434 = vrot.slane %v8209, 2
      %v8435 = vsel %vm1342, %v8432, %v8434
      %v8436 = vrot.slane %v8210, 2
      %v8437 = vrot.slane %v8211, 2
      %v8438 = vsel %vm1342, %v8436, %v8437
      %v8439 = vrot.slane %v8212, 2
      %v8440 = vsel %vm1342, %v8437, %v8439
      %v8441 = vrot.slane %v8213, 2
      %v8442 = vrot.slane %v8214, 2
      %v8443 = vsel %vm1342, %v8441, %v8442
      %v8444 = vrot.slane %v8215, 2
      %v8445 = vsel %vm1342, %v8442, %v8444
      %v8446 = vrot.slane %v8216, 2
      %v8447 = vrot.slane %v8217, 2
      %v8448 = vsel %vm1342, %v8446, %v8447
      %v8449 = vrot.slane %v8218, 2
      %v8450 = vsel %vm1342, %v8447, %v8449
      %v8451 = vrot.slane %v8219, 2
      %v8452 = vrot.slane %v8220, 2
      %v8453 = vsel %vm1342, %v8451, %v8452
      %v8454 = vrot.slane %v8221, 2
      %v8455 = vsel %vm1342, %v8452, %v8454
      %v8456 = vrot.slane %v8222, 2
      %v8457 = vrot.slane %v8223, 2
      %v8458 = vsel %vm1342, %v8456, %v8457
      %v8459 = vrot.slane %v8224, 2
      %v8460 = vsel %vm1342, %v8457, %v8459
      %v8461 = vrot.slane %v8225, 2
      %v8462 = vrot.slane %v8226, 2
      %v8463 = vsel %vm1342, %v8461, %v8462
      %v8464 = vrot.slane %v8227, 2
      %v8465 = vsel %vm1342, %v8462, %v8464
      %v8466 = vrot.slane %v8228, 2
      %v8467 = vrot.slane %v8229, 2
      %v8468 = vsel %vm1342, %v8466, %v8467
      %v8469 = vrot.slane %v8230, 2
      %v8470 = vsel %vm1342, %v8467, %v8469
      %v8471 = vrot.slane %v8231, 2
      %v8472 = vrot.slane %v8232, 2
      %v8473 = vsel %vm1342, %v8471, %v8472
      %v8474 = vrot.slane %v8233, 2
      %v8475 = vsel %vm1342, %v8472, %v8474
      %v8476 = vrot.slane %v8234, 2
      %v8477 = vrot.slane %v8235, 2
      %v8478 = vsel %vm1342, %v8476, %v8477
      %v8479 = vrot.slane %v8236, 2
      %v8480 = vsel %vm1342, %v8477, %v8479
      %v8481 = vrot.slane %v8237, 2
      %v8482 = vrot.slane %v8238, 2
      %v8483 = vsel %vm1342, %v8481, %v8482
      %v8484 = vrot.slane %v8239, 2
      %v8485 = vsel %vm1342, %v8482, %v8484
      %v8486 = vrot.slane %v8240, 2
      %v8487 = vrot.slane %v8241, 2
      %v8488 = vsel %vm1342, %v8486, %v8487
      %v8489 = vrot.slane %v8242, 2
      %v8490 = vsel %vm1342, %v8487, %v8489
      %v8491 = vrot.slane %v8243, 2
      %v8492 = vrot.slane %v8244, 2
      %v8493 = vsel %vm1342, %v8491, %v8492
      %v8494 = vrot.slane %v8245, 2
      %v8495 = vsel %vm1342, %v8492, %v8494
      %v8496 = vrot.slane %v8246, 2
      %v8497 = vrot.slane %v8247, 2
      %v8498 = vsel %vm1342, %v8496, %v8497
      %v8499 = vrot.slane %v8248, 2
      %v8500 = vsel %vm1342, %v8497, %v8499
      %v8501 = vrot.slane %v8249, 2
      %v8502 = vrot.slane %v8250, 2
      %v8503 = vsel %vm1342, %v8501, %v8502
      %v8504 = vrot.slane %v8251, 2
      %v8505 = vsel %vm1342, %v8502, %v8504
      %v8506 = vrot.slane %v8252, 2
      %v8507 = vrot.slane %v8253, 2
      %v8508 = vsel %vm1342, %v8506, %v8507
      %v8509 = vrot.slane %v8254, 2
      %v8510 = vsel %vm1342, %v8507, %v8509
      %v8575 = vadd.f32 %v8091, %v8353
      %v8576 = vadd.f32 %v8092, %v8355
      %v8577 = vadd.f32 %v8093, %v8358
      %v8578 = vadd.f32 %v8094, %v8360
      %v8579 = vadd.f32 %v8095, %v8363
      %v8580 = vadd.f32 %v8096, %v8365
      %v8581 = vadd.f32 %v8097, %v8368
      %v8582 = vadd.f32 %v8098, %v8370
      %v8583 = vadd.f32 %v8099, %v8373
      %v8584 = vadd.f32 %v8100, %v8375
      %v8585 = vadd.f32 %v8101, %v8378
      %v8586 = vadd.f32 %v8102, %v8380
      %v8587 = vadd.f32 %v8103, %v8383
      %v8588 = vadd.f32 %v8104, %v8385
      %v8589 = vadd.f32 %v8105, %v8388
      %v8590 = vadd.f32 %v8106, %v8390
      %v8591 = vadd.f32 %v8107, %v8393
      %v8592 = vadd.f32 %v8108, %v8395
      %v8593 = vadd.f32 %v8109, %v8398
      %v8594 = vadd.f32 %v8110, %v8400
      %v8595 = vadd.f32 %v8111, %v8403
      %v8596 = vadd.f32 %v8112, %v8405
      %v8597 = vadd.f32 %v8113, %v8408
      %v8598 = vadd.f32 %v8114, %v8410
      %v8599 = vadd.f32 %v8115, %v8413
      %v8600 = vadd.f32 %v8116, %v8415
      %v8601 = vadd.f32 %v8117, %v8418
      %v8602 = vadd.f32 %v8118, %v8420
      %v8603 = vadd.f32 %v8119, %v8423
      %v8604 = vadd.f32 %v8120, %v8425
      %v8605 = vadd.f32 %v8121, %v8428
      %v8606 = vadd.f32 %v8122, %v8430
      %v8607 = vadd.f32 %v8123, %v8433
      %v8608 = vadd.f32 %v8124, %v8435
      %v8609 = vadd.f32 %v8125, %v8438
      %v8610 = vadd.f32 %v8126, %v8440
      %v8611 = vadd.f32 %v8127, %v8443
      %v8612 = vadd.f32 %v8128, %v8445
      %v8613 = vadd.f32 %v8129, %v8448
      %v8614 = vadd.f32 %v8130, %v8450
      %v8615 = vadd.f32 %v8131, %v8453
      %v8616 = vadd.f32 %v8132, %v8455
      %v8617 = vadd.f32 %v8133, %v8458
      %v8618 = vadd.f32 %v8134, %v8460
      %v8619 = vadd.f32 %v8135, %v8463
      %v8620 = vadd.f32 %v8136, %v8465
      %v8621 = vadd.f32 %v8137, %v8468
      %v8622 = vadd.f32 %v8138, %v8470
      %v8623 = vadd.f32 %v8139, %v8473
      %v8624 = vadd.f32 %v8140, %v8475
      %v8625 = vadd.f32 %v8141, %v8478
      %v8626 = vadd.f32 %v8142, %v8480
      %v8627 = vadd.f32 %v8143, %v8483
      %v8628 = vadd.f32 %v8144, %v8485
      %v8629 = vadd.f32 %v8145, %v8488
      %v8630 = vadd.f32 %v8146, %v8490
      %v8631 = vadd.f32 %v8147, %v8493
      %v8632 = vadd.f32 %v8148, %v8495
      %v8633 = vadd.f32 %v8149, %v8498
      %v8634 = vadd.f32 %v8150, %v8500
      %v8635 = vadd.f32 %v8151, %v8503
      %v8636 = vadd.f32 %v8152, %v8505
      %v8637 = vadd.f32 %v8153, %v8508
      %v8638 = vadd.f32 %v8154, %v8510
      %v8639 = vlaneseq
      %v8640 = vshrl.u32 %v8639, 7
      %v8641 = vsub.s32 0, %v8640
      %v8642 = vrot.slane %v323, %v8641
      %v8643 = vmul.f32 %v7440, %v8642
      %v8644 = vmul.f32 %v7441, %v8642
      %v8645 = vmul.f32 %v7443, %v8642
      %v8646 = vmul.f32 %v7444, %v8642
      %v8647 = vmul.f32 %v7446, %v8642
      %v8648 = vmul.f32 %v7447, %v8642
      %v8649 = vmul.f32 %v7449, %v8642
      %v8650 = vmul.f32 %v7450, %v8642
      %v8651 = vmul.f32 %v7452, %v8642
      %v8652 = vmul.f32 %v7453, %v8642
      %v8653 = vmul.f32 %v7455, %v8642
      %v8654 = vmul.f32 %v7456, %v8642
      %v8655 = vmul.f32 %v7458, %v8642
      %v8656 = vmul.f32 %v7459, %v8642
      %v8657 = vmul.f32 %v7461, %v8642
      %v8658 = vmul.f32 %v7462, %v8642
      %v8659 = vmul.f32 %v7464, %v8642
      %v8660 = vmul.f32 %v7465, %v8642
      %v8661 = vmul.f32 %v7467, %v8642
      %v8662 = vmul.f32 %v7468, %v8642
      %v8663 = vmul.f32 %v7470, %v8642
      %v8664 = vmul.f32 %v7471, %v8642
      %v8665 = vmul.f32 %v7473, %v8642
      %v8666 = vmul.f32 %v7474, %v8642
      %v8667 = vmul.f32 %v7476, %v8642
      %v8668 = vmul.f32 %v7477, %v8642
      %v8669 = vmul.f32 %v7479, %v8642
      %v8670 = vmul.f32 %v7480, %v8642
      %v8671 = vmul.f32 %v7482, %v8642
      %v8672 = vmul.f32 %v7483, %v8642
      %v8673 = vmul.f32 %v7485, %v8642
      %v8674 = vmul.f32 %v7486, %v8642
      %v8675 = vmul.f32 %v7488, %v8642
      %v8676 = vmul.f32 %v7489, %v8642
      %v8677 = vmul.f32 %v7491, %v8642
      %v8678 = vmul.f32 %v7492, %v8642
      %v8679 = vmul.f32 %v7494, %v8642
      %v8680 = vmul.f32 %v7495, %v8642
      %v8681 = vmul.f32 %v7497, %v8642
      %v8682 = vmul.f32 %v7498, %v8642
      %v8683 = vmul.f32 %v7500, %v8642
      %v8684 = vmul.f32 %v7501, %v8642
      %v8685 = vmul.f32 %v7503, %v8642
      %v8686 = vmul.f32 %v7504, %v8642
      %v8687 = vmul.f32 %v7506, %v8642
      %v8688 = vmul.f32 %v7507, %v8642
      %v8689 = vmul.f32 %v7509, %v8642
      %v8690 = vmul.f32 %v7510, %v8642
      %v8691 = vmul.f32 %v7512, %v8642
      %v8692 = vmul.f32 %v7513, %v8642
      %v8693 = vmul.f32 %v7515, %v8642
      %v8694 = vmul.f32 %v7516, %v8642
      %v8695 = vmul.f32 %v7518, %v8642
      %v8696 = vmul.f32 %v7519, %v8642
      %v8697 = vmul.f32 %v7521, %v8642
      %v8698 = vmul.f32 %v7522, %v8642
      %v8699 = vmul.f32 %v7524, %v8642
      %v8700 = vmul.f32 %v7525, %v8642
      %v8701 = vmul.f32 %v7527, %v8642
      %v8702 = vmul.f32 %v7528, %v8642
      %v8703 = vmul.f32 %v7530, %v8642
      %v8704 = vmul.f32 %v7531, %v8642
      %v8705 = vmul.f32 %v7533, %v8642
      %v8706 = vmul.f32 %v7534, %v8642
      %v8707 = vadd.f32 %v8575, %v8643
      %v8708 = vadd.f32 %v8576, %v8644
      %v8709 = vadd.f32 %v8577, %v8645
      %v8710 = vadd.f32 %v8578, %v8646
      %v8711 = vadd.f32 %v8579, %v8647
      %v8712 = vadd.f32 %v8580, %v8648
      %v8713 = vadd.f32 %v8581, %v8649
      %v8714 = vadd.f32 %v8582, %v8650
      %v8715 = vadd.f32 %v8583, %v8651
      %v8716 = vadd.f32 %v8584, %v8652
      %v8717 = vadd.f32 %v8585, %v8653
      %v8718 = vadd.f32 %v8586, %v8654
      %v8719 = vadd.f32 %v8587, %v8655
      %v8720 = vadd.f32 %v8588, %v8656
      %v8721 = vadd.f32 %v8589, %v8657
      %v8722 = vadd.f32 %v8590, %v8658
      %v8723 = vadd.f32 %v8591, %v8659
      %v8724 = vadd.f32 %v8592, %v8660
      %v8725 = vadd.f32 %v8593, %v8661
      %v8726 = vadd.f32 %v8594, %v8662
      %v8727 = vadd.f32 %v8595, %v8663
      %v8728 = vadd.f32 %v8596, %v8664
      %v8729 = vadd.f32 %v8597, %v8665
      %v8730 = vadd.f32 %v8598, %v8666
      %v8731 = vadd.f32 %v8599, %v8667
      %v8732 = vadd.f32 %v8600, %v8668
      %v8733 = vadd.f32 %v8601, %v8669
      %v8734 = vadd.f32 %v8602, %v8670
      %v8735 = vadd.f32 %v8603, %v8671
      %v8736 = vadd.f32 %v8604, %v8672
      %v8737 = vadd.f32 %v8605, %v8673
      %v8738 = vadd.f32 %v8606, %v8674
      %v8739 = vadd.f32 %v8607, %v8675
      %v8740 = vadd.f32 %v8608, %v8676
      %v8741 = vadd.f32 %v8609, %v8677
      %v8742 = vadd.f32 %v8610, %v8678
      %v8743 = vadd.f32 %v8611, %v8679
      %v8744 = vadd.f32 %v8612, %v8680
      %v8745 = vadd.f32 %v8613, %v8681
      %v8746 = vadd.f32 %v8614, %v8682
      %v8747 = vadd.f32 %v8615, %v8683
      %v8748 = vadd.f32 %v8616, %v8684
      %v8749 = vadd.f32 %v8617, %v8685
      %v8750 = vadd.f32 %v8618, %v8686
      %v8751 = vadd.f32 %v8619, %v8687
      %v8752 = vadd.f32 %v8620, %v8688
      %v8753 = vadd.f32 %v8621, %v8689
      %v8754 = vadd.f32 %v8622, %v8690
      %v8755 = vadd.f32 %v8623, %v8691
      %v8756 = vadd.f32 %v8624, %v8692
      %v8757 = vadd.f32 %v8625, %v8693
      %v8758 = vadd.f32 %v8626, %v8694
      %v8759 = vadd.f32 %v8627, %v8695
      %v8760 = vadd.f32 %v8628, %v8696
      %v8761 = vadd.f32 %v8629, %v8697
      %v8762 = vadd.f32 %v8630, %v8698
      %v8763 = vadd.f32 %v8631, %v8699
      %v8764 = vadd.f32 %v8632, %v8700
      %v8765 = vadd.f32 %v8633, %v8701
      %v8766 = vadd.f32 %v8634, %v8702
      %v8767 = vadd.f32 %v8635, %v8703
      %v8768 = vadd.f32 %v8636, %v8704
      %v8769 = vadd.f32 %v8637, %v8705
      %v8770 = vadd.f32 %v8638, %v8706
      %v8771 = vlaneseq
      %v8772 = vshrl.u32 %v8771, 7
      %v8773 = vsub.s32 1, %v8772
      %v8774 = vrot.slane %v323, %v8773
      %v8775 = vmul.f32 %v7440, %v8774
      %v8776 = vmul.f32 %v7441, %v8774
      %v8777 = vmul.f32 %v7442, %v8774
      %v8778 = vmul.f32 %v7443, %v8774
      %v8779 = vmul.f32 %v7444, %v8774
      %v8780 = vmul.f32 %v7445, %v8774
      %v8781 = vmul.f32 %v7446, %v8774
      %v8782 = vmul.f32 %v7447, %v8774
      %v8783 = vmul.f32 %v7448, %v8774
      %v8784 = vmul.f32 %v7449, %v8774
      %v8785 = vmul.f32 %v7450, %v8774
      %v8786 = vmul.f32 %v7451, %v8774
      %v8787 = vmul.f32 %v7452, %v8774
      %v8788 = vmul.f32 %v7453, %v8774
      %v8789 = vmul.f32 %v7454, %v8774
      %v8790 = vmul.f32 %v7455, %v8774
      %v8791 = vmul.f32 %v7456, %v8774
      %v8792 = vmul.f32 %v7457, %v8774
      %v8793 = vmul.f32 %v7458, %v8774
      %v8794 = vmul.f32 %v7459, %v8774
      %v8795 = vmul.f32 %v7460, %v8774
      %v8796 = vmul.f32 %v7461, %v8774
      %v8797 = vmul.f32 %v7462, %v8774
      %v8798 = vmul.f32 %v7463, %v8774
      %v8799 = vmul.f32 %v7464, %v8774
      %v8800 = vmul.f32 %v7465, %v8774
      %v8801 = vmul.f32 %v7466, %v8774
      %v8802 = vmul.f32 %v7467, %v8774
      %v8803 = vmul.f32 %v7468, %v8774
      %v8804 = vmul.f32 %v7469, %v8774
      %v8805 = vmul.f32 %v7470, %v8774
      %v8806 = vmul.f32 %v7471, %v8774
      %v8807 = vmul.f32 %v7472, %v8774
      %v8808 = vmul.f32 %v7473, %v8774
      %v8809 = vmul.f32 %v7474, %v8774
      %v8810 = vmul.f32 %v7475, %v8774
      %v8811 = vmul.f32 %v7476, %v8774
      %v8812 = vmul.f32 %v7477, %v8774
      %v8813 = vmul.f32 %v7478, %v8774
      %v8814 = vmul.f32 %v7479, %v8774
      %v8815 = vmul.f32 %v7480, %v8774
      %v8816 = vmul.f32 %v7481, %v8774
      %v8817 = vmul.f32 %v7482, %v8774
      %v8818 = vmul.f32 %v7483, %v8774
      %v8819 = vmul.f32 %v7484, %v8774
      %v8820 = vmul.f32 %v7485, %v8774
      %v8821 = vmul.f32 %v7486, %v8774
      %v8822 = vmul.f32 %v7487, %v8774
      %v8823 = vmul.f32 %v7488, %v8774
      %v8824 = vmul.f32 %v7489, %v8774
      %v8825 = vmul.f32 %v7490, %v8774
      %v8826 = vmul.f32 %v7491, %v8774
      %v8827 = vmul.f32 %v7492, %v8774
      %v8828 = vmul.f32 %v7493, %v8774
      %v8829 = vmul.f32 %v7494, %v8774
      %v8830 = vmul.f32 %v7495, %v8774
      %v8831 = vmul.f32 %v7496, %v8774
      %v8832 = vmul.f32 %v7497, %v8774
      %v8833 = vmul.f32 %v7498, %v8774
      %v8834 = vmul.f32 %v7499, %v8774
      %v8835 = vmul.f32 %v7500, %v8774
      %v8836 = vmul.f32 %v7501, %v8774
      %v8837 = vmul.f32 %v7502, %v8774
      %v8838 = vmul.f32 %v7503, %v8774
      %v8839 = vmul.f32 %v7504, %v8774
      %v8840 = vmul.f32 %v7505, %v8774
      %v8841 = vmul.f32 %v7506, %v8774
      %v8842 = vmul.f32 %v7507, %v8774
      %v8843 = vmul.f32 %v7508, %v8774
      %v8844 = vmul.f32 %v7509, %v8774
      %v8845 = vmul.f32 %v7510, %v8774
      %v8846 = vmul.f32 %v7511, %v8774
      %v8847 = vmul.f32 %v7512, %v8774
      %v8848 = vmul.f32 %v7513, %v8774
      %v8849 = vmul.f32 %v7514, %v8774
      %v8850 = vmul.f32 %v7515, %v8774
      %v8851 = vmul.f32 %v7516, %v8774
      %v8852 = vmul.f32 %v7517, %v8774
      %v8853 = vmul.f32 %v7518, %v8774
      %v8854 = vmul.f32 %v7519, %v8774
      %v8855 = vmul.f32 %v7520, %v8774
      %v8856 = vmul.f32 %v7521, %v8774
      %v8857 = vmul.f32 %v7522, %v8774
      %v8858 = vmul.f32 %v7523, %v8774
      %v8859 = vmul.f32 %v7524, %v8774
      %v8860 = vmul.f32 %v7525, %v8774
      %v8861 = vmul.f32 %v7526, %v8774
      %v8862 = vmul.f32 %v7527, %v8774
      %v8863 = vmul.f32 %v7528, %v8774
      %v8864 = vmul.f32 %v7529, %v8774
      %v8865 = vmul.f32 %v7530, %v8774
      %v8866 = vmul.f32 %v7531, %v8774
      %v8867 = vmul.f32 %v7532, %v8774
      %v8868 = vmul.f32 %v7533, %v8774
      %v8869 = vmul.f32 %v7534, %v8774
      %v8870 = vmul.f32 %v7535, %v8774
      %v8967 = vrot.slane %v8775, 1
      %v8968 = vrot.slane %v8776, 1
      %v8969 = vsel %vm857, %v8967, %v8968
      %v8970 = vrot.slane %v8777, 1
      %v8971 = vsel %vm857, %v8968, %v8970
      %v8972 = vrot.slane %v8778, 1
      %v8973 = vrot.slane %v8779, 1
      %v8974 = vsel %vm857, %v8972, %v8973
      %v8975 = vrot.slane %v8780, 1
      %v8976 = vsel %vm857, %v8973, %v8975
      %v8977 = vrot.slane %v8781, 1
      %v8978 = vrot.slane %v8782, 1
      %v8979 = vsel %vm857, %v8977, %v8978
      %v8980 = vrot.slane %v8783, 1
      %v8981 = vsel %vm857, %v8978, %v8980
      %v8982 = vrot.slane %v8784, 1
      %v8983 = vrot.slane %v8785, 1
      %v8984 = vsel %vm857, %v8982, %v8983
      %v8985 = vrot.slane %v8786, 1
      %v8986 = vsel %vm857, %v8983, %v8985
      %v8987 = vrot.slane %v8787, 1
      %v8988 = vrot.slane %v8788, 1
      %v8989 = vsel %vm857, %v8987, %v8988
      %v8990 = vrot.slane %v8789, 1
      %v8991 = vsel %vm857, %v8988, %v8990
      %v8992 = vrot.slane %v8790, 1
      %v8993 = vrot.slane %v8791, 1
      %v8994 = vsel %vm857, %v8992, %v8993
      %v8995 = vrot.slane %v8792, 1
      %v8996 = vsel %vm857, %v8993, %v8995
      %v8997 = vrot.slane %v8793, 1
      %v8998 = vrot.slane %v8794, 1
      %v8999 = vsel %vm857, %v8997, %v8998
      %v9000 = vrot.slane %v8795, 1
      %v9001 = vsel %vm857, %v8998, %v9000
      %v9002 = vrot.slane %v8796, 1
      %v9003 = vrot.slane %v8797, 1
      %v9004 = vsel %vm857, %v9002, %v9003
      %v9005 = vrot.slane %v8798, 1
      %v9006 = vsel %vm857, %v9003, %v9005
      %v9007 = vrot.slane %v8799, 1
      %v9008 = vrot.slane %v8800, 1
      %v9009 = vsel %vm857, %v9007, %v9008
      %v9010 = vrot.slane %v8801, 1
      %v9011 = vsel %vm857, %v9008, %v9010
      %v9012 = vrot.slane %v8802, 1
      %v9013 = vrot.slane %v8803, 1
      %v9014 = vsel %vm857, %v9012, %v9013
      %v9015 = vrot.slane %v8804, 1
      %v9016 = vsel %vm857, %v9013, %v9015
      %v9017 = vrot.slane %v8805, 1
      %v9018 = vrot.slane %v8806, 1
      %v9019 = vsel %vm857, %v9017, %v9018
      %v9020 = vrot.slane %v8807, 1
      %v9021 = vsel %vm857, %v9018, %v9020
      %v9022 = vrot.slane %v8808, 1
      %v9023 = vrot.slane %v8809, 1
      %v9024 = vsel %vm857, %v9022, %v9023
      %v9025 = vrot.slane %v8810, 1
      %v9026 = vsel %vm857, %v9023, %v9025
      %v9027 = vrot.slane %v8811, 1
      %v9028 = vrot.slane %v8812, 1
      %v9029 = vsel %vm857, %v9027, %v9028
      %v9030 = vrot.slane %v8813, 1
      %v9031 = vsel %vm857, %v9028, %v9030
      %v9032 = vrot.slane %v8814, 1
      %v9033 = vrot.slane %v8815, 1
      %v9034 = vsel %vm857, %v9032, %v9033
      %v9035 = vrot.slane %v8816, 1
      %v9036 = vsel %vm857, %v9033, %v9035
      %v9037 = vrot.slane %v8817, 1
      %v9038 = vrot.slane %v8818, 1
      %v9039 = vsel %vm857, %v9037, %v9038
      %v9040 = vrot.slane %v8819, 1
      %v9041 = vsel %vm857, %v9038, %v9040
      %v9042 = vrot.slane %v8820, 1
      %v9043 = vrot.slane %v8821, 1
      %v9044 = vsel %vm857, %v9042, %v9043
      %v9045 = vrot.slane %v8822, 1
      %v9046 = vsel %vm857, %v9043, %v9045
      %v9047 = vrot.slane %v8823, 1
      %v9048 = vrot.slane %v8824, 1
      %v9049 = vsel %vm857, %v9047, %v9048
      %v9050 = vrot.slane %v8825, 1
      %v9051 = vsel %vm857, %v9048, %v9050
      %v9052 = vrot.slane %v8826, 1
      %v9053 = vrot.slane %v8827, 1
      %v9054 = vsel %vm857, %v9052, %v9053
      %v9055 = vrot.slane %v8828, 1
      %v9056 = vsel %vm857, %v9053, %v9055
      %v9057 = vrot.slane %v8829, 1
      %v9058 = vrot.slane %v8830, 1
      %v9059 = vsel %vm857, %v9057, %v9058
      %v9060 = vrot.slane %v8831, 1
      %v9061 = vsel %vm857, %v9058, %v9060
      %v9062 = vrot.slane %v8832, 1
      %v9063 = vrot.slane %v8833, 1
      %v9064 = vsel %vm857, %v9062, %v9063
      %v9065 = vrot.slane %v8834, 1
      %v9066 = vsel %vm857, %v9063, %v9065
      %v9067 = vrot.slane %v8835, 1
      %v9068 = vrot.slane %v8836, 1
      %v9069 = vsel %vm857, %v9067, %v9068
      %v9070 = vrot.slane %v8837, 1
      %v9071 = vsel %vm857, %v9068, %v9070
      %v9072 = vrot.slane %v8838, 1
      %v9073 = vrot.slane %v8839, 1
      %v9074 = vsel %vm857, %v9072, %v9073
      %v9075 = vrot.slane %v8840, 1
      %v9076 = vsel %vm857, %v9073, %v9075
      %v9077 = vrot.slane %v8841, 1
      %v9078 = vrot.slane %v8842, 1
      %v9079 = vsel %vm857, %v9077, %v9078
      %v9080 = vrot.slane %v8843, 1
      %v9081 = vsel %vm857, %v9078, %v9080
      %v9082 = vrot.slane %v8844, 1
      %v9083 = vrot.slane %v8845, 1
      %v9084 = vsel %vm857, %v9082, %v9083
      %v9085 = vrot.slane %v8846, 1
      %v9086 = vsel %vm857, %v9083, %v9085
      %v9087 = vrot.slane %v8847, 1
      %v9088 = vrot.slane %v8848, 1
      %v9089 = vsel %vm857, %v9087, %v9088
      %v9090 = vrot.slane %v8849, 1
      %v9091 = vsel %vm857, %v9088, %v9090
      %v9092 = vrot.slane %v8850, 1
      %v9093 = vrot.slane %v8851, 1
      %v9094 = vsel %vm857, %v9092, %v9093
      %v9095 = vrot.slane %v8852, 1
      %v9096 = vsel %vm857, %v9093, %v9095
      %v9097 = vrot.slane %v8853, 1
      %v9098 = vrot.slane %v8854, 1
      %v9099 = vsel %vm857, %v9097, %v9098
      %v9100 = vrot.slane %v8855, 1
      %v9101 = vsel %vm857, %v9098, %v9100
      %v9102 = vrot.slane %v8856, 1
      %v9103 = vrot.slane %v8857, 1
      %v9104 = vsel %vm857, %v9102, %v9103
      %v9105 = vrot.slane %v8858, 1
      %v9106 = vsel %vm857, %v9103, %v9105
      %v9107 = vrot.slane %v8859, 1
      %v9108 = vrot.slane %v8860, 1
      %v9109 = vsel %vm857, %v9107, %v9108
      %v9110 = vrot.slane %v8861, 1
      %v9111 = vsel %vm857, %v9108, %v9110
      %v9112 = vrot.slane %v8862, 1
      %v9113 = vrot.slane %v8863, 1
      %v9114 = vsel %vm857, %v9112, %v9113
      %v9115 = vrot.slane %v8864, 1
      %v9116 = vsel %vm857, %v9113, %v9115
      %v9117 = vrot.slane %v8865, 1
      %v9118 = vrot.slane %v8866, 1
      %v9119 = vsel %vm857, %v9117, %v9118
      %v9120 = vrot.slane %v8867, 1
      %v9121 = vsel %vm857, %v9118, %v9120
      %v9122 = vrot.slane %v8868, 1
      %v9123 = vrot.slane %v8869, 1
      %v9124 = vsel %vm857, %v9122, %v9123
      %v9125 = vrot.slane %v8870, 1
      %v9126 = vsel %vm857, %v9123, %v9125
      %v9191 = vadd.f32 %v8707, %v8969
      %v9192 = vadd.f32 %v8708, %v8971
      %v9193 = vadd.f32 %v8709, %v8974
      %v9194 = vadd.f32 %v8710, %v8976
      %v9195 = vadd.f32 %v8711, %v8979
      %v9196 = vadd.f32 %v8712, %v8981
      %v9197 = vadd.f32 %v8713, %v8984
      %v9198 = vadd.f32 %v8714, %v8986
      %v9199 = vadd.f32 %v8715, %v8989
      %v9200 = vadd.f32 %v8716, %v8991
      %v9201 = vadd.f32 %v8717, %v8994
      %v9202 = vadd.f32 %v8718, %v8996
      %v9203 = vadd.f32 %v8719, %v8999
      %v9204 = vadd.f32 %v8720, %v9001
      %v9205 = vadd.f32 %v8721, %v9004
      %v9206 = vadd.f32 %v8722, %v9006
      %v9207 = vadd.f32 %v8723, %v9009
      %v9208 = vadd.f32 %v8724, %v9011
      %v9209 = vadd.f32 %v8725, %v9014
      %v9210 = vadd.f32 %v8726, %v9016
      %v9211 = vadd.f32 %v8727, %v9019
      %v9212 = vadd.f32 %v8728, %v9021
      %v9213 = vadd.f32 %v8729, %v9024
      %v9214 = vadd.f32 %v8730, %v9026
      %v9215 = vadd.f32 %v8731, %v9029
      %v9216 = vadd.f32 %v8732, %v9031
      %v9217 = vadd.f32 %v8733, %v9034
      %v9218 = vadd.f32 %v8734, %v9036
      %v9219 = vadd.f32 %v8735, %v9039
      %v9220 = vadd.f32 %v8736, %v9041
      %v9221 = vadd.f32 %v8737, %v9044
      %v9222 = vadd.f32 %v8738, %v9046
      %v9223 = vadd.f32 %v8739, %v9049
      %v9224 = vadd.f32 %v8740, %v9051
      %v9225 = vadd.f32 %v8741, %v9054
      %v9226 = vadd.f32 %v8742, %v9056
      %v9227 = vadd.f32 %v8743, %v9059
      %v9228 = vadd.f32 %v8744, %v9061
      %v9229 = vadd.f32 %v8745, %v9064
      %v9230 = vadd.f32 %v8746, %v9066
      %v9231 = vadd.f32 %v8747, %v9069
      %v9232 = vadd.f32 %v8748, %v9071
      %v9233 = vadd.f32 %v8749, %v9074
      %v9234 = vadd.f32 %v8750, %v9076
      %v9235 = vadd.f32 %v8751, %v9079
      %v9236 = vadd.f32 %v8752, %v9081
      %v9237 = vadd.f32 %v8753, %v9084
      %v9238 = vadd.f32 %v8754, %v9086
      %v9239 = vadd.f32 %v8755, %v9089
      %v9240 = vadd.f32 %v8756, %v9091
      %v9241 = vadd.f32 %v8757, %v9094
      %v9242 = vadd.f32 %v8758, %v9096
      %v9243 = vadd.f32 %v8759, %v9099
      %v9244 = vadd.f32 %v8760, %v9101
      %v9245 = vadd.f32 %v8761, %v9104
      %v9246 = vadd.f32 %v8762, %v9106
      %v9247 = vadd.f32 %v8763, %v9109
      %v9248 = vadd.f32 %v8764, %v9111
      %v9249 = vadd.f32 %v8765, %v9114
      %v9250 = vadd.f32 %v8766, %v9116
      %v9251 = vadd.f32 %v8767, %v9119
      %v9252 = vadd.f32 %v8768, %v9121
      %v9253 = vadd.f32 %v8769, %v9124
      %v9254 = vadd.f32 %v8770, %v9126
      %v9255 = vlaneseq
      %v9256 = vshrl.u32 %v9255, 7
      %v9257 = vsub.s32 2, %v9256
      %v9258 = vrot.slane %v323, %v9257
      %v9259 = vmul.f32 %v7440, %v9258
      %v9260 = vmul.f32 %v7441, %v9258
      %v9261 = vmul.f32 %v7442, %v9258
      %v9262 = vmul.f32 %v7443, %v9258
      %v9263 = vmul.f32 %v7444, %v9258
      %v9264 = vmul.f32 %v7445, %v9258
      %v9265 = vmul.f32 %v7446, %v9258
      %v9266 = vmul.f32 %v7447, %v9258
      %v9267 = vmul.f32 %v7448, %v9258
      %v9268 = vmul.f32 %v7449, %v9258
      %v9269 = vmul.f32 %v7450, %v9258
      %v9270 = vmul.f32 %v7451, %v9258
      %v9271 = vmul.f32 %v7452, %v9258
      %v9272 = vmul.f32 %v7453, %v9258
      %v9273 = vmul.f32 %v7454, %v9258
      %v9274 = vmul.f32 %v7455, %v9258
      %v9275 = vmul.f32 %v7456, %v9258
      %v9276 = vmul.f32 %v7457, %v9258
      %v9277 = vmul.f32 %v7458, %v9258
      %v9278 = vmul.f32 %v7459, %v9258
      %v9279 = vmul.f32 %v7460, %v9258
      %v9280 = vmul.f32 %v7461, %v9258
      %v9281 = vmul.f32 %v7462, %v9258
      %v9282 = vmul.f32 %v7463, %v9258
      %v9283 = vmul.f32 %v7464, %v9258
      %v9284 = vmul.f32 %v7465, %v9258
      %v9285 = vmul.f32 %v7466, %v9258
      %v9286 = vmul.f32 %v7467, %v9258
      %v9287 = vmul.f32 %v7468, %v9258
      %v9288 = vmul.f32 %v7469, %v9258
      %v9289 = vmul.f32 %v7470, %v9258
      %v9290 = vmul.f32 %v7471, %v9258
      %v9291 = vmul.f32 %v7472, %v9258
      %v9292 = vmul.f32 %v7473, %v9258
      %v9293 = vmul.f32 %v7474, %v9258
      %v9294 = vmul.f32 %v7475, %v9258
      %v9295 = vmul.f32 %v7476, %v9258
      %v9296 = vmul.f32 %v7477, %v9258
      %v9297 = vmul.f32 %v7478, %v9258
      %v9298 = vmul.f32 %v7479, %v9258
      %v9299 = vmul.f32 %v7480, %v9258
      %v9300 = vmul.f32 %v7481, %v9258
      %v9301 = vmul.f32 %v7482, %v9258
      %v9302 = vmul.f32 %v7483, %v9258
      %v9303 = vmul.f32 %v7484, %v9258
      %v9304 = vmul.f32 %v7485, %v9258
      %v9305 = vmul.f32 %v7486, %v9258
      %v9306 = vmul.f32 %v7487, %v9258
      %v9307 = vmul.f32 %v7488, %v9258
      %v9308 = vmul.f32 %v7489, %v9258
      %v9309 = vmul.f32 %v7490, %v9258
      %v9310 = vmul.f32 %v7491, %v9258
      %v9311 = vmul.f32 %v7492, %v9258
      %v9312 = vmul.f32 %v7493, %v9258
      %v9313 = vmul.f32 %v7494, %v9258
      %v9314 = vmul.f32 %v7495, %v9258
      %v9315 = vmul.f32 %v7496, %v9258
      %v9316 = vmul.f32 %v7497, %v9258
      %v9317 = vmul.f32 %v7498, %v9258
      %v9318 = vmul.f32 %v7499, %v9258
      %v9319 = vmul.f32 %v7500, %v9258
      %v9320 = vmul.f32 %v7501, %v9258
      %v9321 = vmul.f32 %v7502, %v9258
      %v9322 = vmul.f32 %v7503, %v9258
      %v9323 = vmul.f32 %v7504, %v9258
      %v9324 = vmul.f32 %v7505, %v9258
      %v9325 = vmul.f32 %v7506, %v9258
      %v9326 = vmul.f32 %v7507, %v9258
      %v9327 = vmul.f32 %v7508, %v9258
      %v9328 = vmul.f32 %v7509, %v9258
      %v9329 = vmul.f32 %v7510, %v9258
      %v9330 = vmul.f32 %v7511, %v9258
      %v9331 = vmul.f32 %v7512, %v9258
      %v9332 = vmul.f32 %v7513, %v9258
      %v9333 = vmul.f32 %v7514, %v9258
      %v9334 = vmul.f32 %v7515, %v9258
      %v9335 = vmul.f32 %v7516, %v9258
      %v9336 = vmul.f32 %v7517, %v9258
      %v9337 = vmul.f32 %v7518, %v9258
      %v9338 = vmul.f32 %v7519, %v9258
      %v9339 = vmul.f32 %v7520, %v9258
      %v9340 = vmul.f32 %v7521, %v9258
      %v9341 = vmul.f32 %v7522, %v9258
      %v9342 = vmul.f32 %v7523, %v9258
      %v9343 = vmul.f32 %v7524, %v9258
      %v9344 = vmul.f32 %v7525, %v9258
      %v9345 = vmul.f32 %v7526, %v9258
      %v9346 = vmul.f32 %v7527, %v9258
      %v9347 = vmul.f32 %v7528, %v9258
      %v9348 = vmul.f32 %v7529, %v9258
      %v9349 = vmul.f32 %v7530, %v9258
      %v9350 = vmul.f32 %v7531, %v9258
      %v9351 = vmul.f32 %v7532, %v9258
      %v9352 = vmul.f32 %v7533, %v9258
      %v9353 = vmul.f32 %v7534, %v9258
      %v9354 = vmul.f32 %v7535, %v9258
      %v9451 = vrot.slane %v9259, 2
      %v9452 = vrot.slane %v9260, 2
      %v9453 = vsel %vm1342, %v9451, %v9452
      %v9454 = vrot.slane %v9261, 2
      %v9455 = vsel %vm1342, %v9452, %v9454
      %v9456 = vrot.slane %v9262, 2
      %v9457 = vrot.slane %v9263, 2
      %v9458 = vsel %vm1342, %v9456, %v9457
      %v9459 = vrot.slane %v9264, 2
      %v9460 = vsel %vm1342, %v9457, %v9459
      %v9461 = vrot.slane %v9265, 2
      %v9462 = vrot.slane %v9266, 2
      %v9463 = vsel %vm1342, %v9461, %v9462
      %v9464 = vrot.slane %v9267, 2
      %v9465 = vsel %vm1342, %v9462, %v9464
      %v9466 = vrot.slane %v9268, 2
      %v9467 = vrot.slane %v9269, 2
      %v9468 = vsel %vm1342, %v9466, %v9467
      %v9469 = vrot.slane %v9270, 2
      %v9470 = vsel %vm1342, %v9467, %v9469
      %v9471 = vrot.slane %v9271, 2
      %v9472 = vrot.slane %v9272, 2
      %v9473 = vsel %vm1342, %v9471, %v9472
      %v9474 = vrot.slane %v9273, 2
      %v9475 = vsel %vm1342, %v9472, %v9474
      %v9476 = vrot.slane %v9274, 2
      %v9477 = vrot.slane %v9275, 2
      %v9478 = vsel %vm1342, %v9476, %v9477
      %v9479 = vrot.slane %v9276, 2
      %v9480 = vsel %vm1342, %v9477, %v9479
      %v9481 = vrot.slane %v9277, 2
      %v9482 = vrot.slane %v9278, 2
      %v9483 = vsel %vm1342, %v9481, %v9482
      %v9484 = vrot.slane %v9279, 2
      %v9485 = vsel %vm1342, %v9482, %v9484
      %v9486 = vrot.slane %v9280, 2
      %v9487 = vrot.slane %v9281, 2
      %v9488 = vsel %vm1342, %v9486, %v9487
      %v9489 = vrot.slane %v9282, 2
      %v9490 = vsel %vm1342, %v9487, %v9489
      %v9491 = vrot.slane %v9283, 2
      %v9492 = vrot.slane %v9284, 2
      %v9493 = vsel %vm1342, %v9491, %v9492
      %v9494 = vrot.slane %v9285, 2
      %v9495 = vsel %vm1342, %v9492, %v9494
      %v9496 = vrot.slane %v9286, 2
      %v9497 = vrot.slane %v9287, 2
      %v9498 = vsel %vm1342, %v9496, %v9497
      %v9499 = vrot.slane %v9288, 2
      %v9500 = vsel %vm1342, %v9497, %v9499
      %v9501 = vrot.slane %v9289, 2
      %v9502 = vrot.slane %v9290, 2
      %v9503 = vsel %vm1342, %v9501, %v9502
      %v9504 = vrot.slane %v9291, 2
      %v9505 = vsel %vm1342, %v9502, %v9504
      %v9506 = vrot.slane %v9292, 2
      %v9507 = vrot.slane %v9293, 2
      %v9508 = vsel %vm1342, %v9506, %v9507
      %v9509 = vrot.slane %v9294, 2
      %v9510 = vsel %vm1342, %v9507, %v9509
      %v9511 = vrot.slane %v9295, 2
      %v9512 = vrot.slane %v9296, 2
      %v9513 = vsel %vm1342, %v9511, %v9512
      %v9514 = vrot.slane %v9297, 2
      %v9515 = vsel %vm1342, %v9512, %v9514
      %v9516 = vrot.slane %v9298, 2
      %v9517 = vrot.slane %v9299, 2
      %v9518 = vsel %vm1342, %v9516, %v9517
      %v9519 = vrot.slane %v9300, 2
      %v9520 = vsel %vm1342, %v9517, %v9519
      %v9521 = vrot.slane %v9301, 2
      %v9522 = vrot.slane %v9302, 2
      %v9523 = vsel %vm1342, %v9521, %v9522
      %v9524 = vrot.slane %v9303, 2
      %v9525 = vsel %vm1342, %v9522, %v9524
      %v9526 = vrot.slane %v9304, 2
      %v9527 = vrot.slane %v9305, 2
      %v9528 = vsel %vm1342, %v9526, %v9527
      %v9529 = vrot.slane %v9306, 2
      %v9530 = vsel %vm1342, %v9527, %v9529
      %v9531 = vrot.slane %v9307, 2
      %v9532 = vrot.slane %v9308, 2
      %v9533 = vsel %vm1342, %v9531, %v9532
      %v9534 = vrot.slane %v9309, 2
      %v9535 = vsel %vm1342, %v9532, %v9534
      %v9536 = vrot.slane %v9310, 2
      %v9537 = vrot.slane %v9311, 2
      %v9538 = vsel %vm1342, %v9536, %v9537
      %v9539 = vrot.slane %v9312, 2
      %v9540 = vsel %vm1342, %v9537, %v9539
      %v9541 = vrot.slane %v9313, 2
      %v9542 = vrot.slane %v9314, 2
      %v9543 = vsel %vm1342, %v9541, %v9542
      %v9544 = vrot.slane %v9315, 2
      %v9545 = vsel %vm1342, %v9542, %v9544
      %v9546 = vrot.slane %v9316, 2
      %v9547 = vrot.slane %v9317, 2
      %v9548 = vsel %vm1342, %v9546, %v9547
      %v9549 = vrot.slane %v9318, 2
      %v9550 = vsel %vm1342, %v9547, %v9549
      %v9551 = vrot.slane %v9319, 2
      %v9552 = vrot.slane %v9320, 2
      %v9553 = vsel %vm1342, %v9551, %v9552
      %v9554 = vrot.slane %v9321, 2
      %v9555 = vsel %vm1342, %v9552, %v9554
      %v9556 = vrot.slane %v9322, 2
      %v9557 = vrot.slane %v9323, 2
      %v9558 = vsel %vm1342, %v9556, %v9557
      %v9559 = vrot.slane %v9324, 2
      %v9560 = vsel %vm1342, %v9557, %v9559
      %v9561 = vrot.slane %v9325, 2
      %v9562 = vrot.slane %v9326, 2
      %v9563 = vsel %vm1342, %v9561, %v9562
      %v9564 = vrot.slane %v9327, 2
      %v9565 = vsel %vm1342, %v9562, %v9564
      %v9566 = vrot.slane %v9328, 2
      %v9567 = vrot.slane %v9329, 2
      %v9568 = vsel %vm1342, %v9566, %v9567
      %v9569 = vrot.slane %v9330, 2
      %v9570 = vsel %vm1342, %v9567, %v9569
      %v9571 = vrot.slane %v9331, 2
      %v9572 = vrot.slane %v9332, 2
      %v9573 = vsel %vm1342, %v9571, %v9572
      %v9574 = vrot.slane %v9333, 2
      %v9575 = vsel %vm1342, %v9572, %v9574
      %v9576 = vrot.slane %v9334, 2
      %v9577 = vrot.slane %v9335, 2
      %v9578 = vsel %vm1342, %v9576, %v9577
      %v9579 = vrot.slane %v9336, 2
      %v9580 = vsel %vm1342, %v9577, %v9579
      %v9581 = vrot.slane %v9337, 2
      %v9582 = vrot.slane %v9338, 2
      %v9583 = vsel %vm1342, %v9581, %v9582
      %v9584 = vrot.slane %v9339, 2
      %v9585 = vsel %vm1342, %v9582, %v9584
      %v9586 = vrot.slane %v9340, 2
      %v9587 = vrot.slane %v9341, 2
      %v9588 = vsel %vm1342, %v9586, %v9587
      %v9589 = vrot.slane %v9342, 2
      %v9590 = vsel %vm1342, %v9587, %v9589
      %v9591 = vrot.slane %v9343, 2
      %v9592 = vrot.slane %v9344, 2
      %v9593 = vsel %vm1342, %v9591, %v9592
      %v9594 = vrot.slane %v9345, 2
      %v9595 = vsel %vm1342, %v9592, %v9594
      %v9596 = vrot.slane %v9346, 2
      %v9597 = vrot.slane %v9347, 2
      %v9598 = vsel %vm1342, %v9596, %v9597
      %v9599 = vrot.slane %v9348, 2
      %v9600 = vsel %vm1342, %v9597, %v9599
      %v9601 = vrot.slane %v9349, 2
      %v9602 = vrot.slane %v9350, 2
      %v9603 = vsel %vm1342, %v9601, %v9602
      %v9604 = vrot.slane %v9351, 2
      %v9605 = vsel %vm1342, %v9602, %v9604
      %v9606 = vrot.slane %v9352, 2
      %v9607 = vrot.slane %v9353, 2
      %v9608 = vsel %vm1342, %v9606, %v9607
      %v9609 = vrot.slane %v9354, 2
      %v9610 = vsel %vm1342, %v9607, %v9609
      %v9675 = vadd.f32 %v9191, %v9453
      %v9676 = vadd.f32 %v9192, %v9455
      %v9677 = vadd.f32 %v9193, %v9458
      %v9678 = vadd.f32 %v9194, %v9460
      %v9679 = vadd.f32 %v9195, %v9463
      %v9680 = vadd.f32 %v9196, %v9465
      %v9681 = vadd.f32 %v9197, %v9468
      %v9682 = vadd.f32 %v9198, %v9470
      %v9683 = vadd.f32 %v9199, %v9473
      %v9684 = vadd.f32 %v9200, %v9475
      %v9685 = vadd.f32 %v9201, %v9478
      %v9686 = vadd.f32 %v9202, %v9480
      %v9687 = vadd.f32 %v9203, %v9483
      %v9688 = vadd.f32 %v9204, %v9485
      %v9689 = vadd.f32 %v9205, %v9488
      %v9690 = vadd.f32 %v9206, %v9490
      %v9691 = vadd.f32 %v9207, %v9493
      %v9692 = vadd.f32 %v9208, %v9495
      %v9693 = vadd.f32 %v9209, %v9498
      %v9694 = vadd.f32 %v9210, %v9500
      %v9695 = vadd.f32 %v9211, %v9503
      %v9696 = vadd.f32 %v9212, %v9505
      %v9697 = vadd.f32 %v9213, %v9508
      %v9698 = vadd.f32 %v9214, %v9510
      %v9699 = vadd.f32 %v9215, %v9513
      %v9700 = vadd.f32 %v9216, %v9515
      %v9701 = vadd.f32 %v9217, %v9518
      %v9702 = vadd.f32 %v9218, %v9520
      %v9703 = vadd.f32 %v9219, %v9523
      %v9704 = vadd.f32 %v9220, %v9525
      %v9705 = vadd.f32 %v9221, %v9528
      %v9706 = vadd.f32 %v9222, %v9530
      %v9707 = vadd.f32 %v9223, %v9533
      %v9708 = vadd.f32 %v9224, %v9535
      %v9709 = vadd.f32 %v9225, %v9538
      %v9710 = vadd.f32 %v9226, %v9540
      %v9711 = vadd.f32 %v9227, %v9543
      %v9712 = vadd.f32 %v9228, %v9545
      %v9713 = vadd.f32 %v9229, %v9548
      %v9714 = vadd.f32 %v9230, %v9550
      %v9715 = vadd.f32 %v9231, %v9553
      %v9716 = vadd.f32 %v9232, %v9555
      %v9717 = vadd.f32 %v9233, %v9558
      %v9718 = vadd.f32 %v9234, %v9560
      %v9719 = vadd.f32 %v9235, %v9563
      %v9720 = vadd.f32 %v9236, %v9565
      %v9721 = vadd.f32 %v9237, %v9568
      %v9722 = vadd.f32 %v9238, %v9570
      %v9723 = vadd.f32 %v9239, %v9573
      %v9724 = vadd.f32 %v9240, %v9575
      %v9725 = vadd.f32 %v9241, %v9578
      %v9726 = vadd.f32 %v9242, %v9580
      %v9727 = vadd.f32 %v9243, %v9583
      %v9728 = vadd.f32 %v9244, %v9585
      %v9729 = vadd.f32 %v9245, %v9588
      %v9730 = vadd.f32 %v9246, %v9590
      %v9731 = vadd.f32 %v9247, %v9593
      %v9732 = vadd.f32 %v9248, %v9595
      %v9733 = vadd.f32 %v9249, %v9598
      %v9734 = vadd.f32 %v9250, %v9600
      %v9735 = vadd.f32 %v9251, %v9603
      %v9736 = vadd.f32 %v9252, %v9605
      %v9737 = vadd.f32 %v9253, %v9608
      %v9738 = vadd.f32 %v9254, %v9610
      %v9739 = vlaneseq
      %v9740 = vshrl.u32 %v9739, 7
      %v9741 = vsub.s32 0, %v9740
      %v9742 = vrot.slane %v324, %v9741
      %v9743 = vmul.f32 %v7443, %v9742
      %v9744 = vmul.f32 %v7444, %v9742
      %v9745 = vmul.f32 %v7446, %v9742
      %v9746 = vmul.f32 %v7447, %v9742
      %v9747 = vmul.f32 %v7449, %v9742
      %v9748 = vmul.f32 %v7450, %v9742
      %v9749 = vmul.f32 %v7452, %v9742
      %v9750 = vmul.f32 %v7453, %v9742
      %v9751 = vmul.f32 %v7455, %v9742
      %v9752 = vmul.f32 %v7456, %v9742
      %v9753 = vmul.f32 %v7458, %v9742
      %v9754 = vmul.f32 %v7459, %v9742
      %v9755 = vmul.f32 %v7461, %v9742
      %v9756 = vmul.f32 %v7462, %v9742
      %v9757 = vmul.f32 %v7464, %v9742
      %v9758 = vmul.f32 %v7465, %v9742
      %v9759 = vmul.f32 %v7467, %v9742
      %v9760 = vmul.f32 %v7468, %v9742
      %v9761 = vmul.f32 %v7470, %v9742
      %v9762 = vmul.f32 %v7471, %v9742
      %v9763 = vmul.f32 %v7473, %v9742
      %v9764 = vmul.f32 %v7474, %v9742
      %v9765 = vmul.f32 %v7476, %v9742
      %v9766 = vmul.f32 %v7477, %v9742
      %v9767 = vmul.f32 %v7479, %v9742
      %v9768 = vmul.f32 %v7480, %v9742
      %v9769 = vmul.f32 %v7482, %v9742
      %v9770 = vmul.f32 %v7483, %v9742
      %v9771 = vmul.f32 %v7485, %v9742
      %v9772 = vmul.f32 %v7486, %v9742
      %v9773 = vmul.f32 %v7488, %v9742
      %v9774 = vmul.f32 %v7489, %v9742
      %v9775 = vmul.f32 %v7491, %v9742
      %v9776 = vmul.f32 %v7492, %v9742
      %v9777 = vmul.f32 %v7494, %v9742
      %v9778 = vmul.f32 %v7495, %v9742
      %v9779 = vmul.f32 %v7497, %v9742
      %v9780 = vmul.f32 %v7498, %v9742
      %v9781 = vmul.f32 %v7500, %v9742
      %v9782 = vmul.f32 %v7501, %v9742
      %v9783 = vmul.f32 %v7503, %v9742
      %v9784 = vmul.f32 %v7504, %v9742
      %v9785 = vmul.f32 %v7506, %v9742
      %v9786 = vmul.f32 %v7507, %v9742
      %v9787 = vmul.f32 %v7509, %v9742
      %v9788 = vmul.f32 %v7510, %v9742
      %v9789 = vmul.f32 %v7512, %v9742
      %v9790 = vmul.f32 %v7513, %v9742
      %v9791 = vmul.f32 %v7515, %v9742
      %v9792 = vmul.f32 %v7516, %v9742
      %v9793 = vmul.f32 %v7518, %v9742
      %v9794 = vmul.f32 %v7519, %v9742
      %v9795 = vmul.f32 %v7521, %v9742
      %v9796 = vmul.f32 %v7522, %v9742
      %v9797 = vmul.f32 %v7524, %v9742
      %v9798 = vmul.f32 %v7525, %v9742
      %v9799 = vmul.f32 %v7527, %v9742
      %v9800 = vmul.f32 %v7528, %v9742
      %v9801 = vmul.f32 %v7530, %v9742
      %v9802 = vmul.f32 %v7531, %v9742
      %v9803 = vmul.f32 %v7533, %v9742
      %v9804 = vmul.f32 %v7534, %v9742
      %v9805 = vmul.f32 %v7536, %v9742
      %v9806 = vmul.f32 %v7537, %v9742
      %v9807 = vadd.f32 %v9675, %v9743
      %v9808 = vadd.f32 %v9676, %v9744
      %v9809 = vadd.f32 %v9677, %v9745
      %v9810 = vadd.f32 %v9678, %v9746
      %v9811 = vadd.f32 %v9679, %v9747
      %v9812 = vadd.f32 %v9680, %v9748
      %v9813 = vadd.f32 %v9681, %v9749
      %v9814 = vadd.f32 %v9682, %v9750
      %v9815 = vadd.f32 %v9683, %v9751
      %v9816 = vadd.f32 %v9684, %v9752
      %v9817 = vadd.f32 %v9685, %v9753
      %v9818 = vadd.f32 %v9686, %v9754
      %v9819 = vadd.f32 %v9687, %v9755
      %v9820 = vadd.f32 %v9688, %v9756
      %v9821 = vadd.f32 %v9689, %v9757
      %v9822 = vadd.f32 %v9690, %v9758
      %v9823 = vadd.f32 %v9691, %v9759
      %v9824 = vadd.f32 %v9692, %v9760
      %v9825 = vadd.f32 %v9693, %v9761
      %v9826 = vadd.f32 %v9694, %v9762
      %v9827 = vadd.f32 %v9695, %v9763
      %v9828 = vadd.f32 %v9696, %v9764
      %v9829 = vadd.f32 %v9697, %v9765
      %v9830 = vadd.f32 %v9698, %v9766
      %v9831 = vadd.f32 %v9699, %v9767
      %v9832 = vadd.f32 %v9700, %v9768
      %v9833 = vadd.f32 %v9701, %v9769
      %v9834 = vadd.f32 %v9702, %v9770
      %v9835 = vadd.f32 %v9703, %v9771
      %v9836 = vadd.f32 %v9704, %v9772
      %v9837 = vadd.f32 %v9705, %v9773
      %v9838 = vadd.f32 %v9706, %v9774
      %v9839 = vadd.f32 %v9707, %v9775
      %v9840 = vadd.f32 %v9708, %v9776
      %v9841 = vadd.f32 %v9709, %v9777
      %v9842 = vadd.f32 %v9710, %v9778
      %v9843 = vadd.f32 %v9711, %v9779
      %v9844 = vadd.f32 %v9712, %v9780
      %v9845 = vadd.f32 %v9713, %v9781
      %v9846 = vadd.f32 %v9714, %v9782
      %v9847 = vadd.f32 %v9715, %v9783
      %v9848 = vadd.f32 %v9716, %v9784
      %v9849 = vadd.f32 %v9717, %v9785
      %v9850 = vadd.f32 %v9718, %v9786
      %v9851 = vadd.f32 %v9719, %v9787
      %v9852 = vadd.f32 %v9720, %v9788
      %v9853 = vadd.f32 %v9721, %v9789
      %v9854 = vadd.f32 %v9722, %v9790
      %v9855 = vadd.f32 %v9723, %v9791
      %v9856 = vadd.f32 %v9724, %v9792
      %v9857 = vadd.f32 %v9725, %v9793
      %v9858 = vadd.f32 %v9726, %v9794
      %v9859 = vadd.f32 %v9727, %v9795
      %v9860 = vadd.f32 %v9728, %v9796
      %v9861 = vadd.f32 %v9729, %v9797
      %v9862 = vadd.f32 %v9730, %v9798
      %v9863 = vadd.f32 %v9731, %v9799
      %v9864 = vadd.f32 %v9732, %v9800
      %v9865 = vadd.f32 %v9733, %v9801
      %v9866 = vadd.f32 %v9734, %v9802
      %v9867 = vadd.f32 %v9735, %v9803
      %v9868 = vadd.f32 %v9736, %v9804
      %v9869 = vadd.f32 %v9737, %v9805
      %v9870 = vadd.f32 %v9738, %v9806
      %v9871 = vlaneseq
      %v9872 = vshrl.u32 %v9871, 7
      %v9873 = vsub.s32 1, %v9872
      %v9874 = vrot.slane %v324, %v9873
      %v9875 = vmul.f32 %v7443, %v9874
      %v9876 = vmul.f32 %v7444, %v9874
      %v9877 = vmul.f32 %v7445, %v9874
      %v9878 = vmul.f32 %v7446, %v9874
      %v9879 = vmul.f32 %v7447, %v9874
      %v9880 = vmul.f32 %v7448, %v9874
      %v9881 = vmul.f32 %v7449, %v9874
      %v9882 = vmul.f32 %v7450, %v9874
      %v9883 = vmul.f32 %v7451, %v9874
      %v9884 = vmul.f32 %v7452, %v9874
      %v9885 = vmul.f32 %v7453, %v9874
      %v9886 = vmul.f32 %v7454, %v9874
      %v9887 = vmul.f32 %v7455, %v9874
      %v9888 = vmul.f32 %v7456, %v9874
      %v9889 = vmul.f32 %v7457, %v9874
      %v9890 = vmul.f32 %v7458, %v9874
      %v9891 = vmul.f32 %v7459, %v9874
      %v9892 = vmul.f32 %v7460, %v9874
      %v9893 = vmul.f32 %v7461, %v9874
      %v9894 = vmul.f32 %v7462, %v9874
      %v9895 = vmul.f32 %v7463, %v9874
      %v9896 = vmul.f32 %v7464, %v9874
      %v9897 = vmul.f32 %v7465, %v9874
      %v9898 = vmul.f32 %v7466, %v9874
      %v9899 = vmul.f32 %v7467, %v9874
      %v9900 = vmul.f32 %v7468, %v9874
      %v9901 = vmul.f32 %v7469, %v9874
      %v9902 = vmul.f32 %v7470, %v9874
      %v9903 = vmul.f32 %v7471, %v9874
      %v9904 = vmul.f32 %v7472, %v9874
      %v9905 = vmul.f32 %v7473, %v9874
      %v9906 = vmul.f32 %v7474, %v9874
      %v9907 = vmul.f32 %v7475, %v9874
      %v9908 = vmul.f32 %v7476, %v9874
      %v9909 = vmul.f32 %v7477, %v9874
      %v9910 = vmul.f32 %v7478, %v9874
      %v9911 = vmul.f32 %v7479, %v9874
      %v9912 = vmul.f32 %v7480, %v9874
      %v9913 = vmul.f32 %v7481, %v9874
      %v9914 = vmul.f32 %v7482, %v9874
      %v9915 = vmul.f32 %v7483, %v9874
      %v9916 = vmul.f32 %v7484, %v9874
      %v9917 = vmul.f32 %v7485, %v9874
      %v9918 = vmul.f32 %v7486, %v9874
      %v9919 = vmul.f32 %v7487, %v9874
      %v9920 = vmul.f32 %v7488, %v9874
      %v9921 = vmul.f32 %v7489, %v9874
      %v9922 = vmul.f32 %v7490, %v9874
      %v9923 = vmul.f32 %v7491, %v9874
      %v9924 = vmul.f32 %v7492, %v9874
      %v9925 = vmul.f32 %v7493, %v9874
      %v9926 = vmul.f32 %v7494, %v9874
      %v9927 = vmul.f32 %v7495, %v9874
      %v9928 = vmul.f32 %v7496, %v9874
      %v9929 = vmul.f32 %v7497, %v9874
      %v9930 = vmul.f32 %v7498, %v9874
      %v9931 = vmul.f32 %v7499, %v9874
      %v9932 = vmul.f32 %v7500, %v9874
      %v9933 = vmul.f32 %v7501, %v9874
      %v9934 = vmul.f32 %v7502, %v9874
      %v9935 = vmul.f32 %v7503, %v9874
      %v9936 = vmul.f32 %v7504, %v9874
      %v9937 = vmul.f32 %v7505, %v9874
      %v9938 = vmul.f32 %v7506, %v9874
      %v9939 = vmul.f32 %v7507, %v9874
      %v9940 = vmul.f32 %v7508, %v9874
      %v9941 = vmul.f32 %v7509, %v9874
      %v9942 = vmul.f32 %v7510, %v9874
      %v9943 = vmul.f32 %v7511, %v9874
      %v9944 = vmul.f32 %v7512, %v9874
      %v9945 = vmul.f32 %v7513, %v9874
      %v9946 = vmul.f32 %v7514, %v9874
      %v9947 = vmul.f32 %v7515, %v9874
      %v9948 = vmul.f32 %v7516, %v9874
      %v9949 = vmul.f32 %v7517, %v9874
      %v9950 = vmul.f32 %v7518, %v9874
      %v9951 = vmul.f32 %v7519, %v9874
      %v9952 = vmul.f32 %v7520, %v9874
      %v9953 = vmul.f32 %v7521, %v9874
      %v9954 = vmul.f32 %v7522, %v9874
      %v9955 = vmul.f32 %v7523, %v9874
      %v9956 = vmul.f32 %v7524, %v9874
      %v9957 = vmul.f32 %v7525, %v9874
      %v9958 = vmul.f32 %v7526, %v9874
      %v9959 = vmul.f32 %v7527, %v9874
      %v9960 = vmul.f32 %v7528, %v9874
      %v9961 = vmul.f32 %v7529, %v9874
      %v9962 = vmul.f32 %v7530, %v9874
      %v9963 = vmul.f32 %v7531, %v9874
      %v9964 = vmul.f32 %v7532, %v9874
      %v9965 = vmul.f32 %v7533, %v9874
      %v9966 = vmul.f32 %v7534, %v9874
      %v9967 = vmul.f32 %v7535, %v9874
      %v9968 = vmul.f32 %v7536, %v9874
      %v9969 = vmul.f32 %v7537, %v9874
      %v9970 = vmul.f32 %v7538, %v9874
      %v10067 = vrot.slane %v9875, 1
      %v10068 = vrot.slane %v9876, 1
      %v10069 = vsel %vm857, %v10067, %v10068
      %v10070 = vrot.slane %v9877, 1
      %v10071 = vsel %vm857, %v10068, %v10070
      %v10072 = vrot.slane %v9878, 1
      %v10073 = vrot.slane %v9879, 1
      %v10074 = vsel %vm857, %v10072, %v10073
      %v10075 = vrot.slane %v9880, 1
      %v10076 = vsel %vm857, %v10073, %v10075
      %v10077 = vrot.slane %v9881, 1
      %v10078 = vrot.slane %v9882, 1
      %v10079 = vsel %vm857, %v10077, %v10078
      %v10080 = vrot.slane %v9883, 1
      %v10081 = vsel %vm857, %v10078, %v10080
      %v10082 = vrot.slane %v9884, 1
      %v10083 = vrot.slane %v9885, 1
      %v10084 = vsel %vm857, %v10082, %v10083
      %v10085 = vrot.slane %v9886, 1
      %v10086 = vsel %vm857, %v10083, %v10085
      %v10087 = vrot.slane %v9887, 1
      %v10088 = vrot.slane %v9888, 1
      %v10089 = vsel %vm857, %v10087, %v10088
      %v10090 = vrot.slane %v9889, 1
      %v10091 = vsel %vm857, %v10088, %v10090
      %v10092 = vrot.slane %v9890, 1
      %v10093 = vrot.slane %v9891, 1
      %v10094 = vsel %vm857, %v10092, %v10093
      %v10095 = vrot.slane %v9892, 1
      %v10096 = vsel %vm857, %v10093, %v10095
      %v10097 = vrot.slane %v9893, 1
      %v10098 = vrot.slane %v9894, 1
      %v10099 = vsel %vm857, %v10097, %v10098
      %v10100 = vrot.slane %v9895, 1
      %v10101 = vsel %vm857, %v10098, %v10100
      %v10102 = vrot.slane %v9896, 1
      %v10103 = vrot.slane %v9897, 1
      %v10104 = vsel %vm857, %v10102, %v10103
      %v10105 = vrot.slane %v9898, 1
      %v10106 = vsel %vm857, %v10103, %v10105
      %v10107 = vrot.slane %v9899, 1
      %v10108 = vrot.slane %v9900, 1
      %v10109 = vsel %vm857, %v10107, %v10108
      %v10110 = vrot.slane %v9901, 1
      %v10111 = vsel %vm857, %v10108, %v10110
      %v10112 = vrot.slane %v9902, 1
      %v10113 = vrot.slane %v9903, 1
      %v10114 = vsel %vm857, %v10112, %v10113
      %v10115 = vrot.slane %v9904, 1
      %v10116 = vsel %vm857, %v10113, %v10115
      %v10117 = vrot.slane %v9905, 1
      %v10118 = vrot.slane %v9906, 1
      %v10119 = vsel %vm857, %v10117, %v10118
      %v10120 = vrot.slane %v9907, 1
      %v10121 = vsel %vm857, %v10118, %v10120
      %v10122 = vrot.slane %v9908, 1
      %v10123 = vrot.slane %v9909, 1
      %v10124 = vsel %vm857, %v10122, %v10123
      %v10125 = vrot.slane %v9910, 1
      %v10126 = vsel %vm857, %v10123, %v10125
      %v10127 = vrot.slane %v9911, 1
      %v10128 = vrot.slane %v9912, 1
      %v10129 = vsel %vm857, %v10127, %v10128
      %v10130 = vrot.slane %v9913, 1
      %v10131 = vsel %vm857, %v10128, %v10130
      %v10132 = vrot.slane %v9914, 1
      %v10133 = vrot.slane %v9915, 1
      %v10134 = vsel %vm857, %v10132, %v10133
      %v10135 = vrot.slane %v9916, 1
      %v10136 = vsel %vm857, %v10133, %v10135
      %v10137 = vrot.slane %v9917, 1
      %v10138 = vrot.slane %v9918, 1
      %v10139 = vsel %vm857, %v10137, %v10138
      %v10140 = vrot.slane %v9919, 1
      %v10141 = vsel %vm857, %v10138, %v10140
      %v10142 = vrot.slane %v9920, 1
      %v10143 = vrot.slane %v9921, 1
      %v10144 = vsel %vm857, %v10142, %v10143
      %v10145 = vrot.slane %v9922, 1
      %v10146 = vsel %vm857, %v10143, %v10145
      %v10147 = vrot.slane %v9923, 1
      %v10148 = vrot.slane %v9924, 1
      %v10149 = vsel %vm857, %v10147, %v10148
      %v10150 = vrot.slane %v9925, 1
      %v10151 = vsel %vm857, %v10148, %v10150
      %v10152 = vrot.slane %v9926, 1
      %v10153 = vrot.slane %v9927, 1
      %v10154 = vsel %vm857, %v10152, %v10153
      %v10155 = vrot.slane %v9928, 1
      %v10156 = vsel %vm857, %v10153, %v10155
      %v10157 = vrot.slane %v9929, 1
      %v10158 = vrot.slane %v9930, 1
      %v10159 = vsel %vm857, %v10157, %v10158
      %v10160 = vrot.slane %v9931, 1
      %v10161 = vsel %vm857, %v10158, %v10160
      %v10162 = vrot.slane %v9932, 1
      %v10163 = vrot.slane %v9933, 1
      %v10164 = vsel %vm857, %v10162, %v10163
      %v10165 = vrot.slane %v9934, 1
      %v10166 = vsel %vm857, %v10163, %v10165
      %v10167 = vrot.slane %v9935, 1
      %v10168 = vrot.slane %v9936, 1
      %v10169 = vsel %vm857, %v10167, %v10168
      %v10170 = vrot.slane %v9937, 1
      %v10171 = vsel %vm857, %v10168, %v10170
      %v10172 = vrot.slane %v9938, 1
      %v10173 = vrot.slane %v9939, 1
      %v10174 = vsel %vm857, %v10172, %v10173
      %v10175 = vrot.slane %v9940, 1
      %v10176 = vsel %vm857, %v10173, %v10175
      %v10177 = vrot.slane %v9941, 1
      %v10178 = vrot.slane %v9942, 1
      %v10179 = vsel %vm857, %v10177, %v10178
      %v10180 = vrot.slane %v9943, 1
      %v10181 = vsel %vm857, %v10178, %v10180
      %v10182 = vrot.slane %v9944, 1
      %v10183 = vrot.slane %v9945, 1
      %v10184 = vsel %vm857, %v10182, %v10183
      %v10185 = vrot.slane %v9946, 1
      %v10186 = vsel %vm857, %v10183, %v10185
      %v10187 = vrot.slane %v9947, 1
      %v10188 = vrot.slane %v9948, 1
      %v10189 = vsel %vm857, %v10187, %v10188
      %v10190 = vrot.slane %v9949, 1
      %v10191 = vsel %vm857, %v10188, %v10190
      %v10192 = vrot.slane %v9950, 1
      %v10193 = vrot.slane %v9951, 1
      %v10194 = vsel %vm857, %v10192, %v10193
      %v10195 = vrot.slane %v9952, 1
      %v10196 = vsel %vm857, %v10193, %v10195
      %v10197 = vrot.slane %v9953, 1
      %v10198 = vrot.slane %v9954, 1
      %v10199 = vsel %vm857, %v10197, %v10198
      %v10200 = vrot.slane %v9955, 1
      %v10201 = vsel %vm857, %v10198, %v10200
      %v10202 = vrot.slane %v9956, 1
      %v10203 = vrot.slane %v9957, 1
      %v10204 = vsel %vm857, %v10202, %v10203
      %v10205 = vrot.slane %v9958, 1
      %v10206 = vsel %vm857, %v10203, %v10205
      %v10207 = vrot.slane %v9959, 1
      %v10208 = vrot.slane %v9960, 1
      %v10209 = vsel %vm857, %v10207, %v10208
      %v10210 = vrot.slane %v9961, 1
      %v10211 = vsel %vm857, %v10208, %v10210
      %v10212 = vrot.slane %v9962, 1
      %v10213 = vrot.slane %v9963, 1
      %v10214 = vsel %vm857, %v10212, %v10213
      %v10215 = vrot.slane %v9964, 1
      %v10216 = vsel %vm857, %v10213, %v10215
      %v10217 = vrot.slane %v9965, 1
      %v10218 = vrot.slane %v9966, 1
      %v10219 = vsel %vm857, %v10217, %v10218
      %v10220 = vrot.slane %v9967, 1
      %v10221 = vsel %vm857, %v10218, %v10220
      %v10222 = vrot.slane %v9968, 1
      %v10223 = vrot.slane %v9969, 1
      %v10224 = vsel %vm857, %v10222, %v10223
      %v10225 = vrot.slane %v9970, 1
      %v10226 = vsel %vm857, %v10223, %v10225
      %v10291 = vadd.f32 %v9807, %v10069
      %v10292 = vadd.f32 %v9808, %v10071
      %v10293 = vadd.f32 %v9809, %v10074
      %v10294 = vadd.f32 %v9810, %v10076
      %v10295 = vadd.f32 %v9811, %v10079
      %v10296 = vadd.f32 %v9812, %v10081
      %v10297 = vadd.f32 %v9813, %v10084
      %v10298 = vadd.f32 %v9814, %v10086
      %v10299 = vadd.f32 %v9815, %v10089
      %v10300 = vadd.f32 %v9816, %v10091
      %v10301 = vadd.f32 %v9817, %v10094
      %v10302 = vadd.f32 %v9818, %v10096
      %v10303 = vadd.f32 %v9819, %v10099
      %v10304 = vadd.f32 %v9820, %v10101
      %v10305 = vadd.f32 %v9821, %v10104
      %v10306 = vadd.f32 %v9822, %v10106
      %v10307 = vadd.f32 %v9823, %v10109
      %v10308 = vadd.f32 %v9824, %v10111
      %v10309 = vadd.f32 %v9825, %v10114
      %v10310 = vadd.f32 %v9826, %v10116
      %v10311 = vadd.f32 %v9827, %v10119
      %v10312 = vadd.f32 %v9828, %v10121
      %v10313 = vadd.f32 %v9829, %v10124
      %v10314 = vadd.f32 %v9830, %v10126
      %v10315 = vadd.f32 %v9831, %v10129
      %v10316 = vadd.f32 %v9832, %v10131
      %v10317 = vadd.f32 %v9833, %v10134
      %v10318 = vadd.f32 %v9834, %v10136
      %v10319 = vadd.f32 %v9835, %v10139
      %v10320 = vadd.f32 %v9836, %v10141
      %v10321 = vadd.f32 %v9837, %v10144
      %v10322 = vadd.f32 %v9838, %v10146
      %v10323 = vadd.f32 %v9839, %v10149
      %v10324 = vadd.f32 %v9840, %v10151
      %v10325 = vadd.f32 %v9841, %v10154
      %v10326 = vadd.f32 %v9842, %v10156
      %v10327 = vadd.f32 %v9843, %v10159
      %v10328 = vadd.f32 %v9844, %v10161
      %v10329 = vadd.f32 %v9845, %v10164
      %v10330 = vadd.f32 %v9846, %v10166
      %v10331 = vadd.f32 %v9847, %v10169
      %v10332 = vadd.f32 %v9848, %v10171
      %v10333 = vadd.f32 %v9849, %v10174
      %v10334 = vadd.f32 %v9850, %v10176
      %v10335 = vadd.f32 %v9851, %v10179
      %v10336 = vadd.f32 %v9852, %v10181
      %v10337 = vadd.f32 %v9853, %v10184
      %v10338 = vadd.f32 %v9854, %v10186
      %v10339 = vadd.f32 %v9855, %v10189
      %v10340 = vadd.f32 %v9856, %v10191
      %v10341 = vadd.f32 %v9857, %v10194
      %v10342 = vadd.f32 %v9858, %v10196
      %v10343 = vadd.f32 %v9859, %v10199
      %v10344 = vadd.f32 %v9860, %v10201
      %v10345 = vadd.f32 %v9861, %v10204
      %v10346 = vadd.f32 %v9862, %v10206
      %v10347 = vadd.f32 %v9863, %v10209
      %v10348 = vadd.f32 %v9864, %v10211
      %v10349 = vadd.f32 %v9865, %v10214
      %v10350 = vadd.f32 %v9866, %v10216
      %v10351 = vadd.f32 %v9867, %v10219
      %v10352 = vadd.f32 %v9868, %v10221
      %v10353 = vadd.f32 %v9869, %v10224
      %v10354 = vadd.f32 %v9870, %v10226
      %v10355 = vlaneseq
      %v10356 = vshrl.u32 %v10355, 7
      %v10357 = vsub.s32 2, %v10356
      %v10358 = vrot.slane %v324, %v10357
      %v10359 = vmul.f32 %v7443, %v10358
      %v10360 = vmul.f32 %v7444, %v10358
      %v10361 = vmul.f32 %v7445, %v10358
      %v10362 = vmul.f32 %v7446, %v10358
      %v10363 = vmul.f32 %v7447, %v10358
      %v10364 = vmul.f32 %v7448, %v10358
      %v10365 = vmul.f32 %v7449, %v10358
      %v10366 = vmul.f32 %v7450, %v10358
      %v10367 = vmul.f32 %v7451, %v10358
      %v10368 = vmul.f32 %v7452, %v10358
      %v10369 = vmul.f32 %v7453, %v10358
      %v10370 = vmul.f32 %v7454, %v10358
      %v10371 = vmul.f32 %v7455, %v10358
      %v10372 = vmul.f32 %v7456, %v10358
      %v10373 = vmul.f32 %v7457, %v10358
      %v10374 = vmul.f32 %v7458, %v10358
      %v10375 = vmul.f32 %v7459, %v10358
      %v10376 = vmul.f32 %v7460, %v10358
      %v10377 = vmul.f32 %v7461, %v10358
      %v10378 = vmul.f32 %v7462, %v10358
      %v10379 = vmul.f32 %v7463, %v10358
      %v10380 = vmul.f32 %v7464, %v10358
      %v10381 = vmul.f32 %v7465, %v10358
      %v10382 = vmul.f32 %v7466, %v10358
      %v10383 = vmul.f32 %v7467, %v10358
      %v10384 = vmul.f32 %v7468, %v10358
      %v10385 = vmul.f32 %v7469, %v10358
      %v10386 = vmul.f32 %v7470, %v10358
      %v10387 = vmul.f32 %v7471, %v10358
      %v10388 = vmul.f32 %v7472, %v10358
      %v10389 = vmul.f32 %v7473, %v10358
      %v10390 = vmul.f32 %v7474, %v10358
      %v10391 = vmul.f32 %v7475, %v10358
      %v10392 = vmul.f32 %v7476, %v10358
      %v10393 = vmul.f32 %v7477, %v10358
      %v10394 = vmul.f32 %v7478, %v10358
      %v10395 = vmul.f32 %v7479, %v10358
      %v10396 = vmul.f32 %v7480, %v10358
      %v10397 = vmul.f32 %v7481, %v10358
      %v10398 = vmul.f32 %v7482, %v10358
      %v10399 = vmul.f32 %v7483, %v10358
      %v10400 = vmul.f32 %v7484, %v10358
      %v10401 = vmul.f32 %v7485, %v10358
      %v10402 = vmul.f32 %v7486, %v10358
      %v10403 = vmul.f32 %v7487, %v10358
      %v10404 = vmul.f32 %v7488, %v10358
      %v10405 = vmul.f32 %v7489, %v10358
      %v10406 = vmul.f32 %v7490, %v10358
      %v10407 = vmul.f32 %v7491, %v10358
      %v10408 = vmul.f32 %v7492, %v10358
      %v10409 = vmul.f32 %v7493, %v10358
      %v10410 = vmul.f32 %v7494, %v10358
      %v10411 = vmul.f32 %v7495, %v10358
      %v10412 = vmul.f32 %v7496, %v10358
      %v10413 = vmul.f32 %v7497, %v10358
      %v10414 = vmul.f32 %v7498, %v10358
      %v10415 = vmul.f32 %v7499, %v10358
      %v10416 = vmul.f32 %v7500, %v10358
      %v10417 = vmul.f32 %v7501, %v10358
      %v10418 = vmul.f32 %v7502, %v10358
      %v10419 = vmul.f32 %v7503, %v10358
      %v10420 = vmul.f32 %v7504, %v10358
      %v10421 = vmul.f32 %v7505, %v10358
      %v10422 = vmul.f32 %v7506, %v10358
      %v10423 = vmul.f32 %v7507, %v10358
      %v10424 = vmul.f32 %v7508, %v10358
      %v10425 = vmul.f32 %v7509, %v10358
      %v10426 = vmul.f32 %v7510, %v10358
      %v10427 = vmul.f32 %v7511, %v10358
      %v10428 = vmul.f32 %v7512, %v10358
      %v10429 = vmul.f32 %v7513, %v10358
      %v10430 = vmul.f32 %v7514, %v10358
      %v10431 = vmul.f32 %v7515, %v10358
      %v10432 = vmul.f32 %v7516, %v10358
      %v10433 = vmul.f32 %v7517, %v10358
      %v10434 = vmul.f32 %v7518, %v10358
      %v10435 = vmul.f32 %v7519, %v10358
      %v10436 = vmul.f32 %v7520, %v10358
      %v10437 = vmul.f32 %v7521, %v10358
      %v10438 = vmul.f32 %v7522, %v10358
      %v10439 = vmul.f32 %v7523, %v10358
      %v10440 = vmul.f32 %v7524, %v10358
      %v10441 = vmul.f32 %v7525, %v10358
      %v10442 = vmul.f32 %v7526, %v10358
      %v10443 = vmul.f32 %v7527, %v10358
      %v10444 = vmul.f32 %v7528, %v10358
      %v10445 = vmul.f32 %v7529, %v10358
      %v10446 = vmul.f32 %v7530, %v10358
      %v10447 = vmul.f32 %v7531, %v10358
      %v10448 = vmul.f32 %v7532, %v10358
      %v10449 = vmul.f32 %v7533, %v10358
      %v10450 = vmul.f32 %v7534, %v10358
      %v10451 = vmul.f32 %v7535, %v10358
      %v10452 = vmul.f32 %v7536, %v10358
      %v10453 = vmul.f32 %v7537, %v10358
      %v10454 = vmul.f32 %v7538, %v10358
      %v10551 = vrot.slane %v10359, 2
      %v10552 = vrot.slane %v10360, 2
      %v10553 = vsel %vm1342, %v10551, %v10552
      %v10554 = vrot.slane %v10361, 2
      %v10555 = vsel %vm1342, %v10552, %v10554
      %v10556 = vrot.slane %v10362, 2
      %v10557 = vrot.slane %v10363, 2
      %v10558 = vsel %vm1342, %v10556, %v10557
      %v10559 = vrot.slane %v10364, 2
      %v10560 = vsel %vm1342, %v10557, %v10559
      %v10561 = vrot.slane %v10365, 2
      %v10562 = vrot.slane %v10366, 2
      %v10563 = vsel %vm1342, %v10561, %v10562
      %v10564 = vrot.slane %v10367, 2
      %v10565 = vsel %vm1342, %v10562, %v10564
      %v10566 = vrot.slane %v10368, 2
      %v10567 = vrot.slane %v10369, 2
      %v10568 = vsel %vm1342, %v10566, %v10567
      %v10569 = vrot.slane %v10370, 2
      %v10570 = vsel %vm1342, %v10567, %v10569
      %v10571 = vrot.slane %v10371, 2
      %v10572 = vrot.slane %v10372, 2
      %v10573 = vsel %vm1342, %v10571, %v10572
      %v10574 = vrot.slane %v10373, 2
      %v10575 = vsel %vm1342, %v10572, %v10574
      %v10576 = vrot.slane %v10374, 2
      %v10577 = vrot.slane %v10375, 2
      %v10578 = vsel %vm1342, %v10576, %v10577
      %v10579 = vrot.slane %v10376, 2
      %v10580 = vsel %vm1342, %v10577, %v10579
      %v10581 = vrot.slane %v10377, 2
      %v10582 = vrot.slane %v10378, 2
      %v10583 = vsel %vm1342, %v10581, %v10582
      %v10584 = vrot.slane %v10379, 2
      %v10585 = vsel %vm1342, %v10582, %v10584
      %v10586 = vrot.slane %v10380, 2
      %v10587 = vrot.slane %v10381, 2
      %v10588 = vsel %vm1342, %v10586, %v10587
      %v10589 = vrot.slane %v10382, 2
      %v10590 = vsel %vm1342, %v10587, %v10589
      %v10591 = vrot.slane %v10383, 2
      %v10592 = vrot.slane %v10384, 2
      %v10593 = vsel %vm1342, %v10591, %v10592
      %v10594 = vrot.slane %v10385, 2
      %v10595 = vsel %vm1342, %v10592, %v10594
      %v10596 = vrot.slane %v10386, 2
      %v10597 = vrot.slane %v10387, 2
      %v10598 = vsel %vm1342, %v10596, %v10597
      %v10599 = vrot.slane %v10388, 2
      %v10600 = vsel %vm1342, %v10597, %v10599
      %v10601 = vrot.slane %v10389, 2
      %v10602 = vrot.slane %v10390, 2
      %v10603 = vsel %vm1342, %v10601, %v10602
      %v10604 = vrot.slane %v10391, 2
      %v10605 = vsel %vm1342, %v10602, %v10604
      %v10606 = vrot.slane %v10392, 2
      %v10607 = vrot.slane %v10393, 2
      %v10608 = vsel %vm1342, %v10606, %v10607
      %v10609 = vrot.slane %v10394, 2
      %v10610 = vsel %vm1342, %v10607, %v10609
      %v10611 = vrot.slane %v10395, 2
      %v10612 = vrot.slane %v10396, 2
      %v10613 = vsel %vm1342, %v10611, %v10612
      %v10614 = vrot.slane %v10397, 2
      %v10615 = vsel %vm1342, %v10612, %v10614
      %v10616 = vrot.slane %v10398, 2
      %v10617 = vrot.slane %v10399, 2
      %v10618 = vsel %vm1342, %v10616, %v10617
      %v10619 = vrot.slane %v10400, 2
      %v10620 = vsel %vm1342, %v10617, %v10619
      %v10621 = vrot.slane %v10401, 2
      %v10622 = vrot.slane %v10402, 2
      %v10623 = vsel %vm1342, %v10621, %v10622
      %v10624 = vrot.slane %v10403, 2
      %v10625 = vsel %vm1342, %v10622, %v10624
      %v10626 = vrot.slane %v10404, 2
      %v10627 = vrot.slane %v10405, 2
      %v10628 = vsel %vm1342, %v10626, %v10627
      %v10629 = vrot.slane %v10406, 2
      %v10630 = vsel %vm1342, %v10627, %v10629
      %v10631 = vrot.slane %v10407, 2
      %v10632 = vrot.slane %v10408, 2
      %v10633 = vsel %vm1342, %v10631, %v10632
      %v10634 = vrot.slane %v10409, 2
      %v10635 = vsel %vm1342, %v10632, %v10634
      %v10636 = vrot.slane %v10410, 2
      %v10637 = vrot.slane %v10411, 2
      %v10638 = vsel %vm1342, %v10636, %v10637
      %v10639 = vrot.slane %v10412, 2
      %v10640 = vsel %vm1342, %v10637, %v10639
      %v10641 = vrot.slane %v10413, 2
      %v10642 = vrot.slane %v10414, 2
      %v10643 = vsel %vm1342, %v10641, %v10642
      %v10644 = vrot.slane %v10415, 2
      %v10645 = vsel %vm1342, %v10642, %v10644
      %v10646 = vrot.slane %v10416, 2
      %v10647 = vrot.slane %v10417, 2
      %v10648 = vsel %vm1342, %v10646, %v10647
      %v10649 = vrot.slane %v10418, 2
      %v10650 = vsel %vm1342, %v10647, %v10649
      %v10651 = vrot.slane %v10419, 2
      %v10652 = vrot.slane %v10420, 2
      %v10653 = vsel %vm1342, %v10651, %v10652
      %v10654 = vrot.slane %v10421, 2
      %v10655 = vsel %vm1342, %v10652, %v10654
      %v10656 = vrot.slane %v10422, 2
      %v10657 = vrot.slane %v10423, 2
      %v10658 = vsel %vm1342, %v10656, %v10657
      %v10659 = vrot.slane %v10424, 2
      %v10660 = vsel %vm1342, %v10657, %v10659
      %v10661 = vrot.slane %v10425, 2
      %v10662 = vrot.slane %v10426, 2
      %v10663 = vsel %vm1342, %v10661, %v10662
      %v10664 = vrot.slane %v10427, 2
      %v10665 = vsel %vm1342, %v10662, %v10664
      %v10666 = vrot.slane %v10428, 2
      %v10667 = vrot.slane %v10429, 2
      %v10668 = vsel %vm1342, %v10666, %v10667
      %v10669 = vrot.slane %v10430, 2
      %v10670 = vsel %vm1342, %v10667, %v10669
      %v10671 = vrot.slane %v10431, 2
      %v10672 = vrot.slane %v10432, 2
      %v10673 = vsel %vm1342, %v10671, %v10672
      %v10674 = vrot.slane %v10433, 2
      %v10675 = vsel %vm1342, %v10672, %v10674
      %v10676 = vrot.slane %v10434, 2
      %v10677 = vrot.slane %v10435, 2
      %v10678 = vsel %vm1342, %v10676, %v10677
      %v10679 = vrot.slane %v10436, 2
      %v10680 = vsel %vm1342, %v10677, %v10679
      %v10681 = vrot.slane %v10437, 2
      %v10682 = vrot.slane %v10438, 2
      %v10683 = vsel %vm1342, %v10681, %v10682
      %v10684 = vrot.slane %v10439, 2
      %v10685 = vsel %vm1342, %v10682, %v10684
      %v10686 = vrot.slane %v10440, 2
      %v10687 = vrot.slane %v10441, 2
      %v10688 = vsel %vm1342, %v10686, %v10687
      %v10689 = vrot.slane %v10442, 2
      %v10690 = vsel %vm1342, %v10687, %v10689
      %v10691 = vrot.slane %v10443, 2
      %v10692 = vrot.slane %v10444, 2
      %v10693 = vsel %vm1342, %v10691, %v10692
      %v10694 = vrot.slane %v10445, 2
      %v10695 = vsel %vm1342, %v10692, %v10694
      %v10696 = vrot.slane %v10446, 2
      %v10697 = vrot.slane %v10447, 2
      %v10698 = vsel %vm1342, %v10696, %v10697
      %v10699 = vrot.slane %v10448, 2
      %v10700 = vsel %vm1342, %v10697, %v10699
      %v10701 = vrot.slane %v10449, 2
      %v10702 = vrot.slane %v10450, 2
      %v10703 = vsel %vm1342, %v10701, %v10702
      %v10704 = vrot.slane %v10451, 2
      %v10705 = vsel %vm1342, %v10702, %v10704
      %v10706 = vrot.slane %v10452, 2
      %v10707 = vrot.slane %v10453, 2
      %v10708 = vsel %vm1342, %v10706, %v10707
      %v10709 = vrot.slane %v10454, 2
      %v10710 = vsel %vm1342, %v10707, %v10709
      %v10775 = vadd.f32 %v10291, %v10553
      %v10776 = vadd.f32 %v10292, %v10555
      %v10777 = vadd.f32 %v10293, %v10558
      %v10778 = vadd.f32 %v10294, %v10560
      %v10779 = vadd.f32 %v10295, %v10563
      %v10780 = vadd.f32 %v10296, %v10565
      %v10781 = vadd.f32 %v10297, %v10568
      %v10782 = vadd.f32 %v10298, %v10570
      %v10783 = vadd.f32 %v10299, %v10573
      %v10784 = vadd.f32 %v10300, %v10575
      %v10785 = vadd.f32 %v10301, %v10578
      %v10786 = vadd.f32 %v10302, %v10580
      %v10787 = vadd.f32 %v10303, %v10583
      %v10788 = vadd.f32 %v10304, %v10585
      %v10789 = vadd.f32 %v10305, %v10588
      %v10790 = vadd.f32 %v10306, %v10590
      %v10791 = vadd.f32 %v10307, %v10593
      %v10792 = vadd.f32 %v10308, %v10595
      %v10793 = vadd.f32 %v10309, %v10598
      %v10794 = vadd.f32 %v10310, %v10600
      %v10795 = vadd.f32 %v10311, %v10603
      %v10796 = vadd.f32 %v10312, %v10605
      %v10797 = vadd.f32 %v10313, %v10608
      %v10798 = vadd.f32 %v10314, %v10610
      %v10799 = vadd.f32 %v10315, %v10613
      %v10800 = vadd.f32 %v10316, %v10615
      %v10801 = vadd.f32 %v10317, %v10618
      %v10802 = vadd.f32 %v10318, %v10620
      %v10803 = vadd.f32 %v10319, %v10623
      %v10804 = vadd.f32 %v10320, %v10625
      %v10805 = vadd.f32 %v10321, %v10628
      %v10806 = vadd.f32 %v10322, %v10630
      %v10807 = vadd.f32 %v10323, %v10633
      %v10808 = vadd.f32 %v10324, %v10635
      %v10809 = vadd.f32 %v10325, %v10638
      %v10810 = vadd.f32 %v10326, %v10640
      %v10811 = vadd.f32 %v10327, %v10643
      %v10812 = vadd.f32 %v10328, %v10645
      %v10813 = vadd.f32 %v10329, %v10648
      %v10814 = vadd.f32 %v10330, %v10650
      %v10815 = vadd.f32 %v10331, %v10653
      %v10816 = vadd.f32 %v10332, %v10655
      %v10817 = vadd.f32 %v10333, %v10658
      %v10818 = vadd.f32 %v10334, %v10660
      %v10819 = vadd.f32 %v10335, %v10663
      %v10820 = vadd.f32 %v10336, %v10665
      %v10821 = vadd.f32 %v10337, %v10668
      %v10822 = vadd.f32 %v10338, %v10670
      %v10823 = vadd.f32 %v10339, %v10673
      %v10824 = vadd.f32 %v10340, %v10675
      %v10825 = vadd.f32 %v10341, %v10678
      %v10826 = vadd.f32 %v10342, %v10680
      %v10827 = vadd.f32 %v10343, %v10683
      %v10828 = vadd.f32 %v10344, %v10685
      %v10829 = vadd.f32 %v10345, %v10688
      %v10830 = vadd.f32 %v10346, %v10690
      %v10831 = vadd.f32 %v10347, %v10693
      %v10832 = vadd.f32 %v10348, %v10695
      %v10833 = vadd.f32 %v10349, %v10698
      %v10834 = vadd.f32 %v10350, %v10700
      %v10835 = vadd.f32 %v10351, %v10703
      %v10836 = vadd.f32 %v10352, %v10705
      %v10837 = vadd.f32 %v10353, %v10708
      %v10838 = vadd.f32 %v10354, %v10710
      %v10839 = vpack.c.bf16 %v10776, %v10775
      %v10840 = vpack.c.bf16 %v10778, %v10777
      %v10841 = vpack.c.bf16 %v10780, %v10779
      %v10842 = vpack.c.bf16 %v10782, %v10781
      %v10843 = vpack.c.bf16 %v10784, %v10783
      %v10844 = vpack.c.bf16 %v10786, %v10785
      %v10845 = vpack.c.bf16 %v10788, %v10787
      %v10846 = vpack.c.bf16 %v10790, %v10789
      %v10847 = vpack.c.bf16 %v10792, %v10791
      %v10848 = vpack.c.bf16 %v10794, %v10793
      %v10849 = vpack.c.bf16 %v10796, %v10795
      %v10850 = vpack.c.bf16 %v10798, %v10797
      %v10851 = vpack.c.bf16 %v10800, %v10799
      %v10852 = vpack.c.bf16 %v10802, %v10801
      %v10853 = vpack.c.bf16 %v10804, %v10803
      %v10854 = vpack.c.bf16 %v10806, %v10805
      %v10855 = vpack.c.bf16 %v10808, %v10807
      %v10856 = vpack.c.bf16 %v10810, %v10809
      %v10857 = vpack.c.bf16 %v10812, %v10811
      %v10858 = vpack.c.bf16 %v10814, %v10813
      %v10859 = vpack.c.bf16 %v10816, %v10815
      %v10860 = vpack.c.bf16 %v10818, %v10817
      %v10861 = vpack.c.bf16 %v10820, %v10819
      %v10862 = vpack.c.bf16 %v10822, %v10821
      %v10863 = vpack.c.bf16 %v10824, %v10823
      %v10864 = vpack.c.bf16 %v10826, %v10825
      %v10865 = vpack.c.bf16 %v10828, %v10827
      %v10866 = vpack.c.bf16 %v10830, %v10829
      %v10867 = vpack.c.bf16 %v10832, %v10831
      %v10868 = vpack.c.bf16 %v10834, %v10833
      %v10869 = vpack.c.bf16 %v10836, %v10835
      %v10870 = vpack.c.bf16 %v10838, %v10837
      %v10903 = vunpack.c.l.b16 %v10839
      %v10904 = vunpack.c.h.b16 %v10839
      %v10905 = vunpack.c.l.b16 %v10840
      %v10906 = vunpack.c.h.b16 %v10840
      %v10907 = vunpack.c.l.b16 %v10841
      %v10908 = vunpack.c.h.b16 %v10841
      %v10909 = vunpack.c.l.b16 %v10842
      %v10910 = vunpack.c.h.b16 %v10842
      %v10911 = vunpack.c.l.b16 %v10843
      %v10912 = vunpack.c.h.b16 %v10843
      %v10913 = vunpack.c.l.b16 %v10844
      %v10914 = vunpack.c.h.b16 %v10844
      %v10915 = vunpack.c.l.b16 %v10845
      %v10916 = vunpack.c.h.b16 %v10845
      %v10917 = vunpack.c.l.b16 %v10846
      %v10918 = vunpack.c.h.b16 %v10846
      %v10919 = vunpack.c.l.b16 %v10847
      %v10920 = vunpack.c.h.b16 %v10847
      %v10921 = vunpack.c.l.b16 %v10848
      %v10922 = vunpack.c.h.b16 %v10848
      %v10923 = vunpack.c.l.b16 %v10849
      %v10924 = vunpack.c.h.b16 %v10849
      %v10925 = vunpack.c.l.b16 %v10850
      %v10926 = vunpack.c.h.b16 %v10850
      %v10927 = vunpack.c.l.b16 %v10851
      %v10928 = vunpack.c.h.b16 %v10851
      %v10929 = vunpack.c.l.b16 %v10852
      %v10930 = vunpack.c.h.b16 %v10852
      %v10931 = vunpack.c.l.b16 %v10853
      %v10932 = vunpack.c.h.b16 %v10853
      %v10933 = vunpack.c.l.b16 %v10854
      %v10934 = vunpack.c.h.b16 %v10854
      %v10935 = vunpack.c.l.b16 %v10855
      %v10936 = vunpack.c.h.b16 %v10855
      %v10937 = vunpack.c.l.b16 %v10856
      %v10938 = vunpack.c.h.b16 %v10856
      %v10939 = vunpack.c.l.b16 %v10857
      %v10940 = vunpack.c.h.b16 %v10857
      %v10941 = vunpack.c.l.b16 %v10858
      %v10942 = vunpack.c.h.b16 %v10858
      %v10943 = vunpack.c.l.b16 %v10859
      %v10944 = vunpack.c.h.b16 %v10859
      %v10945 = vunpack.c.l.b16 %v10860
      %v10946 = vunpack.c.h.b16 %v10860
      %v10947 = vunpack.c.l.b16 %v10861
      %v10948 = vunpack.c.h.b16 %v10861
      %v10949 = vunpack.c.l.b16 %v10862
      %v10950 = vunpack.c.h.b16 %v10862
      %v10951 = vunpack.c.l.b16 %v10863
      %v10952 = vunpack.c.h.b16 %v10863
      %v10953 = vunpack.c.l.b16 %v10864
      %v10954 = vunpack.c.h.b16 %v10864
      %v10955 = vunpack.c.l.b16 %v10865
      %v10956 = vunpack.c.h.b16 %v10865
      %v10957 = vunpack.c.l.b16 %v10866
      %v10958 = vunpack.c.h.b16 %v10866
      %v10959 = vunpack.c.l.b16 %v10867
      %v10960 = vunpack.c.h.b16 %v10867
      %v10961 = vunpack.c.l.b16 %v10868
      %v10962 = vunpack.c.h.b16 %v10868
      %v10963 = vunpack.c.l.b16 %v10869
      %v10964 = vunpack.c.h.b16 %v10869
      %v10965 = vunpack.c.l.b16 %v10870
      %v10966 = vunpack.c.h.b16 %v10870
      %v10967 = vpack.c.b16 %v10903, %v10903
      %v10968 = vpack.c.b16 %v10904, %v10904
      %v10969 = vpack.c.b16 %v10905, %v10905
      %v10970 = vpack.c.b16 %v10906, %v10906
      %v10971 = vpack.c.b16 %v10907, %v10907
      %v10972 = vpack.c.b16 %v10908, %v10908
      %v10973 = vpack.c.b16 %v10909, %v10909
      %v10974 = vpack.c.b16 %v10910, %v10910
      %v10975 = vpack.c.b16 %v10911, %v10911
      %v10976 = vpack.c.b16 %v10912, %v10912
      %v10977 = vpack.c.b16 %v10913, %v10913
      %v10978 = vpack.c.b16 %v10914, %v10914
      %v10979 = vpack.c.b16 %v10915, %v10915
      %v10980 = vpack.c.b16 %v10916, %v10916
      %v10981 = vpack.c.b16 %v10917, %v10917
      %v10982 = vpack.c.b16 %v10918, %v10918
      %v10983 = vpack.c.b16 %v10919, %v10919
      %v10984 = vpack.c.b16 %v10920, %v10920
      %v10985 = vpack.c.b16 %v10921, %v10921
      %v10986 = vpack.c.b16 %v10922, %v10922
      %v10987 = vpack.c.b16 %v10923, %v10923
      %v10988 = vpack.c.b16 %v10924, %v10924
      %v10989 = vpack.c.b16 %v10925, %v10925
      %v10990 = vpack.c.b16 %v10926, %v10926
      %v10991 = vpack.c.b16 %v10927, %v10927
      %v10992 = vpack.c.b16 %v10928, %v10928
      %v10993 = vpack.c.b16 %v10929, %v10929
      %v10994 = vpack.c.b16 %v10930, %v10930
      %v10995 = vpack.c.b16 %v10931, %v10931
      %v10996 = vpack.c.b16 %v10932, %v10932
      %v10997 = vpack.c.b16 %v10933, %v10933
      %v10998 = vpack.c.b16 %v10934, %v10934
      %v10999 = vpack.c.b16 %v10935, %v10935
      %v11000 = vpack.c.b16 %v10936, %v10936
      %v11001 = vpack.c.b16 %v10937, %v10937
      %v11002 = vpack.c.b16 %v10938, %v10938
      %v11003 = vpack.c.b16 %v10939, %v10939
      %v11004 = vpack.c.b16 %v10940, %v10940
      %v11005 = vpack.c.b16 %v10941, %v10941
      %v11006 = vpack.c.b16 %v10942, %v10942
      %v11007 = vpack.c.b16 %v10943, %v10943
      %v11008 = vpack.c.b16 %v10944, %v10944
      %v11009 = vpack.c.b16 %v10945, %v10945
      %v11010 = vpack.c.b16 %v10946, %v10946
      %v11011 = vpack.c.b16 %v10947, %v10947
      %v11012 = vpack.c.b16 %v10948, %v10948
      %v11013 = vpack.c.b16 %v10949, %v10949
      %v11014 = vpack.c.b16 %v10950, %v10950
      %v11015 = vpack.c.b16 %v10951, %v10951
      %v11016 = vpack.c.b16 %v10952, %v10952
      %v11017 = vpack.c.b16 %v10953, %v10953
      %v11018 = vpack.c.b16 %v10954, %v10954
      %v11019 = vpack.c.b16 %v10955, %v10955
      %v11020 = vpack.c.b16 %v10956, %v10956
      %v11021 = vpack.c.b16 %v10957, %v10957
      %v11022 = vpack.c.b16 %v10958, %v10958
      %v11023 = vpack.c.b16 %v10959, %v10959
      %v11024 = vpack.c.b16 %v10960, %v10960
      %v11025 = vpack.c.b16 %v10961, %v10961
      %v11026 = vpack.c.b16 %v10962, %v10962
      %v11027 = vpack.c.b16 %v10963, %v10963
      %v11028 = vpack.c.b16 %v10964, %v10964
      %v11029 = vpack.c.b16 %v10965, %v10965
      %v11030 = vpack.c.b16 %v10966, %v10966
      %vm11095 = vcmask 11264
      %11096 = vst.msk [vmem:[%s315] sm:$0xf] %vm11095, %v10967
      %11097 = vst.msk [vmem:[%s315 + $0x4] sm:$0xf] %vm11095, %v10968
      %11098 = vst.msk [vmem:[%s315 + $0x8] sm:$0xf] %vm11095, %v10969
      %11099 = vst.msk [vmem:[%s315 + $0xc] sm:$0xf] %vm11095, %v10970
      %11100 = vst.msk [vmem:[%s315 + $0x10] sm:$0xf] %vm11095, %v10971
      %11101 = vst.msk [vmem:[%s315 + $0x14] sm:$0xf] %vm11095, %v10972
      %11102 = vst.msk [vmem:[%s315 + $0x18] sm:$0xf] %vm11095, %v10973
      %11103 = vst.msk [vmem:[%s315 + $0x1c] sm:$0xf] %vm11095, %v10974
      %11104 = vst.msk [vmem:[%s315 + $0x20] sm:$0xf] %vm11095, %v10975
      %11105 = vst.msk [vmem:[%s315 + $0x24] sm:$0xf] %vm11095, %v10976
      %11106 = vst.msk [vmem:[%s315 + $0x28] sm:$0xf] %vm11095, %v10977
      %11107 = vst.msk [vmem:[%s315 + $0x2c] sm:$0xf] %vm11095, %v10978
      %11108 = vst.msk [vmem:[%s315 + $0x30] sm:$0xf] %vm11095, %v10979
      %11109 = vst.msk [vmem:[%s315 + $0x34] sm:$0xf] %vm11095, %v10980
      %11110 = vst.msk [vmem:[%s315 + $0x38] sm:$0xf] %vm11095, %v10981
      %11111 = vst.msk [vmem:[%s315 + $0x3c] sm:$0xf] %vm11095, %v10982
      %11112 = vst.msk [vmem:[%s315 + $0x40] sm:$0xf] %vm11095, %v10983
      %11113 = vst.msk [vmem:[%s315 + $0x44] sm:$0xf] %vm11095, %v10984
      %11114 = vst.msk [vmem:[%s315 + $0x48] sm:$0xf] %vm11095, %v10985
      %11115 = vst.msk [vmem:[%s315 + $0x4c] sm:$0xf] %vm11095, %v10986
      %11116 = vst.msk [vmem:[%s315 + $0x50] sm:$0xf] %vm11095, %v10987
      %11117 = vst.msk [vmem:[%s315 + $0x54] sm:$0xf] %vm11095, %v10988
      %11118 = vst.msk [vmem:[%s315 + $0x58] sm:$0xf] %vm11095, %v10989
      %11119 = vst.msk [vmem:[%s315 + $0x5c] sm:$0xf] %vm11095, %v10990
      %11120 = vst.msk [vmem:[%s315 + $0x60] sm:$0xf] %vm11095, %v10991
      %11121 = vst.msk [vmem:[%s315 + $0x64] sm:$0xf] %vm11095, %v10992
      %11122 = vst.msk [vmem:[%s315 + $0x68] sm:$0xf] %vm11095, %v10993
      %11123 = vst.msk [vmem:[%s315 + $0x6c] sm:$0xf] %vm11095, %v10994
      %11124 = vst.msk [vmem:[%s315 + $0x70] sm:$0xf] %vm11095, %v10995
      %11125 = vst.msk [vmem:[%s315 + $0x74] sm:$0xf] %vm11095, %v10996
      %11126 = vst.msk [vmem:[%s315 + $0x78] sm:$0xf] %vm11095, %v10997
      %11127 = vst.msk [vmem:[%s315 + $0x7c] sm:$0xf] %vm11095, %v10998
      %11128 = vst.msk [vmem:[%s315 + $0x80] sm:$0xf] %vm11095, %v10999
      %11129 = vst.msk [vmem:[%s315 + $0x84] sm:$0xf] %vm11095, %v11000
      %11130 = vst.msk [vmem:[%s315 + $0x88] sm:$0xf] %vm11095, %v11001
      %11131 = vst.msk [vmem:[%s315 + $0x8c] sm:$0xf] %vm11095, %v11002
      %11132 = vst.msk [vmem:[%s315 + $0x90] sm:$0xf] %vm11095, %v11003
      %11133 = vst.msk [vmem:[%s315 + $0x94] sm:$0xf] %vm11095, %v11004
      %11134 = vst.msk [vmem:[%s315 + $0x98] sm:$0xf] %vm11095, %v11005
      %11135 = vst.msk [vmem:[%s315 + $0x9c] sm:$0xf] %vm11095, %v11006
      %11136 = vst.msk [vmem:[%s315 + $0xa0] sm:$0xf] %vm11095, %v11007
      %11137 = vst.msk [vmem:[%s315 + $0xa4] sm:$0xf] %vm11095, %v11008
      %11138 = vst.msk [vmem:[%s315 + $0xa8] sm:$0xf] %vm11095, %v11009
      %11139 = vst.msk [vmem:[%s315 + $0xac] sm:$0xf] %vm11095, %v11010
      %11140 = vst.msk [vmem:[%s315 + $0xb0] sm:$0xf] %vm11095, %v11011
      %11141 = vst.msk [vmem:[%s315 + $0xb4] sm:$0xf] %vm11095, %v11012
      %11142 = vst.msk [vmem:[%s315 + $0xb8] sm:$0xf] %vm11095, %v11013
      %11143 = vst.msk [vmem:[%s315 + $0xbc] sm:$0xf] %vm11095, %v11014
      %11144 = vst.msk [vmem:[%s315 + $0xc0] sm:$0xf] %vm11095, %v11015
      %11145 = vst.msk [vmem:[%s315 + $0xc4] sm:$0xf] %vm11095, %v11016
      %11146 = vst.msk [vmem:[%s315 + $0xc8] sm:$0xf] %vm11095, %v11017
      %11147 = vst.msk [vmem:[%s315 + $0xcc] sm:$0xf] %vm11095, %v11018
      %11148 = vst.msk [vmem:[%s315 + $0xd0] sm:$0xf] %vm11095, %v11019
      %11149 = vst.msk [vmem:[%s315 + $0xd4] sm:$0xf] %vm11095, %v11020
      %11150 = vst.msk [vmem:[%s315 + $0xd8] sm:$0xf] %vm11095, %v11021
      %11151 = vst.msk [vmem:[%s315 + $0xdc] sm:$0xf] %vm11095, %v11022
      %11152 = vst.msk [vmem:[%s315 + $0xe0] sm:$0xf] %vm11095, %v11023
      %11153 = vst.msk [vmem:[%s315 + $0xe4] sm:$0xf] %vm11095, %v11024
      %11154 = vst.msk [vmem:[%s315 + $0xe8] sm:$0xf] %vm11095, %v11025
      %11155 = vst.msk [vmem:[%s315 + $0xec] sm:$0xf] %vm11095, %v11026
      %11156 = vst.msk [vmem:[%s315 + $0xf0] sm:$0xf] %vm11095, %v11027
      %11157 = vst.msk [vmem:[%s315 + $0xf4] sm:$0xf] %vm11095, %v11028
      %11158 = vst.msk [vmem:[%s315 + $0xf8] sm:$0xf] %vm11095, %v11029
      %11159 = vst.msk [vmem:[%s315 + $0xfc] sm:$0xf] %vm11095, %v11030
      %p11160 = scmp.lt.s32.totalorder %s19, 0
      %s11161 = scalar_select %p11160, %s19, 0
      %p11162 = scmp.lt.s32.totalorder %s20, 31
      %s11163 = scalar_select %p11162, %s20, 31
      %s11164 = smul.addr %s11163, 64
      %s11165 = smul.addr %s11161, 2048
      %s11166 = sadd.s32 %s11164, %s11165
      %s11167 = smul.addr %s11166, 4
      %s11168 = scalar_lea.vmem %s4, %s11167
      // Predicated region
      $region37: #{separable_conv3d.2} parent=35 // pred_check
        %p11169 = pneg %p156
      $region38: #{separable_conv3d.2} parent=35 // pred_check_branch
        %11171 = sbr.rel (%p11169) target = $region40
      $region39: #{separable_conv3d.2} parent=35 // pred_region
        _
      $region40: #{separable_conv3d.2} parent=35 // pred_fallthru
        _
    $region36: #{separable_conv3d.2} parent=5 // pred_fallthru
      _
    %p11172 = scmp.le.s32.totalorder 2, %s10
    // Predicated region
    $region41: #{separable_conv3d.2} parent=5 // pred_check
      %p11173 = pneg %p11172
    $region42: #{separable_conv3d.2} parent=5 // pred_check_branch
      %11175 = sbr.rel (%p11173) target = $region44
    $region43: #{separable_conv3d.2} parent=5 // pred_region
      %s11176 = ssub.s32 %s10, 2
      // Predicated region
      $region45: #{separable_conv3d.2} parent=43 // pred_check
        %p11177 = pneg %p162
      $region46: #{separable_conv3d.2} parent=43 // pred_check_branch
        %11179 = sbr.rel (%p11177) target = $region48
      $region47: #{separable_conv3d.2} parent=43 // pred_region
        %p11180 = scmp.lt.s32.totalorder %s21, 0
        %s11181 = scalar_select %p11180, %s21, 0
        %p11182 = scmp.lt.s32.totalorder %s22, 31
        %s11183 = scalar_select %p11182, %s22, 31
        %s11184 = smul.addr %s11183, 64
        %s11185 = smul.addr %s11181, 2048
        %s11186 = sadd.s32 %s11184, %s11185
        %s11187 = smul.addr %s11186, 4
        %s11188 = scalar_lea.vmem %s4, %s11187
      $region48: #{separable_conv3d.2} parent=43 // pred_fallthru
        _
    $region44: #{separable_conv3d.2} parent=5 // pred_fallthru
      _
  $region6: #{separable_conv3d.2} parent=0 // loop_footer
    %s14 = sadd.s32 1, %s10
  $region7: #{separable_conv3d.2} parent=0 // loop_footer_branch
    %9 = sbr.rel target = $region3
  $region8: #{separable_conv3d.2} parent=0 // loop_exit
    _

</llo_original>
